<compile_context>
chip_gen: v7x
topology: tpu7x:2x2x1
jax: 0.10.0
libtpu: 0.0.40
codegen_flags: <defaults>
</compile_context>

<pallas_src>
import jax
import jax.numpy as jnp
from jax.experimental import pallas as pl
from jax.experimental.pallas import tpu as pltpu

_COL0 = 16          # interior column offset in the padded scratch (bf16-tile aligned)
_WIDE_K_MAX_C = 128 # below this, keep the wide-K (K=9C) im2col path


def _make_kernel(H, W, C, col0, wide_k):
    """Builds the fused kernel: conv1 -> bn1 -> relu -> conv2 -> bn2 -> +res -> relu."""
    taps = [(dh, dw) for dh in range(3) for dw in range(3)]

    def conv3x3(pad_ref, w_ref, patch_ref):
        if wide_k:
            # Stage the nine shifted bf16 taps directly into the (H*W, 9C) bf16 patch
            # (no concatenate, no repeated casts), then one wide-K MXU matmul.
            for t, (dh, dw) in enumerate(taps):
                patch_ref[:, t * C:(t + 1) * C] = (
                    pad_ref[dh:dh + H, col0 - 1 + dw:col0 - 1 + dw + W, :]
                    .reshape(H * W, C))
            return jnp.dot(patch_ref[...], w_ref[...],
                           preferred_element_type=jnp.float32)
        # Tap-accumulate path (C >= 128): nine K=C matmuls, f32 accumulation.
        acc = None
        for t, (dh, dw) in enumerate(taps):
            tap = pad_ref[dh:dh + H, col0 - 1 + dw:col0 - 1 + dw + W, :] \
                .reshape(H * W, C)
            p = jnp.dot(tap, w_ref[t], preferred_element_type=jnp.float32)
            acc = p if acc is None else acc + p
        return acc

    def kernel(x_ref, w1_ref, s1_ref, b1_ref, w2_ref, s2_ref, b2_ref, o_ref,
               pad_ref, *extra):
        patch_ref = extra[0] if wide_k else None
        Wp = pad_ref.shape[1]

        x = x_ref[0]                                        # (H, W, C) f32

        # ---- zero only the 1-pixel halo ring (interior is fully rewritten) -------
        zrow = jnp.zeros((1, Wp, C), pad_ref.dtype)
        pad_ref[0:1] = zrow
        pad_ref[H + 1:H + 2] = zrow
        zcol = jnp.zeros((H, 1, C), pad_ref.dtype)
        pad_ref[1:H + 1, col0 - 1:col0, :] = zcol
        pad_ref[1:H + 1, col0 + W:col0 + W + 1, :] = zcol

        # ---- conv1 + bn1 (f32 epilogue) + ReLU ------------------------------------
        pad_ref[1:H + 1, col0:col0 + W, :] = x.astype(pad_ref.dtype)   # aligned store
        acc1 = conv3x3(pad_ref, w1_ref, patch_ref)                     # (H*W, C) f32
        out1 = jnp.maximum(acc1 * s1_ref[...] + b1_ref[...], 0.0)

        # ---- conv2 + bn2 + residual + ReLU (reuse the same padded scratch) --------
        pad_ref[1:H + 1, col0:col0 + W, :] = out1.reshape(H, W, C).astype(pad_ref.dtype)
        acc2 = conv3x3(pad_ref, w2_ref, patch_ref)                     # (H*W, C) f32

        res = x.reshape(H * W, C)                                      # f32 identity
        y = jnp.maximum(acc2 * s2_ref[...] + b2_ref[...] + res, 0.0)
        o_ref[0] = y.astype(o_ref.dtype)                               # (H*W, C) slab

    return kernel


def _bn_scale_bias(gamma, beta, mean, var, eps=1e-5):
    """Inference-mode BN as per-channel (scale, bias), kept in f32 for the epilogue."""
    scale = gamma / jnp.sqrt(var + eps)
    bias = beta - mean * scale
    return scale.reshape(1, -1).astype(jnp.float32), bias.reshape(1, -1).astype(jnp.float32)


def _vmem_limit_bytes(H, W, C, Wp, wide_k):
    """Per-step VMEM footprint estimate (double-buffered blocks + scratches)."""
    f32, bf16 = 4, 2
    x_blk = H * W * C * f32 * 2
    o_blk = H * W * C * f32 * 2
    w_all = 2 * 9 * C * C * bf16 * 2
    sb = 4 * C * f32 * 2
    pad = (H + 2) * Wp * C * bf16
    patch = H * W * 9 * C * bf16 if wide_k else 0
    need = x_blk + o_blk + w_all + sb + pad + patch
    # 2x headroom for compiler temps / relayouts; floor 16 MiB (v5e scoped default),
    # cap 48 MiB to stay under v7x's 64 MiB physical VMEM minus internal scratch.
    return int(min(max(2 * need, 16 * 2**20), 48 * 2**20))


def basic_block_forward_nhwc(x_nhwc, params):
    """x_nhwc: (N, H, W, C) float32 -> (N, H, W, C) float32.  Use this for chains."""
    x = x_nhwc.astype(jnp.float32)
    N, H, W, Cin = x.shape
    Cout = params["w1"].shape[-1]
    if Cin != Cout:
        raise ValueError("identity residual requires in_planes == out_planes "
                         "(downsample=None)")
    C = Cin
    wide_k = C < _WIDE_K_MAX_C
    col0 = _COL0
    Wp = col0 + W + 1

    if wide_k:
        w1 = params["w1"].reshape(9 * C, C).astype(jnp.bfloat16)
        w2 = params["w2"].reshape(9 * C, C).astype(jnp.bfloat16)
        w_spec = lambda shp: pl.BlockSpec(shp, lambda n: (0, 0))
        w1_spec, w2_spec = w_spec((9 * C, C)), w_spec((9 * C, C))
    else:
        w1 = params["w1"].reshape(9, C, C).astype(jnp.bfloat16)
        w2 = params["w2"].reshape(9, C, C).astype(jnp.bfloat16)
        w_spec = lambda shp: pl.BlockSpec(shp, lambda n: (0, 0, 0))
        w1_spec, w2_spec = w_spec((9, C, C)), w_spec((9, C, C))

    s1, b1 = _bn_scale_bias(params["bn1_gamma"], params["bn1_beta"],
                            params["bn1_mean"], params["bn1_var"])
    s2, b2 = _bn_scale_bias(params["bn2_gamma"], params["bn2_beta"],
                            params["bn2_mean"], params["bn2_var"])

    vec_spec = pl.BlockSpec((1, C), lambda n: (0, 0))
    scratch = [pltpu.VMEM((H + 2, Wp, C), jnp.bfloat16)]          # shared padded buf
    if wide_k:
        scratch.append(pltpu.VMEM((H * W, 9 * C), jnp.bfloat16))  # staged im2col patch

    out = pl.pallas_call(
        _make_kernel(H, W, C, col0, wide_k),
        out_shape=jax.ShapeDtypeStruct((N, H * W, C), jnp.float32),
        grid=(N,),
        in_specs=[
            pl.BlockSpec((1, H, W, C), lambda n: (n, 0, 0, 0)),   # x
            w1_spec, vec_spec, vec_spec,                          # w1, bn1 scale/bias
            w2_spec, vec_spec, vec_spec,                          # w2, bn2 scale/bias
        ],
        out_specs=pl.BlockSpec((1, H * W, C), lambda n: (n, 0, 0)),
        scratch_shapes=scratch,
        compiler_params=pltpu.CompilerParams(
            dimension_semantics=("parallel",),
            vmem_limit_bytes=_vmem_limit_bytes(H, W, C, Wp, wide_k),
        ),
    )(x, w1, s1, b1, w2, s2, b2)

    return out.reshape(N, H, W, C)          # free layout plumbing in the wrapper


def basic_block_forward(x_nchw, params):
    """x_nchw: (N, C, H, W) float32 -> (N, C, H, W) float32 (NCHW boundary wrapper)."""
    x = jnp.transpose(x_nchw, (0, 2, 3, 1))
    out = basic_block_forward_nhwc(x, params)
    return jnp.transpose(out, (0, 3, 1, 2))


def init_params(key, in_planes, out_planes):
    ks = jax.random.split(key, 10)
    std1 = (2.0 / (9 * in_planes)) ** 0.5
    std2 = (2.0 / (9 * out_planes)) ** 0.5

    def uni(k, lo, hi):
        return jax.random.uniform(k, (out_planes,), jnp.float32, lo, hi)

    def nrm(k, s):
        return s * jax.random.normal(k, (out_planes,), jnp.float32)

    return {
        "w1": jax.random.normal(ks[0], (3, 3, in_planes, out_planes), jnp.float32) * std1,
        "w2": jax.random.normal(ks[1], (3, 3, out_planes, out_planes), jnp.float32) * std2,
        "bn1_gamma": uni(ks[2], 0.8, 1.2),
        "bn1_beta": nrm(ks[3], 0.1),
        "bn1_mean": nrm(ks[4], 0.1),
        "bn1_var": uni(ks[5], 0.8, 1.2),
        "bn2_gamma": uni(ks[6], 0.8, 1.2),
        "bn2_beta": nrm(ks[7], 0.1),
        "bn2_mean": nrm(ks[8], 0.1),
        "bn2_var": uni(ks[9], 0.8, 1.2),
    }


def _reference_forward(x_nchw, params, eps=1e-5):
    """Pure-JAX (f32) reference matching the PyTorch module in eval mode."""
    def conv(x, w):
        return jax.lax.conv_general_dilated(
            x, w, window_strides=(1, 1), padding=((1, 1), (1, 1)),
            dimension_numbers=("NCHW", "HWIO", "NCHW"))

    def bn(x, prefix):
        g, b = params[prefix + "_gamma"], params[prefix + "_beta"]
        m, v = params[prefix + "_mean"], params[prefix + "_var"]
        s = g / jnp.sqrt(v + eps)
        return x * s[None, :, None, None] + (b - m * s)[None, :, None, None]

    out = jax.nn.relu(bn(conv(x_nchw, params["w1"]), "bn1"))
    out = bn(conv(out, params["w2"]), "bn2")
    return jax.nn.relu(out + x_nchw)


if __name__ == "__main__":
    key = jax.random.PRNGKey(0)
    kx, kp = jax.random.split(key)

    N, C, H, W = 2, 4, 16, 16          # in_planes == out_planes, stride=1, downsample=None
    x = jax.random.normal(kx, (N, C, H, W), jnp.float32)
    params = init_params(kp, C, C)

    out = jax.jit(basic_block_forward)(x, params)
    jax.block_until_ready(out)
    assert out.shape == (N, C, H, W)

    # Loose tolerance: kernel uses bf16 MXU operands, reference is pure f32.
    ref = _reference_forward(x, params)
    assert bool(jnp.allclose(out, ref, rtol=5e-2, atol=1e-1)), (
        "mismatch vs f32 reference: max abs err = "
        f"{float(jnp.max(jnp.abs(out - ref)))}")

    print("KERNEL_OK")
</pallas_src>

<mosaic_0001>
module attributes {stable_mosaic.version = 11 : i64} {
  func.func @kernel(%arg0: i32, %arg1: memref<1x16x16x4xf32, #tpu.memory_space<vmem>>, %arg2: memref<36x4xbf16, #tpu.memory_space<vmem>>, %arg3: memref<1x4xf32, #tpu.memory_space<vmem>>, %arg4: memref<1x4xf32, #tpu.memory_space<vmem>>, %arg5: memref<36x4xbf16, #tpu.memory_space<vmem>>, %arg6: memref<1x4xf32, #tpu.memory_space<vmem>>, %arg7: memref<1x4xf32, #tpu.memory_space<vmem>>, %arg8: memref<1x256x4xf32, #tpu.memory_space<vmem>>, %arg9: memref<18x33x4xbf16, #tpu.memory_space<vmem>>, %arg10: memref<256x36xbf16, #tpu.memory_space<vmem>>) attributes {dimension_semantics = [#tpu.dimension_semantics<parallel>], iteration_bounds = array<i64: 2>, scalar_prefetch = 0 : i64, scratch_operands = 2 : i64, tpu.core_type = #tpu.core_type<tc>, window_params = [{transform_indices = @transform_0, window_bounds = array<i64: 1, 16, 16, 4>}, {pipeline_mode = #tpu.pipeline_mode<synchronous>, transform_indices = @transform_1, window_bounds = array<i64: 36, 4>}, {pipeline_mode = #tpu.pipeline_mode<synchronous>, transform_indices = @transform_2, window_bounds = array<i64: 1, 4>}, {pipeline_mode = #tpu.pipeline_mode<synchronous>, transform_indices = @transform_3, window_bounds = array<i64: 1, 4>}, {pipeline_mode = #tpu.pipeline_mode<synchronous>, transform_indices = @transform_4, window_bounds = array<i64: 36, 4>}, {pipeline_mode = #tpu.pipeline_mode<synchronous>, transform_indices = @transform_5, window_bounds = array<i64: 1, 4>}, {pipeline_mode = #tpu.pipeline_mode<synchronous>, transform_indices = @transform_6, window_bounds = array<i64: 1, 4>}, {transform_indices = @transform_7, window_bounds = array<i64: 1, 256, 4>}]} {
    %c0 = arith.constant 0 : index
    %c0_0 = arith.constant 0 : index
    %c0_1 = arith.constant 0 : index
    %c0_2 = arith.constant 0 : index
    %0 = vector.load %arg1[%c0, %c0_0, %c0_1, %c0_2] : memref<1x16x16x4xf32, #tpu.memory_space<vmem>>, vector<1x16x16x4xf32>
    %1 = vector.shape_cast %0 : vector<1x16x16x4xf32> to vector<16x16x4xf32>
    %cst = arith.constant 0.000000e+00 : bf16
    %2 = vector.broadcast %cst : bf16 to vector<1x33x4xbf16>
    %c0_3 = arith.constant 0 : index
    %c0_4 = arith.constant 0 : index
    %c0_5 = arith.constant 0 : index
    %3 = vector.load %arg9[%c0_3, %c0_4, %c0_5] : memref<18x33x4xbf16, #tpu.memory_space<vmem>>, vector<1x33x4xbf16>
    tpu.vector_store %arg9[%c0_3, %c0_4, %c0_5], %2 {strides = array<i32>} : memref<18x33x4xbf16, #tpu.memory_space<vmem>>, vector<1x33x4xbf16>,
    %c17 = arith.constant 17 : index
    %c0_6 = arith.constant 0 : index
    %c0_7 = arith.constant 0 : index
    %4 = vector.load %arg9[%c17, %c0_6, %c0_7] : memref<18x33x4xbf16, #tpu.memory_space<vmem>>, vector<1x33x4xbf16>
    tpu.vector_store %arg9[%c17, %c0_6, %c0_7], %2 {strides = array<i32>} : memref<18x33x4xbf16, #tpu.memory_space<vmem>>, vector<1x33x4xbf16>,
    %cst_8 = arith.constant 0.000000e+00 : bf16
    %5 = vector.broadcast %cst_8 : bf16 to vector<16x1x4xbf16>
    %c1 = arith.constant 1 : index
    %c15 = arith.constant 15 : index
    %c0_9 = arith.constant 0 : index
    %6 = vector.load %arg9[%c1, %c15, %c0_9] : memref<18x33x4xbf16, #tpu.memory_space<vmem>>, vector<16x1x4xbf16>
    tpu.vector_store %arg9[%c1, %c15, %c0_9], %5 {strides = array<i32>} : memref<18x33x4xbf16, #tpu.memory_space<vmem>>, vector<16x1x4xbf16>,
    %c1_10 = arith.constant 1 : index
    %c32 = arith.constant 32 : index
    %c0_11 = arith.constant 0 : index
    %7 = vector.load %arg9[%c1_10, %c32, %c0_11] : memref<18x33x4xbf16, #tpu.memory_space<vmem>>, vector<16x1x4xbf16>
    tpu.vector_store %arg9[%c1_10, %c32, %c0_11], %5 {strides = array<i32>} : memref<18x33x4xbf16, #tpu.memory_space<vmem>>, vector<16x1x4xbf16>,
    %8 = arith.truncf %1 : vector<16x16x4xf32> to vector<16x16x4xbf16>
    %c1_12 = arith.constant 1 : index
    %c16 = arith.constant 16 : index
    %c0_13 = arith.constant 0 : index
    %9 = vector.load %arg9[%c1_12, %c16, %c0_13] : memref<18x33x4xbf16, #tpu.memory_space<vmem>>, vector<16x16x4xbf16>
    tpu.vector_store %arg9[%c1_12, %c16, %c0_13], %8 {strides = array<i32>} : memref<18x33x4xbf16, #tpu.memory_space<vmem>>, vector<16x16x4xbf16>,
    %c0_14 = arith.constant 0 : index
    %c15_15 = arith.constant 15 : index
    %c0_16 = arith.constant 0 : index
    %10 = vector.load %arg9[%c0_14, %c15_15, %c0_16] : memref<18x33x4xbf16, #tpu.memory_space<vmem>>, vector<16x16x4xbf16>
    %11 = vector.shape_cast %10 : vector<16x16x4xbf16> to vector<256x4xbf16>
    %c0_17 = arith.constant 0 : index
    %c0_18 = arith.constant 0 : index
    %12 = vector.load %arg10[%c0_17, %c0_18] : memref<256x36xbf16, #tpu.memory_space<vmem>>, vector<256x4xbf16>
    tpu.vector_store %arg10[%c0_17, %c0_18], %11 {strides = array<i32>} : memref<256x36xbf16, #tpu.memory_space<vmem>>, vector<256x4xbf16>,
    %c0_19 = arith.constant 0 : index
    %c16_20 = arith.constant 16 : index
    %c0_21 = arith.constant 0 : index
    %13 = vector.load %arg9[%c0_19, %c16_20, %c0_21] : memref<18x33x4xbf16, #tpu.memory_space<vmem>>, vector<16x16x4xbf16>
    %14 = vector.shape_cast %13 : vector<16x16x4xbf16> to vector<256x4xbf16>
    %c0_22 = arith.constant 0 : index
    %c4 = arith.constant 4 : index
    %15 = vector.load %arg10[%c0_22, %c4] : memref<256x36xbf16, #tpu.memory_space<vmem>>, vector<256x4xbf16>
    tpu.vector_store %arg10[%c0_22, %c4], %14 {strides = array<i32>} : memref<256x36xbf16, #tpu.memory_space<vmem>>, vector<256x4xbf16>,
    %c0_23 = arith.constant 0 : index
    %c17_24 = arith.constant 17 : index
    %c0_25 = arith.constant 0 : index
    %16 = vector.load %arg9[%c0_23, %c17_24, %c0_25] : memref<18x33x4xbf16, #tpu.memory_space<vmem>>, vector<16x16x4xbf16>
    %17 = vector.shape_cast %16 : vector<16x16x4xbf16> to vector<256x4xbf16>
    %c0_26 = arith.constant 0 : index
    %c8 = arith.constant 8 : index
    %18 = vector.load %arg10[%c0_26, %c8] : memref<256x36xbf16, #tpu.memory_space<vmem>>, vector<256x4xbf16>
    tpu.vector_store %arg10[%c0_26, %c8], %17 {strides = array<i32>} : memref<256x36xbf16, #tpu.memory_space<vmem>>, vector<256x4xbf16>,
    %c1_27 = arith.constant 1 : index
    %c15_28 = arith.constant 15 : index
    %c0_29 = arith.constant 0 : index
    %19 = vector.load %arg9[%c1_27, %c15_28, %c0_29] : memref<18x33x4xbf16, #tpu.memory_space<vmem>>, vector<16x16x4xbf16>
    %20 = vector.shape_cast %19 : vector<16x16x4xbf16> to vector<256x4xbf16>
    %c0_30 = arith.constant 0 : index
    %c12 = arith.constant 12 : index
    %21 = vector.load %arg10[%c0_30, %c12] : memref<256x36xbf16, #tpu.memory_space<vmem>>, vector<256x4xbf16>
    tpu.vector_store %arg10[%c0_30, %c12], %20 {strides = array<i32>} : memref<256x36xbf16, #tpu.memory_space<vmem>>, vector<256x4xbf16>,
    %c1_31 = arith.constant 1 : index
    %c16_32 = arith.constant 16 : index
    %c0_33 = arith.constant 0 : index
    %22 = vector.load %arg9[%c1_31, %c16_32, %c0_33] : memref<18x33x4xbf16, #tpu.memory_space<vmem>>, vector<16x16x4xbf16>
    %23 = vector.shape_cast %22 : vector<16x16x4xbf16> to vector<256x4xbf16>
    %c0_34 = arith.constant 0 : index
    %c16_35 = arith.constant 16 : index
    %24 = vector.load %arg10[%c0_34, %c16_35] : memref<256x36xbf16, #tpu.memory_space<vmem>>, vector<256x4xbf16>
    tpu.vector_store %arg10[%c0_34, %c16_35], %23 {strides = array<i32>} : memref<256x36xbf16, #tpu.memory_space<vmem>>, vector<256x4xbf16>,
    %c1_36 = arith.constant 1 : index
    %c17_37 = arith.constant 17 : index
    %c0_38 = arith.constant 0 : index
    %25 = vector.load %arg9[%c1_36, %c17_37, %c0_38] : memref<18x33x4xbf16, #tpu.memory_space<vmem>>, vector<16x16x4xbf16>
    %26 = vector.shape_cast %25 : vector<16x16x4xbf16> to vector<256x4xbf16>
    %c0_39 = arith.constant 0 : index
    %c20 = arith.constant 20 : index
    %27 = vector.load %arg10[%c0_39, %c20] : memref<256x36xbf16, #tpu.memory_space<vmem>>, vector<256x4xbf16>
    tpu.vector_store %arg10[%c0_39, %c20], %26 {strides = array<i32>} : memref<256x36xbf16, #tpu.memory_space<vmem>>, vector<256x4xbf16>,
    %c2 = arith.constant 2 : index
    %c15_40 = arith.constant 15 : index
    %c0_41 = arith.constant 0 : index
    %28 = vector.load %arg9[%c2, %c15_40, %c0_41] : memref<18x33x4xbf16, #tpu.memory_space<vmem>>, vector<16x16x4xbf16>
    %29 = vector.shape_cast %28 : vector<16x16x4xbf16> to vector<256x4xbf16>
    %c0_42 = arith.constant 0 : index
    %c24 = arith.constant 24 : index
    %30 = vector.load %arg10[%c0_42, %c24] : memref<256x36xbf16, #tpu.memory_space<vmem>>, vector<256x4xbf16>
    tpu.vector_store %arg10[%c0_42, %c24], %29 {strides = array<i32>} : memref<256x36xbf16, #tpu.memory_space<vmem>>, vector<256x4xbf16>,
    %c2_43 = arith.constant 2 : index
    %c16_44 = arith.constant 16 : index
    %c0_45 = arith.constant 0 : index
    %31 = vector.load %arg9[%c2_43, %c16_44, %c0_45] : memref<18x33x4xbf16, #tpu.memory_space<vmem>>, vector<16x16x4xbf16>
    %32 = vector.shape_cast %31 : vector<16x16x4xbf16> to vector<256x4xbf16>
    %c0_46 = arith.constant 0 : index
    %c28 = arith.constant 28 : index
    %33 = vector.load %arg10[%c0_46, %c28] : memref<256x36xbf16, #tpu.memory_space<vmem>>, vector<256x4xbf16>
    tpu.vector_store %arg10[%c0_46, %c28], %32 {strides = array<i32>} : memref<256x36xbf16, #tpu.memory_space<vmem>>, vector<256x4xbf16>,
    %c2_47 = arith.constant 2 : index
    %c17_48 = arith.constant 17 : index
    %c0_49 = arith.constant 0 : index
    %34 = vector.load %arg9[%c2_47, %c17_48, %c0_49] : memref<18x33x4xbf16, #tpu.memory_space<vmem>>, vector<16x16x4xbf16>
    %35 = vector.shape_cast %34 : vector<16x16x4xbf16> to vector<256x4xbf16>
    %c0_50 = arith.constant 0 : index
    %c32_51 = arith.constant 32 : index
    %36 = vector.load %arg10[%c0_50, %c32_51] : memref<256x36xbf16, #tpu.memory_space<vmem>>, vector<256x4xbf16>
    tpu.vector_store %arg10[%c0_50, %c32_51], %35 {strides = array<i32>} : memref<256x36xbf16, #tpu.memory_space<vmem>>, vector<256x4xbf16>,
    %c0_52 = arith.constant 0 : index
    %c0_53 = arith.constant 0 : index
    %37 = vector.load %arg10[%c0_52, %c0_53] : memref<256x36xbf16, #tpu.memory_space<vmem>>, vector<256x36xbf16>
    %c0_54 = arith.constant 0 : index
    %c0_55 = arith.constant 0 : index
    %38 = vector.load %arg2[%c0_54, %c0_55] : memref<36x4xbf16, #tpu.memory_space<vmem>>, vector<36x4xbf16>
    %cst_56 = arith.constant dense<0.000000e+00> : vector<256x4xf32>
    %39 = tpu.matmul %37, %38, %cst_56 {dimension_numbers = #tpu.dot_dimension_numbers<[1], [0], [0], [1], [0, 0, 1, 1], [], []>} : vector<256x36xbf16>, vector<36x4xbf16>, vector<256x4xf32> -> vector<256x4xf32>
    %c0_57 = arith.constant 0 : index
    %c0_58 = arith.constant 0 : index
    %40 = vector.load %arg3[%c0_57, %c0_58] : memref<1x4xf32, #tpu.memory_space<vmem>>, vector<1x4xf32>
    %41 = vector.broadcast %40 : vector<1x4xf32> to vector<256x4xf32>
    %42 = arith.mulf %39, %41 : vector<256x4xf32>
    %c0_59 = arith.constant 0 : index
    %c0_60 = arith.constant 0 : index
    %43 = vector.load %arg4[%c0_59, %c0_60] : memref<1x4xf32, #tpu.memory_space<vmem>>, vector<1x4xf32>
    %44 = vector.broadcast %43 : vector<1x4xf32> to vector<256x4xf32>
    %45 = arith.addf %42, %44 : vector<256x4xf32>
    %cst_61 = arith.constant 0.000000e+00 : f32
    %46 = vector.broadcast %cst_61 : f32 to vector<256x4xf32>
    %47 = arith.maximumf %45, %46 : vector<256x4xf32>
    %48 = vector.shape_cast %47 : vector<256x4xf32> to vector<16x16x4xf32>
    %49 = arith.truncf %48 : vector<16x16x4xf32> to vector<16x16x4xbf16>
    %c1_62 = arith.constant 1 : index
    %c16_63 = arith.constant 16 : index
    %c0_64 = arith.constant 0 : index
    %50 = vector.load %arg9[%c1_62, %c16_63, %c0_64] : memref<18x33x4xbf16, #tpu.memory_space<vmem>>, vector<16x16x4xbf16>
    tpu.vector_store %arg9[%c1_62, %c16_63, %c0_64], %49 {strides = array<i32>} : memref<18x33x4xbf16, #tpu.memory_space<vmem>>, vector<16x16x4xbf16>,
    %c0_65 = arith.constant 0 : index
    %c15_66 = arith.constant 15 : index
    %c0_67 = arith.constant 0 : index
    %51 = vector.load %arg9[%c0_65, %c15_66, %c0_67] : memref<18x33x4xbf16, #tpu.memory_space<vmem>>, vector<16x16x4xbf16>
    %52 = vector.shape_cast %51 : vector<16x16x4xbf16> to vector<256x4xbf16>
    %c0_68 = arith.constant 0 : index
    %c0_69 = arith.constant 0 : index
    %53 = vector.load %arg10[%c0_68, %c0_69] : memref<256x36xbf16, #tpu.memory_space<vmem>>, vector<256x4xbf16>
    tpu.vector_store %arg10[%c0_68, %c0_69], %52 {strides = array<i32>} : memref<256x36xbf16, #tpu.memory_space<vmem>>, vector<256x4xbf16>,
    %c0_70 = arith.constant 0 : index
    %c16_71 = arith.constant 16 : index
    %c0_72 = arith.constant 0 : index
    %54 = vector.load %arg9[%c0_70, %c16_71, %c0_72] : memref<18x33x4xbf16, #tpu.memory_space<vmem>>, vector<16x16x4xbf16>
    %55 = vector.shape_cast %54 : vector<16x16x4xbf16> to vector<256x4xbf16>
    %c0_73 = arith.constant 0 : index
    %c4_74 = arith.constant 4 : index
    %56 = vector.load %arg10[%c0_73, %c4_74] : memref<256x36xbf16, #tpu.memory_space<vmem>>, vector<256x4xbf16>
    tpu.vector_store %arg10[%c0_73, %c4_74], %55 {strides = array<i32>} : memref<256x36xbf16, #tpu.memory_space<vmem>>, vector<256x4xbf16>,
    %c0_75 = arith.constant 0 : index
    %c17_76 = arith.constant 17 : index
    %c0_77 = arith.constant 0 : index
    %57 = vector.load %arg9[%c0_75, %c17_76, %c0_77] : memref<18x33x4xbf16, #tpu.memory_space<vmem>>, vector<16x16x4xbf16>
    %58 = vector.shape_cast %57 : vector<16x16x4xbf16> to vector<256x4xbf16>
    %c0_78 = arith.constant 0 : index
    %c8_79 = arith.constant 8 : index
    %59 = vector.load %arg10[%c0_78, %c8_79] : memref<256x36xbf16, #tpu.memory_space<vmem>>, vector<256x4xbf16>
    tpu.vector_store %arg10[%c0_78, %c8_79], %58 {strides = array<i32>} : memref<256x36xbf16, #tpu.memory_space<vmem>>, vector<256x4xbf16>,
    %c1_80 = arith.constant 1 : index
    %c15_81 = arith.constant 15 : index
    %c0_82 = arith.constant 0 : index
    %60 = vector.load %arg9[%c1_80, %c15_81, %c0_82] : memref<18x33x4xbf16, #tpu.memory_space<vmem>>, vector<16x16x4xbf16>
    %61 = vector.shape_cast %60 : vector<16x16x4xbf16> to vector<256x4xbf16>
    %c0_83 = arith.constant 0 : index
    %c12_84 = arith.constant 12 : index
    %62 = vector.load %arg10[%c0_83, %c12_84] : memref<256x36xbf16, #tpu.memory_space<vmem>>, vector<256x4xbf16>
    tpu.vector_store %arg10[%c0_83, %c12_84], %61 {strides = array<i32>} : memref<256x36xbf16, #tpu.memory_space<vmem>>, vector<256x4xbf16>,
    %c1_85 = arith.constant 1 : index
    %c16_86 = arith.constant 16 : index
    %c0_87 = arith.constant 0 : index
    %63 = vector.load %arg9[%c1_85, %c16_86, %c0_87] : memref<18x33x4xbf16, #tpu.memory_space<vmem>>, vector<16x16x4xbf16>
    %64 = vector.shape_cast %63 : vector<16x16x4xbf16> to vector<256x4xbf16>
    %c0_88 = arith.constant 0 : index
    %c16_89 = arith.constant 16 : index
    %65 = vector.load %arg10[%c0_88, %c16_89] : memref<256x36xbf16, #tpu.memory_space<vmem>>, vector<256x4xbf16>
    tpu.vector_store %arg10[%c0_88, %c16_89], %64 {strides = array<i32>} : memref<256x36xbf16, #tpu.memory_space<vmem>>, vector<256x4xbf16>,
    %c1_90 = arith.constant 1 : index
    %c17_91 = arith.constant 17 : index
    %c0_92 = arith.constant 0 : index
    %66 = vector.load %arg9[%c1_90, %c17_91, %c0_92] : memref<18x33x4xbf16, #tpu.memory_space<vmem>>, vector<16x16x4xbf16>
    %67 = vector.shape_cast %66 : vector<16x16x4xbf16> to vector<256x4xbf16>
    %c0_93 = arith.constant 0 : index
    %c20_94 = arith.constant 20 : index
    %68 = vector.load %arg10[%c0_93, %c20_94] : memref<256x36xbf16, #tpu.memory_space<vmem>>, vector<256x4xbf16>
    tpu.vector_store %arg10[%c0_93, %c20_94], %67 {strides = array<i32>} : memref<256x36xbf16, #tpu.memory_space<vmem>>, vector<256x4xbf16>,
    %c2_95 = arith.constant 2 : index
    %c15_96 = arith.constant 15 : index
    %c0_97 = arith.constant 0 : index
    %69 = vector.load %arg9[%c2_95, %c15_96, %c0_97] : memref<18x33x4xbf16, #tpu.memory_space<vmem>>, vector<16x16x4xbf16>
    %70 = vector.shape_cast %69 : vector<16x16x4xbf16> to vector<256x4xbf16>
    %c0_98 = arith.constant 0 : index
    %c24_99 = arith.constant 24 : index
    %71 = vector.load %arg10[%c0_98, %c24_99] : memref<256x36xbf16, #tpu.memory_space<vmem>>, vector<256x4xbf16>
    tpu.vector_store %arg10[%c0_98, %c24_99], %70 {strides = array<i32>} : memref<256x36xbf16, #tpu.memory_space<vmem>>, vector<256x4xbf16>,
    %c2_100 = arith.constant 2 : index
    %c16_101 = arith.constant 16 : index
    %c0_102 = arith.constant 0 : index
    %72 = vector.load %arg9[%c2_100, %c16_101, %c0_102] : memref<18x33x4xbf16, #tpu.memory_space<vmem>>, vector<16x16x4xbf16>
    %73 = vector.shape_cast %72 : vector<16x16x4xbf16> to vector<256x4xbf16>
    %c0_103 = arith.constant 0 : index
    %c28_104 = arith.constant 28 : index
    %74 = vector.load %arg10[%c0_103, %c28_104] : memref<256x36xbf16, #tpu.memory_space<vmem>>, vector<256x4xbf16>
    tpu.vector_store %arg10[%c0_103, %c28_104], %73 {strides = array<i32>} : memref<256x36xbf16, #tpu.memory_space<vmem>>, vector<256x4xbf16>,
    %c2_105 = arith.constant 2 : index
    %c17_106 = arith.constant 17 : index
    %c0_107 = arith.constant 0 : index
    %75 = vector.load %arg9[%c2_105, %c17_106, %c0_107] : memref<18x33x4xbf16, #tpu.memory_space<vmem>>, vector<16x16x4xbf16>
    %76 = vector.shape_cast %75 : vector<16x16x4xbf16> to vector<256x4xbf16>
    %c0_108 = arith.constant 0 : index
    %c32_109 = arith.constant 32 : index
    %77 = vector.load %arg10[%c0_108, %c32_109] : memref<256x36xbf16, #tpu.memory_space<vmem>>, vector<256x4xbf16>
    tpu.vector_store %arg10[%c0_108, %c32_109], %76 {strides = array<i32>} : memref<256x36xbf16, #tpu.memory_space<vmem>>, vector<256x4xbf16>,
    %c0_110 = arith.constant 0 : index
    %c0_111 = arith.constant 0 : index
    %78 = vector.load %arg10[%c0_110, %c0_111] : memref<256x36xbf16, #tpu.memory_space<vmem>>, vector<256x36xbf16>
    %c0_112 = arith.constant 0 : index
    %c0_113 = arith.constant 0 : index
    %79 = vector.load %arg5[%c0_112, %c0_113] : memref<36x4xbf16, #tpu.memory_space<vmem>>, vector<36x4xbf16>
    %cst_114 = arith.constant dense<0.000000e+00> : vector<256x4xf32>
    %80 = tpu.matmul %78, %79, %cst_114 {dimension_numbers = #tpu.dot_dimension_numbers<[1], [0], [0], [1], [0, 0, 1, 1], [], []>} : vector<256x36xbf16>, vector<36x4xbf16>, vector<256x4xf32> -> vector<256x4xf32>
    %81 = vector.shape_cast %1 : vector<16x16x4xf32> to vector<256x4xf32>
    %c0_115 = arith.constant 0 : index
    %c0_116 = arith.constant 0 : index
    %82 = vector.load %arg6[%c0_115, %c0_116] : memref<1x4xf32, #tpu.memory_space<vmem>>, vector<1x4xf32>
    %83 = vector.broadcast %82 : vector<1x4xf32> to vector<256x4xf32>
    %84 = arith.mulf %80, %83 : vector<256x4xf32>
    %c0_117 = arith.constant 0 : index
    %c0_118 = arith.constant 0 : index
    %85 = vector.load %arg7[%c0_117, %c0_118] : memref<1x4xf32, #tpu.memory_space<vmem>>, vector<1x4xf32>
    %86 = vector.broadcast %85 : vector<1x4xf32> to vector<256x4xf32>
    %87 = arith.addf %84, %86 : vector<256x4xf32>
    %88 = arith.addf %87, %81 : vector<256x4xf32>
    %cst_119 = arith.constant 0.000000e+00 : f32
    %89 = vector.broadcast %cst_119 : f32 to vector<256x4xf32>
    %90 = arith.maximumf %88, %89 : vector<256x4xf32>
    %c0_120 = arith.constant 0 : index
    %c0_121 = arith.constant 0 : index
    %c0_122 = arith.constant 0 : index
    %91 = vector.load %arg8[%c0_120, %c0_121, %c0_122] : memref<1x256x4xf32, #tpu.memory_space<vmem>>, vector<1x256x4xf32>
    %92 = vector.shape_cast %91 : vector<1x256x4xf32> to vector<256x4xf32>
    %93 = vector.shape_cast %90 : vector<256x4xf32> to vector<1x256x4xf32>
    tpu.vector_store %arg8[%c0_120, %c0_121, %c0_122], %93 {strides = array<i32>} : memref<1x256x4xf32, #tpu.memory_space<vmem>>, vector<1x256x4xf32>,
    return
  }
  func.func @transform_0(%arg0: i32) -> (i32, i32, i32, i32) {
    %c0_i32 = arith.constant 0 : i32
    %c0_i32_0 = arith.constant 0 : i32
    %c0_i32_1 = arith.constant 0 : i32
    %c0_i32_2 = arith.constant 0 : i32
    return %arg0, %c0_i32, %c0_i32_0, %c0_i32_1 : i32, i32, i32, i32
  }
  func.func @transform_1(%arg0: i32) -> (i32, i32) {
    %c0_i32 = arith.constant 0 : i32
    %c0_i32_0 = arith.constant 0 : i32
    %c0_i32_1 = arith.constant 0 : i32
    return %c0_i32, %c0_i32_0 : i32, i32
  }
  func.func @transform_2(%arg0: i32) -> (i32, i32) {
    %c0_i32 = arith.constant 0 : i32
    %c0_i32_0 = arith.constant 0 : i32
    %c0_i32_1 = arith.constant 0 : i32
    return %c0_i32, %c0_i32_0 : i32, i32
  }
  func.func @transform_3(%arg0: i32) -> (i32, i32) {
    %c0_i32 = arith.constant 0 : i32
    %c0_i32_0 = arith.constant 0 : i32
    %c0_i32_1 = arith.constant 0 : i32
    return %c0_i32, %c0_i32_0 : i32, i32
  }
  func.func @transform_4(%arg0: i32) -> (i32, i32) {
    %c0_i32 = arith.constant 0 : i32
    %c0_i32_0 = arith.constant 0 : i32
    %c0_i32_1 = arith.constant 0 : i32
    return %c0_i32, %c0_i32_0 : i32, i32
  }
  func.func @transform_5(%arg0: i32) -> (i32, i32) {
    %c0_i32 = arith.constant 0 : i32
    %c0_i32_0 = arith.constant 0 : i32
    %c0_i32_1 = arith.constant 0 : i32
    return %c0_i32, %c0_i32_0 : i32, i32
  }
  func.func @transform_6(%arg0: i32) -> (i32, i32) {
    %c0_i32 = arith.constant 0 : i32
    %c0_i32_0 = arith.constant 0 : i32
    %c0_i32_1 = arith.constant 0 : i32
    return %c0_i32, %c0_i32_0 : i32, i32
  }
  func.func @transform_7(%arg0: i32) -> (i32, i32, i32) {
    %c0_i32 = arith.constant 0 : i32
    %c0_i32_0 = arith.constant 0 : i32
    %c0_i32_1 = arith.constant 0 : i32
    return %arg0, %c0_i32, %c0_i32_0 : i32, i32, i32
  }
}

</mosaic_0001>

<llo_original>
// kernel: basic_block_forward.1
$region0: #{basic_block_forward.1}
  #allocation0 [shape = 'u32[]', space=smem, size = 0x4, offset = 0x4, fixed_abs, tag = 'smem constant byte address 0x4 - core index']
  #allocation1 [shape = 'u32[144,128]{1,0:T(1,128)}', space=vmem, size = 0x12000, scoped, tag = 'internal scratch']
  #allocation2 [shape = 'bf16[18,33,4]{2,1,0:T(8,128)(2,1)}', space=vmem, size = 0x2d000, scoped, tag = 'scratch operand']
  #allocation3 [shape = 'bf16[256,36]{1,0:T(16,128)(2,1)}', space=vmem, size = 0x10000, scoped, tag = 'scratch operand']
  %s0 = inlined_call_operand.vmem [shape: f32[2,16,16,4], index: 0, kind: input, shape index: {}]
  %s1 = inlined_call_operand.vmem [shape: bf16[36,4], index: 1, kind: input, shape index: {}]
  %s2 = inlined_call_operand.vmem [shape: f32[1,4], index: 2, kind: input, shape index: {}]
  %s3 = inlined_call_operand.vmem [shape: f32[1,4], index: 3, kind: input, shape index: {}]
  %s4 = inlined_call_operand.vmem [shape: bf16[36,4], index: 4, kind: input, shape index: {}]
  %s5 = inlined_call_operand.vmem [shape: f32[1,4], index: 5, kind: input, shape index: {}]
  %s6 = inlined_call_operand.vmem [shape: f32[1,4], index: 6, kind: input, shape index: {}]
  %s7 = inlined_call_operand.vmem [shape: f32[2,256,4], index: 7, kind: output, shape index: {}]
  %s8 = sld [smem:[#allocation0]]
  $region61: #{basic_block_forward.1} parent=0
    _
  %s10 = ssub.s32 1, %s8
  %s11 = scalar_select 0, %s10, %s8
  loop: start=0, step=1, limit=4
  $region2: #{basic_block_forward.1} parent=0 // loop_pre_header
    _
  $region3: #{basic_block_forward.1} parent=0 // loop_header
    %s13 = sphi 0, %s17
    %p14 = scmp.ge.s32.totalorder %s13, 4
    %s23 = sphi 0, %s25
    %s26 = sphi 0, %s23
    %s27 = sphi 0, %s26
    %s43 = sphi 0, %s27
    %s47 = sphi 0, %s47
    %s49 = sphi 0, %s47
    %s50 = sphi 0, %s49
    %s64 = sphi 0, %s50
    %s68 = sphi 0, %s68
    %s70 = sphi 0, %s68
    %s71 = sphi 0, %s70
    %s85 = sphi 0, %s71
    %s89 = sphi 0, %s89
    %s91 = sphi 0, %s89
    %s92 = sphi 0, %s91
    %s106 = sphi 0, %s92
    %s110 = sphi 0, %s110
    %s112 = sphi 0, %s110
    %s113 = sphi 0, %s112
    %s127 = sphi 0, %s113
    %s131 = sphi 0, %s131
    %s133 = sphi 0, %s131
    %s134 = sphi 0, %s133
    %s148 = sphi 0, %s134
    %s152 = sphi 0, %s152
    %s154 = sphi 0, %s152
    %s155 = sphi 0, %s154
    %s169 = sphi 0, %s155
    %s175 = sphi 0, %s177
    %s178 = sphi 0, %s175
    %s179 = sphi 0, %s178
    %s195 = sphi 0, %s179
  $region4: #{basic_block_forward.1} parent=0 // loop_header_branch
    %16 = sbr.rel (%p14) target = $region8
  $region5: #{basic_block_forward.1} parent=0 // loop_body
    %s18 = ssub.s32 %s13, 1
    %s19 = ssub.s32 %s13, 2
    %s20 = sadd.s32 %s13, 1
    %s21 = ssub.s32 %s13, %s20
    %p22 = scmp.eq.s32.totalorder %s21, 0
    %s24 = sadd.s32 %s23, 1
    %s25 = scalar_select %p22, %s23, %s24
    %p28 = pneg %p22
    %p29 = scmp.eq.s32.totalorder %s13, 1
    %p30 = por %p28, %p29
    %p31 = scmp.ne.s32.totalorder %s23, %s26
    %p32 = scmp.eq.s32.totalorder %s13, 0
    %p33 = por %p31, %p32
    %p34 = scmp.ne.s32.totalorder %s23, %s26
    %p35 = scmp.eq.s32.totalorder %s18, 1
    %p36 = por %p34, %p35
    %p37 = scmp.ne.s32.totalorder %s26, %s27
    %p38 = scmp.eq.s32.totalorder %s18, 0
    %p39 = por %p37, %p38
    %p40 = scmp.ne.s32.totalorder %s26, %s27
    %p41 = scmp.eq.s32.totalorder %s19, 1
    %p42 = por %p40, %p41
    %p44 = scmp.ne.s32.totalorder %s27, %s43
    %p45 = scmp.eq.s32.totalorder %s19, 0
    %p46 = por %p44, %p45
    %s48 = sadd.s32 %s47, 1
    %p51 = scmp.eq.s32.totalorder %s13, 1
    %p52 = scmp.ne.s32.totalorder %s47, %s49
    %p53 = scmp.eq.s32.totalorder %s13, 0
    %p54 = por %p52, %p53
    %p55 = scmp.ne.s32.totalorder %s47, %s49
    %p56 = scmp.eq.s32.totalorder %s18, 1
    %p57 = por %p55, %p56
    %p58 = scmp.ne.s32.totalorder %s49, %s50
    %p59 = scmp.eq.s32.totalorder %s18, 0
    %p60 = por %p58, %p59
    %p61 = scmp.ne.s32.totalorder %s49, %s50
    %p62 = scmp.eq.s32.totalorder %s19, 1
    %p63 = por %p61, %p62
    %p65 = scmp.ne.s32.totalorder %s50, %s64
    %p66 = scmp.eq.s32.totalorder %s19, 0
    %p67 = por %p65, %p66
    %s69 = sadd.s32 %s68, 1
    %p72 = scmp.eq.s32.totalorder %s13, 1
    %p73 = scmp.ne.s32.totalorder %s68, %s70
    %p74 = scmp.eq.s32.totalorder %s13, 0
    %p75 = por %p73, %p74
    %p76 = scmp.ne.s32.totalorder %s68, %s70
    %p77 = scmp.eq.s32.totalorder %s18, 1
    %p78 = por %p76, %p77
    %p79 = scmp.ne.s32.totalorder %s70, %s71
    %p80 = scmp.eq.s32.totalorder %s18, 0
    %p81 = por %p79, %p80
    %p82 = scmp.ne.s32.totalorder %s70, %s71
    %p83 = scmp.eq.s32.totalorder %s19, 1
    %p84 = por %p82, %p83
    %p86 = scmp.ne.s32.totalorder %s71, %s85
    %p87 = scmp.eq.s32.totalorder %s19, 0
    %p88 = por %p86, %p87
    %s90 = sadd.s32 %s89, 1
    %p93 = scmp.eq.s32.totalorder %s13, 1
    %p94 = scmp.ne.s32.totalorder %s89, %s91
    %p95 = scmp.eq.s32.totalorder %s13, 0
    %p96 = por %p94, %p95
    %p97 = scmp.ne.s32.totalorder %s89, %s91
    %p98 = scmp.eq.s32.totalorder %s18, 1
    %p99 = por %p97, %p98
    %p100 = scmp.ne.s32.totalorder %s91, %s92
    %p101 = scmp.eq.s32.totalorder %s18, 0
    %p102 = por %p100, %p101
    %p103 = scmp.ne.s32.totalorder %s91, %s92
    %p104 = scmp.eq.s32.totalorder %s19, 1
    %p105 = por %p103, %p104
    %p107 = scmp.ne.s32.totalorder %s92, %s106
    %p108 = scmp.eq.s32.totalorder %s19, 0
    %p109 = por %p107, %p108
    %s111 = sadd.s32 %s110, 1
    %p114 = scmp.eq.s32.totalorder %s13, 1
    %p115 = scmp.ne.s32.totalorder %s110, %s112
    %p116 = scmp.eq.s32.totalorder %s13, 0
    %p117 = por %p115, %p116
    %p118 = scmp.ne.s32.totalorder %s110, %s112
    %p119 = scmp.eq.s32.totalorder %s18, 1
    %p120 = por %p118, %p119
    %p121 = scmp.ne.s32.totalorder %s112, %s113
    %p122 = scmp.eq.s32.totalorder %s18, 0
    %p123 = por %p121, %p122
    %p124 = scmp.ne.s32.totalorder %s112, %s113
    %p125 = scmp.eq.s32.totalorder %s19, 1
    %p126 = por %p124, %p125
    %p128 = scmp.ne.s32.totalorder %s113, %s127
    %p129 = scmp.eq.s32.totalorder %s19, 0
    %p130 = por %p128, %p129
    %s132 = sadd.s32 %s131, 1
    %p135 = scmp.eq.s32.totalorder %s13, 1
    %p136 = scmp.ne.s32.totalorder %s131, %s133
    %p137 = scmp.eq.s32.totalorder %s13, 0
    %p138 = por %p136, %p137
    %p139 = scmp.ne.s32.totalorder %s131, %s133
    %p140 = scmp.eq.s32.totalorder %s18, 1
    %p141 = por %p139, %p140
    %p142 = scmp.ne.s32.totalorder %s133, %s134
    %p143 = scmp.eq.s32.totalorder %s18, 0
    %p144 = por %p142, %p143
    %p145 = scmp.ne.s32.totalorder %s133, %s134
    %p146 = scmp.eq.s32.totalorder %s19, 1
    %p147 = por %p145, %p146
    %p149 = scmp.ne.s32.totalorder %s134, %s148
    %p150 = scmp.eq.s32.totalorder %s19, 0
    %p151 = por %p149, %p150
    %s153 = sadd.s32 %s152, 1
    %p156 = scmp.eq.s32.totalorder %s13, 1
    %p157 = scmp.ne.s32.totalorder %s152, %s154
    %p158 = scmp.eq.s32.totalorder %s13, 0
    %p159 = por %p157, %p158
    %p160 = scmp.ne.s32.totalorder %s152, %s154
    %p161 = scmp.eq.s32.totalorder %s18, 1
    %p162 = por %p160, %p161
    %p163 = scmp.ne.s32.totalorder %s154, %s155
    %p164 = scmp.eq.s32.totalorder %s18, 0
    %p165 = por %p163, %p164
    %p166 = scmp.ne.s32.totalorder %s154, %s155
    %p167 = scmp.eq.s32.totalorder %s19, 1
    %p168 = por %p166, %p167
    %p170 = scmp.ne.s32.totalorder %s155, %s169
    %p171 = scmp.eq.s32.totalorder %s19, 0
    %p172 = por %p170, %p171
    %s173 = ssub.s32 %s13, %s20
    %p174 = scmp.eq.s32.totalorder %s173, 0
    %s176 = sadd.s32 %s175, 1
    %s177 = scalar_select %p174, %s175, %s176
    %p180 = pneg %p174
    %p181 = scmp.eq.s32.totalorder %s13, 1
    %p182 = por %p180, %p181
    %p183 = scmp.ne.s32.totalorder %s175, %s178
    %p184 = scmp.eq.s32.totalorder %s13, 0
    %p185 = por %p183, %p184
    %p186 = scmp.ne.s32.totalorder %s175, %s178
    %p187 = scmp.eq.s32.totalorder %s18, 1
    %p188 = por %p186, %p187
    %p189 = scmp.ne.s32.totalorder %s178, %s179
    %p190 = scmp.eq.s32.totalorder %s18, 0
    %p191 = por %p189, %p190
    %p192 = scmp.ne.s32.totalorder %s178, %s179
    %p193 = scmp.eq.s32.totalorder %s19, 1
    %p194 = por %p192, %p193
    %p196 = scmp.ne.s32.totalorder %s179, %s195
    %p197 = scmp.eq.s32.totalorder %s19, 0
    %p198 = por %p196, %p197
    %p199 = scmp.le.s32.totalorder 1, %s13
    %p200 = scmp.lt.s32.totalorder %s13, 3
    %p201 = pnand %p199, %p200
    %p202 = pneg %p201
    // Predicated region
    $region9: #{basic_block_forward.1} parent=5 // pred_check
      _
    $region10: #{basic_block_forward.1} parent=5 // pred_check_branch
      %204 = sbr.rel (%p201) target = $region12
    $region11: #{basic_block_forward.1} parent=5 // pred_region
      %s205 = ssub.s32 %s13, 1
      // Predicated region
      $region13: #{basic_block_forward.1} parent=11 // pred_check
        %p206 = pneg %p60
      $region14: #{basic_block_forward.1} parent=11 // pred_check_branch
        %208 = sbr.rel (%p206) target = $region16
      $region15: #{basic_block_forward.1} parent=11 // pred_region
        _
      $region16: #{basic_block_forward.1} parent=11 // pred_fallthru
        _
      // Predicated region
      $region17: #{basic_block_forward.1} parent=11 // pred_check
        %p209 = pneg %p81
      $region18: #{basic_block_forward.1} parent=11 // pred_check_branch
        %211 = sbr.rel (%p209) target = $region20
      $region19: #{basic_block_forward.1} parent=11 // pred_region
        _
      $region20: #{basic_block_forward.1} parent=11 // pred_fallthru
        _
      // Predicated region
      $region21: #{basic_block_forward.1} parent=11 // pred_check
        %p212 = pneg %p102
      $region22: #{basic_block_forward.1} parent=11 // pred_check_branch
        %214 = sbr.rel (%p212) target = $region24
      $region23: #{basic_block_forward.1} parent=11 // pred_region
        _
      $region24: #{basic_block_forward.1} parent=11 // pred_fallthru
        _
      // Predicated region
      $region25: #{basic_block_forward.1} parent=11 // pred_check
        %p215 = pneg %p123
      $region26: #{basic_block_forward.1} parent=11 // pred_check_branch
        %217 = sbr.rel (%p215) target = $region28
      $region27: #{basic_block_forward.1} parent=11 // pred_region
        _
      $region28: #{basic_block_forward.1} parent=11 // pred_fallthru
        _
      // Predicated region
      $region29: #{basic_block_forward.1} parent=11 // pred_check
        %p218 = pneg %p144
      $region30: #{basic_block_forward.1} parent=11 // pred_check_branch
        %220 = sbr.rel (%p218) target = $region32
      $region31: #{basic_block_forward.1} parent=11 // pred_region
        _
      $region32: #{basic_block_forward.1} parent=11 // pred_fallthru
        _
      // Predicated region
      $region33: #{basic_block_forward.1} parent=11 // pred_check
        %p221 = pneg %p165
      $region34: #{basic_block_forward.1} parent=11 // pred_check_branch
        %223 = sbr.rel (%p221) target = $region36
      $region35: #{basic_block_forward.1} parent=11 // pred_region
        _
      $region36: #{basic_block_forward.1} parent=11 // pred_fallthru
        _
    $region12: #{basic_block_forward.1} parent=5 // pred_fallthru
      _
    %p224 = scmp.lt.s32.totalorder %s13, 2
    // Predicated region
    $region37: #{basic_block_forward.1} parent=5 // pred_check
      %p225 = pneg %p224
    $region38: #{basic_block_forward.1} parent=5 // pred_check_branch
      %227 = sbr.rel (%p225) target = $region40
    $region39: #{basic_block_forward.1} parent=5 // pred_region
      // Predicated region
      $region41: #{basic_block_forward.1} parent=39 // pred_check
        %p228 = pneg %p33
      $region42: #{basic_block_forward.1} parent=39 // pred_check_branch
        %230 = sbr.rel (%p228) target = $region44
      $region43: #{basic_block_forward.1} parent=39 // pred_region
        %p231 = scmp.lt.s32.totalorder %s13, 1
        %s232 = scalar_select %p231, %s13, 1
        %s233 = smul.addr %s232, 32
        %s234 = smul.addr %s233, 8
        %s235 = scalar_lea.vmem %s0, %s234
      $region44: #{basic_block_forward.1} parent=39 // pred_fallthru
        _
    $region40: #{basic_block_forward.1} parent=5 // pred_fallthru
      _
    %p236 = scmp.le.s32.totalorder 1, %s13
    %p237 = scmp.lt.s32.totalorder %s13, 3
    %p238 = pnand %p236, %p237
    %p239 = pneg %p238
    // Predicated region
    $region45: #{basic_block_forward.1} parent=5 // pred_check
      _
    $region46: #{basic_block_forward.1} parent=5 // pred_check_branch
      %241 = sbr.rel (%p238) target = $region48
    $region47: #{basic_block_forward.1} parent=5 // pred_region
      %s242 = ssub.s32 %s13, 1
      %p243 = scmp.lt.s32.totalorder %s18, 1
      %s244 = scalar_select %p243, %s18, 1
      %s245 = smul.addr %s244, 32
      %s246 = smul.addr %s245, 8
      %s247 = scalar_lea.vmem %s0, %s246
      %p248 = pneg %p39
      %p249 = pneg %p36
      %p250 = pneg %p60
      %p251 = pneg %p57
      %p252 = pneg %p81
      %p253 = pneg %p78
      %p254 = pneg %p102
      %p255 = pneg %p99
      %p256 = pneg %p123
      %p257 = pneg %p120
      %p258 = pneg %p144
      %p259 = pneg %p141
      %p260 = pneg %p165
      %p261 = pneg %p162
      %p262 = pneg %p191
      %p263 = pneg %p188
      %p264 = scmp.lt.s32.totalorder %s18, 1
      %s265 = scalar_select %p264, %s18, 1
      %s266 = smul.addr %s265, 32
      %s267 = smul.addr %s266, 8
      %s268 = scalar_lea.vmem %s7, %s267
      %p269 = scmp.lt.s32.totalorder %s18, 1
      %s270 = scalar_select %p269, %s18, 1
      %s271 = smul.addr %s270, 32
      %s272 = smul.addr %s271, 8
      %s273 = scalar_lea.vmem %s0, %s272
      %p274 = scmp.lt.s32.totalorder %s18, 1
      %s275 = scalar_select %p274, %s18, 1
      %s276 = smul.addr %s275, 32
      %s277 = smul.addr %s276, 8
      %s278 = scalar_lea.vmem %s7, %s277
      %v280 = vld [vmem:[%s273] sm:$0xff]
      %v281 = vld [vmem:[%s273 + $0x8] sm:$0xff]
      %v282 = vld [vmem:[%s273 + $0x10] sm:$0xff]
      %v283 = vld [vmem:[%s273 + $0x18] sm:$0xff]
      %v284 = vld [vmem:[%s273 + $0x20] sm:$0xff]
      %v285 = vld [vmem:[%s273 + $0x28] sm:$0xff]
      %v286 = vld [vmem:[%s273 + $0x30] sm:$0xff]
      %v287 = vld [vmem:[%s273 + $0x38] sm:$0xff]
      %v288 = vld [vmem:[%s273 + $0x40] sm:$0xff]
      %v289 = vld [vmem:[%s273 + $0x48] sm:$0xff]
      %v290 = vld [vmem:[%s273 + $0x50] sm:$0xff]
      %v291 = vld [vmem:[%s273 + $0x58] sm:$0xff]
      %v292 = vld [vmem:[%s273 + $0x60] sm:$0xff]
      %v293 = vld [vmem:[%s273 + $0x68] sm:$0xff]
      %v294 = vld [vmem:[%s273 + $0x70] sm:$0xff]
      %v295 = vld [vmem:[%s273 + $0x78] sm:$0xff]
      %v296 = vld [vmem:[%s273 + $0x80] sm:$0xff]
      %v297 = vld [vmem:[%s273 + $0x88] sm:$0xff]
      %v298 = vld [vmem:[%s273 + $0x90] sm:$0xff]
      %v299 = vld [vmem:[%s273 + $0x98] sm:$0xff]
      %v300 = vld [vmem:[%s273 + $0xa0] sm:$0xff]
      %v301 = vld [vmem:[%s273 + $0xa8] sm:$0xff]
      %v302 = vld [vmem:[%s273 + $0xb0] sm:$0xff]
      %v303 = vld [vmem:[%s273 + $0xb8] sm:$0xff]
      %v304 = vld [vmem:[%s273 + $0xc0] sm:$0xff]
      %v305 = vld [vmem:[%s273 + $0xc8] sm:$0xff]
      %v306 = vld [vmem:[%s273 + $0xd0] sm:$0xff]
      %v307 = vld [vmem:[%s273 + $0xd8] sm:$0xff]
      %v308 = vld [vmem:[%s273 + $0xe0] sm:$0xff]
      %v309 = vld [vmem:[%s273 + $0xe8] sm:$0xff]
      %v310 = vld [vmem:[%s273 + $0xf0] sm:$0xff]
      %v311 = vld [vmem:[%s273 + $0xf8] sm:$0xff]
      %vm312 = vcmask 27648
      %313 = vst.msk [vmem:[#allocation2] sm:$0xf] %vm312, 0
      %314 = vst.msk [vmem:[#allocation2 + $0x4] sm:$0xf] %vm312, 0
      %315 = vst.msk [vmem:[#allocation2 + $0x8] sm:$0xf] %vm312, 0
      %316 = vst.msk [vmem:[#allocation2 + $0xc] sm:$0xf] %vm312, 0
      %vm317 = vcmask 24576
      %vm318 = vsmask.f32 256
      %vm319 = vmand %vm317, %vm318
      %v320 = vld [vmem:[#allocation2 + $0x10] sm:$0x1]
      %v321 = vsel %vm319, 0, %v320
      %322 = vst [vmem:[#allocation2 + $0x10] sm:$0x1] %v321
      %s323 = scalar_lea.vmem [#allocation2], 340
      %324 = vst.msk [vmem:[%s323] sm:$0xf] %vm312, 0
      %325 = vst.msk [vmem:[%s323 + $0x4] sm:$0xf] %vm312, 0
      %326 = vst.msk [vmem:[%s323 + $0x8] sm:$0xf] %vm312, 0
      %327 = vst.msk [vmem:[%s323 + $0xc] sm:$0xf] %vm312, 0
      %v328 = vld [vmem:[%s323 + $0x10] sm:$0x1]
      %v329 = vsel %vm319, 0, %v328
      %330 = vst [vmem:[%s323 + $0x10] sm:$0x1] %v329
      %s331 = scalar_lea.vmem [#allocation2], 20
      %vm332 = vcmask 27651
      %vm333 = vsmask.f32 7950
      %vm334 = vmand %vm332, %vm333
      %v335 = vld [vmem:[%s331 + $0x4] sm:$0x8]
      %v336 = vsel %vm334, 0, %v335
      %337 = vst [vmem:[%s331 + $0x4] sm:$0x8] %v336
      %v338 = vld [vmem:[%s331 + $0x18] sm:$0x8]
      %v339 = vsel %vm334, 0, %v338
      %340 = vst [vmem:[%s331 + $0x18] sm:$0x8] %v339
      %v341 = vld [vmem:[%s331 + $0x2c] sm:$0x8]
      %v342 = vsel %vm334, 0, %v341
      %343 = vst [vmem:[%s331 + $0x2c] sm:$0x8] %v342
      %v344 = vld [vmem:[%s331 + $0x40] sm:$0x8]
      %v345 = vsel %vm334, 0, %v344
      %346 = vst [vmem:[%s331 + $0x40] sm:$0x8] %v345
      %v347 = vld [vmem:[%s331 + $0x54] sm:$0x8]
      %v348 = vsel %vm334, 0, %v347
      %349 = vst [vmem:[%s331 + $0x54] sm:$0x8] %v348
      %v350 = vld [vmem:[%s331 + $0x68] sm:$0x8]
      %v351 = vsel %vm334, 0, %v350
      %352 = vst [vmem:[%s331 + $0x68] sm:$0x8] %v351
      %v353 = vld [vmem:[%s331 + $0x7c] sm:$0x8]
      %v354 = vsel %vm334, 0, %v353
      %355 = vst [vmem:[%s331 + $0x7c] sm:$0x8] %v354
      %v356 = vld [vmem:[%s331 + $0x90] sm:$0x8]
      %v357 = vsel %vm334, 0, %v356
      %358 = vst [vmem:[%s331 + $0x90] sm:$0x8] %v357
      %v359 = vld [vmem:[%s331 + $0xa4] sm:$0x8]
      %v360 = vsel %vm334, 0, %v359
      %361 = vst [vmem:[%s331 + $0xa4] sm:$0x8] %v360
      %v362 = vld [vmem:[%s331 + $0xb8] sm:$0x8]
      %v363 = vsel %vm334, 0, %v362
      %364 = vst [vmem:[%s331 + $0xb8] sm:$0x8] %v363
      %v365 = vld [vmem:[%s331 + $0xcc] sm:$0x8]
      %v366 = vsel %vm334, 0, %v365
      %367 = vst [vmem:[%s331 + $0xcc] sm:$0x8] %v366
      %v368 = vld [vmem:[%s331 + $0xe0] sm:$0x8]
      %v369 = vsel %vm334, 0, %v368
      %370 = vst [vmem:[%s331 + $0xe0] sm:$0x8] %v369
      %v371 = vld [vmem:[%s331 + $0xf4] sm:$0x8]
      %v372 = vsel %vm334, 0, %v371
      %373 = vst [vmem:[%s331 + $0xf4] sm:$0x8] %v372
      %v374 = vld [vmem:[%s331 + $0x108] sm:$0x8]
      %v375 = vsel %vm334, 0, %v374
      %376 = vst [vmem:[%s331 + $0x108] sm:$0x8] %v375
      %v377 = vld [vmem:[%s331 + $0x11c] sm:$0x8]
      %v378 = vsel %vm334, 0, %v377
      %379 = vst [vmem:[%s331 + $0x11c] sm:$0x8] %v378
      %v380 = vld [vmem:[%s331 + $0x130] sm:$0x8]
      %v381 = vsel %vm334, 0, %v380
      %382 = vst [vmem:[%s331 + $0x130] sm:$0x8] %v381
      %v383 = vld [vmem:[%s331 + $0x10] sm:$0x1]
      %v384 = vsel %vm319, 0, %v383
      %385 = vst [vmem:[%s331 + $0x10] sm:$0x1] %v384
      %v386 = vld [vmem:[%s331 + $0x24] sm:$0x1]
      %v387 = vsel %vm319, 0, %v386
      %388 = vst [vmem:[%s331 + $0x24] sm:$0x1] %v387
      %v389 = vld [vmem:[%s331 + $0x38] sm:$0x1]
      %v390 = vsel %vm319, 0, %v389
      %391 = vst [vmem:[%s331 + $0x38] sm:$0x1] %v390
      %v392 = vld [vmem:[%s331 + $0x4c] sm:$0x1]
      %v393 = vsel %vm319, 0, %v392
      %394 = vst [vmem:[%s331 + $0x4c] sm:$0x1] %v393
      %v395 = vld [vmem:[%s331 + $0x60] sm:$0x1]
      %v396 = vsel %vm319, 0, %v395
      %397 = vst [vmem:[%s331 + $0x60] sm:$0x1] %v396
      %v398 = vld [vmem:[%s331 + $0x74] sm:$0x1]
      %v399 = vsel %vm319, 0, %v398
      %400 = vst [vmem:[%s331 + $0x74] sm:$0x1] %v399
      %v401 = vld [vmem:[%s331 + $0x88] sm:$0x1]
      %v402 = vsel %vm319, 0, %v401
      %403 = vst [vmem:[%s331 + $0x88] sm:$0x1] %v402
      %v404 = vld [vmem:[%s331 + $0x9c] sm:$0x1]
      %v405 = vsel %vm319, 0, %v404
      %406 = vst [vmem:[%s331 + $0x9c] sm:$0x1] %v405
      %v407 = vld [vmem:[%s331 + $0xb0] sm:$0x1]
      %v408 = vsel %vm319, 0, %v407
      %409 = vst [vmem:[%s331 + $0xb0] sm:$0x1] %v408
      %v410 = vld [vmem:[%s331 + $0xc4] sm:$0x1]
      %v411 = vsel %vm319, 0, %v410
      %412 = vst [vmem:[%s331 + $0xc4] sm:$0x1] %v411
      %v413 = vld [vmem:[%s331 + $0xd8] sm:$0x1]
      %v414 = vsel %vm319, 0, %v413
      %415 = vst [vmem:[%s331 + $0xd8] sm:$0x1] %v414
      %v416 = vld [vmem:[%s331 + $0xec] sm:$0x1]
      %v417 = vsel %vm319, 0, %v416
      %418 = vst [vmem:[%s331 + $0xec] sm:$0x1] %v417
      %v419 = vld [vmem:[%s331 + $0x100] sm:$0x1]
      %v420 = vsel %vm319, 0, %v419
      %421 = vst [vmem:[%s331 + $0x100] sm:$0x1] %v420
      %v422 = vld [vmem:[%s331 + $0x114] sm:$0x1]
      %v423 = vsel %vm319, 0, %v422
      %424 = vst [vmem:[%s331 + $0x114] sm:$0x1] %v423
      %v425 = vld [vmem:[%s331 + $0x128] sm:$0x1]
      %v426 = vsel %vm319, 0, %v425
      %427 = vst [vmem:[%s331 + $0x128] sm:$0x1] %v426
      %v428 = vld [vmem:[%s331 + $0x13c] sm:$0x1]
      %v429 = vsel %vm319, 0, %v428
      %430 = vst [vmem:[%s331 + $0x13c] sm:$0x1] %v429
      %v431 = vpack.c.bf16 %v281, %v280
      %v432 = vpack.c.bf16 %v283, %v282
      %v433 = vpack.c.bf16 %v285, %v284
      %v434 = vpack.c.bf16 %v287, %v286
      %v435 = vpack.c.bf16 %v289, %v288
      %v436 = vpack.c.bf16 %v291, %v290
      %v437 = vpack.c.bf16 %v293, %v292
      %v438 = vpack.c.bf16 %v295, %v294
      %v439 = vpack.c.bf16 %v297, %v296
      %v440 = vpack.c.bf16 %v299, %v298
      %v441 = vpack.c.bf16 %v301, %v300
      %v442 = vpack.c.bf16 %v303, %v302
      %v443 = vpack.c.bf16 %v305, %v304
      %v444 = vpack.c.bf16 %v307, %v306
      %v445 = vpack.c.bf16 %v309, %v308
      %v446 = vpack.c.bf16 %v311, %v310
      %v463 = vunpack.c.l.b16 %v431
      %v464 = vunpack.c.h.b16 %v431
      %v465 = vunpack.c.l.b16 %v432
      %v466 = vunpack.c.h.b16 %v432
      %v467 = vunpack.c.l.b16 %v433
      %v468 = vunpack.c.h.b16 %v433
      %v469 = vunpack.c.l.b16 %v434
      %v470 = vunpack.c.h.b16 %v434
      %v471 = vunpack.c.l.b16 %v435
      %v472 = vunpack.c.h.b16 %v435
      %v473 = vunpack.c.l.b16 %v436
      %v474 = vunpack.c.h.b16 %v436
      %v475 = vunpack.c.l.b16 %v437
      %v476 = vunpack.c.h.b16 %v437
      %v477 = vunpack.c.l.b16 %v438
      %v478 = vunpack.c.h.b16 %v438
      %v479 = vunpack.c.l.b16 %v439
      %v480 = vunpack.c.h.b16 %v439
      %v481 = vunpack.c.l.b16 %v440
      %v482 = vunpack.c.h.b16 %v440
      %v483 = vunpack.c.l.b16 %v441
      %v484 = vunpack.c.h.b16 %v441
      %v485 = vunpack.c.l.b16 %v442
      %v486 = vunpack.c.h.b16 %v442
      %v487 = vunpack.c.l.b16 %v443
      %v488 = vunpack.c.h.b16 %v443
      %v489 = vunpack.c.l.b16 %v444
      %v490 = vunpack.c.h.b16 %v444
      %v491 = vunpack.c.l.b16 %v445
      %v492 = vunpack.c.h.b16 %v445
      %v493 = vunpack.c.l.b16 %v446
      %v494 = vunpack.c.h.b16 %v446
      %v495 = vpack.c.b16 %v463, %v463
      %v496 = vpack.c.b16 %v464, %v464
      %v497 = vpack.c.b16 %v465, %v465
      %v498 = vpack.c.b16 %v466, %v466
      %v499 = vpack.c.b16 %v467, %v467
      %v500 = vpack.c.b16 %v468, %v468
      %v501 = vpack.c.b16 %v469, %v469
      %v502 = vpack.c.b16 %v470, %v470
      %v503 = vpack.c.b16 %v471, %v471
      %v504 = vpack.c.b16 %v472, %v472
      %v505 = vpack.c.b16 %v473, %v473
      %v506 = vpack.c.b16 %v474, %v474
      %v507 = vpack.c.b16 %v475, %v475
      %v508 = vpack.c.b16 %v476, %v476
      %v509 = vpack.c.b16 %v477, %v477
      %v510 = vpack.c.b16 %v478, %v478
      %v511 = vpack.c.b16 %v479, %v479
      %v512 = vpack.c.b16 %v480, %v480
      %v513 = vpack.c.b16 %v481, %v481
      %v514 = vpack.c.b16 %v482, %v482
      %v515 = vpack.c.b16 %v483, %v483
      %v516 = vpack.c.b16 %v484, %v484
      %v517 = vpack.c.b16 %v485, %v485
      %v518 = vpack.c.b16 %v486, %v486
      %v519 = vpack.c.b16 %v487, %v487
      %v520 = vpack.c.b16 %v488, %v488
      %v521 = vpack.c.b16 %v489, %v489
      %v522 = vpack.c.b16 %v490, %v490
      %v523 = vpack.c.b16 %v491, %v491
      %v524 = vpack.c.b16 %v492, %v492
      %v525 = vpack.c.b16 %v493, %v493
      %v526 = vpack.c.b16 %v494, %v494
      %559 = vst.msk [vmem:[%s331 + $0x8] sm:$0xf] %vm312, %v495
      %560 = vst.msk [vmem:[%s331 + $0xc] sm:$0xf] %vm312, %v496
      %561 = vst.msk [vmem:[%s331 + $0x1c] sm:$0xf] %vm312, %v497
      %562 = vst.msk [vmem:[%s331 + $0x20] sm:$0xf] %vm312, %v498
      %563 = vst.msk [vmem:[%s331 + $0x30] sm:$0xf] %vm312, %v499
      %564 = vst.msk [vmem:[%s331 + $0x34] sm:$0xf] %vm312, %v500
      %565 = vst.msk [vmem:[%s331 + $0x44] sm:$0xf] %vm312, %v501
      %566 = vst.msk [vmem:[%s331 + $0x48] sm:$0xf] %vm312, %v502
      %567 = vst.msk [vmem:[%s331 + $0x58] sm:$0xf] %vm312, %v503
      %568 = vst.msk [vmem:[%s331 + $0x5c] sm:$0xf] %vm312, %v504
      %569 = vst.msk [vmem:[%s331 + $0x6c] sm:$0xf] %vm312, %v505
      %570 = vst.msk [vmem:[%s331 + $0x70] sm:$0xf] %vm312, %v506
      %571 = vst.msk [vmem:[%s331 + $0x80] sm:$0xf] %vm312, %v507
      %572 = vst.msk [vmem:[%s331 + $0x84] sm:$0xf] %vm312, %v508
      %573 = vst.msk [vmem:[%s331 + $0x94] sm:$0xf] %vm312, %v509
      %574 = vst.msk [vmem:[%s331 + $0x98] sm:$0xf] %vm312, %v510
      %575 = vst.msk [vmem:[%s331 + $0xa8] sm:$0xf] %vm312, %v511
      %576 = vst.msk [vmem:[%s331 + $0xac] sm:$0xf] %vm312, %v512
      %577 = vst.msk [vmem:[%s331 + $0xbc] sm:$0xf] %vm312, %v513
      %578 = vst.msk [vmem:[%s331 + $0xc0] sm:$0xf] %vm312, %v514
      %579 = vst.msk [vmem:[%s331 + $0xd0] sm:$0xf] %vm312, %v515
      %580 = vst.msk [vmem:[%s331 + $0xd4] sm:$0xf] %vm312, %v516
      %581 = vst.msk [vmem:[%s331 + $0xe4] sm:$0xf] %vm312, %v517
      %582 = vst.msk [vmem:[%s331 + $0xe8] sm:$0xf] %vm312, %v518
      %583 = vst.msk [vmem:[%s331 + $0xf8] sm:$0xf] %vm312, %v519
      %584 = vst.msk [vmem:[%s331 + $0xfc] sm:$0xf] %vm312, %v520
      %585 = vst.msk [vmem:[%s331 + $0x10c] sm:$0xf] %vm312, %v521
      %586 = vst.msk [vmem:[%s331 + $0x110] sm:$0xf] %vm312, %v522
      %587 = vst.msk [vmem:[%s331 + $0x120] sm:$0xf] %vm312, %v523
      %588 = vst.msk [vmem:[%s331 + $0x124] sm:$0xf] %vm312, %v524
      %589 = vst.msk [vmem:[%s331 + $0x134] sm:$0xf] %vm312, %v525
      %590 = vst.msk [vmem:[%s331 + $0x138] sm:$0xf] %vm312, %v526
      %v591 = vld [vmem:[#allocation2 + $0x4] sm:$0x8]
      %v592 = vld [vmem:[#allocation2 + $0x8] sm:$0xf]
      %v593 = vld [vmem:[#allocation2 + $0xc] sm:$0xf]
      %v594 = vld [vmem:[#allocation2 + $0x18] sm:$0x8]
      %v595 = vld [vmem:[#allocation2 + $0x1c] sm:$0xf]
      %v596 = vld [vmem:[#allocation2 + $0x20] sm:$0xf]
      %v597 = vld [vmem:[#allocation2 + $0x2c] sm:$0x8]
      %v598 = vld [vmem:[#allocation2 + $0x30] sm:$0xf]
      %v599 = vld [vmem:[#allocation2 + $0x34] sm:$0xf]
      %v600 = vld [vmem:[#allocation2 + $0x40] sm:$0x8]
      %v601 = vld [vmem:[#allocation2 + $0x44] sm:$0xf]
      %v602 = vld [vmem:[#allocation2 + $0x48] sm:$0xf]
      %v603 = vld [vmem:[#allocation2 + $0x54] sm:$0x8]
      %v604 = vld [vmem:[#allocation2 + $0x58] sm:$0xf]
      %v605 = vld [vmem:[#allocation2 + $0x5c] sm:$0xf]
      %v606 = vld [vmem:[#allocation2 + $0x68] sm:$0x8]
      %v607 = vld [vmem:[#allocation2 + $0x6c] sm:$0xf]
      %v608 = vld [vmem:[#allocation2 + $0x70] sm:$0xf]
      %v609 = vld [vmem:[#allocation2 + $0x7c] sm:$0x8]
      %v610 = vld [vmem:[#allocation2 + $0x80] sm:$0xf]
      %v611 = vld [vmem:[#allocation2 + $0x84] sm:$0xf]
      %v612 = vld [vmem:[#allocation2 + $0x90] sm:$0x8]
      %v613 = vld [vmem:[#allocation2 + $0x94] sm:$0xf]
      %v614 = vld [vmem:[#allocation2 + $0x98] sm:$0xf]
      %v615 = vld [vmem:[#allocation2 + $0xa4] sm:$0x8]
      %v616 = vld [vmem:[#allocation2 + $0xa8] sm:$0xf]
      %v617 = vld [vmem:[#allocation2 + $0xac] sm:$0xf]
      %v618 = vld [vmem:[#allocation2 + $0xb8] sm:$0x8]
      %v619 = vld [vmem:[#allocation2 + $0xbc] sm:$0xf]
      %v620 = vld [vmem:[#allocation2 + $0xc0] sm:$0xf]
      %v621 = vld [vmem:[#allocation2 + $0xcc] sm:$0x8]
      %v622 = vld [vmem:[#allocation2 + $0xd0] sm:$0xf]
      %v623 = vld [vmem:[#allocation2 + $0xd4] sm:$0xf]
      %v624 = vld [vmem:[#allocation2 + $0xe0] sm:$0x8]
      %v625 = vld [vmem:[#allocation2 + $0xe4] sm:$0xf]
      %v626 = vld [vmem:[#allocation2 + $0xe8] sm:$0xf]
      %v627 = vld [vmem:[#allocation2 + $0xf4] sm:$0x8]
      %v628 = vld [vmem:[#allocation2 + $0xf8] sm:$0xf]
      %v629 = vld [vmem:[#allocation2 + $0xfc] sm:$0xf]
      %v630 = vld [vmem:[#allocation2 + $0x108] sm:$0x8]
      %v631 = vld [vmem:[#allocation2 + $0x10c] sm:$0xf]
      %v632 = vld [vmem:[#allocation2 + $0x110] sm:$0xf]
      %v633 = vld [vmem:[#allocation2 + $0x11c] sm:$0x8]
      %v634 = vld [vmem:[#allocation2 + $0x120] sm:$0xf]
      %v635 = vld [vmem:[#allocation2 + $0x124] sm:$0xf]
      %v636 = vld [vmem:[#allocation2 + $0x130] sm:$0x8]
      %v637 = vld [vmem:[#allocation2 + $0x134] sm:$0xf]
      %v638 = vld [vmem:[#allocation2 + $0x138] sm:$0xf]
      %vm639 = vsmask.f32 4368
      %vm640 = vmor %vm318, %vm639
      %v642 = vshrl.u32 %v591, 16
      %v644 = vrot.slane %v642, 7
      %v645 = vrot.slane %v644, 4
      %v647 = vshrl.u32 %v592, 16
      %v649 = vrot.slane %v647, 7
      %v650 = vshll.u32 %v592, 16
      %v652 = vor.u32 %v649, %v650
      %v653 = vsel %vm640, %v645, %v652
      %v654 = vrot.slane %v649, 4
      %v656 = vshrl.u32 %v593, 16
      %v658 = vrot.slane %v656, 7
      %v659 = vshll.u32 %v593, 16
      %v661 = vor.u32 %v658, %v659
      %v662 = vsel %vm640, %v654, %v661
      %v664 = vshrl.u32 %v594, 16
      %v666 = vrot.slane %v664, 7
      %v667 = vrot.slane %v666, 4
      %v669 = vshrl.u32 %v595, 16
      %v671 = vrot.slane %v669, 7
      %v672 = vshll.u32 %v595, 16
      %v674 = vor.u32 %v671, %v672
      %v675 = vsel %vm640, %v667, %v674
      %v676 = vrot.slane %v671, 4
      %v678 = vshrl.u32 %v596, 16
      %v680 = vrot.slane %v678, 7
      %v681 = vshll.u32 %v596, 16
      %v683 = vor.u32 %v680, %v681
      %v684 = vsel %vm640, %v676, %v683
      %v686 = vshrl.u32 %v597, 16
      %v688 = vrot.slane %v686, 7
      %v689 = vrot.slane %v688, 4
      %v691 = vshrl.u32 %v598, 16
      %v693 = vrot.slane %v691, 7
      %v694 = vshll.u32 %v598, 16
      %v696 = vor.u32 %v693, %v694
      %v697 = vsel %vm640, %v689, %v696
      %v698 = vrot.slane %v693, 4
      %v700 = vshrl.u32 %v599, 16
      %v702 = vrot.slane %v700, 7
      %v703 = vshll.u32 %v599, 16
      %v705 = vor.u32 %v702, %v703
      %v706 = vsel %vm640, %v698, %v705
      %v708 = vshrl.u32 %v600, 16
      %v710 = vrot.slane %v708, 7
      %v711 = vrot.slane %v710, 4
      %v713 = vshrl.u32 %v601, 16
      %v715 = vrot.slane %v713, 7
      %v716 = vshll.u32 %v601, 16
      %v718 = vor.u32 %v715, %v716
      %v719 = vsel %vm640, %v711, %v718
      %v720 = vrot.slane %v715, 4
      %v722 = vshrl.u32 %v602, 16
      %v724 = vrot.slane %v722, 7
      %v725 = vshll.u32 %v602, 16
      %v727 = vor.u32 %v724, %v725
      %v728 = vsel %vm640, %v720, %v727
      %v730 = vshrl.u32 %v603, 16
      %v732 = vrot.slane %v730, 7
      %v733 = vrot.slane %v732, 4
      %v735 = vshrl.u32 %v604, 16
      %v737 = vrot.slane %v735, 7
      %v738 = vshll.u32 %v604, 16
      %v740 = vor.u32 %v737, %v738
      %v741 = vsel %vm640, %v733, %v740
      %v742 = vrot.slane %v737, 4
      %v744 = vshrl.u32 %v605, 16
      %v746 = vrot.slane %v744, 7
      %v747 = vshll.u32 %v605, 16
      %v749 = vor.u32 %v746, %v747
      %v750 = vsel %vm640, %v742, %v749
      %v752 = vshrl.u32 %v606, 16
      %v754 = vrot.slane %v752, 7
      %v755 = vrot.slane %v754, 4
      %v757 = vshrl.u32 %v607, 16
      %v759 = vrot.slane %v757, 7
      %v760 = vshll.u32 %v607, 16
      %v762 = vor.u32 %v759, %v760
      %v763 = vsel %vm640, %v755, %v762
      %v764 = vrot.slane %v759, 4
      %v766 = vshrl.u32 %v608, 16
      %v768 = vrot.slane %v766, 7
      %v769 = vshll.u32 %v608, 16
      %v771 = vor.u32 %v768, %v769
      %v772 = vsel %vm640, %v764, %v771
      %v774 = vshrl.u32 %v609, 16
      %v776 = vrot.slane %v774, 7
      %v777 = vrot.slane %v776, 4
      %v779 = vshrl.u32 %v610, 16
      %v781 = vrot.slane %v779, 7
      %v782 = vshll.u32 %v610, 16
      %v784 = vor.u32 %v781, %v782
      %v785 = vsel %vm640, %v777, %v784
      %v786 = vrot.slane %v781, 4
      %v788 = vshrl.u32 %v611, 16
      %v790 = vrot.slane %v788, 7
      %v791 = vshll.u32 %v611, 16
      %v793 = vor.u32 %v790, %v791
      %v794 = vsel %vm640, %v786, %v793
      %v796 = vshrl.u32 %v612, 16
      %v798 = vrot.slane %v796, 7
      %v799 = vrot.slane %v798, 4
      %v801 = vshrl.u32 %v613, 16
      %v803 = vrot.slane %v801, 7
      %v804 = vshll.u32 %v613, 16
      %v806 = vor.u32 %v803, %v804
      %v807 = vsel %vm640, %v799, %v806
      %v808 = vrot.slane %v803, 4
      %v810 = vshrl.u32 %v614, 16
      %v812 = vrot.slane %v810, 7
      %v813 = vshll.u32 %v614, 16
      %v815 = vor.u32 %v812, %v813
      %v816 = vsel %vm640, %v808, %v815
      %v818 = vshrl.u32 %v615, 16
      %v820 = vrot.slane %v818, 7
      %v821 = vrot.slane %v820, 4
      %v823 = vshrl.u32 %v616, 16
      %v825 = vrot.slane %v823, 7
      %v826 = vshll.u32 %v616, 16
      %v828 = vor.u32 %v825, %v826
      %v829 = vsel %vm640, %v821, %v828
      %v830 = vrot.slane %v825, 4
      %v832 = vshrl.u32 %v617, 16
      %v834 = vrot.slane %v832, 7
      %v835 = vshll.u32 %v617, 16
      %v837 = vor.u32 %v834, %v835
      %v838 = vsel %vm640, %v830, %v837
      %v840 = vshrl.u32 %v618, 16
      %v842 = vrot.slane %v840, 7
      %v843 = vrot.slane %v842, 4
      %v845 = vshrl.u32 %v619, 16
      %v847 = vrot.slane %v845, 7
      %v848 = vshll.u32 %v619, 16
      %v850 = vor.u32 %v847, %v848
      %v851 = vsel %vm640, %v843, %v850
      %v852 = vrot.slane %v847, 4
      %v854 = vshrl.u32 %v620, 16
      %v856 = vrot.slane %v854, 7
      %v857 = vshll.u32 %v620, 16
      %v859 = vor.u32 %v856, %v857
      %v860 = vsel %vm640, %v852, %v859
      %v862 = vshrl.u32 %v621, 16
      %v864 = vrot.slane %v862, 7
      %v865 = vrot.slane %v864, 4
      %v867 = vshrl.u32 %v622, 16
      %v869 = vrot.slane %v867, 7
      %v870 = vshll.u32 %v622, 16
      %v872 = vor.u32 %v869, %v870
      %v873 = vsel %vm640, %v865, %v872
      %v874 = vrot.slane %v869, 4
      %v876 = vshrl.u32 %v623, 16
      %v878 = vrot.slane %v876, 7
      %v879 = vshll.u32 %v623, 16
      %v881 = vor.u32 %v878, %v879
      %v882 = vsel %vm640, %v874, %v881
      %v884 = vshrl.u32 %v624, 16
      %v886 = vrot.slane %v884, 7
      %v887 = vrot.slane %v886, 4
      %v889 = vshrl.u32 %v625, 16
      %v891 = vrot.slane %v889, 7
      %v892 = vshll.u32 %v625, 16
      %v894 = vor.u32 %v891, %v892
      %v895 = vsel %vm640, %v887, %v894
      %v896 = vrot.slane %v891, 4
      %v898 = vshrl.u32 %v626, 16
      %v900 = vrot.slane %v898, 7
      %v901 = vshll.u32 %v626, 16
      %v903 = vor.u32 %v900, %v901
      %v904 = vsel %vm640, %v896, %v903
      %v906 = vshrl.u32 %v627, 16
      %v908 = vrot.slane %v906, 7
      %v909 = vrot.slane %v908, 4
      %v911 = vshrl.u32 %v628, 16
      %v913 = vrot.slane %v911, 7
      %v914 = vshll.u32 %v628, 16
      %v916 = vor.u32 %v913, %v914
      %v917 = vsel %vm640, %v909, %v916
      %v918 = vrot.slane %v913, 4
      %v920 = vshrl.u32 %v629, 16
      %v922 = vrot.slane %v920, 7
      %v923 = vshll.u32 %v629, 16
      %v925 = vor.u32 %v922, %v923
      %v926 = vsel %vm640, %v918, %v925
      %v928 = vshrl.u32 %v630, 16
      %v930 = vrot.slane %v928, 7
      %v931 = vrot.slane %v930, 4
      %v933 = vshrl.u32 %v631, 16
      %v935 = vrot.slane %v933, 7
      %v936 = vshll.u32 %v631, 16
      %v938 = vor.u32 %v935, %v936
      %v939 = vsel %vm640, %v931, %v938
      %v940 = vrot.slane %v935, 4
      %v942 = vshrl.u32 %v632, 16
      %v944 = vrot.slane %v942, 7
      %v945 = vshll.u32 %v632, 16
      %v947 = vor.u32 %v944, %v945
      %v948 = vsel %vm640, %v940, %v947
      %v950 = vshrl.u32 %v633, 16
      %v952 = vrot.slane %v950, 7
      %v953 = vrot.slane %v952, 4
      %v955 = vshrl.u32 %v634, 16
      %v957 = vrot.slane %v955, 7
      %v958 = vshll.u32 %v634, 16
      %v960 = vor.u32 %v957, %v958
      %v961 = vsel %vm640, %v953, %v960
      %v962 = vrot.slane %v957, 4
      %v964 = vshrl.u32 %v635, 16
      %v966 = vrot.slane %v964, 7
      %v967 = vshll.u32 %v635, 16
      %v969 = vor.u32 %v966, %v967
      %v970 = vsel %vm640, %v962, %v969
      %v972 = vshrl.u32 %v636, 16
      %v974 = vrot.slane %v972, 7
      %v975 = vrot.slane %v974, 4
      %v977 = vshrl.u32 %v637, 16
      %v979 = vrot.slane %v977, 7
      %v980 = vshll.u32 %v637, 16
      %v982 = vor.u32 %v979, %v980
      %v983 = vsel %vm640, %v975, %v982
      %v984 = vrot.slane %v979, 4
      %v986 = vshrl.u32 %v638, 16
      %v988 = vrot.slane %v986, 7
      %v989 = vshll.u32 %v638, 16
      %v991 = vor.u32 %v988, %v989
      %v992 = vsel %vm640, %v984, %v991
      %v993 = vunpack.c.l.b16 %v653
      %v994 = vunpack.c.l.b16 %v662
      %v995 = vunpack.c.l.b16 %v675
      %v996 = vunpack.c.l.b16 %v684
      %v997 = vunpack.c.l.b16 %v697
      %v998 = vunpack.c.l.b16 %v706
      %v999 = vunpack.c.l.b16 %v719
      %v1000 = vunpack.c.l.b16 %v728
      %v1001 = vunpack.c.l.b16 %v741
      %v1002 = vunpack.c.l.b16 %v750
      %v1003 = vunpack.c.l.b16 %v763
      %v1004 = vunpack.c.l.b16 %v772
      %v1005 = vunpack.c.l.b16 %v785
      %v1006 = vunpack.c.l.b16 %v794
      %v1007 = vunpack.c.l.b16 %v807
      %v1008 = vunpack.c.l.b16 %v816
      %v1009 = vunpack.c.l.b16 %v829
      %v1010 = vunpack.c.l.b16 %v838
      %v1011 = vunpack.c.l.b16 %v851
      %v1012 = vunpack.c.l.b16 %v860
      %v1013 = vunpack.c.l.b16 %v873
      %v1014 = vunpack.c.l.b16 %v882
      %v1015 = vunpack.c.l.b16 %v895
      %v1016 = vunpack.c.l.b16 %v904
      %v1017 = vunpack.c.l.b16 %v917
      %v1018 = vunpack.c.l.b16 %v926
      %v1019 = vunpack.c.l.b16 %v939
      %v1020 = vunpack.c.l.b16 %v948
      %v1021 = vunpack.c.l.b16 %v961
      %v1022 = vunpack.c.l.b16 %v970
      %v1023 = vunpack.c.l.b16 %v983
      %v1024 = vunpack.c.l.b16 %v992
      %v1025 = vpack.c.b16 %v994, %v993
      %v1026 = vpack.c.b16 %v996, %v995
      %v1027 = vpack.c.b16 %v998, %v997
      %v1028 = vpack.c.b16 %v1000, %v999
      %v1029 = vpack.c.b16 %v1002, %v1001
      %v1030 = vpack.c.b16 %v1004, %v1003
      %v1031 = vpack.c.b16 %v1006, %v1005
      %v1032 = vpack.c.b16 %v1008, %v1007
      %v1033 = vpack.c.b16 %v1010, %v1009
      %v1034 = vpack.c.b16 %v1012, %v1011
      %v1035 = vpack.c.b16 %v1014, %v1013
      %v1036 = vpack.c.b16 %v1016, %v1015
      %v1037 = vpack.c.b16 %v1018, %v1017
      %v1038 = vpack.c.b16 %v1020, %v1019
      %v1039 = vpack.c.b16 %v1022, %v1021
      %v1040 = vpack.c.b16 %v1024, %v1023
      %vm1057 = vcmask 31744
      %1058 = vst.msk [vmem:[#allocation3] sm:$0xff] %vm1057, %v1025
      %1059 = vst.msk [vmem:[#allocation3 + $0x8] sm:$0xff] %vm1057, %v1026
      %1060 = vst.msk [vmem:[#allocation3 + $0x10] sm:$0xff] %vm1057, %v1027
      %1061 = vst.msk [vmem:[#allocation3 + $0x18] sm:$0xff] %vm1057, %v1028
      %1062 = vst.msk [vmem:[#allocation3 + $0x20] sm:$0xff] %vm1057, %v1029
      %1063 = vst.msk [vmem:[#allocation3 + $0x28] sm:$0xff] %vm1057, %v1030
      %1064 = vst.msk [vmem:[#allocation3 + $0x30] sm:$0xff] %vm1057, %v1031
      %1065 = vst.msk [vmem:[#allocation3 + $0x38] sm:$0xff] %vm1057, %v1032
      %1066 = vst.msk [vmem:[#allocation3 + $0x40] sm:$0xff] %vm1057, %v1033
      %1067 = vst.msk [vmem:[#allocation3 + $0x48] sm:$0xff] %vm1057, %v1034
      %1068 = vst.msk [vmem:[#allocation3 + $0x50] sm:$0xff] %vm1057, %v1035
      %1069 = vst.msk [vmem:[#allocation3 + $0x58] sm:$0xff] %vm1057, %v1036
      %1070 = vst.msk [vmem:[#allocation3 + $0x60] sm:$0xff] %vm1057, %v1037
      %1071 = vst.msk [vmem:[#allocation3 + $0x68] sm:$0xff] %vm1057, %v1038
      %1072 = vst.msk [vmem:[#allocation3 + $0x70] sm:$0xff] %vm1057, %v1039
      %1073 = vst.msk [vmem:[#allocation3 + $0x78] sm:$0xff] %vm1057, %v1040
      %v1074 = vld [vmem:[#allocation2 + $0x8] sm:$0xf]
      %v1075 = vld [vmem:[#allocation2 + $0xc] sm:$0xf]
      %v1076 = vld [vmem:[#allocation2 + $0x1c] sm:$0xf]
      %v1077 = vld [vmem:[#allocation2 + $0x20] sm:$0xf]
      %v1078 = vld [vmem:[#allocation2 + $0x30] sm:$0xf]
      %v1079 = vld [vmem:[#allocation2 + $0x34] sm:$0xf]
      %v1080 = vld [vmem:[#allocation2 + $0x44] sm:$0xf]
      %v1081 = vld [vmem:[#allocation2 + $0x48] sm:$0xf]
      %v1082 = vld [vmem:[#allocation2 + $0x58] sm:$0xf]
      %v1083 = vld [vmem:[#allocation2 + $0x5c] sm:$0xf]
      %v1084 = vld [vmem:[#allocation2 + $0x6c] sm:$0xf]
      %v1085 = vld [vmem:[#allocation2 + $0x70] sm:$0xf]
      %v1086 = vld [vmem:[#allocation2 + $0x80] sm:$0xf]
      %v1087 = vld [vmem:[#allocation2 + $0x84] sm:$0xf]
      %v1088 = vld [vmem:[#allocation2 + $0x94] sm:$0xf]
      %v1089 = vld [vmem:[#allocation2 + $0x98] sm:$0xf]
      %v1090 = vld [vmem:[#allocation2 + $0xa8] sm:$0xf]
      %v1091 = vld [vmem:[#allocation2 + $0xac] sm:$0xf]
      %v1092 = vld [vmem:[#allocation2 + $0xbc] sm:$0xf]
      %v1093 = vld [vmem:[#allocation2 + $0xc0] sm:$0xf]
      %v1094 = vld [vmem:[#allocation2 + $0xd0] sm:$0xf]
      %v1095 = vld [vmem:[#allocation2 + $0xd4] sm:$0xf]
      %v1096 = vld [vmem:[#allocation2 + $0xe4] sm:$0xf]
      %v1097 = vld [vmem:[#allocation2 + $0xe8] sm:$0xf]
      %v1098 = vld [vmem:[#allocation2 + $0xf8] sm:$0xf]
      %v1099 = vld [vmem:[#allocation2 + $0xfc] sm:$0xf]
      %v1100 = vld [vmem:[#allocation2 + $0x10c] sm:$0xf]
      %v1101 = vld [vmem:[#allocation2 + $0x110] sm:$0xf]
      %v1102 = vld [vmem:[#allocation2 + $0x120] sm:$0xf]
      %v1103 = vld [vmem:[#allocation2 + $0x124] sm:$0xf]
      %v1104 = vld [vmem:[#allocation2 + $0x134] sm:$0xf]
      %v1105 = vld [vmem:[#allocation2 + $0x138] sm:$0xf]
      %v1138 = vunpack.c.l.b16 %v1074
      %v1139 = vunpack.c.l.b16 %v1075
      %v1140 = vunpack.c.l.b16 %v1076
      %v1141 = vunpack.c.l.b16 %v1077
      %v1142 = vunpack.c.l.b16 %v1078
      %v1143 = vunpack.c.l.b16 %v1079
      %v1144 = vunpack.c.l.b16 %v1080
      %v1145 = vunpack.c.l.b16 %v1081
      %v1146 = vunpack.c.l.b16 %v1082
      %v1147 = vunpack.c.l.b16 %v1083
      %v1148 = vunpack.c.l.b16 %v1084
      %v1149 = vunpack.c.l.b16 %v1085
      %v1150 = vunpack.c.l.b16 %v1086
      %v1151 = vunpack.c.l.b16 %v1087
      %v1152 = vunpack.c.l.b16 %v1088
      %v1153 = vunpack.c.l.b16 %v1089
      %v1154 = vunpack.c.l.b16 %v1090
      %v1155 = vunpack.c.l.b16 %v1091
      %v1156 = vunpack.c.l.b16 %v1092
      %v1157 = vunpack.c.l.b16 %v1093
      %v1158 = vunpack.c.l.b16 %v1094
      %v1159 = vunpack.c.l.b16 %v1095
      %v1160 = vunpack.c.l.b16 %v1096
      %v1161 = vunpack.c.l.b16 %v1097
      %v1162 = vunpack.c.l.b16 %v1098
      %v1163 = vunpack.c.l.b16 %v1099
      %v1164 = vunpack.c.l.b16 %v1100
      %v1165 = vunpack.c.l.b16 %v1101
      %v1166 = vunpack.c.l.b16 %v1102
      %v1167 = vunpack.c.l.b16 %v1103
      %v1168 = vunpack.c.l.b16 %v1104
      %v1169 = vunpack.c.l.b16 %v1105
      %v1170 = vpack.c.b16 %v1139, %v1138
      %v1171 = vpack.c.b16 %v1141, %v1140
      %v1172 = vpack.c.b16 %v1143, %v1142
      %v1173 = vpack.c.b16 %v1145, %v1144
      %v1174 = vpack.c.b16 %v1147, %v1146
      %v1175 = vpack.c.b16 %v1149, %v1148
      %v1176 = vpack.c.b16 %v1151, %v1150
      %v1177 = vpack.c.b16 %v1153, %v1152
      %v1178 = vpack.c.b16 %v1155, %v1154
      %v1179 = vpack.c.b16 %v1157, %v1156
      %v1180 = vpack.c.b16 %v1159, %v1158
      %v1181 = vpack.c.b16 %v1161, %v1160
      %v1182 = vpack.c.b16 %v1163, %v1162
      %v1183 = vpack.c.b16 %v1165, %v1164
      %v1184 = vpack.c.b16 %v1167, %v1166
      %v1185 = vpack.c.b16 %v1169, %v1168
      %1186 = vrot.lane.b32.xlu0 %v1170, 4
      %v1187 = vpop.permute.xlu0 %1186
      %1188 = vrot.lane.b32.xlu0 %v1171, 4
      %v1189 = vpop.permute.xlu0 %1188
      %1190 = vrot.lane.b32.xlu0 %v1172, 4
      %v1191 = vpop.permute.xlu0 %1190
      %1192 = vrot.lane.b32.xlu0 %v1173, 4
      %v1193 = vpop.permute.xlu0 %1192
      %1194 = vrot.lane.b32.xlu0 %v1174, 4
      %v1195 = vpop.permute.xlu0 %1194
      %1196 = vrot.lane.b32.xlu0 %v1175, 4
      %v1197 = vpop.permute.xlu0 %1196
      %1198 = vrot.lane.b32.xlu0 %v1176, 4
      %v1199 = vpop.permute.xlu0 %1198
      %1200 = vrot.lane.b32.xlu0 %v1177, 4
      %v1201 = vpop.permute.xlu0 %1200
      %1202 = vrot.lane.b32.xlu0 %v1178, 4
      %v1203 = vpop.permute.xlu0 %1202
      %1204 = vrot.lane.b32.xlu0 %v1179, 4
      %v1205 = vpop.permute.xlu0 %1204
      %1206 = vrot.lane.b32.xlu0 %v1180, 4
      %v1207 = vpop.permute.xlu0 %1206
      %1208 = vrot.lane.b32.xlu0 %v1181, 4
      %v1209 = vpop.permute.xlu0 %1208
      %1210 = vrot.lane.b32.xlu0 %v1182, 4
      %v1211 = vpop.permute.xlu0 %1210
      %1212 = vrot.lane.b32.xlu0 %v1183, 4
      %v1213 = vpop.permute.xlu0 %1212
      %1214 = vrot.lane.b32.xlu0 %v1184, 4
      %v1215 = vpop.permute.xlu0 %1214
      %1216 = vrot.lane.b32.xlu0 %v1185, 4
      %v1217 = vpop.permute.xlu0 %1216
      %vm1234 = vcmask 64544
      %1235 = vst.msk [vmem:[#allocation3] sm:$0xff] %vm1234, %v1187
      %1236 = vst.msk [vmem:[#allocation3 + $0x8] sm:$0xff] %vm1234, %v1189
      %1237 = vst.msk [vmem:[#allocation3 + $0x10] sm:$0xff] %vm1234, %v1191
      %1238 = vst.msk [vmem:[#allocation3 + $0x18] sm:$0xff] %vm1234, %v1193
      %1239 = vst.msk [vmem:[#allocation3 + $0x20] sm:$0xff] %vm1234, %v1195
      %1240 = vst.msk [vmem:[#allocation3 + $0x28] sm:$0xff] %vm1234, %v1197
      %1241 = vst.msk [vmem:[#allocation3 + $0x30] sm:$0xff] %vm1234, %v1199
      %1242 = vst.msk [vmem:[#allocation3 + $0x38] sm:$0xff] %vm1234, %v1201
      %1243 = vst.msk [vmem:[#allocation3 + $0x40] sm:$0xff] %vm1234, %v1203
      %1244 = vst.msk [vmem:[#allocation3 + $0x48] sm:$0xff] %vm1234, %v1205
      %1245 = vst.msk [vmem:[#allocation3 + $0x50] sm:$0xff] %vm1234, %v1207
      %1246 = vst.msk [vmem:[#allocation3 + $0x58] sm:$0xff] %vm1234, %v1209
      %1247 = vst.msk [vmem:[#allocation3 + $0x60] sm:$0xff] %vm1234, %v1211
      %1248 = vst.msk [vmem:[#allocation3 + $0x68] sm:$0xff] %vm1234, %v1213
      %1249 = vst.msk [vmem:[#allocation3 + $0x70] sm:$0xff] %vm1234, %v1215
      %1250 = vst.msk [vmem:[#allocation3 + $0x78] sm:$0xff] %vm1234, %v1217
      %v1251 = vld [vmem:[#allocation2 + $0x8] sm:$0xf]
      %v1252 = vld [vmem:[#allocation2 + $0xc] sm:$0xf]
      %v1253 = vld [vmem:[#allocation2 + $0x10] sm:$0x1]
      %v1254 = vld [vmem:[#allocation2 + $0x1c] sm:$0xf]
      %v1255 = vld [vmem:[#allocation2 + $0x20] sm:$0xf]
      %v1256 = vld [vmem:[#allocation2 + $0x24] sm:$0x1]
      %v1257 = vld [vmem:[#allocation2 + $0x30] sm:$0xf]
      %v1258 = vld [vmem:[#allocation2 + $0x34] sm:$0xf]
      %v1259 = vld [vmem:[#allocation2 + $0x38] sm:$0x1]
      %v1260 = vld [vmem:[#allocation2 + $0x44] sm:$0xf]
      %v1261 = vld [vmem:[#allocation2 + $0x48] sm:$0xf]
      %v1262 = vld [vmem:[#allocation2 + $0x4c] sm:$0x1]
      %v1263 = vld [vmem:[#allocation2 + $0x58] sm:$0xf]
      %v1264 = vld [vmem:[#allocation2 + $0x5c] sm:$0xf]
      %v1265 = vld [vmem:[#allocation2 + $0x60] sm:$0x1]
      %v1266 = vld [vmem:[#allocation2 + $0x6c] sm:$0xf]
      %v1267 = vld [vmem:[#allocation2 + $0x70] sm:$0xf]
      %v1268 = vld [vmem:[#allocation2 + $0x74] sm:$0x1]
      %v1269 = vld [vmem:[#allocation2 + $0x80] sm:$0xf]
      %v1270 = vld [vmem:[#allocation2 + $0x84] sm:$0xf]
      %v1271 = vld [vmem:[#allocation2 + $0x88] sm:$0x1]
      %v1272 = vld [vmem:[#allocation2 + $0x94] sm:$0xf]
      %v1273 = vld [vmem:[#allocation2 + $0x98] sm:$0xf]
      %v1274 = vld [vmem:[#allocation2 + $0x9c] sm:$0x1]
      %v1275 = vld [vmem:[#allocation2 + $0xa8] sm:$0xf]
      %v1276 = vld [vmem:[#allocation2 + $0xac] sm:$0xf]
      %v1277 = vld [vmem:[#allocation2 + $0xb0] sm:$0x1]
      %v1278 = vld [vmem:[#allocation2 + $0xbc] sm:$0xf]
      %v1279 = vld [vmem:[#allocation2 + $0xc0] sm:$0xf]
      %v1280 = vld [vmem:[#allocation2 + $0xc4] sm:$0x1]
      %v1281 = vld [vmem:[#allocation2 + $0xd0] sm:$0xf]
      %v1282 = vld [vmem:[#allocation2 + $0xd4] sm:$0xf]
      %v1283 = vld [vmem:[#allocation2 + $0xd8] sm:$0x1]
      %v1284 = vld [vmem:[#allocation2 + $0xe4] sm:$0xf]
      %v1285 = vld [vmem:[#allocation2 + $0xe8] sm:$0xf]
      %v1286 = vld [vmem:[#allocation2 + $0xec] sm:$0x1]
      %v1287 = vld [vmem:[#allocation2 + $0xf8] sm:$0xf]
      %v1288 = vld [vmem:[#allocation2 + $0xfc] sm:$0xf]
      %v1289 = vld [vmem:[#allocation2 + $0x100] sm:$0x1]
      %v1290 = vld [vmem:[#allocation2 + $0x10c] sm:$0xf]
      %v1291 = vld [vmem:[#allocation2 + $0x110] sm:$0xf]
      %v1292 = vld [vmem:[#allocation2 + $0x114] sm:$0x1]
      %v1293 = vld [vmem:[#allocation2 + $0x120] sm:$0xf]
      %v1294 = vld [vmem:[#allocation2 + $0x124] sm:$0xf]
      %v1295 = vld [vmem:[#allocation2 + $0x128] sm:$0x1]
      %v1296 = vld [vmem:[#allocation2 + $0x134] sm:$0xf]
      %v1297 = vld [vmem:[#allocation2 + $0x138] sm:$0xf]
      %v1298 = vld [vmem:[#allocation2 + $0x13c] sm:$0x1]
      %vm1299 = vsmask.f32 3328
      %vm1300 = vsmask.f32 7440
      %vm1301 = vmor %vm1299, %vm1300
      %v1303 = vshrl.u32 %v1251, 16
      %v1305 = vrot.slane %v1303, 4
      %v1306 = vshll.u32 %v1251, 16
      %v1308 = vrot.slane %v1306, 5
      %v1309 = vor.u32 %v1305, %v1308
      %v1310 = vrot.slane %v1309, 4
      %v1312 = vshll.u32 %v1252, 16
      %v1314 = vrot.slane %v1312, 5
      %v1315 = vsel %vm1301, %v1310, %v1314
      %v1316 = vshrl.u32 %v1252, 16
      %v1318 = vrot.slane %v1316, 4
      %v1319 = vor.u32 %v1318, %v1314
      %v1320 = vrot.slane %v1319, 4
      %v1322 = vshll.u32 %v1253, 16
      %v1324 = vrot.slane %v1322, 5
      %v1325 = vsel %vm1301, %v1320, %v1324
      %v1327 = vshrl.u32 %v1254, 16
      %v1329 = vrot.slane %v1327, 4
      %v1330 = vshll.u32 %v1254, 16
      %v1332 = vrot.slane %v1330, 5
      %v1333 = vor.u32 %v1329, %v1332
      %v1334 = vrot.slane %v1333, 4
      %v1336 = vshll.u32 %v1255, 16
      %v1338 = vrot.slane %v1336, 5
      %v1339 = vsel %vm1301, %v1334, %v1338
      %v1340 = vshrl.u32 %v1255, 16
      %v1342 = vrot.slane %v1340, 4
      %v1343 = vor.u32 %v1342, %v1338
      %v1344 = vrot.slane %v1343, 4
      %v1346 = vshll.u32 %v1256, 16
      %v1348 = vrot.slane %v1346, 5
      %v1349 = vsel %vm1301, %v1344, %v1348
      %v1351 = vshrl.u32 %v1257, 16
      %v1353 = vrot.slane %v1351, 4
      %v1354 = vshll.u32 %v1257, 16
      %v1356 = vrot.slane %v1354, 5
      %v1357 = vor.u32 %v1353, %v1356
      %v1358 = vrot.slane %v1357, 4
      %v1360 = vshll.u32 %v1258, 16
      %v1362 = vrot.slane %v1360, 5
      %v1363 = vsel %vm1301, %v1358, %v1362
      %v1364 = vshrl.u32 %v1258, 16
      %v1366 = vrot.slane %v1364, 4
      %v1367 = vor.u32 %v1366, %v1362
      %v1368 = vrot.slane %v1367, 4
      %v1370 = vshll.u32 %v1259, 16
      %v1372 = vrot.slane %v1370, 5
      %v1373 = vsel %vm1301, %v1368, %v1372
      %v1375 = vshrl.u32 %v1260, 16
      %v1377 = vrot.slane %v1375, 4
      %v1378 = vshll.u32 %v1260, 16
      %v1380 = vrot.slane %v1378, 5
      %v1381 = vor.u32 %v1377, %v1380
      %v1382 = vrot.slane %v1381, 4
      %v1384 = vshll.u32 %v1261, 16
      %v1386 = vrot.slane %v1384, 5
      %v1387 = vsel %vm1301, %v1382, %v1386
      %v1388 = vshrl.u32 %v1261, 16
      %v1390 = vrot.slane %v1388, 4
      %v1391 = vor.u32 %v1390, %v1386
      %v1392 = vrot.slane %v1391, 4
      %v1394 = vshll.u32 %v1262, 16
      %v1396 = vrot.slane %v1394, 5
      %v1397 = vsel %vm1301, %v1392, %v1396
      %v1399 = vshrl.u32 %v1263, 16
      %v1401 = vrot.slane %v1399, 4
      %v1402 = vshll.u32 %v1263, 16
      %v1404 = vrot.slane %v1402, 5
      %v1405 = vor.u32 %v1401, %v1404
      %v1406 = vrot.slane %v1405, 4
      %v1408 = vshll.u32 %v1264, 16
      %v1410 = vrot.slane %v1408, 5
      %v1411 = vsel %vm1301, %v1406, %v1410
      %v1412 = vshrl.u32 %v1264, 16
      %v1414 = vrot.slane %v1412, 4
      %v1415 = vor.u32 %v1414, %v1410
      %v1416 = vrot.slane %v1415, 4
      %v1418 = vshll.u32 %v1265, 16
      %v1420 = vrot.slane %v1418, 5
      %v1421 = vsel %vm1301, %v1416, %v1420
      %v1423 = vshrl.u32 %v1266, 16
      %v1425 = vrot.slane %v1423, 4
      %v1426 = vshll.u32 %v1266, 16
      %v1428 = vrot.slane %v1426, 5
      %v1429 = vor.u32 %v1425, %v1428
      %v1430 = vrot.slane %v1429, 4
      %v1432 = vshll.u32 %v1267, 16
      %v1434 = vrot.slane %v1432, 5
      %v1435 = vsel %vm1301, %v1430, %v1434
      %v1436 = vshrl.u32 %v1267, 16
      %v1438 = vrot.slane %v1436, 4
      %v1439 = vor.u32 %v1438, %v1434
      %v1440 = vrot.slane %v1439, 4
      %v1442 = vshll.u32 %v1268, 16
      %v1444 = vrot.slane %v1442, 5
      %v1445 = vsel %vm1301, %v1440, %v1444
      %v1447 = vshrl.u32 %v1269, 16
      %v1449 = vrot.slane %v1447, 4
      %v1450 = vshll.u32 %v1269, 16
      %v1452 = vrot.slane %v1450, 5
      %v1453 = vor.u32 %v1449, %v1452
      %v1454 = vrot.slane %v1453, 4
      %v1456 = vshll.u32 %v1270, 16
      %v1458 = vrot.slane %v1456, 5
      %v1459 = vsel %vm1301, %v1454, %v1458
      %v1460 = vshrl.u32 %v1270, 16
      %v1462 = vrot.slane %v1460, 4
      %v1463 = vor.u32 %v1462, %v1458
      %v1464 = vrot.slane %v1463, 4
      %v1466 = vshll.u32 %v1271, 16
      %v1468 = vrot.slane %v1466, 5
      %v1469 = vsel %vm1301, %v1464, %v1468
      %v1471 = vshrl.u32 %v1272, 16
      %v1473 = vrot.slane %v1471, 4
      %v1474 = vshll.u32 %v1272, 16
      %v1476 = vrot.slane %v1474, 5
      %v1477 = vor.u32 %v1473, %v1476
      %v1478 = vrot.slane %v1477, 4
      %v1480 = vshll.u32 %v1273, 16
      %v1482 = vrot.slane %v1480, 5
      %v1483 = vsel %vm1301, %v1478, %v1482
      %v1484 = vshrl.u32 %v1273, 16
      %v1486 = vrot.slane %v1484, 4
      %v1487 = vor.u32 %v1486, %v1482
      %v1488 = vrot.slane %v1487, 4
      %v1490 = vshll.u32 %v1274, 16
      %v1492 = vrot.slane %v1490, 5
      %v1493 = vsel %vm1301, %v1488, %v1492
      %v1495 = vshrl.u32 %v1275, 16
      %v1497 = vrot.slane %v1495, 4
      %v1498 = vshll.u32 %v1275, 16
      %v1500 = vrot.slane %v1498, 5
      %v1501 = vor.u32 %v1497, %v1500
      %v1502 = vrot.slane %v1501, 4
      %v1504 = vshll.u32 %v1276, 16
      %v1506 = vrot.slane %v1504, 5
      %v1507 = vsel %vm1301, %v1502, %v1506
      %v1508 = vshrl.u32 %v1276, 16
      %v1510 = vrot.slane %v1508, 4
      %v1511 = vor.u32 %v1510, %v1506
      %v1512 = vrot.slane %v1511, 4
      %v1514 = vshll.u32 %v1277, 16
      %v1516 = vrot.slane %v1514, 5
      %v1517 = vsel %vm1301, %v1512, %v1516
      %v1519 = vshrl.u32 %v1278, 16
      %v1521 = vrot.slane %v1519, 4
      %v1522 = vshll.u32 %v1278, 16
      %v1524 = vrot.slane %v1522, 5
      %v1525 = vor.u32 %v1521, %v1524
      %v1526 = vrot.slane %v1525, 4
      %v1528 = vshll.u32 %v1279, 16
      %v1530 = vrot.slane %v1528, 5
      %v1531 = vsel %vm1301, %v1526, %v1530
      %v1532 = vshrl.u32 %v1279, 16
      %v1534 = vrot.slane %v1532, 4
      %v1535 = vor.u32 %v1534, %v1530
      %v1536 = vrot.slane %v1535, 4
      %v1538 = vshll.u32 %v1280, 16
      %v1540 = vrot.slane %v1538, 5
      %v1541 = vsel %vm1301, %v1536, %v1540
      %v1543 = vshrl.u32 %v1281, 16
      %v1545 = vrot.slane %v1543, 4
      %v1546 = vshll.u32 %v1281, 16
      %v1548 = vrot.slane %v1546, 5
      %v1549 = vor.u32 %v1545, %v1548
      %v1550 = vrot.slane %v1549, 4
      %v1552 = vshll.u32 %v1282, 16
      %v1554 = vrot.slane %v1552, 5
      %v1555 = vsel %vm1301, %v1550, %v1554
      %v1556 = vshrl.u32 %v1282, 16
      %v1558 = vrot.slane %v1556, 4
      %v1559 = vor.u32 %v1558, %v1554
      %v1560 = vrot.slane %v1559, 4
      %v1562 = vshll.u32 %v1283, 16
      %v1564 = vrot.slane %v1562, 5
      %v1565 = vsel %vm1301, %v1560, %v1564
      %v1567 = vshrl.u32 %v1284, 16
      %v1569 = vrot.slane %v1567, 4
      %v1570 = vshll.u32 %v1284, 16
      %v1572 = vrot.slane %v1570, 5
      %v1573 = vor.u32 %v1569, %v1572
      %v1574 = vrot.slane %v1573, 4
      %v1576 = vshll.u32 %v1285, 16
      %v1578 = vrot.slane %v1576, 5
      %v1579 = vsel %vm1301, %v1574, %v1578
      %v1580 = vshrl.u32 %v1285, 16
      %v1582 = vrot.slane %v1580, 4
      %v1583 = vor.u32 %v1582, %v1578
      %v1584 = vrot.slane %v1583, 4
      %v1586 = vshll.u32 %v1286, 16
      %v1588 = vrot.slane %v1586, 5
      %v1589 = vsel %vm1301, %v1584, %v1588
      %v1591 = vshrl.u32 %v1287, 16
      %v1593 = vrot.slane %v1591, 4
      %v1594 = vshll.u32 %v1287, 16
      %v1596 = vrot.slane %v1594, 5
      %v1597 = vor.u32 %v1593, %v1596
      %v1598 = vrot.slane %v1597, 4
      %v1600 = vshll.u32 %v1288, 16
      %v1602 = vrot.slane %v1600, 5
      %v1603 = vsel %vm1301, %v1598, %v1602
      %v1604 = vshrl.u32 %v1288, 16
      %v1606 = vrot.slane %v1604, 4
      %v1607 = vor.u32 %v1606, %v1602
      %v1608 = vrot.slane %v1607, 4
      %v1610 = vshll.u32 %v1289, 16
      %v1612 = vrot.slane %v1610, 5
      %v1613 = vsel %vm1301, %v1608, %v1612
      %v1615 = vshrl.u32 %v1290, 16
      %v1617 = vrot.slane %v1615, 4
      %v1618 = vshll.u32 %v1290, 16
      %v1620 = vrot.slane %v1618, 5
      %v1621 = vor.u32 %v1617, %v1620
      %v1622 = vrot.slane %v1621, 4
      %v1624 = vshll.u32 %v1291, 16
      %v1626 = vrot.slane %v1624, 5
      %v1627 = vsel %vm1301, %v1622, %v1626
      %v1628 = vshrl.u32 %v1291, 16
      %v1630 = vrot.slane %v1628, 4
      %v1631 = vor.u32 %v1630, %v1626
      %v1632 = vrot.slane %v1631, 4
      %v1634 = vshll.u32 %v1292, 16
      %v1636 = vrot.slane %v1634, 5
      %v1637 = vsel %vm1301, %v1632, %v1636
      %v1639 = vshrl.u32 %v1293, 16
      %v1641 = vrot.slane %v1639, 4
      %v1642 = vshll.u32 %v1293, 16
      %v1644 = vrot.slane %v1642, 5
      %v1645 = vor.u32 %v1641, %v1644
      %v1646 = vrot.slane %v1645, 4
      %v1648 = vshll.u32 %v1294, 16
      %v1650 = vrot.slane %v1648, 5
      %v1651 = vsel %vm1301, %v1646, %v1650
      %v1652 = vshrl.u32 %v1294, 16
      %v1654 = vrot.slane %v1652, 4
      %v1655 = vor.u32 %v1654, %v1650
      %v1656 = vrot.slane %v1655, 4
      %v1658 = vshll.u32 %v1295, 16
      %v1660 = vrot.slane %v1658, 5
      %v1661 = vsel %vm1301, %v1656, %v1660
      %v1663 = vshrl.u32 %v1296, 16
      %v1665 = vrot.slane %v1663, 4
      %v1666 = vshll.u32 %v1296, 16
      %v1668 = vrot.slane %v1666, 5
      %v1669 = vor.u32 %v1665, %v1668
      %v1670 = vrot.slane %v1669, 4
      %v1672 = vshll.u32 %v1297, 16
      %v1674 = vrot.slane %v1672, 5
      %v1675 = vsel %vm1301, %v1670, %v1674
      %v1676 = vshrl.u32 %v1297, 16
      %v1678 = vrot.slane %v1676, 4
      %v1679 = vor.u32 %v1678, %v1674
      %v1680 = vrot.slane %v1679, 4
      %v1682 = vshll.u32 %v1298, 16
      %v1684 = vrot.slane %v1682, 5
      %v1685 = vsel %vm1301, %v1680, %v1684
      %v1686 = vunpack.c.l.b16 %v1315
      %v1687 = vunpack.c.l.b16 %v1325
      %v1688 = vunpack.c.l.b16 %v1339
      %v1689 = vunpack.c.l.b16 %v1349
      %v1690 = vunpack.c.l.b16 %v1363
      %v1691 = vunpack.c.l.b16 %v1373
      %v1692 = vunpack.c.l.b16 %v1387
      %v1693 = vunpack.c.l.b16 %v1397
      %v1694 = vunpack.c.l.b16 %v1411
      %v1695 = vunpack.c.l.b16 %v1421
      %v1696 = vunpack.c.l.b16 %v1435
      %v1697 = vunpack.c.l.b16 %v1445
      %v1698 = vunpack.c.l.b16 %v1459
      %v1699 = vunpack.c.l.b16 %v1469
      %v1700 = vunpack.c.l.b16 %v1483
      %v1701 = vunpack.c.l.b16 %v1493
      %v1702 = vunpack.c.l.b16 %v1507
      %v1703 = vunpack.c.l.b16 %v1517
      %v1704 = vunpack.c.l.b16 %v1531
      %v1705 = vunpack.c.l.b16 %v1541
      %v1706 = vunpack.c.l.b16 %v1555
      %v1707 = vunpack.c.l.b16 %v1565
      %v1708 = vunpack.c.l.b16 %v1579
      %v1709 = vunpack.c.l.b16 %v1589
      %v1710 = vunpack.c.l.b16 %v1603
      %v1711 = vunpack.c.l.b16 %v1613
      %v1712 = vunpack.c.l.b16 %v1627
      %v1713 = vunpack.c.l.b16 %v1637
      %v1714 = vunpack.c.l.b16 %v1651
      %v1715 = vunpack.c.l.b16 %v1661
      %v1716 = vunpack.c.l.b16 %v1675
      %v1717 = vunpack.c.l.b16 %v1685
      %v1718 = vpack.c.b16 %v1687, %v1686
      %v1719 = vpack.c.b16 %v1689, %v1688
      %v1720 = vpack.c.b16 %v1691, %v1690
      %v1721 = vpack.c.b16 %v1693, %v1692
      %v1722 = vpack.c.b16 %v1695, %v1694
      %v1723 = vpack.c.b16 %v1697, %v1696
      %v1724 = vpack.c.b16 %v1699, %v1698
      %v1725 = vpack.c.b16 %v1701, %v1700
      %v1726 = vpack.c.b16 %v1703, %v1702
      %v1727 = vpack.c.b16 %v1705, %v1704
      %v1728 = vpack.c.b16 %v1707, %v1706
      %v1729 = vpack.c.b16 %v1709, %v1708
      %v1730 = vpack.c.b16 %v1711, %v1710
      %v1731 = vpack.c.b16 %v1713, %v1712
      %v1732 = vpack.c.b16 %v1715, %v1714
      %v1733 = vpack.c.b16 %v1717, %v1716
      %1734 = vrot.lane.b32.xlu0 %v1718, 8
      %v1735 = vpop.permute.xlu0 %1734
      %1736 = vrot.lane.b32.xlu0 %v1719, 8
      %v1737 = vpop.permute.xlu0 %1736
      %1738 = vrot.lane.b32.xlu0 %v1720, 8
      %v1739 = vpop.permute.xlu0 %1738
      %1740 = vrot.lane.b32.xlu0 %v1721, 8
      %v1741 = vpop.permute.xlu0 %1740
      %1742 = vrot.lane.b32.xlu0 %v1722, 8
      %v1743 = vpop.permute.xlu0 %1742
      %1744 = vrot.lane.b32.xlu0 %v1723, 8
      %v1745 = vpop.permute.xlu0 %1744
      %1746 = vrot.lane.b32.xlu0 %v1724, 8
      %v1747 = vpop.permute.xlu0 %1746
      %1748 = vrot.lane.b32.xlu0 %v1725, 8
      %v1749 = vpop.permute.xlu0 %1748
      %1750 = vrot.lane.b32.xlu0 %v1726, 8
      %v1751 = vpop.permute.xlu0 %1750
      %1752 = vrot.lane.b32.xlu0 %v1727, 8
      %v1753 = vpop.permute.xlu0 %1752
      %1754 = vrot.lane.b32.xlu0 %v1728, 8
      %v1755 = vpop.permute.xlu0 %1754
      %1756 = vrot.lane.b32.xlu0 %v1729, 8
      %v1757 = vpop.permute.xlu0 %1756
      %1758 = vrot.lane.b32.xlu0 %v1730, 8
      %v1759 = vpop.permute.xlu0 %1758
      %1760 = vrot.lane.b32.xlu0 %v1731, 8
      %v1761 = vpop.permute.xlu0 %1760
      %1762 = vrot.lane.b32.xlu0 %v1732, 8
      %v1763 = vpop.permute.xlu0 %1762
      %1764 = vrot.lane.b32.xlu0 %v1733, 8
      %v1765 = vpop.permute.xlu0 %1764
      %vm1782 = vcmask 97344
      %1783 = vst.msk [vmem:[#allocation3] sm:$0xff] %vm1782, %v1735
      %1784 = vst.msk [vmem:[#allocation3 + $0x8] sm:$0xff] %vm1782, %v1737
      %1785 = vst.msk [vmem:[#allocation3 + $0x10] sm:$0xff] %vm1782, %v1739
      %1786 = vst.msk [vmem:[#allocation3 + $0x18] sm:$0xff] %vm1782, %v1741
      %1787 = vst.msk [vmem:[#allocation3 + $0x20] sm:$0xff] %vm1782, %v1743
      %1788 = vst.msk [vmem:[#allocation3 + $0x28] sm:$0xff] %vm1782, %v1745
      %1789 = vst.msk [vmem:[#allocation3 + $0x30] sm:$0xff] %vm1782, %v1747
      %1790 = vst.msk [vmem:[#allocation3 + $0x38] sm:$0xff] %vm1782, %v1749
      %1791 = vst.msk [vmem:[#allocation3 + $0x40] sm:$0xff] %vm1782, %v1751
      %1792 = vst.msk [vmem:[#allocation3 + $0x48] sm:$0xff] %vm1782, %v1753
      %1793 = vst.msk [vmem:[#allocation3 + $0x50] sm:$0xff] %vm1782, %v1755
      %1794 = vst.msk [vmem:[#allocation3 + $0x58] sm:$0xff] %vm1782, %v1757
      %1795 = vst.msk [vmem:[#allocation3 + $0x60] sm:$0xff] %vm1782, %v1759
      %1796 = vst.msk [vmem:[#allocation3 + $0x68] sm:$0xff] %vm1782, %v1761
      %1797 = vst.msk [vmem:[#allocation3 + $0x70] sm:$0xff] %vm1782, %v1763
      %1798 = vst.msk [vmem:[#allocation3 + $0x78] sm:$0xff] %vm1782, %v1765
      %v1799 = vld [vmem:[%s331 + $0x4] sm:$0x8]
      %v1800 = vld [vmem:[%s331 + $0x8] sm:$0xf]
      %v1801 = vld [vmem:[%s331 + $0xc] sm:$0xf]
      %v1802 = vld [vmem:[%s331 + $0x18] sm:$0x8]
      %v1803 = vld [vmem:[%s331 + $0x1c] sm:$0xf]
      %v1804 = vld [vmem:[%s331 + $0x20] sm:$0xf]
      %v1805 = vld [vmem:[%s331 + $0x2c] sm:$0x8]
      %v1806 = vld [vmem:[%s331 + $0x30] sm:$0xf]
      %v1807 = vld [vmem:[%s331 + $0x34] sm:$0xf]
      %v1808 = vld [vmem:[%s331 + $0x40] sm:$0x8]
      %v1809 = vld [vmem:[%s331 + $0x44] sm:$0xf]
      %v1810 = vld [vmem:[%s331 + $0x48] sm:$0xf]
      %v1811 = vld [vmem:[%s331 + $0x54] sm:$0x8]
      %v1812 = vld [vmem:[%s331 + $0x58] sm:$0xf]
      %v1813 = vld [vmem:[%s331 + $0x5c] sm:$0xf]
      %v1814 = vld [vmem:[%s331 + $0x68] sm:$0x8]
      %v1815 = vld [vmem:[%s331 + $0x6c] sm:$0xf]
      %v1816 = vld [vmem:[%s331 + $0x70] sm:$0xf]
      %v1817 = vld [vmem:[%s331 + $0x7c] sm:$0x8]
      %v1818 = vld [vmem:[%s331 + $0x80] sm:$0xf]
      %v1819 = vld [vmem:[%s331 + $0x84] sm:$0xf]
      %v1820 = vld [vmem:[%s331 + $0x90] sm:$0x8]
      %v1821 = vld [vmem:[%s331 + $0x94] sm:$0xf]
      %v1822 = vld [vmem:[%s331 + $0x98] sm:$0xf]
      %v1823 = vld [vmem:[%s331 + $0xa4] sm:$0x8]
      %v1824 = vld [vmem:[%s331 + $0xa8] sm:$0xf]
      %v1825 = vld [vmem:[%s331 + $0xac] sm:$0xf]
      %v1826 = vld [vmem:[%s331 + $0xb8] sm:$0x8]
      %v1827 = vld [vmem:[%s331 + $0xbc] sm:$0xf]
      %v1828 = vld [vmem:[%s331 + $0xc0] sm:$0xf]
      %v1829 = vld [vmem:[%s331 + $0xcc] sm:$0x8]
      %v1830 = vld [vmem:[%s331 + $0xd0] sm:$0xf]
      %v1831 = vld [vmem:[%s331 + $0xd4] sm:$0xf]
      %v1832 = vld [vmem:[%s331 + $0xe0] sm:$0x8]
      %v1833 = vld [vmem:[%s331 + $0xe4] sm:$0xf]
      %v1834 = vld [vmem:[%s331 + $0xe8] sm:$0xf]
      %v1835 = vld [vmem:[%s331 + $0xf4] sm:$0x8]
      %v1836 = vld [vmem:[%s331 + $0xf8] sm:$0xf]
      %v1837 = vld [vmem:[%s331 + $0xfc] sm:$0xf]
      %v1838 = vld [vmem:[%s331 + $0x108] sm:$0x8]
      %v1839 = vld [vmem:[%s331 + $0x10c] sm:$0xf]
      %v1840 = vld [vmem:[%s331 + $0x110] sm:$0xf]
      %v1841 = vld [vmem:[%s331 + $0x11c] sm:$0x8]
      %v1842 = vld [vmem:[%s331 + $0x120] sm:$0xf]
      %v1843 = vld [vmem:[%s331 + $0x124] sm:$0xf]
      %v1844 = vld [vmem:[%s331 + $0x130] sm:$0x8]
      %v1845 = vld [vmem:[%s331 + $0x134] sm:$0xf]
      %v1846 = vld [vmem:[%s331 + $0x138] sm:$0xf]
      %v1848 = vshrl.u32 %v1799, 16
      %v1850 = vrot.slane %v1848, 7
      %v1851 = vrot.slane %v1850, 4
      %v1853 = vshrl.u32 %v1800, 16
      %v1855 = vrot.slane %v1853, 7
      %v1856 = vshll.u32 %v1800, 16
      %v1858 = vor.u32 %v1855, %v1856
      %v1859 = vsel %vm640, %v1851, %v1858
      %v1860 = vrot.slane %v1855, 4
      %v1862 = vshrl.u32 %v1801, 16
      %v1864 = vrot.slane %v1862, 7
      %v1865 = vshll.u32 %v1801, 16
      %v1867 = vor.u32 %v1864, %v1865
      %v1868 = vsel %vm640, %v1860, %v1867
      %v1870 = vshrl.u32 %v1802, 16
      %v1872 = vrot.slane %v1870, 7
      %v1873 = vrot.slane %v1872, 4
      %v1875 = vshrl.u32 %v1803, 16
      %v1877 = vrot.slane %v1875, 7
      %v1878 = vshll.u32 %v1803, 16
      %v1880 = vor.u32 %v1877, %v1878
      %v1881 = vsel %vm640, %v1873, %v1880
      %v1882 = vrot.slane %v1877, 4
      %v1884 = vshrl.u32 %v1804, 16
      %v1886 = vrot.slane %v1884, 7
      %v1887 = vshll.u32 %v1804, 16
      %v1889 = vor.u32 %v1886, %v1887
      %v1890 = vsel %vm640, %v1882, %v1889
      %v1892 = vshrl.u32 %v1805, 16
      %v1894 = vrot.slane %v1892, 7
      %v1895 = vrot.slane %v1894, 4
      %v1897 = vshrl.u32 %v1806, 16
      %v1899 = vrot.slane %v1897, 7
      %v1900 = vshll.u32 %v1806, 16
      %v1902 = vor.u32 %v1899, %v1900
      %v1903 = vsel %vm640, %v1895, %v1902
      %v1904 = vrot.slane %v1899, 4
      %v1906 = vshrl.u32 %v1807, 16
      %v1908 = vrot.slane %v1906, 7
      %v1909 = vshll.u32 %v1807, 16
      %v1911 = vor.u32 %v1908, %v1909
      %v1912 = vsel %vm640, %v1904, %v1911
      %v1914 = vshrl.u32 %v1808, 16
      %v1916 = vrot.slane %v1914, 7
      %v1917 = vrot.slane %v1916, 4
      %v1919 = vshrl.u32 %v1809, 16
      %v1921 = vrot.slane %v1919, 7
      %v1922 = vshll.u32 %v1809, 16
      %v1924 = vor.u32 %v1921, %v1922
      %v1925 = vsel %vm640, %v1917, %v1924
      %v1926 = vrot.slane %v1921, 4
      %v1928 = vshrl.u32 %v1810, 16
      %v1930 = vrot.slane %v1928, 7
      %v1931 = vshll.u32 %v1810, 16
      %v1933 = vor.u32 %v1930, %v1931
      %v1934 = vsel %vm640, %v1926, %v1933
      %v1936 = vshrl.u32 %v1811, 16
      %v1938 = vrot.slane %v1936, 7
      %v1939 = vrot.slane %v1938, 4
      %v1941 = vshrl.u32 %v1812, 16
      %v1943 = vrot.slane %v1941, 7
      %v1944 = vshll.u32 %v1812, 16
      %v1946 = vor.u32 %v1943, %v1944
      %v1947 = vsel %vm640, %v1939, %v1946
      %v1948 = vrot.slane %v1943, 4
      %v1950 = vshrl.u32 %v1813, 16
      %v1952 = vrot.slane %v1950, 7
      %v1953 = vshll.u32 %v1813, 16
      %v1955 = vor.u32 %v1952, %v1953
      %v1956 = vsel %vm640, %v1948, %v1955
      %v1958 = vshrl.u32 %v1814, 16
      %v1960 = vrot.slane %v1958, 7
      %v1961 = vrot.slane %v1960, 4
      %v1963 = vshrl.u32 %v1815, 16
      %v1965 = vrot.slane %v1963, 7
      %v1966 = vshll.u32 %v1815, 16
      %v1968 = vor.u32 %v1965, %v1966
      %v1969 = vsel %vm640, %v1961, %v1968
      %v1970 = vrot.slane %v1965, 4
      %v1972 = vshrl.u32 %v1816, 16
      %v1974 = vrot.slane %v1972, 7
      %v1975 = vshll.u32 %v1816, 16
      %v1977 = vor.u32 %v1974, %v1975
      %v1978 = vsel %vm640, %v1970, %v1977
      %v1980 = vshrl.u32 %v1817, 16
      %v1982 = vrot.slane %v1980, 7
      %v1983 = vrot.slane %v1982, 4
      %v1985 = vshrl.u32 %v1818, 16
      %v1987 = vrot.slane %v1985, 7
      %v1988 = vshll.u32 %v1818, 16
      %v1990 = vor.u32 %v1987, %v1988
      %v1991 = vsel %vm640, %v1983, %v1990
      %v1992 = vrot.slane %v1987, 4
      %v1994 = vshrl.u32 %v1819, 16
      %v1996 = vrot.slane %v1994, 7
      %v1997 = vshll.u32 %v1819, 16
      %v1999 = vor.u32 %v1996, %v1997
      %v2000 = vsel %vm640, %v1992, %v1999
      %v2002 = vshrl.u32 %v1820, 16
      %v2004 = vrot.slane %v2002, 7
      %v2005 = vrot.slane %v2004, 4
      %v2007 = vshrl.u32 %v1821, 16
      %v2009 = vrot.slane %v2007, 7
      %v2010 = vshll.u32 %v1821, 16
      %v2012 = vor.u32 %v2009, %v2010
      %v2013 = vsel %vm640, %v2005, %v2012
      %v2014 = vrot.slane %v2009, 4
      %v2016 = vshrl.u32 %v1822, 16
      %v2018 = vrot.slane %v2016, 7
      %v2019 = vshll.u32 %v1822, 16
      %v2021 = vor.u32 %v2018, %v2019
      %v2022 = vsel %vm640, %v2014, %v2021
      %v2024 = vshrl.u32 %v1823, 16
      %v2026 = vrot.slane %v2024, 7
      %v2027 = vrot.slane %v2026, 4
      %v2029 = vshrl.u32 %v1824, 16
      %v2031 = vrot.slane %v2029, 7
      %v2032 = vshll.u32 %v1824, 16
      %v2034 = vor.u32 %v2031, %v2032
      %v2035 = vsel %vm640, %v2027, %v2034
      %v2036 = vrot.slane %v2031, 4
      %v2038 = vshrl.u32 %v1825, 16
      %v2040 = vrot.slane %v2038, 7
      %v2041 = vshll.u32 %v1825, 16
      %v2043 = vor.u32 %v2040, %v2041
      %v2044 = vsel %vm640, %v2036, %v2043
      %v2046 = vshrl.u32 %v1826, 16
      %v2048 = vrot.slane %v2046, 7
      %v2049 = vrot.slane %v2048, 4
      %v2051 = vshrl.u32 %v1827, 16
      %v2053 = vrot.slane %v2051, 7
      %v2054 = vshll.u32 %v1827, 16
      %v2056 = vor.u32 %v2053, %v2054
      %v2057 = vsel %vm640, %v2049, %v2056
      %v2058 = vrot.slane %v2053, 4
      %v2060 = vshrl.u32 %v1828, 16
      %v2062 = vrot.slane %v2060, 7
      %v2063 = vshll.u32 %v1828, 16
      %v2065 = vor.u32 %v2062, %v2063
      %v2066 = vsel %vm640, %v2058, %v2065
      %v2068 = vshrl.u32 %v1829, 16
      %v2070 = vrot.slane %v2068, 7
      %v2071 = vrot.slane %v2070, 4
      %v2073 = vshrl.u32 %v1830, 16
      %v2075 = vrot.slane %v2073, 7
      %v2076 = vshll.u32 %v1830, 16
      %v2078 = vor.u32 %v2075, %v2076
      %v2079 = vsel %vm640, %v2071, %v2078
      %v2080 = vrot.slane %v2075, 4
      %v2082 = vshrl.u32 %v1831, 16
      %v2084 = vrot.slane %v2082, 7
      %v2085 = vshll.u32 %v1831, 16
      %v2087 = vor.u32 %v2084, %v2085
      %v2088 = vsel %vm640, %v2080, %v2087
      %v2090 = vshrl.u32 %v1832, 16
      %v2092 = vrot.slane %v2090, 7
      %v2093 = vrot.slane %v2092, 4
      %v2095 = vshrl.u32 %v1833, 16
      %v2097 = vrot.slane %v2095, 7
      %v2098 = vshll.u32 %v1833, 16
      %v2100 = vor.u32 %v2097, %v2098
      %v2101 = vsel %vm640, %v2093, %v2100
      %v2102 = vrot.slane %v2097, 4
      %v2104 = vshrl.u32 %v1834, 16
      %v2106 = vrot.slane %v2104, 7
      %v2107 = vshll.u32 %v1834, 16
      %v2109 = vor.u32 %v2106, %v2107
      %v2110 = vsel %vm640, %v2102, %v2109
      %v2112 = vshrl.u32 %v1835, 16
      %v2114 = vrot.slane %v2112, 7
      %v2115 = vrot.slane %v2114, 4
      %v2117 = vshrl.u32 %v1836, 16
      %v2119 = vrot.slane %v2117, 7
      %v2120 = vshll.u32 %v1836, 16
      %v2122 = vor.u32 %v2119, %v2120
      %v2123 = vsel %vm640, %v2115, %v2122
      %v2124 = vrot.slane %v2119, 4
      %v2126 = vshrl.u32 %v1837, 16
      %v2128 = vrot.slane %v2126, 7
      %v2129 = vshll.u32 %v1837, 16
      %v2131 = vor.u32 %v2128, %v2129
      %v2132 = vsel %vm640, %v2124, %v2131
      %v2134 = vshrl.u32 %v1838, 16
      %v2136 = vrot.slane %v2134, 7
      %v2137 = vrot.slane %v2136, 4
      %v2139 = vshrl.u32 %v1839, 16
      %v2141 = vrot.slane %v2139, 7
      %v2142 = vshll.u32 %v1839, 16
      %v2144 = vor.u32 %v2141, %v2142
      %v2145 = vsel %vm640, %v2137, %v2144
      %v2146 = vrot.slane %v2141, 4
      %v2148 = vshrl.u32 %v1840, 16
      %v2150 = vrot.slane %v2148, 7
      %v2151 = vshll.u32 %v1840, 16
      %v2153 = vor.u32 %v2150, %v2151
      %v2154 = vsel %vm640, %v2146, %v2153
      %v2156 = vshrl.u32 %v1841, 16
      %v2158 = vrot.slane %v2156, 7
      %v2159 = vrot.slane %v2158, 4
      %v2161 = vshrl.u32 %v1842, 16
      %v2163 = vrot.slane %v2161, 7
      %v2164 = vshll.u32 %v1842, 16
      %v2166 = vor.u32 %v2163, %v2164
      %v2167 = vsel %vm640, %v2159, %v2166
      %v2168 = vrot.slane %v2163, 4
      %v2170 = vshrl.u32 %v1843, 16
      %v2172 = vrot.slane %v2170, 7
      %v2173 = vshll.u32 %v1843, 16
      %v2175 = vor.u32 %v2172, %v2173
      %v2176 = vsel %vm640, %v2168, %v2175
      %v2178 = vshrl.u32 %v1844, 16
      %v2180 = vrot.slane %v2178, 7
      %v2181 = vrot.slane %v2180, 4
      %v2183 = vshrl.u32 %v1845, 16
      %v2185 = vrot.slane %v2183, 7
      %v2186 = vshll.u32 %v1845, 16
      %v2188 = vor.u32 %v2185, %v2186
      %v2189 = vsel %vm640, %v2181, %v2188
      %v2190 = vrot.slane %v2185, 4
      %v2192 = vshrl.u32 %v1846, 16
      %v2194 = vrot.slane %v2192, 7
      %v2195 = vshll.u32 %v1846, 16
      %v2197 = vor.u32 %v2194, %v2195
      %v2198 = vsel %vm640, %v2190, %v2197
      %v2199 = vunpack.c.l.b16 %v1859
      %v2200 = vunpack.c.l.b16 %v1868
      %v2201 = vunpack.c.l.b16 %v1881
      %v2202 = vunpack.c.l.b16 %v1890
      %v2203 = vunpack.c.l.b16 %v1903
      %v2204 = vunpack.c.l.b16 %v1912
      %v2205 = vunpack.c.l.b16 %v1925
      %v2206 = vunpack.c.l.b16 %v1934
      %v2207 = vunpack.c.l.b16 %v1947
      %v2208 = vunpack.c.l.b16 %v1956
      %v2209 = vunpack.c.l.b16 %v1969
      %v2210 = vunpack.c.l.b16 %v1978
      %v2211 = vunpack.c.l.b16 %v1991
      %v2212 = vunpack.c.l.b16 %v2000
      %v2213 = vunpack.c.l.b16 %v2013
      %v2214 = vunpack.c.l.b16 %v2022
      %v2215 = vunpack.c.l.b16 %v2035
      %v2216 = vunpack.c.l.b16 %v2044
      %v2217 = vunpack.c.l.b16 %v2057
      %v2218 = vunpack.c.l.b16 %v2066
      %v2219 = vunpack.c.l.b16 %v2079
      %v2220 = vunpack.c.l.b16 %v2088
      %v2221 = vunpack.c.l.b16 %v2101
      %v2222 = vunpack.c.l.b16 %v2110
      %v2223 = vunpack.c.l.b16 %v2123
      %v2224 = vunpack.c.l.b16 %v2132
      %v2225 = vunpack.c.l.b16 %v2145
      %v2226 = vunpack.c.l.b16 %v2154
      %v2227 = vunpack.c.l.b16 %v2167
      %v2228 = vunpack.c.l.b16 %v2176
      %v2229 = vunpack.c.l.b16 %v2189
      %v2230 = vunpack.c.l.b16 %v2198
      %v2231 = vpack.c.b16 %v2200, %v2199
      %v2232 = vpack.c.b16 %v2202, %v2201
      %v2233 = vpack.c.b16 %v2204, %v2203
      %v2234 = vpack.c.b16 %v2206, %v2205
      %v2235 = vpack.c.b16 %v2208, %v2207
      %v2236 = vpack.c.b16 %v2210, %v2209
      %v2237 = vpack.c.b16 %v2212, %v2211
      %v2238 = vpack.c.b16 %v2214, %v2213
      %v2239 = vpack.c.b16 %v2216, %v2215
      %v2240 = vpack.c.b16 %v2218, %v2217
      %v2241 = vpack.c.b16 %v2220, %v2219
      %v2242 = vpack.c.b16 %v2222, %v2221
      %v2243 = vpack.c.b16 %v2224, %v2223
      %v2244 = vpack.c.b16 %v2226, %v2225
      %v2245 = vpack.c.b16 %v2228, %v2227
      %v2246 = vpack.c.b16 %v2230, %v2229
      %2247 = vrot.lane.b32.xlu0 %v2231, 12
      %v2248 = vpop.permute.xlu0 %2247
      %2249 = vrot.lane.b32.xlu0 %v2232, 12
      %v2250 = vpop.permute.xlu0 %2249
      %2251 = vrot.lane.b32.xlu0 %v2233, 12
      %v2252 = vpop.permute.xlu0 %2251
      %2253 = vrot.lane.b32.xlu0 %v2234, 12
      %v2254 = vpop.permute.xlu0 %2253
      %2255 = vrot.lane.b32.xlu0 %v2235, 12
      %v2256 = vpop.permute.xlu0 %2255
      %2257 = vrot.lane.b32.xlu0 %v2236, 12
      %v2258 = vpop.permute.xlu0 %2257
      %2259 = vrot.lane.b32.xlu0 %v2237, 12
      %v2260 = vpop.permute.xlu0 %2259
      %2261 = vrot.lane.b32.xlu0 %v2238, 12
      %v2262 = vpop.permute.xlu0 %2261
      %2263 = vrot.lane.b32.xlu0 %v2239, 12
      %v2264 = vpop.permute.xlu0 %2263
      %2265 = vrot.lane.b32.xlu0 %v2240, 12
      %v2266 = vpop.permute.xlu0 %2265
      %2267 = vrot.lane.b32.xlu0 %v2241, 12
      %v2268 = vpop.permute.xlu0 %2267
      %2269 = vrot.lane.b32.xlu0 %v2242, 12
      %v2270 = vpop.permute.xlu0 %2269
      %2271 = vrot.lane.b32.xlu0 %v2243, 12
      %v2272 = vpop.permute.xlu0 %2271
      %2273 = vrot.lane.b32.xlu0 %v2244, 12
      %v2274 = vpop.permute.xlu0 %2273
      %2275 = vrot.lane.b32.xlu0 %v2245, 12
      %v2276 = vpop.permute.xlu0 %2275
      %2277 = vrot.lane.b32.xlu0 %v2246, 12
      %v2278 = vpop.permute.xlu0 %2277
      %vm2295 = vcmask 130144
      %2296 = vst.msk [vmem:[#allocation3] sm:$0xff] %vm2295, %v2248
      %2297 = vst.msk [vmem:[#allocation3 + $0x8] sm:$0xff] %vm2295, %v2250
      %2298 = vst.msk [vmem:[#allocation3 + $0x10] sm:$0xff] %vm2295, %v2252
      %2299 = vst.msk [vmem:[#allocation3 + $0x18] sm:$0xff] %vm2295, %v2254
      %2300 = vst.msk [vmem:[#allocation3 + $0x20] sm:$0xff] %vm2295, %v2256
      %2301 = vst.msk [vmem:[#allocation3 + $0x28] sm:$0xff] %vm2295, %v2258
      %2302 = vst.msk [vmem:[#allocation3 + $0x30] sm:$0xff] %vm2295, %v2260
      %2303 = vst.msk [vmem:[#allocation3 + $0x38] sm:$0xff] %vm2295, %v2262
      %2304 = vst.msk [vmem:[#allocation3 + $0x40] sm:$0xff] %vm2295, %v2264
      %2305 = vst.msk [vmem:[#allocation3 + $0x48] sm:$0xff] %vm2295, %v2266
      %2306 = vst.msk [vmem:[#allocation3 + $0x50] sm:$0xff] %vm2295, %v2268
      %2307 = vst.msk [vmem:[#allocation3 + $0x58] sm:$0xff] %vm2295, %v2270
      %2308 = vst.msk [vmem:[#allocation3 + $0x60] sm:$0xff] %vm2295, %v2272
      %2309 = vst.msk [vmem:[#allocation3 + $0x68] sm:$0xff] %vm2295, %v2274
      %2310 = vst.msk [vmem:[#allocation3 + $0x70] sm:$0xff] %vm2295, %v2276
      %2311 = vst.msk [vmem:[#allocation3 + $0x78] sm:$0xff] %vm2295, %v2278
      %v2312 = vld [vmem:[%s331 + $0x8] sm:$0xf]
      %v2313 = vld [vmem:[%s331 + $0xc] sm:$0xf]
      %v2314 = vld [vmem:[%s331 + $0x1c] sm:$0xf]
      %v2315 = vld [vmem:[%s331 + $0x20] sm:$0xf]
      %v2316 = vld [vmem:[%s331 + $0x30] sm:$0xf]
      %v2317 = vld [vmem:[%s331 + $0x34] sm:$0xf]
      %v2318 = vld [vmem:[%s331 + $0x44] sm:$0xf]
      %v2319 = vld [vmem:[%s331 + $0x48] sm:$0xf]
      %v2320 = vld [vmem:[%s331 + $0x58] sm:$0xf]
      %v2321 = vld [vmem:[%s331 + $0x5c] sm:$0xf]
      %v2322 = vld [vmem:[%s331 + $0x6c] sm:$0xf]
      %v2323 = vld [vmem:[%s331 + $0x70] sm:$0xf]
      %v2324 = vld [vmem:[%s331 + $0x80] sm:$0xf]
      %v2325 = vld [vmem:[%s331 + $0x84] sm:$0xf]
      %v2326 = vld [vmem:[%s331 + $0x94] sm:$0xf]
      %v2327 = vld [vmem:[%s331 + $0x98] sm:$0xf]
      %v2328 = vld [vmem:[%s331 + $0xa8] sm:$0xf]
      %v2329 = vld [vmem:[%s331 + $0xac] sm:$0xf]
      %v2330 = vld [vmem:[%s331 + $0xbc] sm:$0xf]
      %v2331 = vld [vmem:[%s331 + $0xc0] sm:$0xf]
      %v2332 = vld [vmem:[%s331 + $0xd0] sm:$0xf]
      %v2333 = vld [vmem:[%s331 + $0xd4] sm:$0xf]
      %v2334 = vld [vmem:[%s331 + $0xe4] sm:$0xf]
      %v2335 = vld [vmem:[%s331 + $0xe8] sm:$0xf]
      %v2336 = vld [vmem:[%s331 + $0xf8] sm:$0xf]
      %v2337 = vld [vmem:[%s331 + $0xfc] sm:$0xf]
      %v2338 = vld [vmem:[%s331 + $0x10c] sm:$0xf]
      %v2339 = vld [vmem:[%s331 + $0x110] sm:$0xf]
      %v2340 = vld [vmem:[%s331 + $0x120] sm:$0xf]
      %v2341 = vld [vmem:[%s331 + $0x124] sm:$0xf]
      %v2342 = vld [vmem:[%s331 + $0x134] sm:$0xf]
      %v2343 = vld [vmem:[%s331 + $0x138] sm:$0xf]
      %v2376 = vunpack.c.l.b16 %v2312
      %v2377 = vunpack.c.l.b16 %v2313
      %v2378 = vunpack.c.l.b16 %v2314
      %v2379 = vunpack.c.l.b16 %v2315
      %v2380 = vunpack.c.l.b16 %v2316
      %v2381 = vunpack.c.l.b16 %v2317
      %v2382 = vunpack.c.l.b16 %v2318
      %v2383 = vunpack.c.l.b16 %v2319
      %v2384 = vunpack.c.l.b16 %v2320
      %v2385 = vunpack.c.l.b16 %v2321
      %v2386 = vunpack.c.l.b16 %v2322
      %v2387 = vunpack.c.l.b16 %v2323
      %v2388 = vunpack.c.l.b16 %v2324
      %v2389 = vunpack.c.l.b16 %v2325
      %v2390 = vunpack.c.l.b16 %v2326
      %v2391 = vunpack.c.l.b16 %v2327
      %v2392 = vunpack.c.l.b16 %v2328
      %v2393 = vunpack.c.l.b16 %v2329
      %v2394 = vunpack.c.l.b16 %v2330
      %v2395 = vunpack.c.l.b16 %v2331
      %v2396 = vunpack.c.l.b16 %v2332
      %v2397 = vunpack.c.l.b16 %v2333
      %v2398 = vunpack.c.l.b16 %v2334
      %v2399 = vunpack.c.l.b16 %v2335
      %v2400 = vunpack.c.l.b16 %v2336
      %v2401 = vunpack.c.l.b16 %v2337
      %v2402 = vunpack.c.l.b16 %v2338
      %v2403 = vunpack.c.l.b16 %v2339
      %v2404 = vunpack.c.l.b16 %v2340
      %v2405 = vunpack.c.l.b16 %v2341
      %v2406 = vunpack.c.l.b16 %v2342
      %v2407 = vunpack.c.l.b16 %v2343
      %v2408 = vpack.c.b16 %v2377, %v2376
      %v2409 = vpack.c.b16 %v2379, %v2378
      %v2410 = vpack.c.b16 %v2381, %v2380
      %v2411 = vpack.c.b16 %v2383, %v2382
      %v2412 = vpack.c.b16 %v2385, %v2384
      %v2413 = vpack.c.b16 %v2387, %v2386
      %v2414 = vpack.c.b16 %v2389, %v2388
      %v2415 = vpack.c.b16 %v2391, %v2390
      %v2416 = vpack.c.b16 %v2393, %v2392
      %v2417 = vpack.c.b16 %v2395, %v2394
      %v2418 = vpack.c.b16 %v2397, %v2396
      %v2419 = vpack.c.b16 %v2399, %v2398
      %v2420 = vpack.c.b16 %v2401, %v2400
      %v2421 = vpack.c.b16 %v2403, %v2402
      %v2422 = vpack.c.b16 %v2405, %v2404
      %v2423 = vpack.c.b16 %v2407, %v2406
      %2424 = vrot.lane.b32.xlu0 %v2408, 16
      %v2425 = vpop.permute.xlu0 %2424
      %2426 = vrot.lane.b32.xlu0 %v2409, 16
      %v2427 = vpop.permute.xlu0 %2426
      %2428 = vrot.lane.b32.xlu0 %v2410, 16
      %v2429 = vpop.permute.xlu0 %2428
      %2430 = vrot.lane.b32.xlu0 %v2411, 16
      %v2431 = vpop.permute.xlu0 %2430
      %2432 = vrot.lane.b32.xlu0 %v2412, 16
      %v2433 = vpop.permute.xlu0 %2432
      %2434 = vrot.lane.b32.xlu0 %v2413, 16
      %v2435 = vpop.permute.xlu0 %2434
      %2436 = vrot.lane.b32.xlu0 %v2414, 16
      %v2437 = vpop.permute.xlu0 %2436
      %2438 = vrot.lane.b32.xlu0 %v2415, 16
      %v2439 = vpop.permute.xlu0 %2438
      %2440 = vrot.lane.b32.xlu0 %v2416, 16
      %v2441 = vpop.permute.xlu0 %2440
      %2442 = vrot.lane.b32.xlu0 %v2417, 16
      %v2443 = vpop.permute.xlu0 %2442
      %2444 = vrot.lane.b32.xlu0 %v2418, 16
      %v2445 = vpop.permute.xlu0 %2444
      %2446 = vrot.lane.b32.xlu0 %v2419, 16
      %v2447 = vpop.permute.xlu0 %2446
      %2448 = vrot.lane.b32.xlu0 %v2420, 16
      %v2449 = vpop.permute.xlu0 %2448
      %2450 = vrot.lane.b32.xlu0 %v2421, 16
      %v2451 = vpop.permute.xlu0 %2450
      %2452 = vrot.lane.b32.xlu0 %v2422, 16
      %v2453 = vpop.permute.xlu0 %2452
      %2454 = vrot.lane.b32.xlu0 %v2423, 16
      %v2455 = vpop.permute.xlu0 %2454
      %vm2472 = vcmask 162944
      %2473 = vst.msk [vmem:[#allocation3] sm:$0xff] %vm2472, %v2425
      %2474 = vst.msk [vmem:[#allocation3 + $0x8] sm:$0xff] %vm2472, %v2427
      %2475 = vst.msk [vmem:[#allocation3 + $0x10] sm:$0xff] %vm2472, %v2429
      %2476 = vst.msk [vmem:[#allocation3 + $0x18] sm:$0xff] %vm2472, %v2431
      %2477 = vst.msk [vmem:[#allocation3 + $0x20] sm:$0xff] %vm2472, %v2433
      %2478 = vst.msk [vmem:[#allocation3 + $0x28] sm:$0xff] %vm2472, %v2435
      %2479 = vst.msk [vmem:[#allocation3 + $0x30] sm:$0xff] %vm2472, %v2437
      %2480 = vst.msk [vmem:[#allocation3 + $0x38] sm:$0xff] %vm2472, %v2439
      %2481 = vst.msk [vmem:[#allocation3 + $0x40] sm:$0xff] %vm2472, %v2441
      %2482 = vst.msk [vmem:[#allocation3 + $0x48] sm:$0xff] %vm2472, %v2443
      %2483 = vst.msk [vmem:[#allocation3 + $0x50] sm:$0xff] %vm2472, %v2445
      %2484 = vst.msk [vmem:[#allocation3 + $0x58] sm:$0xff] %vm2472, %v2447
      %2485 = vst.msk [vmem:[#allocation3 + $0x60] sm:$0xff] %vm2472, %v2449
      %2486 = vst.msk [vmem:[#allocation3 + $0x68] sm:$0xff] %vm2472, %v2451
      %2487 = vst.msk [vmem:[#allocation3 + $0x70] sm:$0xff] %vm2472, %v2453
      %2488 = vst.msk [vmem:[#allocation3 + $0x78] sm:$0xff] %vm2472, %v2455
      %v2489 = vld [vmem:[%s331 + $0x8] sm:$0xf]
      %v2490 = vld [vmem:[%s331 + $0xc] sm:$0xf]
      %v2491 = vld [vmem:[%s331 + $0x10] sm:$0x1]
      %v2492 = vld [vmem:[%s331 + $0x1c] sm:$0xf]
      %v2493 = vld [vmem:[%s331 + $0x20] sm:$0xf]
      %v2494 = vld [vmem:[%s331 + $0x24] sm:$0x1]
      %v2495 = vld [vmem:[%s331 + $0x30] sm:$0xf]
      %v2496 = vld [vmem:[%s331 + $0x34] sm:$0xf]
      %v2497 = vld [vmem:[%s331 + $0x38] sm:$0x1]
      %v2498 = vld [vmem:[%s331 + $0x44] sm:$0xf]
      %v2499 = vld [vmem:[%s331 + $0x48] sm:$0xf]
      %v2500 = vld [vmem:[%s331 + $0x4c] sm:$0x1]
      %v2501 = vld [vmem:[%s331 + $0x58] sm:$0xf]
      %v2502 = vld [vmem:[%s331 + $0x5c] sm:$0xf]
      %v2503 = vld [vmem:[%s331 + $0x60] sm:$0x1]
      %v2504 = vld [vmem:[%s331 + $0x6c] sm:$0xf]
      %v2505 = vld [vmem:[%s331 + $0x70] sm:$0xf]
      %v2506 = vld [vmem:[%s331 + $0x74] sm:$0x1]
      %v2507 = vld [vmem:[%s331 + $0x80] sm:$0xf]
      %v2508 = vld [vmem:[%s331 + $0x84] sm:$0xf]
      %v2509 = vld [vmem:[%s331 + $0x88] sm:$0x1]
      %v2510 = vld [vmem:[%s331 + $0x94] sm:$0xf]
      %v2511 = vld [vmem:[%s331 + $0x98] sm:$0xf]
      %v2512 = vld [vmem:[%s331 + $0x9c] sm:$0x1]
      %v2513 = vld [vmem:[%s331 + $0xa8] sm:$0xf]
      %v2514 = vld [vmem:[%s331 + $0xac] sm:$0xf]
      %v2515 = vld [vmem:[%s331 + $0xb0] sm:$0x1]
      %v2516 = vld [vmem:[%s331 + $0xbc] sm:$0xf]
      %v2517 = vld [vmem:[%s331 + $0xc0] sm:$0xf]
      %v2518 = vld [vmem:[%s331 + $0xc4] sm:$0x1]
      %v2519 = vld [vmem:[%s331 + $0xd0] sm:$0xf]
      %v2520 = vld [vmem:[%s331 + $0xd4] sm:$0xf]
      %v2521 = vld [vmem:[%s331 + $0xd8] sm:$0x1]
      %v2522 = vld [vmem:[%s331 + $0xe4] sm:$0xf]
      %v2523 = vld [vmem:[%s331 + $0xe8] sm:$0xf]
      %v2524 = vld [vmem:[%s331 + $0xec] sm:$0x1]
      %v2525 = vld [vmem:[%s331 + $0xf8] sm:$0xf]
      %v2526 = vld [vmem:[%s331 + $0xfc] sm:$0xf]
      %v2527 = vld [vmem:[%s331 + $0x100] sm:$0x1]
      %v2528 = vld [vmem:[%s331 + $0x10c] sm:$0xf]
      %v2529 = vld [vmem:[%s331 + $0x110] sm:$0xf]
      %v2530 = vld [vmem:[%s331 + $0x114] sm:$0x1]
      %v2531 = vld [vmem:[%s331 + $0x120] sm:$0xf]
      %v2532 = vld [vmem:[%s331 + $0x124] sm:$0xf]
      %v2533 = vld [vmem:[%s331 + $0x128] sm:$0x1]
      %v2534 = vld [vmem:[%s331 + $0x134] sm:$0xf]
      %v2535 = vld [vmem:[%s331 + $0x138] sm:$0xf]
      %v2536 = vld [vmem:[%s331 + $0x13c] sm:$0x1]
      %v2538 = vshrl.u32 %v2489, 16
      %v2540 = vrot.slane %v2538, 4
      %v2541 = vshll.u32 %v2489, 16
      %v2543 = vrot.slane %v2541, 5
      %v2544 = vor.u32 %v2540, %v2543
      %v2545 = vrot.slane %v2544, 4
      %v2547 = vshll.u32 %v2490, 16
      %v2549 = vrot.slane %v2547, 5
      %v2550 = vsel %vm1301, %v2545, %v2549
      %v2551 = vshrl.u32 %v2490, 16
      %v2553 = vrot.slane %v2551, 4
      %v2554 = vor.u32 %v2553, %v2549
      %v2555 = vrot.slane %v2554, 4
      %v2557 = vshll.u32 %v2491, 16
      %v2559 = vrot.slane %v2557, 5
      %v2560 = vsel %vm1301, %v2555, %v2559
      %v2562 = vshrl.u32 %v2492, 16
      %v2564 = vrot.slane %v2562, 4
      %v2565 = vshll.u32 %v2492, 16
      %v2567 = vrot.slane %v2565, 5
      %v2568 = vor.u32 %v2564, %v2567
      %v2569 = vrot.slane %v2568, 4
      %v2571 = vshll.u32 %v2493, 16
      %v2573 = vrot.slane %v2571, 5
      %v2574 = vsel %vm1301, %v2569, %v2573
      %v2575 = vshrl.u32 %v2493, 16
      %v2577 = vrot.slane %v2575, 4
      %v2578 = vor.u32 %v2577, %v2573
      %v2579 = vrot.slane %v2578, 4
      %v2581 = vshll.u32 %v2494, 16
      %v2583 = vrot.slane %v2581, 5
      %v2584 = vsel %vm1301, %v2579, %v2583
      %v2586 = vshrl.u32 %v2495, 16
      %v2588 = vrot.slane %v2586, 4
      %v2589 = vshll.u32 %v2495, 16
      %v2591 = vrot.slane %v2589, 5
      %v2592 = vor.u32 %v2588, %v2591
      %v2593 = vrot.slane %v2592, 4
      %v2595 = vshll.u32 %v2496, 16
      %v2597 = vrot.slane %v2595, 5
      %v2598 = vsel %vm1301, %v2593, %v2597
      %v2599 = vshrl.u32 %v2496, 16
      %v2601 = vrot.slane %v2599, 4
      %v2602 = vor.u32 %v2601, %v2597
      %v2603 = vrot.slane %v2602, 4
      %v2605 = vshll.u32 %v2497, 16
      %v2607 = vrot.slane %v2605, 5
      %v2608 = vsel %vm1301, %v2603, %v2607
      %v2610 = vshrl.u32 %v2498, 16
      %v2612 = vrot.slane %v2610, 4
      %v2613 = vshll.u32 %v2498, 16
      %v2615 = vrot.slane %v2613, 5
      %v2616 = vor.u32 %v2612, %v2615
      %v2617 = vrot.slane %v2616, 4
      %v2619 = vshll.u32 %v2499, 16
      %v2621 = vrot.slane %v2619, 5
      %v2622 = vsel %vm1301, %v2617, %v2621
      %v2623 = vshrl.u32 %v2499, 16
      %v2625 = vrot.slane %v2623, 4
      %v2626 = vor.u32 %v2625, %v2621
      %v2627 = vrot.slane %v2626, 4
      %v2629 = vshll.u32 %v2500, 16
      %v2631 = vrot.slane %v2629, 5
      %v2632 = vsel %vm1301, %v2627, %v2631
      %v2634 = vshrl.u32 %v2501, 16
      %v2636 = vrot.slane %v2634, 4
      %v2637 = vshll.u32 %v2501, 16
      %v2639 = vrot.slane %v2637, 5
      %v2640 = vor.u32 %v2636, %v2639
      %v2641 = vrot.slane %v2640, 4
      %v2643 = vshll.u32 %v2502, 16
      %v2645 = vrot.slane %v2643, 5
      %v2646 = vsel %vm1301, %v2641, %v2645
      %v2647 = vshrl.u32 %v2502, 16
      %v2649 = vrot.slane %v2647, 4
      %v2650 = vor.u32 %v2649, %v2645
      %v2651 = vrot.slane %v2650, 4
      %v2653 = vshll.u32 %v2503, 16
      %v2655 = vrot.slane %v2653, 5
      %v2656 = vsel %vm1301, %v2651, %v2655
      %v2658 = vshrl.u32 %v2504, 16
      %v2660 = vrot.slane %v2658, 4
      %v2661 = vshll.u32 %v2504, 16
      %v2663 = vrot.slane %v2661, 5
      %v2664 = vor.u32 %v2660, %v2663
      %v2665 = vrot.slane %v2664, 4
      %v2667 = vshll.u32 %v2505, 16
      %v2669 = vrot.slane %v2667, 5
      %v2670 = vsel %vm1301, %v2665, %v2669
      %v2671 = vshrl.u32 %v2505, 16
      %v2673 = vrot.slane %v2671, 4
      %v2674 = vor.u32 %v2673, %v2669
      %v2675 = vrot.slane %v2674, 4
      %v2677 = vshll.u32 %v2506, 16
      %v2679 = vrot.slane %v2677, 5
      %v2680 = vsel %vm1301, %v2675, %v2679
      %v2682 = vshrl.u32 %v2507, 16
      %v2684 = vrot.slane %v2682, 4
      %v2685 = vshll.u32 %v2507, 16
      %v2687 = vrot.slane %v2685, 5
      %v2688 = vor.u32 %v2684, %v2687
      %v2689 = vrot.slane %v2688, 4
      %v2691 = vshll.u32 %v2508, 16
      %v2693 = vrot.slane %v2691, 5
      %v2694 = vsel %vm1301, %v2689, %v2693
      %v2695 = vshrl.u32 %v2508, 16
      %v2697 = vrot.slane %v2695, 4
      %v2698 = vor.u32 %v2697, %v2693
      %v2699 = vrot.slane %v2698, 4
      %v2701 = vshll.u32 %v2509, 16
      %v2703 = vrot.slane %v2701, 5
      %v2704 = vsel %vm1301, %v2699, %v2703
      %v2706 = vshrl.u32 %v2510, 16
      %v2708 = vrot.slane %v2706, 4
      %v2709 = vshll.u32 %v2510, 16
      %v2711 = vrot.slane %v2709, 5
      %v2712 = vor.u32 %v2708, %v2711
      %v2713 = vrot.slane %v2712, 4
      %v2715 = vshll.u32 %v2511, 16
      %v2717 = vrot.slane %v2715, 5
      %v2718 = vsel %vm1301, %v2713, %v2717
      %v2719 = vshrl.u32 %v2511, 16
      %v2721 = vrot.slane %v2719, 4
      %v2722 = vor.u32 %v2721, %v2717
      %v2723 = vrot.slane %v2722, 4
      %v2725 = vshll.u32 %v2512, 16
      %v2727 = vrot.slane %v2725, 5
      %v2728 = vsel %vm1301, %v2723, %v2727
      %v2730 = vshrl.u32 %v2513, 16
      %v2732 = vrot.slane %v2730, 4
      %v2733 = vshll.u32 %v2513, 16
      %v2735 = vrot.slane %v2733, 5
      %v2736 = vor.u32 %v2732, %v2735
      %v2737 = vrot.slane %v2736, 4
      %v2739 = vshll.u32 %v2514, 16
      %v2741 = vrot.slane %v2739, 5
      %v2742 = vsel %vm1301, %v2737, %v2741
      %v2743 = vshrl.u32 %v2514, 16
      %v2745 = vrot.slane %v2743, 4
      %v2746 = vor.u32 %v2745, %v2741
      %v2747 = vrot.slane %v2746, 4
      %v2749 = vshll.u32 %v2515, 16
      %v2751 = vrot.slane %v2749, 5
      %v2752 = vsel %vm1301, %v2747, %v2751
      %v2754 = vshrl.u32 %v2516, 16
      %v2756 = vrot.slane %v2754, 4
      %v2757 = vshll.u32 %v2516, 16
      %v2759 = vrot.slane %v2757, 5
      %v2760 = vor.u32 %v2756, %v2759
      %v2761 = vrot.slane %v2760, 4
      %v2763 = vshll.u32 %v2517, 16
      %v2765 = vrot.slane %v2763, 5
      %v2766 = vsel %vm1301, %v2761, %v2765
      %v2767 = vshrl.u32 %v2517, 16
      %v2769 = vrot.slane %v2767, 4
      %v2770 = vor.u32 %v2769, %v2765
      %v2771 = vrot.slane %v2770, 4
      %v2773 = vshll.u32 %v2518, 16
      %v2775 = vrot.slane %v2773, 5
      %v2776 = vsel %vm1301, %v2771, %v2775
      %v2778 = vshrl.u32 %v2519, 16
      %v2780 = vrot.slane %v2778, 4
      %v2781 = vshll.u32 %v2519, 16
      %v2783 = vrot.slane %v2781, 5
      %v2784 = vor.u32 %v2780, %v2783
      %v2785 = vrot.slane %v2784, 4
      %v2787 = vshll.u32 %v2520, 16
      %v2789 = vrot.slane %v2787, 5
      %v2790 = vsel %vm1301, %v2785, %v2789
      %v2791 = vshrl.u32 %v2520, 16
      %v2793 = vrot.slane %v2791, 4
      %v2794 = vor.u32 %v2793, %v2789
      %v2795 = vrot.slane %v2794, 4
      %v2797 = vshll.u32 %v2521, 16
      %v2799 = vrot.slane %v2797, 5
      %v2800 = vsel %vm1301, %v2795, %v2799
      %v2802 = vshrl.u32 %v2522, 16
      %v2804 = vrot.slane %v2802, 4
      %v2805 = vshll.u32 %v2522, 16
      %v2807 = vrot.slane %v2805, 5
      %v2808 = vor.u32 %v2804, %v2807
      %v2809 = vrot.slane %v2808, 4
      %v2811 = vshll.u32 %v2523, 16
      %v2813 = vrot.slane %v2811, 5
      %v2814 = vsel %vm1301, %v2809, %v2813
      %v2815 = vshrl.u32 %v2523, 16
      %v2817 = vrot.slane %v2815, 4
      %v2818 = vor.u32 %v2817, %v2813
      %v2819 = vrot.slane %v2818, 4
      %v2821 = vshll.u32 %v2524, 16
      %v2823 = vrot.slane %v2821, 5
      %v2824 = vsel %vm1301, %v2819, %v2823
      %v2826 = vshrl.u32 %v2525, 16
      %v2828 = vrot.slane %v2826, 4
      %v2829 = vshll.u32 %v2525, 16
      %v2831 = vrot.slane %v2829, 5
      %v2832 = vor.u32 %v2828, %v2831
      %v2833 = vrot.slane %v2832, 4
      %v2835 = vshll.u32 %v2526, 16
      %v2837 = vrot.slane %v2835, 5
      %v2838 = vsel %vm1301, %v2833, %v2837
      %v2839 = vshrl.u32 %v2526, 16
      %v2841 = vrot.slane %v2839, 4
      %v2842 = vor.u32 %v2841, %v2837
      %v2843 = vrot.slane %v2842, 4
      %v2845 = vshll.u32 %v2527, 16
      %v2847 = vrot.slane %v2845, 5
      %v2848 = vsel %vm1301, %v2843, %v2847
      %v2850 = vshrl.u32 %v2528, 16
      %v2852 = vrot.slane %v2850, 4
      %v2853 = vshll.u32 %v2528, 16
      %v2855 = vrot.slane %v2853, 5
      %v2856 = vor.u32 %v2852, %v2855
      %v2857 = vrot.slane %v2856, 4
      %v2859 = vshll.u32 %v2529, 16
      %v2861 = vrot.slane %v2859, 5
      %v2862 = vsel %vm1301, %v2857, %v2861
      %v2863 = vshrl.u32 %v2529, 16
      %v2865 = vrot.slane %v2863, 4
      %v2866 = vor.u32 %v2865, %v2861
      %v2867 = vrot.slane %v2866, 4
      %v2869 = vshll.u32 %v2530, 16
      %v2871 = vrot.slane %v2869, 5
      %v2872 = vsel %vm1301, %v2867, %v2871
      %v2874 = vshrl.u32 %v2531, 16
      %v2876 = vrot.slane %v2874, 4
      %v2877 = vshll.u32 %v2531, 16
      %v2879 = vrot.slane %v2877, 5
      %v2880 = vor.u32 %v2876, %v2879
      %v2881 = vrot.slane %v2880, 4
      %v2883 = vshll.u32 %v2532, 16
      %v2885 = vrot.slane %v2883, 5
      %v2886 = vsel %vm1301, %v2881, %v2885
      %v2887 = vshrl.u32 %v2532, 16
      %v2889 = vrot.slane %v2887, 4
      %v2890 = vor.u32 %v2889, %v2885
      %v2891 = vrot.slane %v2890, 4
      %v2893 = vshll.u32 %v2533, 16
      %v2895 = vrot.slane %v2893, 5
      %v2896 = vsel %vm1301, %v2891, %v2895
      %v2898 = vshrl.u32 %v2534, 16
      %v2900 = vrot.slane %v2898, 4
      %v2901 = vshll.u32 %v2534, 16
      %v2903 = vrot.slane %v2901, 5
      %v2904 = vor.u32 %v2900, %v2903
      %v2905 = vrot.slane %v2904, 4
      %v2907 = vshll.u32 %v2535, 16
      %v2909 = vrot.slane %v2907, 5
      %v2910 = vsel %vm1301, %v2905, %v2909
      %v2911 = vshrl.u32 %v2535, 16
      %v2913 = vrot.slane %v2911, 4
      %v2914 = vor.u32 %v2913, %v2909
      %v2915 = vrot.slane %v2914, 4
      %v2917 = vshll.u32 %v2536, 16
      %v2919 = vrot.slane %v2917, 5
      %v2920 = vsel %vm1301, %v2915, %v2919
      %v2921 = vunpack.c.l.b16 %v2550
      %v2922 = vunpack.c.l.b16 %v2560
      %v2923 = vunpack.c.l.b16 %v2574
      %v2924 = vunpack.c.l.b16 %v2584
      %v2925 = vunpack.c.l.b16 %v2598
      %v2926 = vunpack.c.l.b16 %v2608
      %v2927 = vunpack.c.l.b16 %v2622
      %v2928 = vunpack.c.l.b16 %v2632
      %v2929 = vunpack.c.l.b16 %v2646
      %v2930 = vunpack.c.l.b16 %v2656
      %v2931 = vunpack.c.l.b16 %v2670
      %v2932 = vunpack.c.l.b16 %v2680
      %v2933 = vunpack.c.l.b16 %v2694
      %v2934 = vunpack.c.l.b16 %v2704
      %v2935 = vunpack.c.l.b16 %v2718
      %v2936 = vunpack.c.l.b16 %v2728
      %v2937 = vunpack.c.l.b16 %v2742
      %v2938 = vunpack.c.l.b16 %v2752
      %v2939 = vunpack.c.l.b16 %v2766
      %v2940 = vunpack.c.l.b16 %v2776
      %v2941 = vunpack.c.l.b16 %v2790
      %v2942 = vunpack.c.l.b16 %v2800
      %v2943 = vunpack.c.l.b16 %v2814
      %v2944 = vunpack.c.l.b16 %v2824
      %v2945 = vunpack.c.l.b16 %v2838
      %v2946 = vunpack.c.l.b16 %v2848
      %v2947 = vunpack.c.l.b16 %v2862
      %v2948 = vunpack.c.l.b16 %v2872
      %v2949 = vunpack.c.l.b16 %v2886
      %v2950 = vunpack.c.l.b16 %v2896
      %v2951 = vunpack.c.l.b16 %v2910
      %v2952 = vunpack.c.l.b16 %v2920
      %v2953 = vpack.c.b16 %v2922, %v2921
      %v2954 = vpack.c.b16 %v2924, %v2923
      %v2955 = vpack.c.b16 %v2926, %v2925
      %v2956 = vpack.c.b16 %v2928, %v2927
      %v2957 = vpack.c.b16 %v2930, %v2929
      %v2958 = vpack.c.b16 %v2932, %v2931
      %v2959 = vpack.c.b16 %v2934, %v2933
      %v2960 = vpack.c.b16 %v2936, %v2935
      %v2961 = vpack.c.b16 %v2938, %v2937
      %v2962 = vpack.c.b16 %v2940, %v2939
      %v2963 = vpack.c.b16 %v2942, %v2941
      %v2964 = vpack.c.b16 %v2944, %v2943
      %v2965 = vpack.c.b16 %v2946, %v2945
      %v2966 = vpack.c.b16 %v2948, %v2947
      %v2967 = vpack.c.b16 %v2950, %v2949
      %v2968 = vpack.c.b16 %v2952, %v2951
      %2969 = vrot.lane.b32.xlu0 %v2953, 20
      %v2970 = vpop.permute.xlu0 %2969
      %2971 = vrot.lane.b32.xlu0 %v2954, 20
      %v2972 = vpop.permute.xlu0 %2971
      %2973 = vrot.lane.b32.xlu0 %v2955, 20
      %v2974 = vpop.permute.xlu0 %2973
      %2975 = vrot.lane.b32.xlu0 %v2956, 20
      %v2976 = vpop.permute.xlu0 %2975
      %2977 = vrot.lane.b32.xlu0 %v2957, 20
      %v2978 = vpop.permute.xlu0 %2977
      %2979 = vrot.lane.b32.xlu0 %v2958, 20
      %v2980 = vpop.permute.xlu0 %2979
      %2981 = vrot.lane.b32.xlu0 %v2959, 20
      %v2982 = vpop.permute.xlu0 %2981
      %2983 = vrot.lane.b32.xlu0 %v2960, 20
      %v2984 = vpop.permute.xlu0 %2983
      %2985 = vrot.lane.b32.xlu0 %v2961, 20
      %v2986 = vpop.permute.xlu0 %2985
      %2987 = vrot.lane.b32.xlu0 %v2962, 20
      %v2988 = vpop.permute.xlu0 %2987
      %2989 = vrot.lane.b32.xlu0 %v2963, 20
      %v2990 = vpop.permute.xlu0 %2989
      %2991 = vrot.lane.b32.xlu0 %v2964, 20
      %v2992 = vpop.permute.xlu0 %2991
      %2993 = vrot.lane.b32.xlu0 %v2965, 20
      %v2994 = vpop.permute.xlu0 %2993
      %2995 = vrot.lane.b32.xlu0 %v2966, 20
      %v2996 = vpop.permute.xlu0 %2995
      %2997 = vrot.lane.b32.xlu0 %v2967, 20
      %v2998 = vpop.permute.xlu0 %2997
      %2999 = vrot.lane.b32.xlu0 %v2968, 20
      %v3000 = vpop.permute.xlu0 %2999
      %vm3017 = vcmask 195744
      %3018 = vst.msk [vmem:[#allocation3] sm:$0xff] %vm3017, %v2970
      %3019 = vst.msk [vmem:[#allocation3 + $0x8] sm:$0xff] %vm3017, %v2972
      %3020 = vst.msk [vmem:[#allocation3 + $0x10] sm:$0xff] %vm3017, %v2974
      %3021 = vst.msk [vmem:[#allocation3 + $0x18] sm:$0xff] %vm3017, %v2976
      %3022 = vst.msk [vmem:[#allocation3 + $0x20] sm:$0xff] %vm3017, %v2978
      %3023 = vst.msk [vmem:[#allocation3 + $0x28] sm:$0xff] %vm3017, %v2980
      %3024 = vst.msk [vmem:[#allocation3 + $0x30] sm:$0xff] %vm3017, %v2982
      %3025 = vst.msk [vmem:[#allocation3 + $0x38] sm:$0xff] %vm3017, %v2984
      %3026 = vst.msk [vmem:[#allocation3 + $0x40] sm:$0xff] %vm3017, %v2986
      %3027 = vst.msk [vmem:[#allocation3 + $0x48] sm:$0xff] %vm3017, %v2988
      %3028 = vst.msk [vmem:[#allocation3 + $0x50] sm:$0xff] %vm3017, %v2990
      %3029 = vst.msk [vmem:[#allocation3 + $0x58] sm:$0xff] %vm3017, %v2992
      %3030 = vst.msk [vmem:[#allocation3 + $0x60] sm:$0xff] %vm3017, %v2994
      %3031 = vst.msk [vmem:[#allocation3 + $0x68] sm:$0xff] %vm3017, %v2996
      %3032 = vst.msk [vmem:[#allocation3 + $0x70] sm:$0xff] %vm3017, %v2998
      %3033 = vst.msk [vmem:[#allocation3 + $0x78] sm:$0xff] %vm3017, %v3000
      %s3034 = scalar_lea.vmem [#allocation2], 40
      %v3035 = vld [vmem:[%s3034 + $0x4] sm:$0x8]
      %v3036 = vld [vmem:[%s3034 + $0x8] sm:$0xf]
      %v3037 = vld [vmem:[%s3034 + $0xc] sm:$0xf]
      %v3038 = vld [vmem:[%s3034 + $0x18] sm:$0x8]
      %v3039 = vld [vmem:[%s3034 + $0x1c] sm:$0xf]
      %v3040 = vld [vmem:[%s3034 + $0x20] sm:$0xf]
      %v3041 = vld [vmem:[%s3034 + $0x2c] sm:$0x8]
      %v3042 = vld [vmem:[%s3034 + $0x30] sm:$0xf]
      %v3043 = vld [vmem:[%s3034 + $0x34] sm:$0xf]
      %v3044 = vld [vmem:[%s3034 + $0x40] sm:$0x8]
      %v3045 = vld [vmem:[%s3034 + $0x44] sm:$0xf]
      %v3046 = vld [vmem:[%s3034 + $0x48] sm:$0xf]
      %v3047 = vld [vmem:[%s3034 + $0x54] sm:$0x8]
      %v3048 = vld [vmem:[%s3034 + $0x58] sm:$0xf]
      %v3049 = vld [vmem:[%s3034 + $0x5c] sm:$0xf]
      %v3050 = vld [vmem:[%s3034 + $0x68] sm:$0x8]
      %v3051 = vld [vmem:[%s3034 + $0x6c] sm:$0xf]
      %v3052 = vld [vmem:[%s3034 + $0x70] sm:$0xf]
      %v3053 = vld [vmem:[%s3034 + $0x7c] sm:$0x8]
      %v3054 = vld [vmem:[%s3034 + $0x80] sm:$0xf]
      %v3055 = vld [vmem:[%s3034 + $0x84] sm:$0xf]
      %v3056 = vld [vmem:[%s3034 + $0x90] sm:$0x8]
      %v3057 = vld [vmem:[%s3034 + $0x94] sm:$0xf]
      %v3058 = vld [vmem:[%s3034 + $0x98] sm:$0xf]
      %v3059 = vld [vmem:[%s3034 + $0xa4] sm:$0x8]
      %v3060 = vld [vmem:[%s3034 + $0xa8] sm:$0xf]
      %v3061 = vld [vmem:[%s3034 + $0xac] sm:$0xf]
      %v3062 = vld [vmem:[%s3034 + $0xb8] sm:$0x8]
      %v3063 = vld [vmem:[%s3034 + $0xbc] sm:$0xf]
      %v3064 = vld [vmem:[%s3034 + $0xc0] sm:$0xf]
      %v3065 = vld [vmem:[%s3034 + $0xcc] sm:$0x8]
      %v3066 = vld [vmem:[%s3034 + $0xd0] sm:$0xf]
      %v3067 = vld [vmem:[%s3034 + $0xd4] sm:$0xf]
      %v3068 = vld [vmem:[%s3034 + $0xe0] sm:$0x8]
      %v3069 = vld [vmem:[%s3034 + $0xe4] sm:$0xf]
      %v3070 = vld [vmem:[%s3034 + $0xe8] sm:$0xf]
      %v3071 = vld [vmem:[%s3034 + $0xf4] sm:$0x8]
      %v3072 = vld [vmem:[%s3034 + $0xf8] sm:$0xf]
      %v3073 = vld [vmem:[%s3034 + $0xfc] sm:$0xf]
      %v3074 = vld [vmem:[%s3034 + $0x108] sm:$0x8]
      %v3075 = vld [vmem:[%s3034 + $0x10c] sm:$0xf]
      %v3076 = vld [vmem:[%s3034 + $0x110] sm:$0xf]
      %v3077 = vld [vmem:[%s3034 + $0x11c] sm:$0x8]
      %v3078 = vld [vmem:[%s3034 + $0x120] sm:$0xf]
      %v3079 = vld [vmem:[%s3034 + $0x124] sm:$0xf]
      %v3080 = vld [vmem:[%s3034 + $0x130] sm:$0x8]
      %v3081 = vld [vmem:[%s3034 + $0x134] sm:$0xf]
      %v3082 = vld [vmem:[%s3034 + $0x138] sm:$0xf]
      %v3084 = vshrl.u32 %v3035, 16
      %v3086 = vrot.slane %v3084, 7
      %v3087 = vrot.slane %v3086, 4
      %v3089 = vshrl.u32 %v3036, 16
      %v3091 = vrot.slane %v3089, 7
      %v3092 = vshll.u32 %v3036, 16
      %v3094 = vor.u32 %v3091, %v3092
      %v3095 = vsel %vm640, %v3087, %v3094
      %v3096 = vrot.slane %v3091, 4
      %v3098 = vshrl.u32 %v3037, 16
      %v3100 = vrot.slane %v3098, 7
      %v3101 = vshll.u32 %v3037, 16
      %v3103 = vor.u32 %v3100, %v3101
      %v3104 = vsel %vm640, %v3096, %v3103
      %v3106 = vshrl.u32 %v3038, 16
      %v3108 = vrot.slane %v3106, 7
      %v3109 = vrot.slane %v3108, 4
      %v3111 = vshrl.u32 %v3039, 16
      %v3113 = vrot.slane %v3111, 7
      %v3114 = vshll.u32 %v3039, 16
      %v3116 = vor.u32 %v3113, %v3114
      %v3117 = vsel %vm640, %v3109, %v3116
      %v3118 = vrot.slane %v3113, 4
      %v3120 = vshrl.u32 %v3040, 16
      %v3122 = vrot.slane %v3120, 7
      %v3123 = vshll.u32 %v3040, 16
      %v3125 = vor.u32 %v3122, %v3123
      %v3126 = vsel %vm640, %v3118, %v3125
      %v3128 = vshrl.u32 %v3041, 16
      %v3130 = vrot.slane %v3128, 7
      %v3131 = vrot.slane %v3130, 4
      %v3133 = vshrl.u32 %v3042, 16
      %v3135 = vrot.slane %v3133, 7
      %v3136 = vshll.u32 %v3042, 16
      %v3138 = vor.u32 %v3135, %v3136
      %v3139 = vsel %vm640, %v3131, %v3138
      %v3140 = vrot.slane %v3135, 4
      %v3142 = vshrl.u32 %v3043, 16
      %v3144 = vrot.slane %v3142, 7
      %v3145 = vshll.u32 %v3043, 16
      %v3147 = vor.u32 %v3144, %v3145
      %v3148 = vsel %vm640, %v3140, %v3147
      %v3150 = vshrl.u32 %v3044, 16
      %v3152 = vrot.slane %v3150, 7
      %v3153 = vrot.slane %v3152, 4
      %v3155 = vshrl.u32 %v3045, 16
      %v3157 = vrot.slane %v3155, 7
      %v3158 = vshll.u32 %v3045, 16
      %v3160 = vor.u32 %v3157, %v3158
      %v3161 = vsel %vm640, %v3153, %v3160
      %v3162 = vrot.slane %v3157, 4
      %v3164 = vshrl.u32 %v3046, 16
      %v3166 = vrot.slane %v3164, 7
      %v3167 = vshll.u32 %v3046, 16
      %v3169 = vor.u32 %v3166, %v3167
      %v3170 = vsel %vm640, %v3162, %v3169
      %v3172 = vshrl.u32 %v3047, 16
      %v3174 = vrot.slane %v3172, 7
      %v3175 = vrot.slane %v3174, 4
      %v3177 = vshrl.u32 %v3048, 16
      %v3179 = vrot.slane %v3177, 7
      %v3180 = vshll.u32 %v3048, 16
      %v3182 = vor.u32 %v3179, %v3180
      %v3183 = vsel %vm640, %v3175, %v3182
      %v3184 = vrot.slane %v3179, 4
      %v3186 = vshrl.u32 %v3049, 16
      %v3188 = vrot.slane %v3186, 7
      %v3189 = vshll.u32 %v3049, 16
      %v3191 = vor.u32 %v3188, %v3189
      %v3192 = vsel %vm640, %v3184, %v3191
      %v3194 = vshrl.u32 %v3050, 16
      %v3196 = vrot.slane %v3194, 7
      %v3197 = vrot.slane %v3196, 4
      %v3199 = vshrl.u32 %v3051, 16
      %v3201 = vrot.slane %v3199, 7
      %v3202 = vshll.u32 %v3051, 16
      %v3204 = vor.u32 %v3201, %v3202
      %v3205 = vsel %vm640, %v3197, %v3204
      %v3206 = vrot.slane %v3201, 4
      %v3208 = vshrl.u32 %v3052, 16
      %v3210 = vrot.slane %v3208, 7
      %v3211 = vshll.u32 %v3052, 16
      %v3213 = vor.u32 %v3210, %v3211
      %v3214 = vsel %vm640, %v3206, %v3213
      %v3216 = vshrl.u32 %v3053, 16
      %v3218 = vrot.slane %v3216, 7
      %v3219 = vrot.slane %v3218, 4
      %v3221 = vshrl.u32 %v3054, 16
      %v3223 = vrot.slane %v3221, 7
      %v3224 = vshll.u32 %v3054, 16
      %v3226 = vor.u32 %v3223, %v3224
      %v3227 = vsel %vm640, %v3219, %v3226
      %v3228 = vrot.slane %v3223, 4
      %v3230 = vshrl.u32 %v3055, 16
      %v3232 = vrot.slane %v3230, 7
      %v3233 = vshll.u32 %v3055, 16
      %v3235 = vor.u32 %v3232, %v3233
      %v3236 = vsel %vm640, %v3228, %v3235
      %v3238 = vshrl.u32 %v3056, 16
      %v3240 = vrot.slane %v3238, 7
      %v3241 = vrot.slane %v3240, 4
      %v3243 = vshrl.u32 %v3057, 16
      %v3245 = vrot.slane %v3243, 7
      %v3246 = vshll.u32 %v3057, 16
      %v3248 = vor.u32 %v3245, %v3246
      %v3249 = vsel %vm640, %v3241, %v3248
      %v3250 = vrot.slane %v3245, 4
      %v3252 = vshrl.u32 %v3058, 16
      %v3254 = vrot.slane %v3252, 7
      %v3255 = vshll.u32 %v3058, 16
      %v3257 = vor.u32 %v3254, %v3255
      %v3258 = vsel %vm640, %v3250, %v3257
      %v3260 = vshrl.u32 %v3059, 16
      %v3262 = vrot.slane %v3260, 7
      %v3263 = vrot.slane %v3262, 4
      %v3265 = vshrl.u32 %v3060, 16
      %v3267 = vrot.slane %v3265, 7
      %v3268 = vshll.u32 %v3060, 16
      %v3270 = vor.u32 %v3267, %v3268
      %v3271 = vsel %vm640, %v3263, %v3270
      %v3272 = vrot.slane %v3267, 4
      %v3274 = vshrl.u32 %v3061, 16
      %v3276 = vrot.slane %v3274, 7
      %v3277 = vshll.u32 %v3061, 16
      %v3279 = vor.u32 %v3276, %v3277
      %v3280 = vsel %vm640, %v3272, %v3279
      %v3282 = vshrl.u32 %v3062, 16
      %v3284 = vrot.slane %v3282, 7
      %v3285 = vrot.slane %v3284, 4
      %v3287 = vshrl.u32 %v3063, 16
      %v3289 = vrot.slane %v3287, 7
      %v3290 = vshll.u32 %v3063, 16
      %v3292 = vor.u32 %v3289, %v3290
      %v3293 = vsel %vm640, %v3285, %v3292
      %v3294 = vrot.slane %v3289, 4
      %v3296 = vshrl.u32 %v3064, 16
      %v3298 = vrot.slane %v3296, 7
      %v3299 = vshll.u32 %v3064, 16
      %v3301 = vor.u32 %v3298, %v3299
      %v3302 = vsel %vm640, %v3294, %v3301
      %v3304 = vshrl.u32 %v3065, 16
      %v3306 = vrot.slane %v3304, 7
      %v3307 = vrot.slane %v3306, 4
      %v3309 = vshrl.u32 %v3066, 16
      %v3311 = vrot.slane %v3309, 7
      %v3312 = vshll.u32 %v3066, 16
      %v3314 = vor.u32 %v3311, %v3312
      %v3315 = vsel %vm640, %v3307, %v3314
      %v3316 = vrot.slane %v3311, 4
      %v3318 = vshrl.u32 %v3067, 16
      %v3320 = vrot.slane %v3318, 7
      %v3321 = vshll.u32 %v3067, 16
      %v3323 = vor.u32 %v3320, %v3321
      %v3324 = vsel %vm640, %v3316, %v3323
      %v3326 = vshrl.u32 %v3068, 16
      %v3328 = vrot.slane %v3326, 7
      %v3329 = vrot.slane %v3328, 4
      %v3331 = vshrl.u32 %v3069, 16
      %v3333 = vrot.slane %v3331, 7
      %v3334 = vshll.u32 %v3069, 16
      %v3336 = vor.u32 %v3333, %v3334
      %v3337 = vsel %vm640, %v3329, %v3336
      %v3338 = vrot.slane %v3333, 4
      %v3340 = vshrl.u32 %v3070, 16
      %v3342 = vrot.slane %v3340, 7
      %v3343 = vshll.u32 %v3070, 16
      %v3345 = vor.u32 %v3342, %v3343
      %v3346 = vsel %vm640, %v3338, %v3345
      %v3348 = vshrl.u32 %v3071, 16
      %v3350 = vrot.slane %v3348, 7
      %v3351 = vrot.slane %v3350, 4
      %v3353 = vshrl.u32 %v3072, 16
      %v3355 = vrot.slane %v3353, 7
      %v3356 = vshll.u32 %v3072, 16
      %v3358 = vor.u32 %v3355, %v3356
      %v3359 = vsel %vm640, %v3351, %v3358
      %v3360 = vrot.slane %v3355, 4
      %v3362 = vshrl.u32 %v3073, 16
      %v3364 = vrot.slane %v3362, 7
      %v3365 = vshll.u32 %v3073, 16
      %v3367 = vor.u32 %v3364, %v3365
      %v3368 = vsel %vm640, %v3360, %v3367
      %v3370 = vshrl.u32 %v3074, 16
      %v3372 = vrot.slane %v3370, 7
      %v3373 = vrot.slane %v3372, 4
      %v3375 = vshrl.u32 %v3075, 16
      %v3377 = vrot.slane %v3375, 7
      %v3378 = vshll.u32 %v3075, 16
      %v3380 = vor.u32 %v3377, %v3378
      %v3381 = vsel %vm640, %v3373, %v3380
      %v3382 = vrot.slane %v3377, 4
      %v3384 = vshrl.u32 %v3076, 16
      %v3386 = vrot.slane %v3384, 7
      %v3387 = vshll.u32 %v3076, 16
      %v3389 = vor.u32 %v3386, %v3387
      %v3390 = vsel %vm640, %v3382, %v3389
      %v3392 = vshrl.u32 %v3077, 16
      %v3394 = vrot.slane %v3392, 7
      %v3395 = vrot.slane %v3394, 4
      %v3397 = vshrl.u32 %v3078, 16
      %v3399 = vrot.slane %v3397, 7
      %v3400 = vshll.u32 %v3078, 16
      %v3402 = vor.u32 %v3399, %v3400
      %v3403 = vsel %vm640, %v3395, %v3402
      %v3404 = vrot.slane %v3399, 4
      %v3406 = vshrl.u32 %v3079, 16
      %v3408 = vrot.slane %v3406, 7
      %v3409 = vshll.u32 %v3079, 16
      %v3411 = vor.u32 %v3408, %v3409
      %v3412 = vsel %vm640, %v3404, %v3411
      %v3414 = vshrl.u32 %v3080, 16
      %v3416 = vrot.slane %v3414, 7
      %v3417 = vrot.slane %v3416, 4
      %v3419 = vshrl.u32 %v3081, 16
      %v3421 = vrot.slane %v3419, 7
      %v3422 = vshll.u32 %v3081, 16
      %v3424 = vor.u32 %v3421, %v3422
      %v3425 = vsel %vm640, %v3417, %v3424
      %v3426 = vrot.slane %v3421, 4
      %v3428 = vshrl.u32 %v3082, 16
      %v3430 = vrot.slane %v3428, 7
      %v3431 = vshll.u32 %v3082, 16
      %v3433 = vor.u32 %v3430, %v3431
      %v3434 = vsel %vm640, %v3426, %v3433
      %v3435 = vunpack.c.l.b16 %v3095
      %v3436 = vunpack.c.l.b16 %v3104
      %v3437 = vunpack.c.l.b16 %v3117
      %v3438 = vunpack.c.l.b16 %v3126
      %v3439 = vunpack.c.l.b16 %v3139
      %v3440 = vunpack.c.l.b16 %v3148
      %v3441 = vunpack.c.l.b16 %v3161
      %v3442 = vunpack.c.l.b16 %v3170
      %v3443 = vunpack.c.l.b16 %v3183
      %v3444 = vunpack.c.l.b16 %v3192
      %v3445 = vunpack.c.l.b16 %v3205
      %v3446 = vunpack.c.l.b16 %v3214
      %v3447 = vunpack.c.l.b16 %v3227
      %v3448 = vunpack.c.l.b16 %v3236
      %v3449 = vunpack.c.l.b16 %v3249
      %v3450 = vunpack.c.l.b16 %v3258
      %v3451 = vunpack.c.l.b16 %v3271
      %v3452 = vunpack.c.l.b16 %v3280
      %v3453 = vunpack.c.l.b16 %v3293
      %v3454 = vunpack.c.l.b16 %v3302
      %v3455 = vunpack.c.l.b16 %v3315
      %v3456 = vunpack.c.l.b16 %v3324
      %v3457 = vunpack.c.l.b16 %v3337
      %v3458 = vunpack.c.l.b16 %v3346
      %v3459 = vunpack.c.l.b16 %v3359
      %v3460 = vunpack.c.l.b16 %v3368
      %v3461 = vunpack.c.l.b16 %v3381
      %v3462 = vunpack.c.l.b16 %v3390
      %v3463 = vunpack.c.l.b16 %v3403
      %v3464 = vunpack.c.l.b16 %v3412
      %v3465 = vunpack.c.l.b16 %v3425
      %v3466 = vunpack.c.l.b16 %v3434
      %v3467 = vpack.c.b16 %v3436, %v3435
      %v3468 = vpack.c.b16 %v3438, %v3437
      %v3469 = vpack.c.b16 %v3440, %v3439
      %v3470 = vpack.c.b16 %v3442, %v3441
      %v3471 = vpack.c.b16 %v3444, %v3443
      %v3472 = vpack.c.b16 %v3446, %v3445
      %v3473 = vpack.c.b16 %v3448, %v3447
      %v3474 = vpack.c.b16 %v3450, %v3449
      %v3475 = vpack.c.b16 %v3452, %v3451
      %v3476 = vpack.c.b16 %v3454, %v3453
      %v3477 = vpack.c.b16 %v3456, %v3455
      %v3478 = vpack.c.b16 %v3458, %v3457
      %v3479 = vpack.c.b16 %v3460, %v3459
      %v3480 = vpack.c.b16 %v3462, %v3461
      %v3481 = vpack.c.b16 %v3464, %v3463
      %v3482 = vpack.c.b16 %v3466, %v3465
      %3483 = vrot.lane.b32.xlu0 %v3467, 24
      %v3484 = vpop.permute.xlu0 %3483
      %3485 = vrot.lane.b32.xlu0 %v3468, 24
      %v3486 = vpop.permute.xlu0 %3485
      %3487 = vrot.lane.b32.xlu0 %v3469, 24
      %v3488 = vpop.permute.xlu0 %3487
      %3489 = vrot.lane.b32.xlu0 %v3470, 24
      %v3490 = vpop.permute.xlu0 %3489
      %3491 = vrot.lane.b32.xlu0 %v3471, 24
      %v3492 = vpop.permute.xlu0 %3491
      %3493 = vrot.lane.b32.xlu0 %v3472, 24
      %v3494 = vpop.permute.xlu0 %3493
      %3495 = vrot.lane.b32.xlu0 %v3473, 24
      %v3496 = vpop.permute.xlu0 %3495
      %3497 = vrot.lane.b32.xlu0 %v3474, 24
      %v3498 = vpop.permute.xlu0 %3497
      %3499 = vrot.lane.b32.xlu0 %v3475, 24
      %v3500 = vpop.permute.xlu0 %3499
      %3501 = vrot.lane.b32.xlu0 %v3476, 24
      %v3502 = vpop.permute.xlu0 %3501
      %3503 = vrot.lane.b32.xlu0 %v3477, 24
      %v3504 = vpop.permute.xlu0 %3503
      %3505 = vrot.lane.b32.xlu0 %v3478, 24
      %v3506 = vpop.permute.xlu0 %3505
      %3507 = vrot.lane.b32.xlu0 %v3479, 24
      %v3508 = vpop.permute.xlu0 %3507
      %3509 = vrot.lane.b32.xlu0 %v3480, 24
      %v3510 = vpop.permute.xlu0 %3509
      %3511 = vrot.lane.b32.xlu0 %v3481, 24
      %v3512 = vpop.permute.xlu0 %3511
      %3513 = vrot.lane.b32.xlu0 %v3482, 24
      %v3514 = vpop.permute.xlu0 %3513
      %vm3531 = vcmask 228544
      %3532 = vst.msk [vmem:[#allocation3] sm:$0xff] %vm3531, %v3484
      %3533 = vst.msk [vmem:[#allocation3 + $0x8] sm:$0xff] %vm3531, %v3486
      %3534 = vst.msk [vmem:[#allocation3 + $0x10] sm:$0xff] %vm3531, %v3488
      %3535 = vst.msk [vmem:[#allocation3 + $0x18] sm:$0xff] %vm3531, %v3490
      %3536 = vst.msk [vmem:[#allocation3 + $0x20] sm:$0xff] %vm3531, %v3492
      %3537 = vst.msk [vmem:[#allocation3 + $0x28] sm:$0xff] %vm3531, %v3494
      %3538 = vst.msk [vmem:[#allocation3 + $0x30] sm:$0xff] %vm3531, %v3496
      %3539 = vst.msk [vmem:[#allocation3 + $0x38] sm:$0xff] %vm3531, %v3498
      %3540 = vst.msk [vmem:[#allocation3 + $0x40] sm:$0xff] %vm3531, %v3500
      %3541 = vst.msk [vmem:[#allocation3 + $0x48] sm:$0xff] %vm3531, %v3502
      %3542 = vst.msk [vmem:[#allocation3 + $0x50] sm:$0xff] %vm3531, %v3504
      %3543 = vst.msk [vmem:[#allocation3 + $0x58] sm:$0xff] %vm3531, %v3506
      %3544 = vst.msk [vmem:[#allocation3 + $0x60] sm:$0xff] %vm3531, %v3508
      %3545 = vst.msk [vmem:[#allocation3 + $0x68] sm:$0xff] %vm3531, %v3510
      %3546 = vst.msk [vmem:[#allocation3 + $0x70] sm:$0xff] %vm3531, %v3512
      %3547 = vst.msk [vmem:[#allocation3 + $0x78] sm:$0xff] %vm3531, %v3514
      %v3548 = vld [vmem:[%s3034 + $0x8] sm:$0xf]
      %v3549 = vld [vmem:[%s3034 + $0xc] sm:$0xf]
      %v3550 = vld [vmem:[%s3034 + $0x1c] sm:$0xf]
      %v3551 = vld [vmem:[%s3034 + $0x20] sm:$0xf]
      %v3552 = vld [vmem:[%s3034 + $0x30] sm:$0xf]
      %v3553 = vld [vmem:[%s3034 + $0x34] sm:$0xf]
      %v3554 = vld [vmem:[%s3034 + $0x44] sm:$0xf]
      %v3555 = vld [vmem:[%s3034 + $0x48] sm:$0xf]
      %v3556 = vld [vmem:[%s3034 + $0x58] sm:$0xf]
      %v3557 = vld [vmem:[%s3034 + $0x5c] sm:$0xf]
      %v3558 = vld [vmem:[%s3034 + $0x6c] sm:$0xf]
      %v3559 = vld [vmem:[%s3034 + $0x70] sm:$0xf]
      %v3560 = vld [vmem:[%s3034 + $0x80] sm:$0xf]
      %v3561 = vld [vmem:[%s3034 + $0x84] sm:$0xf]
      %v3562 = vld [vmem:[%s3034 + $0x94] sm:$0xf]
      %v3563 = vld [vmem:[%s3034 + $0x98] sm:$0xf]
      %v3564 = vld [vmem:[%s3034 + $0xa8] sm:$0xf]
      %v3565 = vld [vmem:[%s3034 + $0xac] sm:$0xf]
      %v3566 = vld [vmem:[%s3034 + $0xbc] sm:$0xf]
      %v3567 = vld [vmem:[%s3034 + $0xc0] sm:$0xf]
      %v3568 = vld [vmem:[%s3034 + $0xd0] sm:$0xf]
      %v3569 = vld [vmem:[%s3034 + $0xd4] sm:$0xf]
      %v3570 = vld [vmem:[%s3034 + $0xe4] sm:$0xf]
      %v3571 = vld [vmem:[%s3034 + $0xe8] sm:$0xf]
      %v3572 = vld [vmem:[%s3034 + $0xf8] sm:$0xf]
      %v3573 = vld [vmem:[%s3034 + $0xfc] sm:$0xf]
      %v3574 = vld [vmem:[%s3034 + $0x10c] sm:$0xf]
      %v3575 = vld [vmem:[%s3034 + $0x110] sm:$0xf]
      %v3576 = vld [vmem:[%s3034 + $0x120] sm:$0xf]
      %v3577 = vld [vmem:[%s3034 + $0x124] sm:$0xf]
      %v3578 = vld [vmem:[%s3034 + $0x134] sm:$0xf]
      %v3579 = vld [vmem:[%s3034 + $0x138] sm:$0xf]
      %v3612 = vunpack.c.l.b16 %v3548
      %v3613 = vunpack.c.l.b16 %v3549
      %v3614 = vunpack.c.l.b16 %v3550
      %v3615 = vunpack.c.l.b16 %v3551
      %v3616 = vunpack.c.l.b16 %v3552
      %v3617 = vunpack.c.l.b16 %v3553
      %v3618 = vunpack.c.l.b16 %v3554
      %v3619 = vunpack.c.l.b16 %v3555
      %v3620 = vunpack.c.l.b16 %v3556
      %v3621 = vunpack.c.l.b16 %v3557
      %v3622 = vunpack.c.l.b16 %v3558
      %v3623 = vunpack.c.l.b16 %v3559
      %v3624 = vunpack.c.l.b16 %v3560
      %v3625 = vunpack.c.l.b16 %v3561
      %v3626 = vunpack.c.l.b16 %v3562
      %v3627 = vunpack.c.l.b16 %v3563
      %v3628 = vunpack.c.l.b16 %v3564
      %v3629 = vunpack.c.l.b16 %v3565
      %v3630 = vunpack.c.l.b16 %v3566
      %v3631 = vunpack.c.l.b16 %v3567
      %v3632 = vunpack.c.l.b16 %v3568
      %v3633 = vunpack.c.l.b16 %v3569
      %v3634 = vunpack.c.l.b16 %v3570
      %v3635 = vunpack.c.l.b16 %v3571
      %v3636 = vunpack.c.l.b16 %v3572
      %v3637 = vunpack.c.l.b16 %v3573
      %v3638 = vunpack.c.l.b16 %v3574
      %v3639 = vunpack.c.l.b16 %v3575
      %v3640 = vunpack.c.l.b16 %v3576
      %v3641 = vunpack.c.l.b16 %v3577
      %v3642 = vunpack.c.l.b16 %v3578
      %v3643 = vunpack.c.l.b16 %v3579
      %v3644 = vpack.c.b16 %v3613, %v3612
      %v3645 = vpack.c.b16 %v3615, %v3614
      %v3646 = vpack.c.b16 %v3617, %v3616
      %v3647 = vpack.c.b16 %v3619, %v3618
      %v3648 = vpack.c.b16 %v3621, %v3620
      %v3649 = vpack.c.b16 %v3623, %v3622
      %v3650 = vpack.c.b16 %v3625, %v3624
      %v3651 = vpack.c.b16 %v3627, %v3626
      %v3652 = vpack.c.b16 %v3629, %v3628
      %v3653 = vpack.c.b16 %v3631, %v3630
      %v3654 = vpack.c.b16 %v3633, %v3632
      %v3655 = vpack.c.b16 %v3635, %v3634
      %v3656 = vpack.c.b16 %v3637, %v3636
      %v3657 = vpack.c.b16 %v3639, %v3638
      %v3658 = vpack.c.b16 %v3641, %v3640
      %v3659 = vpack.c.b16 %v3643, %v3642
      %3660 = vrot.lane.b32.xlu0 %v3644, 28
      %v3661 = vpop.permute.xlu0 %3660
      %3662 = vrot.lane.b32.xlu0 %v3645, 28
      %v3663 = vpop.permute.xlu0 %3662
      %3664 = vrot.lane.b32.xlu0 %v3646, 28
      %v3665 = vpop.permute.xlu0 %3664
      %3666 = vrot.lane.b32.xlu0 %v3647, 28
      %v3667 = vpop.permute.xlu0 %3666
      %3668 = vrot.lane.b32.xlu0 %v3648, 28
      %v3669 = vpop.permute.xlu0 %3668
      %3670 = vrot.lane.b32.xlu0 %v3649, 28
      %v3671 = vpop.permute.xlu0 %3670
      %3672 = vrot.lane.b32.xlu0 %v3650, 28
      %v3673 = vpop.permute.xlu0 %3672
      %3674 = vrot.lane.b32.xlu0 %v3651, 28
      %v3675 = vpop.permute.xlu0 %3674
      %3676 = vrot.lane.b32.xlu0 %v3652, 28
      %v3677 = vpop.permute.xlu0 %3676
      %3678 = vrot.lane.b32.xlu0 %v3653, 28
      %v3679 = vpop.permute.xlu0 %3678
      %3680 = vrot.lane.b32.xlu0 %v3654, 28
      %v3681 = vpop.permute.xlu0 %3680
      %3682 = vrot.lane.b32.xlu0 %v3655, 28
      %v3683 = vpop.permute.xlu0 %3682
      %3684 = vrot.lane.b32.xlu0 %v3656, 28
      %v3685 = vpop.permute.xlu0 %3684
      %3686 = vrot.lane.b32.xlu0 %v3657, 28
      %v3687 = vpop.permute.xlu0 %3686
      %3688 = vrot.lane.b32.xlu0 %v3658, 28
      %v3689 = vpop.permute.xlu0 %3688
      %3690 = vrot.lane.b32.xlu0 %v3659, 28
      %v3691 = vpop.permute.xlu0 %3690
      %vm3708 = vcmask 261344
      %3709 = vst.msk [vmem:[#allocation3] sm:$0xff] %vm3708, %v3661
      %3710 = vst.msk [vmem:[#allocation3 + $0x8] sm:$0xff] %vm3708, %v3663
      %3711 = vst.msk [vmem:[#allocation3 + $0x10] sm:$0xff] %vm3708, %v3665
      %3712 = vst.msk [vmem:[#allocation3 + $0x18] sm:$0xff] %vm3708, %v3667
      %3713 = vst.msk [vmem:[#allocation3 + $0x20] sm:$0xff] %vm3708, %v3669
      %3714 = vst.msk [vmem:[#allocation3 + $0x28] sm:$0xff] %vm3708, %v3671
      %3715 = vst.msk [vmem:[#allocation3 + $0x30] sm:$0xff] %vm3708, %v3673
      %3716 = vst.msk [vmem:[#allocation3 + $0x38] sm:$0xff] %vm3708, %v3675
      %3717 = vst.msk [vmem:[#allocation3 + $0x40] sm:$0xff] %vm3708, %v3677
      %3718 = vst.msk [vmem:[#allocation3 + $0x48] sm:$0xff] %vm3708, %v3679
      %3719 = vst.msk [vmem:[#allocation3 + $0x50] sm:$0xff] %vm3708, %v3681
      %3720 = vst.msk [vmem:[#allocation3 + $0x58] sm:$0xff] %vm3708, %v3683
      %3721 = vst.msk [vmem:[#allocation3 + $0x60] sm:$0xff] %vm3708, %v3685
      %3722 = vst.msk [vmem:[#allocation3 + $0x68] sm:$0xff] %vm3708, %v3687
      %3723 = vst.msk [vmem:[#allocation3 + $0x70] sm:$0xff] %vm3708, %v3689
      %3724 = vst.msk [vmem:[#allocation3 + $0x78] sm:$0xff] %vm3708, %v3691
      %v3725 = vld [vmem:[%s3034 + $0x8] sm:$0xf]
      %v3726 = vld [vmem:[%s3034 + $0xc] sm:$0xf]
      %v3727 = vld [vmem:[%s3034 + $0x10] sm:$0x1]
      %v3728 = vld [vmem:[%s3034 + $0x1c] sm:$0xf]
      %v3729 = vld [vmem:[%s3034 + $0x20] sm:$0xf]
      %v3730 = vld [vmem:[%s3034 + $0x24] sm:$0x1]
      %v3731 = vld [vmem:[%s3034 + $0x30] sm:$0xf]
      %v3732 = vld [vmem:[%s3034 + $0x34] sm:$0xf]
      %v3733 = vld [vmem:[%s3034 + $0x38] sm:$0x1]
      %v3734 = vld [vmem:[%s3034 + $0x44] sm:$0xf]
      %v3735 = vld [vmem:[%s3034 + $0x48] sm:$0xf]
      %v3736 = vld [vmem:[%s3034 + $0x4c] sm:$0x1]
      %v3737 = vld [vmem:[%s3034 + $0x58] sm:$0xf]
      %v3738 = vld [vmem:[%s3034 + $0x5c] sm:$0xf]
      %v3739 = vld [vmem:[%s3034 + $0x60] sm:$0x1]
      %v3740 = vld [vmem:[%s3034 + $0x6c] sm:$0xf]
      %v3741 = vld [vmem:[%s3034 + $0x70] sm:$0xf]
      %v3742 = vld [vmem:[%s3034 + $0x74] sm:$0x1]
      %v3743 = vld [vmem:[%s3034 + $0x80] sm:$0xf]
      %v3744 = vld [vmem:[%s3034 + $0x84] sm:$0xf]
      %v3745 = vld [vmem:[%s3034 + $0x88] sm:$0x1]
      %v3746 = vld [vmem:[%s3034 + $0x94] sm:$0xf]
      %v3747 = vld [vmem:[%s3034 + $0x98] sm:$0xf]
      %v3748 = vld [vmem:[%s3034 + $0x9c] sm:$0x1]
      %v3749 = vld [vmem:[%s3034 + $0xa8] sm:$0xf]
      %v3750 = vld [vmem:[%s3034 + $0xac] sm:$0xf]
      %v3751 = vld [vmem:[%s3034 + $0xb0] sm:$0x1]
      %v3752 = vld [vmem:[%s3034 + $0xbc] sm:$0xf]
      %v3753 = vld [vmem:[%s3034 + $0xc0] sm:$0xf]
      %v3754 = vld [vmem:[%s3034 + $0xc4] sm:$0x1]
      %v3755 = vld [vmem:[%s3034 + $0xd0] sm:$0xf]
      %v3756 = vld [vmem:[%s3034 + $0xd4] sm:$0xf]
      %v3757 = vld [vmem:[%s3034 + $0xd8] sm:$0x1]
      %v3758 = vld [vmem:[%s3034 + $0xe4] sm:$0xf]
      %v3759 = vld [vmem:[%s3034 + $0xe8] sm:$0xf]
      %v3760 = vld [vmem:[%s3034 + $0xec] sm:$0x1]
      %v3761 = vld [vmem:[%s3034 + $0xf8] sm:$0xf]
      %v3762 = vld [vmem:[%s3034 + $0xfc] sm:$0xf]
      %v3763 = vld [vmem:[%s3034 + $0x100] sm:$0x1]
      %v3764 = vld [vmem:[%s3034 + $0x10c] sm:$0xf]
      %v3765 = vld [vmem:[%s3034 + $0x110] sm:$0xf]
      %v3766 = vld [vmem:[%s3034 + $0x114] sm:$0x1]
      %v3767 = vld [vmem:[%s3034 + $0x120] sm:$0xf]
      %v3768 = vld [vmem:[%s3034 + $0x124] sm:$0xf]
      %v3769 = vld [vmem:[%s3034 + $0x128] sm:$0x1]
      %v3770 = vld [vmem:[%s3034 + $0x134] sm:$0xf]
      %v3771 = vld [vmem:[%s3034 + $0x138] sm:$0xf]
      %v3772 = vld [vmem:[%s3034 + $0x13c] sm:$0x1]
      %v3774 = vshrl.u32 %v3725, 16
      %v3776 = vrot.slane %v3774, 4
      %v3777 = vshll.u32 %v3725, 16
      %v3779 = vrot.slane %v3777, 5
      %v3780 = vor.u32 %v3776, %v3779
      %v3781 = vrot.slane %v3780, 4
      %v3783 = vshll.u32 %v3726, 16
      %v3785 = vrot.slane %v3783, 5
      %v3786 = vsel %vm1301, %v3781, %v3785
      %v3787 = vshrl.u32 %v3726, 16
      %v3789 = vrot.slane %v3787, 4
      %v3790 = vor.u32 %v3789, %v3785
      %v3791 = vrot.slane %v3790, 4
      %v3793 = vshll.u32 %v3727, 16
      %v3795 = vrot.slane %v3793, 5
      %v3796 = vsel %vm1301, %v3791, %v3795
      %v3798 = vshrl.u32 %v3728, 16
      %v3800 = vrot.slane %v3798, 4
      %v3801 = vshll.u32 %v3728, 16
      %v3803 = vrot.slane %v3801, 5
      %v3804 = vor.u32 %v3800, %v3803
      %v3805 = vrot.slane %v3804, 4
      %v3807 = vshll.u32 %v3729, 16
      %v3809 = vrot.slane %v3807, 5
      %v3810 = vsel %vm1301, %v3805, %v3809
      %v3811 = vshrl.u32 %v3729, 16
      %v3813 = vrot.slane %v3811, 4
      %v3814 = vor.u32 %v3813, %v3809
      %v3815 = vrot.slane %v3814, 4
      %v3817 = vshll.u32 %v3730, 16
      %v3819 = vrot.slane %v3817, 5
      %v3820 = vsel %vm1301, %v3815, %v3819
      %v3822 = vshrl.u32 %v3731, 16
      %v3824 = vrot.slane %v3822, 4
      %v3825 = vshll.u32 %v3731, 16
      %v3827 = vrot.slane %v3825, 5
      %v3828 = vor.u32 %v3824, %v3827
      %v3829 = vrot.slane %v3828, 4
      %v3831 = vshll.u32 %v3732, 16
      %v3833 = vrot.slane %v3831, 5
      %v3834 = vsel %vm1301, %v3829, %v3833
      %v3835 = vshrl.u32 %v3732, 16
      %v3837 = vrot.slane %v3835, 4
      %v3838 = vor.u32 %v3837, %v3833
      %v3839 = vrot.slane %v3838, 4
      %v3841 = vshll.u32 %v3733, 16
      %v3843 = vrot.slane %v3841, 5
      %v3844 = vsel %vm1301, %v3839, %v3843
      %v3846 = vshrl.u32 %v3734, 16
      %v3848 = vrot.slane %v3846, 4
      %v3849 = vshll.u32 %v3734, 16
      %v3851 = vrot.slane %v3849, 5
      %v3852 = vor.u32 %v3848, %v3851
      %v3853 = vrot.slane %v3852, 4
      %v3855 = vshll.u32 %v3735, 16
      %v3857 = vrot.slane %v3855, 5
      %v3858 = vsel %vm1301, %v3853, %v3857
      %v3859 = vshrl.u32 %v3735, 16
      %v3861 = vrot.slane %v3859, 4
      %v3862 = vor.u32 %v3861, %v3857
      %v3863 = vrot.slane %v3862, 4
      %v3865 = vshll.u32 %v3736, 16
      %v3867 = vrot.slane %v3865, 5
      %v3868 = vsel %vm1301, %v3863, %v3867
      %v3870 = vshrl.u32 %v3737, 16
      %v3872 = vrot.slane %v3870, 4
      %v3873 = vshll.u32 %v3737, 16
      %v3875 = vrot.slane %v3873, 5
      %v3876 = vor.u32 %v3872, %v3875
      %v3877 = vrot.slane %v3876, 4
      %v3879 = vshll.u32 %v3738, 16
      %v3881 = vrot.slane %v3879, 5
      %v3882 = vsel %vm1301, %v3877, %v3881
      %v3883 = vshrl.u32 %v3738, 16
      %v3885 = vrot.slane %v3883, 4
      %v3886 = vor.u32 %v3885, %v3881
      %v3887 = vrot.slane %v3886, 4
      %v3889 = vshll.u32 %v3739, 16
      %v3891 = vrot.slane %v3889, 5
      %v3892 = vsel %vm1301, %v3887, %v3891
      %v3894 = vshrl.u32 %v3740, 16
      %v3896 = vrot.slane %v3894, 4
      %v3897 = vshll.u32 %v3740, 16
      %v3899 = vrot.slane %v3897, 5
      %v3900 = vor.u32 %v3896, %v3899
      %v3901 = vrot.slane %v3900, 4
      %v3903 = vshll.u32 %v3741, 16
      %v3905 = vrot.slane %v3903, 5
      %v3906 = vsel %vm1301, %v3901, %v3905
      %v3907 = vshrl.u32 %v3741, 16
      %v3909 = vrot.slane %v3907, 4
      %v3910 = vor.u32 %v3909, %v3905
      %v3911 = vrot.slane %v3910, 4
      %v3913 = vshll.u32 %v3742, 16
      %v3915 = vrot.slane %v3913, 5
      %v3916 = vsel %vm1301, %v3911, %v3915
      %v3918 = vshrl.u32 %v3743, 16
      %v3920 = vrot.slane %v3918, 4
      %v3921 = vshll.u32 %v3743, 16
      %v3923 = vrot.slane %v3921, 5
      %v3924 = vor.u32 %v3920, %v3923
      %v3925 = vrot.slane %v3924, 4
      %v3927 = vshll.u32 %v3744, 16
      %v3929 = vrot.slane %v3927, 5
      %v3930 = vsel %vm1301, %v3925, %v3929
      %v3931 = vshrl.u32 %v3744, 16
      %v3933 = vrot.slane %v3931, 4
      %v3934 = vor.u32 %v3933, %v3929
      %v3935 = vrot.slane %v3934, 4
      %v3937 = vshll.u32 %v3745, 16
      %v3939 = vrot.slane %v3937, 5
      %v3940 = vsel %vm1301, %v3935, %v3939
      %v3942 = vshrl.u32 %v3746, 16
      %v3944 = vrot.slane %v3942, 4
      %v3945 = vshll.u32 %v3746, 16
      %v3947 = vrot.slane %v3945, 5
      %v3948 = vor.u32 %v3944, %v3947
      %v3949 = vrot.slane %v3948, 4
      %v3951 = vshll.u32 %v3747, 16
      %v3953 = vrot.slane %v3951, 5
      %v3954 = vsel %vm1301, %v3949, %v3953
      %v3955 = vshrl.u32 %v3747, 16
      %v3957 = vrot.slane %v3955, 4
      %v3958 = vor.u32 %v3957, %v3953
      %v3959 = vrot.slane %v3958, 4
      %v3961 = vshll.u32 %v3748, 16
      %v3963 = vrot.slane %v3961, 5
      %v3964 = vsel %vm1301, %v3959, %v3963
      %v3966 = vshrl.u32 %v3749, 16
      %v3968 = vrot.slane %v3966, 4
      %v3969 = vshll.u32 %v3749, 16
      %v3971 = vrot.slane %v3969, 5
      %v3972 = vor.u32 %v3968, %v3971
      %v3973 = vrot.slane %v3972, 4
      %v3975 = vshll.u32 %v3750, 16
      %v3977 = vrot.slane %v3975, 5
      %v3978 = vsel %vm1301, %v3973, %v3977
      %v3979 = vshrl.u32 %v3750, 16
      %v3981 = vrot.slane %v3979, 4
      %v3982 = vor.u32 %v3981, %v3977
      %v3983 = vrot.slane %v3982, 4
      %v3985 = vshll.u32 %v3751, 16
      %v3987 = vrot.slane %v3985, 5
      %v3988 = vsel %vm1301, %v3983, %v3987
      %v3990 = vshrl.u32 %v3752, 16
      %v3992 = vrot.slane %v3990, 4
      %v3993 = vshll.u32 %v3752, 16
      %v3995 = vrot.slane %v3993, 5
      %v3996 = vor.u32 %v3992, %v3995
      %v3997 = vrot.slane %v3996, 4
      %v3999 = vshll.u32 %v3753, 16
      %v4001 = vrot.slane %v3999, 5
      %v4002 = vsel %vm1301, %v3997, %v4001
      %v4003 = vshrl.u32 %v3753, 16
      %v4005 = vrot.slane %v4003, 4
      %v4006 = vor.u32 %v4005, %v4001
      %v4007 = vrot.slane %v4006, 4
      %v4009 = vshll.u32 %v3754, 16
      %v4011 = vrot.slane %v4009, 5
      %v4012 = vsel %vm1301, %v4007, %v4011
      %v4014 = vshrl.u32 %v3755, 16
      %v4016 = vrot.slane %v4014, 4
      %v4017 = vshll.u32 %v3755, 16
      %v4019 = vrot.slane %v4017, 5
      %v4020 = vor.u32 %v4016, %v4019
      %v4021 = vrot.slane %v4020, 4
      %v4023 = vshll.u32 %v3756, 16
      %v4025 = vrot.slane %v4023, 5
      %v4026 = vsel %vm1301, %v4021, %v4025
      %v4027 = vshrl.u32 %v3756, 16
      %v4029 = vrot.slane %v4027, 4
      %v4030 = vor.u32 %v4029, %v4025
      %v4031 = vrot.slane %v4030, 4
      %v4033 = vshll.u32 %v3757, 16
      %v4035 = vrot.slane %v4033, 5
      %v4036 = vsel %vm1301, %v4031, %v4035
      %v4038 = vshrl.u32 %v3758, 16
      %v4040 = vrot.slane %v4038, 4
      %v4041 = vshll.u32 %v3758, 16
      %v4043 = vrot.slane %v4041, 5
      %v4044 = vor.u32 %v4040, %v4043
      %v4045 = vrot.slane %v4044, 4
      %v4047 = vshll.u32 %v3759, 16
      %v4049 = vrot.slane %v4047, 5
      %v4050 = vsel %vm1301, %v4045, %v4049
      %v4051 = vshrl.u32 %v3759, 16
      %v4053 = vrot.slane %v4051, 4
      %v4054 = vor.u32 %v4053, %v4049
      %v4055 = vrot.slane %v4054, 4
      %v4057 = vshll.u32 %v3760, 16
      %v4059 = vrot.slane %v4057, 5
      %v4060 = vsel %vm1301, %v4055, %v4059
      %v4062 = vshrl.u32 %v3761, 16
      %v4064 = vrot.slane %v4062, 4
      %v4065 = vshll.u32 %v3761, 16
      %v4067 = vrot.slane %v4065, 5
      %v4068 = vor.u32 %v4064, %v4067
      %v4069 = vrot.slane %v4068, 4
      %v4071 = vshll.u32 %v3762, 16
      %v4073 = vrot.slane %v4071, 5
      %v4074 = vsel %vm1301, %v4069, %v4073
      %v4075 = vshrl.u32 %v3762, 16
      %v4077 = vrot.slane %v4075, 4
      %v4078 = vor.u32 %v4077, %v4073
      %v4079 = vrot.slane %v4078, 4
      %v4081 = vshll.u32 %v3763, 16
      %v4083 = vrot.slane %v4081, 5
      %v4084 = vsel %vm1301, %v4079, %v4083
      %v4086 = vshrl.u32 %v3764, 16
      %v4088 = vrot.slane %v4086, 4
      %v4089 = vshll.u32 %v3764, 16
      %v4091 = vrot.slane %v4089, 5
      %v4092 = vor.u32 %v4088, %v4091
      %v4093 = vrot.slane %v4092, 4
      %v4095 = vshll.u32 %v3765, 16
      %v4097 = vrot.slane %v4095, 5
      %v4098 = vsel %vm1301, %v4093, %v4097
      %v4099 = vshrl.u32 %v3765, 16
      %v4101 = vrot.slane %v4099, 4
      %v4102 = vor.u32 %v4101, %v4097
      %v4103 = vrot.slane %v4102, 4
      %v4105 = vshll.u32 %v3766, 16
      %v4107 = vrot.slane %v4105, 5
      %v4108 = vsel %vm1301, %v4103, %v4107
      %v4110 = vshrl.u32 %v3767, 16
      %v4112 = vrot.slane %v4110, 4
      %v4113 = vshll.u32 %v3767, 16
      %v4115 = vrot.slane %v4113, 5
      %v4116 = vor.u32 %v4112, %v4115
      %v4117 = vrot.slane %v4116, 4
      %v4119 = vshll.u32 %v3768, 16
      %v4121 = vrot.slane %v4119, 5
      %v4122 = vsel %vm1301, %v4117, %v4121
      %v4123 = vshrl.u32 %v3768, 16
      %v4125 = vrot.slane %v4123, 4
      %v4126 = vor.u32 %v4125, %v4121
      %v4127 = vrot.slane %v4126, 4
      %v4129 = vshll.u32 %v3769, 16
      %v4131 = vrot.slane %v4129, 5
      %v4132 = vsel %vm1301, %v4127, %v4131
      %v4134 = vshrl.u32 %v3770, 16
      %v4136 = vrot.slane %v4134, 4
      %v4137 = vshll.u32 %v3770, 16
      %v4139 = vrot.slane %v4137, 5
      %v4140 = vor.u32 %v4136, %v4139
      %v4141 = vrot.slane %v4140, 4
      %v4143 = vshll.u32 %v3771, 16
      %v4145 = vrot.slane %v4143, 5
      %v4146 = vsel %vm1301, %v4141, %v4145
      %v4147 = vshrl.u32 %v3771, 16
      %v4149 = vrot.slane %v4147, 4
      %v4150 = vor.u32 %v4149, %v4145
      %v4151 = vrot.slane %v4150, 4
      %v4153 = vshll.u32 %v3772, 16
      %v4155 = vrot.slane %v4153, 5
      %v4156 = vsel %vm1301, %v4151, %v4155
      %v4157 = vunpack.c.l.b16 %v3786
      %v4158 = vunpack.c.l.b16 %v3796
      %v4159 = vunpack.c.l.b16 %v3810
      %v4160 = vunpack.c.l.b16 %v3820
      %v4161 = vunpack.c.l.b16 %v3834
      %v4162 = vunpack.c.l.b16 %v3844
      %v4163 = vunpack.c.l.b16 %v3858
      %v4164 = vunpack.c.l.b16 %v3868
      %v4165 = vunpack.c.l.b16 %v3882
      %v4166 = vunpack.c.l.b16 %v3892
      %v4167 = vunpack.c.l.b16 %v3906
      %v4168 = vunpack.c.l.b16 %v3916
      %v4169 = vunpack.c.l.b16 %v3930
      %v4170 = vunpack.c.l.b16 %v3940
      %v4171 = vunpack.c.l.b16 %v3954
      %v4172 = vunpack.c.l.b16 %v3964
      %v4173 = vunpack.c.l.b16 %v3978
      %v4174 = vunpack.c.l.b16 %v3988
      %v4175 = vunpack.c.l.b16 %v4002
      %v4176 = vunpack.c.l.b16 %v4012
      %v4177 = vunpack.c.l.b16 %v4026
      %v4178 = vunpack.c.l.b16 %v4036
      %v4179 = vunpack.c.l.b16 %v4050
      %v4180 = vunpack.c.l.b16 %v4060
      %v4181 = vunpack.c.l.b16 %v4074
      %v4182 = vunpack.c.l.b16 %v4084
      %v4183 = vunpack.c.l.b16 %v4098
      %v4184 = vunpack.c.l.b16 %v4108
      %v4185 = vunpack.c.l.b16 %v4122
      %v4186 = vunpack.c.l.b16 %v4132
      %v4187 = vunpack.c.l.b16 %v4146
      %v4188 = vunpack.c.l.b16 %v4156
      %v4189 = vpack.c.b16 %v4158, %v4157
      %v4190 = vpack.c.b16 %v4160, %v4159
      %v4191 = vpack.c.b16 %v4162, %v4161
      %v4192 = vpack.c.b16 %v4164, %v4163
      %v4193 = vpack.c.b16 %v4166, %v4165
      %v4194 = vpack.c.b16 %v4168, %v4167
      %v4195 = vpack.c.b16 %v4170, %v4169
      %v4196 = vpack.c.b16 %v4172, %v4171
      %v4197 = vpack.c.b16 %v4174, %v4173
      %v4198 = vpack.c.b16 %v4176, %v4175
      %v4199 = vpack.c.b16 %v4178, %v4177
      %v4200 = vpack.c.b16 %v4180, %v4179
      %v4201 = vpack.c.b16 %v4182, %v4181
      %v4202 = vpack.c.b16 %v4184, %v4183
      %v4203 = vpack.c.b16 %v4186, %v4185
      %v4204 = vpack.c.b16 %v4188, %v4187
      %4205 = vrot.lane.b32.xlu0 %v4189, 32
      %v4206 = vpop.permute.xlu0 %4205
      %4207 = vrot.lane.b32.xlu0 %v4190, 32
      %v4208 = vpop.permute.xlu0 %4207
      %4209 = vrot.lane.b32.xlu0 %v4191, 32
      %v4210 = vpop.permute.xlu0 %4209
      %4211 = vrot.lane.b32.xlu0 %v4192, 32
      %v4212 = vpop.permute.xlu0 %4211
      %4213 = vrot.lane.b32.xlu0 %v4193, 32
      %v4214 = vpop.permute.xlu0 %4213
      %4215 = vrot.lane.b32.xlu0 %v4194, 32
      %v4216 = vpop.permute.xlu0 %4215
      %4217 = vrot.lane.b32.xlu0 %v4195, 32
      %v4218 = vpop.permute.xlu0 %4217
      %4219 = vrot.lane.b32.xlu0 %v4196, 32
      %v4220 = vpop.permute.xlu0 %4219
      %4221 = vrot.lane.b32.xlu0 %v4197, 32
      %v4222 = vpop.permute.xlu0 %4221
      %4223 = vrot.lane.b32.xlu0 %v4198, 32
      %v4224 = vpop.permute.xlu0 %4223
      %4225 = vrot.lane.b32.xlu0 %v4199, 32
      %v4226 = vpop.permute.xlu0 %4225
      %4227 = vrot.lane.b32.xlu0 %v4200, 32
      %v4228 = vpop.permute.xlu0 %4227
      %4229 = vrot.lane.b32.xlu0 %v4201, 32
      %v4230 = vpop.permute.xlu0 %4229
      %4231 = vrot.lane.b32.xlu0 %v4202, 32
      %v4232 = vpop.permute.xlu0 %4231
      %4233 = vrot.lane.b32.xlu0 %v4203, 32
      %v4234 = vpop.permute.xlu0 %4233
      %4235 = vrot.lane.b32.xlu0 %v4204, 32
      %v4236 = vpop.permute.xlu0 %4235
      %vm4253 = vcmask 294144
      %4254 = vst.msk [vmem:[#allocation3] sm:$0xff] %vm4253, %v4206
      %4255 = vst.msk [vmem:[#allocation3 + $0x8] sm:$0xff] %vm4253, %v4208
      %4256 = vst.msk [vmem:[#allocation3 + $0x10] sm:$0xff] %vm4253, %v4210
      %4257 = vst.msk [vmem:[#allocation3 + $0x18] sm:$0xff] %vm4253, %v4212
      %4258 = vst.msk [vmem:[#allocation3 + $0x20] sm:$0xff] %vm4253, %v4214
      %4259 = vst.msk [vmem:[#allocation3 + $0x28] sm:$0xff] %vm4253, %v4216
      %4260 = vst.msk [vmem:[#allocation3 + $0x30] sm:$0xff] %vm4253, %v4218
      %4261 = vst.msk [vmem:[#allocation3 + $0x38] sm:$0xff] %vm4253, %v4220
      %4262 = vst.msk [vmem:[#allocation3 + $0x40] sm:$0xff] %vm4253, %v4222
      %4263 = vst.msk [vmem:[#allocation3 + $0x48] sm:$0xff] %vm4253, %v4224
      %4264 = vst.msk [vmem:[#allocation3 + $0x50] sm:$0xff] %vm4253, %v4226
      %4265 = vst.msk [vmem:[#allocation3 + $0x58] sm:$0xff] %vm4253, %v4228
      %4266 = vst.msk [vmem:[#allocation3 + $0x60] sm:$0xff] %vm4253, %v4230
      %4267 = vst.msk [vmem:[#allocation3 + $0x68] sm:$0xff] %vm4253, %v4232
      %4268 = vst.msk [vmem:[#allocation3 + $0x70] sm:$0xff] %vm4253, %v4234
      %4269 = vst.msk [vmem:[#allocation3 + $0x78] sm:$0xff] %vm4253, %v4236
      %v4270 = vld [vmem:[#allocation3] sm:$0xff]
      %v4271 = vld [vmem:[#allocation3 + $0x8] sm:$0xff]
      %v4272 = vld [vmem:[#allocation3 + $0x10] sm:$0xff]
      %v4273 = vld [vmem:[#allocation3 + $0x18] sm:$0xff]
      %v4274 = vld [vmem:[#allocation3 + $0x20] sm:$0xff]
      %v4275 = vld [vmem:[#allocation3 + $0x28] sm:$0xff]
      %v4276 = vld [vmem:[#allocation3 + $0x30] sm:$0xff]
      %v4277 = vld [vmem:[#allocation3 + $0x38] sm:$0xff]
      %v4278 = vld [vmem:[#allocation3 + $0x40] sm:$0xff]
      %v4279 = vld [vmem:[#allocation3 + $0x48] sm:$0xff]
      %v4280 = vld [vmem:[#allocation3 + $0x50] sm:$0xff]
      %v4281 = vld [vmem:[#allocation3 + $0x58] sm:$0xff]
      %v4282 = vld [vmem:[#allocation3 + $0x60] sm:$0xff]
      %v4283 = vld [vmem:[#allocation3 + $0x68] sm:$0xff]
      %v4284 = vld [vmem:[#allocation3 + $0x70] sm:$0xff]
      %v4285 = vld [vmem:[#allocation3 + $0x78] sm:$0xff]
      %v4286 = vld [vmem:[%s1] sm:$0xf]
      %v4287 = vld [vmem:[%s1 + $0x4] sm:$0xf]
      %v4288 = vld [vmem:[%s1 + $0x8] sm:$0xf]
      %v4289 = vld [vmem:[%s1 + $0xc] sm:$0xf]
      %v4290 = vld [vmem:[%s1 + $0x10] sm:$0x3]
      %v4296 = vunpack.c.l.b16 %v4286
      %v4297 = vunpack.c.l.b16 %v4287
      %v4298 = vunpack.c.l.b16 %v4288
      %v4299 = vunpack.c.l.b16 %v4289
      %v4300 = vunpack.c.l.b16 %v4290
      %v4301 = vpack.c.b16 %v4297, %v4296
      %v4302 = vpack.c.b16 %v4299, %v4298
      %v4303 = vpack.c.b16 %v4300, %v4300
      %vm4306 = vcmask 293888
      %v4308 = vsel %vm4306, %v4270, 0
      %v4311 = vsel %vm4306, %v4271, 0
      %v4314 = vsel %vm4306, %v4272, 0
      %v4317 = vsel %vm4306, %v4273, 0
      %v4320 = vsel %vm4306, %v4274, 0
      %v4323 = vsel %vm4306, %v4275, 0
      %v4326 = vsel %vm4306, %v4276, 0
      %v4329 = vsel %vm4306, %v4277, 0
      %v4332 = vsel %vm4306, %v4278, 0
      %v4335 = vsel %vm4306, %v4279, 0
      %v4338 = vsel %vm4306, %v4280, 0
      %v4341 = vsel %vm4306, %v4281, 0
      %v4344 = vsel %vm4306, %v4282, 0
      %v4347 = vsel %vm4306, %v4283, 0
      %v4350 = vsel %vm4306, %v4284, 0
      %v4353 = vsel %vm4306, %v4285, 0
      %vm4355 = vcmask 1041408
      %v4357 = vsel %vm4355, %v4303, 0
      %4359 = vmatprep.subr.bf16.mxu0 0
      %4360 = vmatpush1.bf16.msra.mxu0 %v4301
      %4361 = vmatprep.subr.bf16.mxu0 0
      %4362 = vmatpush1.bf16.msra.mxu0 %v4302
      %4363 = vmatprep.subr.bf16.mxu0 0
      %4364 = vmatpush1.bf16.msra.mxu0 %v4357
      %4365 = vmatprep.subr.bf16.mxu0 0
      %4366 = vmatpush1.bf16.msra.mxu0 0
      %4367 = vmatprep.subr.bf16.mxu0 0
      %4368 = vmatpush1.bf16.msra.mxu0 0
      %4369 = vmatprep.subr.bf16.mxu0 0
      %4370 = vmatpush1.bf16.msra.mxu0 0
      %4371 = vmatprep.subr.bf16.mxu0 0
      %4372 = vmatpush1.bf16.msra.mxu0 0
      %4373 = vmatprep.subr.bf16.mxu0 0
      %4374 = vmatpush1.bf16.msra.mxu0 0
      %4375 = vmatprep.subr.bf16.mxu0 0
      %4376 = vmatpush1.bf16.msra.mxu0 0
      %4377 = vmatprep.subr.bf16.mxu0 0
      %4378 = vmatpush1.bf16.msra.mxu0 0
      %4379 = vmatprep.subr.bf16.mxu0 0
      %4380 = vmatpush1.bf16.msra.mxu0 0
      %4381 = vmatprep.subr.bf16.mxu0 0
      %4382 = vmatpush1.bf16.msra.mxu0 0
      %4383 = vmatprep.subr.bf16.mxu0 0
      %4384 = vmatpush1.bf16.msra.mxu0 0
      %4385 = vmatprep.subr.bf16.mxu0 0
      %4386 = vmatpush1.bf16.msra.mxu0 0
      %4387 = vmatprep.subr.bf16.mxu0 0
      %4388 = vmatpush1.bf16.msra.mxu0 0
      %4389 = vmatprep.subr.bf16.mxu0 0
      %4390 = vmatpush1.bf16.msra.mxu0 0
      %4391 = vmatprep.mubr.bf16.mxu0 0
      %4392 = vmatmul.mubr.bf16.gmra.mrb[0].mxu0 %v4308
      %v4393 = vpop.f32.mrb[0].mxu0
      %v4394 = vadd.f32 0.0, %v4393
      %v4395 = vpop.f32.mrb[0].mxu0
      %v4396 = vpop.f32.mrb[0].mxu0
      %v4397 = vadd.f32 0.0, %v4396
      %v4398 = vpop.f32.mrb[0].mxu0
      %4399 = vmatprep.mubr.bf16.mxu0 0
      %4400 = vmatmul.mubr.bf16.gmra.mrb[0].mxu0 %v4311
      %v4401 = vpop.f32.mrb[0].mxu0
      %v4402 = vadd.f32 0.0, %v4401
      %v4403 = vpop.f32.mrb[0].mxu0
      %v4404 = vpop.f32.mrb[0].mxu0
      %v4405 = vadd.f32 0.0, %v4404
      %v4406 = vpop.f32.mrb[0].mxu0
      %4407 = vmatprep.mubr.bf16.mxu0 0
      %4408 = vmatmul.mubr.bf16.gmra.mrb[0].mxu0 %v4314
      %v4409 = vpop.f32.mrb[0].mxu0
      %v4410 = vadd.f32 0.0, %v4409
      %v4411 = vpop.f32.mrb[0].mxu0
      %v4412 = vpop.f32.mrb[0].mxu0
      %v4413 = vadd.f32 0.0, %v4412
      %v4414 = vpop.f32.mrb[0].mxu0
      %4415 = vmatprep.mubr.bf16.mxu0 0
      %4416 = vmatmul.mubr.bf16.gmra.mrb[0].mxu0 %v4317
      %v4417 = vpop.f32.mrb[0].mxu0
      %v4418 = vadd.f32 0.0, %v4417
      %v4419 = vpop.f32.mrb[0].mxu0
      %v4420 = vpop.f32.mrb[0].mxu0
      %v4421 = vadd.f32 0.0, %v4420
      %v4422 = vpop.f32.mrb[0].mxu0
      %4423 = vmatprep.mubr.bf16.mxu0 0
      %4424 = vmatmul.mubr.bf16.gmra.mrb[0].mxu0 %v4320
      %v4425 = vpop.f32.mrb[0].mxu0
      %v4426 = vadd.f32 0.0, %v4425
      %v4427 = vpop.f32.mrb[0].mxu0
      %v4428 = vpop.f32.mrb[0].mxu0
      %v4429 = vadd.f32 0.0, %v4428
      %v4430 = vpop.f32.mrb[0].mxu0
      %4431 = vmatprep.mubr.bf16.mxu0 0
      %4432 = vmatmul.mubr.bf16.gmra.mrb[0].mxu0 %v4323
      %v4433 = vpop.f32.mrb[0].mxu0
      %v4434 = vadd.f32 0.0, %v4433
      %v4435 = vpop.f32.mrb[0].mxu0
      %v4436 = vpop.f32.mrb[0].mxu0
      %v4437 = vadd.f32 0.0, %v4436
      %v4438 = vpop.f32.mrb[0].mxu0
      %4439 = vmatprep.mubr.bf16.mxu0 0
      %4440 = vmatmul.mubr.bf16.gmra.mrb[0].mxu0 %v4326
      %v4441 = vpop.f32.mrb[0].mxu0
      %v4442 = vadd.f32 0.0, %v4441
      %v4443 = vpop.f32.mrb[0].mxu0
      %v4444 = vpop.f32.mrb[0].mxu0
      %v4445 = vadd.f32 0.0, %v4444
      %v4446 = vpop.f32.mrb[0].mxu0
      %4447 = vmatprep.mubr.bf16.mxu0 0
      %4448 = vmatmul.mubr.bf16.gmra.mrb[0].mxu0 %v4329
      %v4449 = vpop.f32.mrb[0].mxu0
      %v4450 = vadd.f32 0.0, %v4449
      %v4451 = vpop.f32.mrb[0].mxu0
      %v4452 = vpop.f32.mrb[0].mxu0
      %v4453 = vadd.f32 0.0, %v4452
      %v4454 = vpop.f32.mrb[0].mxu0
      %4455 = vmatprep.mubr.bf16.mxu0 0
      %4456 = vmatmul.mubr.bf16.gmra.mrb[0].mxu0 %v4332
      %v4457 = vpop.f32.mrb[0].mxu0
      %v4458 = vadd.f32 0.0, %v4457
      %v4459 = vpop.f32.mrb[0].mxu0
      %v4460 = vpop.f32.mrb[0].mxu0
      %v4461 = vadd.f32 0.0, %v4460
      %v4462 = vpop.f32.mrb[0].mxu0
      %4463 = vmatprep.mubr.bf16.mxu0 0
      %4464 = vmatmul.mubr.bf16.gmra.mrb[0].mxu0 %v4335
      %v4465 = vpop.f32.mrb[0].mxu0
      %v4466 = vadd.f32 0.0, %v4465
      %v4467 = vpop.f32.mrb[0].mxu0
      %v4468 = vpop.f32.mrb[0].mxu0
      %v4469 = vadd.f32 0.0, %v4468
      %v4470 = vpop.f32.mrb[0].mxu0
      %4471 = vmatprep.mubr.bf16.mxu0 0
      %4472 = vmatmul.mubr.bf16.gmra.mrb[0].mxu0 %v4338
      %v4473 = vpop.f32.mrb[0].mxu0
      %v4474 = vadd.f32 0.0, %v4473
      %v4475 = vpop.f32.mrb[0].mxu0
      %v4476 = vpop.f32.mrb[0].mxu0
      %v4477 = vadd.f32 0.0, %v4476
      %v4478 = vpop.f32.mrb[0].mxu0
      %4479 = vmatprep.mubr.bf16.mxu0 0
      %4480 = vmatmul.mubr.bf16.gmra.mrb[0].mxu0 %v4341
      %v4481 = vpop.f32.mrb[0].mxu0
      %v4482 = vadd.f32 0.0, %v4481
      %v4483 = vpop.f32.mrb[0].mxu0
      %v4484 = vpop.f32.mrb[0].mxu0
      %v4485 = vadd.f32 0.0, %v4484
      %v4486 = vpop.f32.mrb[0].mxu0
      %4487 = vmatprep.mubr.bf16.mxu0 0
      %4488 = vmatmul.mubr.bf16.gmra.mrb[0].mxu0 %v4344
      %v4489 = vpop.f32.mrb[0].mxu0
      %v4490 = vadd.f32 0.0, %v4489
      %v4491 = vpop.f32.mrb[0].mxu0
      %v4492 = vpop.f32.mrb[0].mxu0
      %v4493 = vadd.f32 0.0, %v4492
      %v4494 = vpop.f32.mrb[0].mxu0
      %4495 = vmatprep.mubr.bf16.mxu0 0
      %4496 = vmatmul.mubr.bf16.gmra.mrb[0].mxu0 %v4347
      %v4497 = vpop.f32.mrb[0].mxu0
      %v4498 = vadd.f32 0.0, %v4497
      %v4499 = vpop.f32.mrb[0].mxu0
      %v4500 = vpop.f32.mrb[0].mxu0
      %v4501 = vadd.f32 0.0, %v4500
      %v4502 = vpop.f32.mrb[0].mxu0
      %4503 = vmatprep.mubr.bf16.mxu0 0
      %4504 = vmatmul.mubr.bf16.gmra.mrb[0].mxu0 %v4350
      %v4505 = vpop.f32.mrb[0].mxu0
      %v4506 = vadd.f32 0.0, %v4505
      %v4507 = vpop.f32.mrb[0].mxu0
      %v4508 = vpop.f32.mrb[0].mxu0
      %v4509 = vadd.f32 0.0, %v4508
      %v4510 = vpop.f32.mrb[0].mxu0
      %4511 = vmatprep.mubr.bf16.mxu0 0
      %4512 = vmatmul.mubr.bf16.gmra.mrb[0].mxu0 %v4353
      %v4513 = vpop.f32.mrb[0].mxu0
      %v4514 = vadd.f32 0.0, %v4513
      %v4515 = vpop.f32.mrb[0].mxu0
      %v4516 = vpop.f32.mrb[0].mxu0
      %v4517 = vadd.f32 0.0, %v4516
      %v4518 = vpop.f32.mrb[0].mxu0
      %4519 = vdwg.mxu0
      %v4520 = vld [vmem:[%s2] sm:$0x1]
      %v4522 = vlaneseq
      %v4523 = vshrl.u32 %v4522, 7
      %v4524 = vsub.s32 0, %v4523
      %v4525 = vrot.slane %v4520, %v4524
      %v4527 = vmul.f32 %v4394, %v4525
      %v4528 = vmul.f32 %v4397, %v4525
      %v4529 = vmul.f32 %v4402, %v4525
      %v4530 = vmul.f32 %v4405, %v4525
      %v4531 = vmul.f32 %v4410, %v4525
      %v4532 = vmul.f32 %v4413, %v4525
      %v4533 = vmul.f32 %v4418, %v4525
      %v4534 = vmul.f32 %v4421, %v4525
      %v4535 = vmul.f32 %v4426, %v4525
      %v4536 = vmul.f32 %v4429, %v4525
      %v4537 = vmul.f32 %v4434, %v4525
      %v4538 = vmul.f32 %v4437, %v4525
      %v4539 = vmul.f32 %v4442, %v4525
      %v4540 = vmul.f32 %v4445, %v4525
      %v4541 = vmul.f32 %v4450, %v4525
      %v4542 = vmul.f32 %v4453, %v4525
      %v4543 = vmul.f32 %v4458, %v4525
      %v4544 = vmul.f32 %v4461, %v4525
      %v4545 = vmul.f32 %v4466, %v4525
      %v4546 = vmul.f32 %v4469, %v4525
      %v4547 = vmul.f32 %v4474, %v4525
      %v4548 = vmul.f32 %v4477, %v4525
      %v4549 = vmul.f32 %v4482, %v4525
      %v4550 = vmul.f32 %v4485, %v4525
      %v4551 = vmul.f32 %v4490, %v4525
      %v4552 = vmul.f32 %v4493, %v4525
      %v4553 = vmul.f32 %v4498, %v4525
      %v4554 = vmul.f32 %v4501, %v4525
      %v4555 = vmul.f32 %v4506, %v4525
      %v4556 = vmul.f32 %v4509, %v4525
      %v4557 = vmul.f32 %v4514, %v4525
      %v4558 = vmul.f32 %v4517, %v4525
      %v4559 = vld [vmem:[%s3] sm:$0x1]
      %v4561 = vlaneseq
      %v4562 = vshrl.u32 %v4561, 7
      %v4563 = vsub.s32 0, %v4562
      %v4564 = vrot.slane %v4559, %v4563
      %v4566 = vadd.f32 %v4527, %v4564
      %v4567 = vadd.f32 %v4528, %v4564
      %v4568 = vadd.f32 %v4529, %v4564
      %v4569 = vadd.f32 %v4530, %v4564
      %v4570 = vadd.f32 %v4531, %v4564
      %v4571 = vadd.f32 %v4532, %v4564
      %v4572 = vadd.f32 %v4533, %v4564
      %v4573 = vadd.f32 %v4534, %v4564
      %v4574 = vadd.f32 %v4535, %v4564
      %v4575 = vadd.f32 %v4536, %v4564
      %v4576 = vadd.f32 %v4537, %v4564
      %v4577 = vadd.f32 %v4538, %v4564
      %v4578 = vadd.f32 %v4539, %v4564
      %v4579 = vadd.f32 %v4540, %v4564
      %v4580 = vadd.f32 %v4541, %v4564
      %v4581 = vadd.f32 %v4542, %v4564
      %v4582 = vadd.f32 %v4543, %v4564
      %v4583 = vadd.f32 %v4544, %v4564
      %v4584 = vadd.f32 %v4545, %v4564
      %v4585 = vadd.f32 %v4546, %v4564
      %v4586 = vadd.f32 %v4547, %v4564
      %v4587 = vadd.f32 %v4548, %v4564
      %v4588 = vadd.f32 %v4549, %v4564
      %v4589 = vadd.f32 %v4550, %v4564
      %v4590 = vadd.f32 %v4551, %v4564
      %v4591 = vadd.f32 %v4552, %v4564
      %v4592 = vadd.f32 %v4553, %v4564
      %v4593 = vadd.f32 %v4554, %v4564
      %v4594 = vadd.f32 %v4555, %v4564
      %v4595 = vadd.f32 %v4556, %v4564
      %v4596 = vadd.f32 %v4557, %v4564
      %v4597 = vadd.f32 %v4558, %v4564
      %v4598 = vmax.f32 %v4566, 0.0
      %v4599 = vmax.f32 %v4567, 0.0
      %v4600 = vmax.f32 %v4568, 0.0
      %v4601 = vmax.f32 %v4569, 0.0
      %v4602 = vmax.f32 %v4570, 0.0
      %v4603 = vmax.f32 %v4571, 0.0
      %v4604 = vmax.f32 %v4572, 0.0
      %v4605 = vmax.f32 %v4573, 0.0
      %v4606 = vmax.f32 %v4574, 0.0
      %v4607 = vmax.f32 %v4575, 0.0
      %v4608 = vmax.f32 %v4576, 0.0
      %v4609 = vmax.f32 %v4577, 0.0
      %v4610 = vmax.f32 %v4578, 0.0
      %v4611 = vmax.f32 %v4579, 0.0
      %v4612 = vmax.f32 %v4580, 0.0
      %v4613 = vmax.f32 %v4581, 0.0
      %v4614 = vmax.f32 %v4582, 0.0
      %v4615 = vmax.f32 %v4583, 0.0
      %v4616 = vmax.f32 %v4584, 0.0
      %v4617 = vmax.f32 %v4585, 0.0
      %v4618 = vmax.f32 %v4586, 0.0
      %v4619 = vmax.f32 %v4587, 0.0
      %v4620 = vmax.f32 %v4588, 0.0
      %v4621 = vmax.f32 %v4589, 0.0
      %v4622 = vmax.f32 %v4590, 0.0
      %v4623 = vmax.f32 %v4591, 0.0
      %v4624 = vmax.f32 %v4592, 0.0
      %v4625 = vmax.f32 %v4593, 0.0
      %v4626 = vmax.f32 %v4594, 0.0
      %v4627 = vmax.f32 %v4595, 0.0
      %v4628 = vmax.f32 %v4596, 0.0
      %v4629 = vmax.f32 %v4597, 0.0
      %v4630 = vpack.c.bf16 %v4599, %v4598
      %v4631 = vpack.c.bf16 %v4601, %v4600
      %v4632 = vpack.c.bf16 %v4603, %v4602
      %v4633 = vpack.c.bf16 %v4605, %v4604
      %v4634 = vpack.c.bf16 %v4607, %v4606
      %v4635 = vpack.c.bf16 %v4609, %v4608
      %v4636 = vpack.c.bf16 %v4611, %v4610
      %v4637 = vpack.c.bf16 %v4613, %v4612
      %v4638 = vpack.c.bf16 %v4615, %v4614
      %v4639 = vpack.c.bf16 %v4617, %v4616
      %v4640 = vpack.c.bf16 %v4619, %v4618
      %v4641 = vpack.c.bf16 %v4621, %v4620
      %v4642 = vpack.c.bf16 %v4623, %v4622
      %v4643 = vpack.c.bf16 %v4625, %v4624
      %v4644 = vpack.c.bf16 %v4627, %v4626
      %v4645 = vpack.c.bf16 %v4629, %v4628
      %v4662 = vunpack.c.l.b16 %v4630
      %v4663 = vunpack.c.h.b16 %v4630
      %v4664 = vunpack.c.l.b16 %v4631
      %v4665 = vunpack.c.h.b16 %v4631
      %v4666 = vunpack.c.l.b16 %v4632
      %v4667 = vunpack.c.h.b16 %v4632
      %v4668 = vunpack.c.l.b16 %v4633
      %v4669 = vunpack.c.h.b16 %v4633
      %v4670 = vunpack.c.l.b16 %v4634
      %v4671 = vunpack.c.h.b16 %v4634
      %v4672 = vunpack.c.l.b16 %v4635
      %v4673 = vunpack.c.h.b16 %v4635
      %v4674 = vunpack.c.l.b16 %v4636
      %v4675 = vunpack.c.h.b16 %v4636
      %v4676 = vunpack.c.l.b16 %v4637
      %v4677 = vunpack.c.h.b16 %v4637
      %v4678 = vunpack.c.l.b16 %v4638
      %v4679 = vunpack.c.h.b16 %v4638
      %v4680 = vunpack.c.l.b16 %v4639
      %v4681 = vunpack.c.h.b16 %v4639
      %v4682 = vunpack.c.l.b16 %v4640
      %v4683 = vunpack.c.h.b16 %v4640
      %v4684 = vunpack.c.l.b16 %v4641
      %v4685 = vunpack.c.h.b16 %v4641
      %v4686 = vunpack.c.l.b16 %v4642
      %v4687 = vunpack.c.h.b16 %v4642
      %v4688 = vunpack.c.l.b16 %v4643
      %v4689 = vunpack.c.h.b16 %v4643
      %v4690 = vunpack.c.l.b16 %v4644
      %v4691 = vunpack.c.h.b16 %v4644
      %v4692 = vunpack.c.l.b16 %v4645
      %v4693 = vunpack.c.h.b16 %v4645
      %v4694 = vpack.c.b16 %v4662, %v4662
      %v4695 = vpack.c.b16 %v4663, %v4663
      %v4696 = vpack.c.b16 %v4664, %v4664
      %v4697 = vpack.c.b16 %v4665, %v4665
      %v4698 = vpack.c.b16 %v4666, %v4666
      %v4699 = vpack.c.b16 %v4667, %v4667
      %v4700 = vpack.c.b16 %v4668, %v4668
      %v4701 = vpack.c.b16 %v4669, %v4669
      %v4702 = vpack.c.b16 %v4670, %v4670
      %v4703 = vpack.c.b16 %v4671, %v4671
      %v4704 = vpack.c.b16 %v4672, %v4672
      %v4705 = vpack.c.b16 %v4673, %v4673
      %v4706 = vpack.c.b16 %v4674, %v4674
      %v4707 = vpack.c.b16 %v4675, %v4675
      %v4708 = vpack.c.b16 %v4676, %v4676
      %v4709 = vpack.c.b16 %v4677, %v4677
      %v4710 = vpack.c.b16 %v4678, %v4678
      %v4711 = vpack.c.b16 %v4679, %v4679
      %v4712 = vpack.c.b16 %v4680, %v4680
      %v4713 = vpack.c.b16 %v4681, %v4681
      %v4714 = vpack.c.b16 %v4682, %v4682
      %v4715 = vpack.c.b16 %v4683, %v4683
      %v4716 = vpack.c.b16 %v4684, %v4684
      %v4717 = vpack.c.b16 %v4685, %v4685
      %v4718 = vpack.c.b16 %v4686, %v4686
      %v4719 = vpack.c.b16 %v4687, %v4687
      %v4720 = vpack.c.b16 %v4688, %v4688
      %v4721 = vpack.c.b16 %v4689, %v4689
      %v4722 = vpack.c.b16 %v4690, %v4690
      %v4723 = vpack.c.b16 %v4691, %v4691
      %v4724 = vpack.c.b16 %v4692, %v4692
      %v4725 = vpack.c.b16 %v4693, %v4693
      %4758 = vst.msk [vmem:[%s331 + $0x8] sm:$0xf] %vm312, %v4694
      %4759 = vst.msk [vmem:[%s331 + $0xc] sm:$0xf] %vm312, %v4695
      %4760 = vst.msk [vmem:[%s331 + $0x1c] sm:$0xf] %vm312, %v4696
      %4761 = vst.msk [vmem:[%s331 + $0x20] sm:$0xf] %vm312, %v4697
      %4762 = vst.msk [vmem:[%s331 + $0x30] sm:$0xf] %vm312, %v4698
      %4763 = vst.msk [vmem:[%s331 + $0x34] sm:$0xf] %vm312, %v4699
      %4764 = vst.msk [vmem:[%s331 + $0x44] sm:$0xf] %vm312, %v4700
      %4765 = vst.msk [vmem:[%s331 + $0x48] sm:$0xf] %vm312, %v4701
      %4766 = vst.msk [vmem:[%s331 + $0x58] sm:$0xf] %vm312, %v4702
      %4767 = vst.msk [vmem:[%s331 + $0x5c] sm:$0xf] %vm312, %v4703
      %4768 = vst.msk [vmem:[%s331 + $0x6c] sm:$0xf] %vm312, %v4704
      %4769 = vst.msk [vmem:[%s331 + $0x70] sm:$0xf] %vm312, %v4705
      %4770 = vst.msk [vmem:[%s331 + $0x80] sm:$0xf] %vm312, %v4706
      %4771 = vst.msk [vmem:[%s331 + $0x84] sm:$0xf] %vm312, %v4707
      %4772 = vst.msk [vmem:[%s331 + $0x94] sm:$0xf] %vm312, %v4708
      %4773 = vst.msk [vmem:[%s331 + $0x98] sm:$0xf] %vm312, %v4709
      %4774 = vst.msk [vmem:[%s331 + $0xa8] sm:$0xf] %vm312, %v4710
      %4775 = vst.msk [vmem:[%s331 + $0xac] sm:$0xf] %vm312, %v4711
      %4776 = vst.msk [vmem:[%s331 + $0xbc] sm:$0xf] %vm312, %v4712
      %4777 = vst.msk [vmem:[%s331 + $0xc0] sm:$0xf] %vm312, %v4713
      %4778 = vst.msk [vmem:[%s331 + $0xd0] sm:$0xf] %vm312, %v4714
      %4779 = vst.msk [vmem:[%s331 + $0xd4] sm:$0xf] %vm312, %v4715
      %4780 = vst.msk [vmem:[%s331 + $0xe4] sm:$0xf] %vm312, %v4716
      %4781 = vst.msk [vmem:[%s331 + $0xe8] sm:$0xf] %vm312, %v4717
      %4782 = vst.msk [vmem:[%s331 + $0xf8] sm:$0xf] %vm312, %v4718
      %4783 = vst.msk [vmem:[%s331 + $0xfc] sm:$0xf] %vm312, %v4719
      %4784 = vst.msk [vmem:[%s331 + $0x10c] sm:$0xf] %vm312, %v4720
      %4785 = vst.msk [vmem:[%s331 + $0x110] sm:$0xf] %vm312, %v4721
      %4786 = vst.msk [vmem:[%s331 + $0x120] sm:$0xf] %vm312, %v4722
      %4787 = vst.msk [vmem:[%s331 + $0x124] sm:$0xf] %vm312, %v4723
      %4788 = vst.msk [vmem:[%s331 + $0x134] sm:$0xf] %vm312, %v4724
      %4789 = vst.msk [vmem:[%s331 + $0x138] sm:$0xf] %vm312, %v4725
      %v4790 = vld [vmem:[#allocation2 + $0x4] sm:$0x8]
      %v4791 = vld [vmem:[#allocation2 + $0x8] sm:$0xf]
      %v4792 = vld [vmem:[#allocation2 + $0xc] sm:$0xf]
      %v4793 = vld [vmem:[#allocation2 + $0x18] sm:$0x8]
      %v4794 = vld [vmem:[#allocation2 + $0x1c] sm:$0xf]
      %v4795 = vld [vmem:[#allocation2 + $0x20] sm:$0xf]
      %v4796 = vld [vmem:[#allocation2 + $0x2c] sm:$0x8]
      %v4797 = vld [vmem:[#allocation2 + $0x30] sm:$0xf]
      %v4798 = vld [vmem:[#allocation2 + $0x34] sm:$0xf]
      %v4799 = vld [vmem:[#allocation2 + $0x40] sm:$0x8]
      %v4800 = vld [vmem:[#allocation2 + $0x44] sm:$0xf]
      %v4801 = vld [vmem:[#allocation2 + $0x48] sm:$0xf]
      %v4802 = vld [vmem:[#allocation2 + $0x54] sm:$0x8]
      %v4803 = vld [vmem:[#allocation2 + $0x58] sm:$0xf]
      %v4804 = vld [vmem:[#allocation2 + $0x5c] sm:$0xf]
      %v4805 = vld [vmem:[#allocation2 + $0x68] sm:$0x8]
      %v4806 = vld [vmem:[#allocation2 + $0x6c] sm:$0xf]
      %v4807 = vld [vmem:[#allocation2 + $0x70] sm:$0xf]
      %v4808 = vld [vmem:[#allocation2 + $0x7c] sm:$0x8]
      %v4809 = vld [vmem:[#allocation2 + $0x80] sm:$0xf]
      %v4810 = vld [vmem:[#allocation2 + $0x84] sm:$0xf]
      %v4811 = vld [vmem:[#allocation2 + $0x90] sm:$0x8]
      %v4812 = vld [vmem:[#allocation2 + $0x94] sm:$0xf]
      %v4813 = vld [vmem:[#allocation2 + $0x98] sm:$0xf]
      %v4814 = vld [vmem:[#allocation2 + $0xa4] sm:$0x8]
      %v4815 = vld [vmem:[#allocation2 + $0xa8] sm:$0xf]
      %v4816 = vld [vmem:[#allocation2 + $0xac] sm:$0xf]
      %v4817 = vld [vmem:[#allocation2 + $0xb8] sm:$0x8]
      %v4818 = vld [vmem:[#allocation2 + $0xbc] sm:$0xf]
      %v4819 = vld [vmem:[#allocation2 + $0xc0] sm:$0xf]
      %v4820 = vld [vmem:[#allocation2 + $0xcc] sm:$0x8]
      %v4821 = vld [vmem:[#allocation2 + $0xd0] sm:$0xf]
      %v4822 = vld [vmem:[#allocation2 + $0xd4] sm:$0xf]
      %v4823 = vld [vmem:[#allocation2 + $0xe0] sm:$0x8]
      %v4824 = vld [vmem:[#allocation2 + $0xe4] sm:$0xf]
      %v4825 = vld [vmem:[#allocation2 + $0xe8] sm:$0xf]
      %v4826 = vld [vmem:[#allocation2 + $0xf4] sm:$0x8]
      %v4827 = vld [vmem:[#allocation2 + $0xf8] sm:$0xf]
      %v4828 = vld [vmem:[#allocation2 + $0xfc] sm:$0xf]
      %v4829 = vld [vmem:[#allocation2 + $0x108] sm:$0x8]
      %v4830 = vld [vmem:[#allocation2 + $0x10c] sm:$0xf]
      %v4831 = vld [vmem:[#allocation2 + $0x110] sm:$0xf]
      %v4832 = vld [vmem:[#allocation2 + $0x11c] sm:$0x8]
      %v4833 = vld [vmem:[#allocation2 + $0x120] sm:$0xf]
      %v4834 = vld [vmem:[#allocation2 + $0x124] sm:$0xf]
      %v4835 = vld [vmem:[#allocation2 + $0x130] sm:$0x8]
      %v4836 = vld [vmem:[#allocation2 + $0x134] sm:$0xf]
      %v4837 = vld [vmem:[#allocation2 + $0x138] sm:$0xf]
      %v4839 = vshrl.u32 %v4790, 16
      %v4841 = vrot.slane %v4839, 7
      %v4842 = vrot.slane %v4841, 4
      %v4844 = vshrl.u32 %v4791, 16
      %v4846 = vrot.slane %v4844, 7
      %v4847 = vshll.u32 %v4791, 16
      %v4849 = vor.u32 %v4846, %v4847
      %v4850 = vsel %vm640, %v4842, %v4849
      %v4851 = vrot.slane %v4846, 4
      %v4853 = vshrl.u32 %v4792, 16
      %v4855 = vrot.slane %v4853, 7
      %v4856 = vshll.u32 %v4792, 16
      %v4858 = vor.u32 %v4855, %v4856
      %v4859 = vsel %vm640, %v4851, %v4858
      %v4861 = vshrl.u32 %v4793, 16
      %v4863 = vrot.slane %v4861, 7
      %v4864 = vrot.slane %v4863, 4
      %v4866 = vshrl.u32 %v4794, 16
      %v4868 = vrot.slane %v4866, 7
      %v4869 = vshll.u32 %v4794, 16
      %v4871 = vor.u32 %v4868, %v4869
      %v4872 = vsel %vm640, %v4864, %v4871
      %v4873 = vrot.slane %v4868, 4
      %v4875 = vshrl.u32 %v4795, 16
      %v4877 = vrot.slane %v4875, 7
      %v4878 = vshll.u32 %v4795, 16
      %v4880 = vor.u32 %v4877, %v4878
      %v4881 = vsel %vm640, %v4873, %v4880
      %v4883 = vshrl.u32 %v4796, 16
      %v4885 = vrot.slane %v4883, 7
      %v4886 = vrot.slane %v4885, 4
      %v4888 = vshrl.u32 %v4797, 16
      %v4890 = vrot.slane %v4888, 7
      %v4891 = vshll.u32 %v4797, 16
      %v4893 = vor.u32 %v4890, %v4891
      %v4894 = vsel %vm640, %v4886, %v4893
      %v4895 = vrot.slane %v4890, 4
      %v4897 = vshrl.u32 %v4798, 16
      %v4899 = vrot.slane %v4897, 7
      %v4900 = vshll.u32 %v4798, 16
      %v4902 = vor.u32 %v4899, %v4900
      %v4903 = vsel %vm640, %v4895, %v4902
      %v4905 = vshrl.u32 %v4799, 16
      %v4907 = vrot.slane %v4905, 7
      %v4908 = vrot.slane %v4907, 4
      %v4910 = vshrl.u32 %v4800, 16
      %v4912 = vrot.slane %v4910, 7
      %v4913 = vshll.u32 %v4800, 16
      %v4915 = vor.u32 %v4912, %v4913
      %v4916 = vsel %vm640, %v4908, %v4915
      %v4917 = vrot.slane %v4912, 4
      %v4919 = vshrl.u32 %v4801, 16
      %v4921 = vrot.slane %v4919, 7
      %v4922 = vshll.u32 %v4801, 16
      %v4924 = vor.u32 %v4921, %v4922
      %v4925 = vsel %vm640, %v4917, %v4924
      %v4927 = vshrl.u32 %v4802, 16
      %v4929 = vrot.slane %v4927, 7
      %v4930 = vrot.slane %v4929, 4
      %v4932 = vshrl.u32 %v4803, 16
      %v4934 = vrot.slane %v4932, 7
      %v4935 = vshll.u32 %v4803, 16
      %v4937 = vor.u32 %v4934, %v4935
      %v4938 = vsel %vm640, %v4930, %v4937
      %v4939 = vrot.slane %v4934, 4
      %v4941 = vshrl.u32 %v4804, 16
      %v4943 = vrot.slane %v4941, 7
      %v4944 = vshll.u32 %v4804, 16
      %v4946 = vor.u32 %v4943, %v4944
      %v4947 = vsel %vm640, %v4939, %v4946
      %v4949 = vshrl.u32 %v4805, 16
      %v4951 = vrot.slane %v4949, 7
      %v4952 = vrot.slane %v4951, 4
      %v4954 = vshrl.u32 %v4806, 16
      %v4956 = vrot.slane %v4954, 7
      %v4957 = vshll.u32 %v4806, 16
      %v4959 = vor.u32 %v4956, %v4957
      %v4960 = vsel %vm640, %v4952, %v4959
      %v4961 = vrot.slane %v4956, 4
      %v4963 = vshrl.u32 %v4807, 16
      %v4965 = vrot.slane %v4963, 7
      %v4966 = vshll.u32 %v4807, 16
      %v4968 = vor.u32 %v4965, %v4966
      %v4969 = vsel %vm640, %v4961, %v4968
      %v4971 = vshrl.u32 %v4808, 16
      %v4973 = vrot.slane %v4971, 7
      %v4974 = vrot.slane %v4973, 4
      %v4976 = vshrl.u32 %v4809, 16
      %v4978 = vrot.slane %v4976, 7
      %v4979 = vshll.u32 %v4809, 16
      %v4981 = vor.u32 %v4978, %v4979
      %v4982 = vsel %vm640, %v4974, %v4981
      %v4983 = vrot.slane %v4978, 4
      %v4985 = vshrl.u32 %v4810, 16
      %v4987 = vrot.slane %v4985, 7
      %v4988 = vshll.u32 %v4810, 16
      %v4990 = vor.u32 %v4987, %v4988
      %v4991 = vsel %vm640, %v4983, %v4990
      %v4993 = vshrl.u32 %v4811, 16
      %v4995 = vrot.slane %v4993, 7
      %v4996 = vrot.slane %v4995, 4
      %v4998 = vshrl.u32 %v4812, 16
      %v5000 = vrot.slane %v4998, 7
      %v5001 = vshll.u32 %v4812, 16
      %v5003 = vor.u32 %v5000, %v5001
      %v5004 = vsel %vm640, %v4996, %v5003
      %v5005 = vrot.slane %v5000, 4
      %v5007 = vshrl.u32 %v4813, 16
      %v5009 = vrot.slane %v5007, 7
      %v5010 = vshll.u32 %v4813, 16
      %v5012 = vor.u32 %v5009, %v5010
      %v5013 = vsel %vm640, %v5005, %v5012
      %v5015 = vshrl.u32 %v4814, 16
      %v5017 = vrot.slane %v5015, 7
      %v5018 = vrot.slane %v5017, 4
      %v5020 = vshrl.u32 %v4815, 16
      %v5022 = vrot.slane %v5020, 7
      %v5023 = vshll.u32 %v4815, 16
      %v5025 = vor.u32 %v5022, %v5023
      %v5026 = vsel %vm640, %v5018, %v5025
      %v5027 = vrot.slane %v5022, 4
      %v5029 = vshrl.u32 %v4816, 16
      %v5031 = vrot.slane %v5029, 7
      %v5032 = vshll.u32 %v4816, 16
      %v5034 = vor.u32 %v5031, %v5032
      %v5035 = vsel %vm640, %v5027, %v5034
      %v5037 = vshrl.u32 %v4817, 16
      %v5039 = vrot.slane %v5037, 7
      %v5040 = vrot.slane %v5039, 4
      %v5042 = vshrl.u32 %v4818, 16
      %v5044 = vrot.slane %v5042, 7
      %v5045 = vshll.u32 %v4818, 16
      %v5047 = vor.u32 %v5044, %v5045
      %v5048 = vsel %vm640, %v5040, %v5047
      %v5049 = vrot.slane %v5044, 4
      %v5051 = vshrl.u32 %v4819, 16
      %v5053 = vrot.slane %v5051, 7
      %v5054 = vshll.u32 %v4819, 16
      %v5056 = vor.u32 %v5053, %v5054
      %v5057 = vsel %vm640, %v5049, %v5056
      %v5059 = vshrl.u32 %v4820, 16
      %v5061 = vrot.slane %v5059, 7
      %v5062 = vrot.slane %v5061, 4
      %v5064 = vshrl.u32 %v4821, 16
      %v5066 = vrot.slane %v5064, 7
      %v5067 = vshll.u32 %v4821, 16
      %v5069 = vor.u32 %v5066, %v5067
      %v5070 = vsel %vm640, %v5062, %v5069
      %v5071 = vrot.slane %v5066, 4
      %v5073 = vshrl.u32 %v4822, 16
      %v5075 = vrot.slane %v5073, 7
      %v5076 = vshll.u32 %v4822, 16
      %v5078 = vor.u32 %v5075, %v5076
      %v5079 = vsel %vm640, %v5071, %v5078
      %v5081 = vshrl.u32 %v4823, 16
      %v5083 = vrot.slane %v5081, 7
      %v5084 = vrot.slane %v5083, 4
      %v5086 = vshrl.u32 %v4824, 16
      %v5088 = vrot.slane %v5086, 7
      %v5089 = vshll.u32 %v4824, 16
      %v5091 = vor.u32 %v5088, %v5089
      %v5092 = vsel %vm640, %v5084, %v5091
      %v5093 = vrot.slane %v5088, 4
      %v5095 = vshrl.u32 %v4825, 16
      %v5097 = vrot.slane %v5095, 7
      %v5098 = vshll.u32 %v4825, 16
      %v5100 = vor.u32 %v5097, %v5098
      %v5101 = vsel %vm640, %v5093, %v5100
      %v5103 = vshrl.u32 %v4826, 16
      %v5105 = vrot.slane %v5103, 7
      %v5106 = vrot.slane %v5105, 4
      %v5108 = vshrl.u32 %v4827, 16
      %v5110 = vrot.slane %v5108, 7
      %v5111 = vshll.u32 %v4827, 16
      %v5113 = vor.u32 %v5110, %v5111
      %v5114 = vsel %vm640, %v5106, %v5113
      %v5115 = vrot.slane %v5110, 4
      %v5117 = vshrl.u32 %v4828, 16
      %v5119 = vrot.slane %v5117, 7
      %v5120 = vshll.u32 %v4828, 16
      %v5122 = vor.u32 %v5119, %v5120
      %v5123 = vsel %vm640, %v5115, %v5122
      %v5125 = vshrl.u32 %v4829, 16
      %v5127 = vrot.slane %v5125, 7
      %v5128 = vrot.slane %v5127, 4
      %v5130 = vshrl.u32 %v4830, 16
      %v5132 = vrot.slane %v5130, 7
      %v5133 = vshll.u32 %v4830, 16
      %v5135 = vor.u32 %v5132, %v5133
      %v5136 = vsel %vm640, %v5128, %v5135
      %v5137 = vrot.slane %v5132, 4
      %v5139 = vshrl.u32 %v4831, 16
      %v5141 = vrot.slane %v5139, 7
      %v5142 = vshll.u32 %v4831, 16
      %v5144 = vor.u32 %v5141, %v5142
      %v5145 = vsel %vm640, %v5137, %v5144
      %v5147 = vshrl.u32 %v4832, 16
      %v5149 = vrot.slane %v5147, 7
      %v5150 = vrot.slane %v5149, 4
      %v5152 = vshrl.u32 %v4833, 16
      %v5154 = vrot.slane %v5152, 7
      %v5155 = vshll.u32 %v4833, 16
      %v5157 = vor.u32 %v5154, %v5155
      %v5158 = vsel %vm640, %v5150, %v5157
      %v5159 = vrot.slane %v5154, 4
      %v5161 = vshrl.u32 %v4834, 16
      %v5163 = vrot.slane %v5161, 7
      %v5164 = vshll.u32 %v4834, 16
      %v5166 = vor.u32 %v5163, %v5164
      %v5167 = vsel %vm640, %v5159, %v5166
      %v5169 = vshrl.u32 %v4835, 16
      %v5171 = vrot.slane %v5169, 7
      %v5172 = vrot.slane %v5171, 4
      %v5174 = vshrl.u32 %v4836, 16
      %v5176 = vrot.slane %v5174, 7
      %v5177 = vshll.u32 %v4836, 16
      %v5179 = vor.u32 %v5176, %v5177
      %v5180 = vsel %vm640, %v5172, %v5179
      %v5181 = vrot.slane %v5176, 4
      %v5183 = vshrl.u32 %v4837, 16
      %v5185 = vrot.slane %v5183, 7
      %v5186 = vshll.u32 %v4837, 16
      %v5188 = vor.u32 %v5185, %v5186
      %v5189 = vsel %vm640, %v5181, %v5188
      %v5190 = vunpack.c.l.b16 %v4850
      %v5191 = vunpack.c.l.b16 %v4859
      %v5192 = vunpack.c.l.b16 %v4872
      %v5193 = vunpack.c.l.b16 %v4881
      %v5194 = vunpack.c.l.b16 %v4894
      %v5195 = vunpack.c.l.b16 %v4903
      %v5196 = vunpack.c.l.b16 %v4916
      %v5197 = vunpack.c.l.b16 %v4925
      %v5198 = vunpack.c.l.b16 %v4938
      %v5199 = vunpack.c.l.b16 %v4947
      %v5200 = vunpack.c.l.b16 %v4960
      %v5201 = vunpack.c.l.b16 %v4969
      %v5202 = vunpack.c.l.b16 %v4982
      %v5203 = vunpack.c.l.b16 %v4991
      %v5204 = vunpack.c.l.b16 %v5004
      %v5205 = vunpack.c.l.b16 %v5013
      %v5206 = vunpack.c.l.b16 %v5026
      %v5207 = vunpack.c.l.b16 %v5035
      %v5208 = vunpack.c.l.b16 %v5048
      %v5209 = vunpack.c.l.b16 %v5057
      %v5210 = vunpack.c.l.b16 %v5070
      %v5211 = vunpack.c.l.b16 %v5079
      %v5212 = vunpack.c.l.b16 %v5092
      %v5213 = vunpack.c.l.b16 %v5101
      %v5214 = vunpack.c.l.b16 %v5114
      %v5215 = vunpack.c.l.b16 %v5123
      %v5216 = vunpack.c.l.b16 %v5136
      %v5217 = vunpack.c.l.b16 %v5145
      %v5218 = vunpack.c.l.b16 %v5158
      %v5219 = vunpack.c.l.b16 %v5167
      %v5220 = vunpack.c.l.b16 %v5180
      %v5221 = vunpack.c.l.b16 %v5189
      %v5222 = vpack.c.b16 %v5191, %v5190
      %v5223 = vpack.c.b16 %v5193, %v5192
      %v5224 = vpack.c.b16 %v5195, %v5194
      %v5225 = vpack.c.b16 %v5197, %v5196
      %v5226 = vpack.c.b16 %v5199, %v5198
      %v5227 = vpack.c.b16 %v5201, %v5200
      %v5228 = vpack.c.b16 %v5203, %v5202
      %v5229 = vpack.c.b16 %v5205, %v5204
      %v5230 = vpack.c.b16 %v5207, %v5206
      %v5231 = vpack.c.b16 %v5209, %v5208
      %v5232 = vpack.c.b16 %v5211, %v5210
      %v5233 = vpack.c.b16 %v5213, %v5212
      %v5234 = vpack.c.b16 %v5215, %v5214
      %v5235 = vpack.c.b16 %v5217, %v5216
      %v5236 = vpack.c.b16 %v5219, %v5218
      %v5237 = vpack.c.b16 %v5221, %v5220
      %5254 = vst.msk [vmem:[#allocation3] sm:$0xff] %vm1057, %v5222
      %5255 = vst.msk [vmem:[#allocation3 + $0x8] sm:$0xff] %vm1057, %v5223
      %5256 = vst.msk [vmem:[#allocation3 + $0x10] sm:$0xff] %vm1057, %v5224
      %5257 = vst.msk [vmem:[#allocation3 + $0x18] sm:$0xff] %vm1057, %v5225
      %5258 = vst.msk [vmem:[#allocation3 + $0x20] sm:$0xff] %vm1057, %v5226
      %5259 = vst.msk [vmem:[#allocation3 + $0x28] sm:$0xff] %vm1057, %v5227
      %5260 = vst.msk [vmem:[#allocation3 + $0x30] sm:$0xff] %vm1057, %v5228
      %5261 = vst.msk [vmem:[#allocation3 + $0x38] sm:$0xff] %vm1057, %v5229
      %5262 = vst.msk [vmem:[#allocation3 + $0x40] sm:$0xff] %vm1057, %v5230
      %5263 = vst.msk [vmem:[#allocation3 + $0x48] sm:$0xff] %vm1057, %v5231
      %5264 = vst.msk [vmem:[#allocation3 + $0x50] sm:$0xff] %vm1057, %v5232
      %5265 = vst.msk [vmem:[#allocation3 + $0x58] sm:$0xff] %vm1057, %v5233
      %5266 = vst.msk [vmem:[#allocation3 + $0x60] sm:$0xff] %vm1057, %v5234
      %5267 = vst.msk [vmem:[#allocation3 + $0x68] sm:$0xff] %vm1057, %v5235
      %5268 = vst.msk [vmem:[#allocation3 + $0x70] sm:$0xff] %vm1057, %v5236
      %5269 = vst.msk [vmem:[#allocation3 + $0x78] sm:$0xff] %vm1057, %v5237
      %v5270 = vld [vmem:[#allocation2 + $0x8] sm:$0xf]
      %v5271 = vld [vmem:[#allocation2 + $0xc] sm:$0xf]
      %v5272 = vld [vmem:[#allocation2 + $0x1c] sm:$0xf]
      %v5273 = vld [vmem:[#allocation2 + $0x20] sm:$0xf]
      %v5274 = vld [vmem:[#allocation2 + $0x30] sm:$0xf]
      %v5275 = vld [vmem:[#allocation2 + $0x34] sm:$0xf]
      %v5276 = vld [vmem:[#allocation2 + $0x44] sm:$0xf]
      %v5277 = vld [vmem:[#allocation2 + $0x48] sm:$0xf]
      %v5278 = vld [vmem:[#allocation2 + $0x58] sm:$0xf]
      %v5279 = vld [vmem:[#allocation2 + $0x5c] sm:$0xf]
      %v5280 = vld [vmem:[#allocation2 + $0x6c] sm:$0xf]
      %v5281 = vld [vmem:[#allocation2 + $0x70] sm:$0xf]
      %v5282 = vld [vmem:[#allocation2 + $0x80] sm:$0xf]
      %v5283 = vld [vmem:[#allocation2 + $0x84] sm:$0xf]
      %v5284 = vld [vmem:[#allocation2 + $0x94] sm:$0xf]
      %v5285 = vld [vmem:[#allocation2 + $0x98] sm:$0xf]
      %v5286 = vld [vmem:[#allocation2 + $0xa8] sm:$0xf]
      %v5287 = vld [vmem:[#allocation2 + $0xac] sm:$0xf]
      %v5288 = vld [vmem:[#allocation2 + $0xbc] sm:$0xf]
      %v5289 = vld [vmem:[#allocation2 + $0xc0] sm:$0xf]
      %v5290 = vld [vmem:[#allocation2 + $0xd0] sm:$0xf]
      %v5291 = vld [vmem:[#allocation2 + $0xd4] sm:$0xf]
      %v5292 = vld [vmem:[#allocation2 + $0xe4] sm:$0xf]
      %v5293 = vld [vmem:[#allocation2 + $0xe8] sm:$0xf]
      %v5294 = vld [vmem:[#allocation2 + $0xf8] sm:$0xf]
      %v5295 = vld [vmem:[#allocation2 + $0xfc] sm:$0xf]
      %v5296 = vld [vmem:[#allocation2 + $0x10c] sm:$0xf]
      %v5297 = vld [vmem:[#allocation2 + $0x110] sm:$0xf]
      %v5298 = vld [vmem:[#allocation2 + $0x120] sm:$0xf]
      %v5299 = vld [vmem:[#allocation2 + $0x124] sm:$0xf]
      %v5300 = vld [vmem:[#allocation2 + $0x134] sm:$0xf]
      %v5301 = vld [vmem:[#allocation2 + $0x138] sm:$0xf]
      %v5334 = vunpack.c.l.b16 %v5270
      %v5335 = vunpack.c.l.b16 %v5271
      %v5336 = vunpack.c.l.b16 %v5272
      %v5337 = vunpack.c.l.b16 %v5273
      %v5338 = vunpack.c.l.b16 %v5274
      %v5339 = vunpack.c.l.b16 %v5275
      %v5340 = vunpack.c.l.b16 %v5276
      %v5341 = vunpack.c.l.b16 %v5277
      %v5342 = vunpack.c.l.b16 %v5278
      %v5343 = vunpack.c.l.b16 %v5279
      %v5344 = vunpack.c.l.b16 %v5280
      %v5345 = vunpack.c.l.b16 %v5281
      %v5346 = vunpack.c.l.b16 %v5282
      %v5347 = vunpack.c.l.b16 %v5283
      %v5348 = vunpack.c.l.b16 %v5284
      %v5349 = vunpack.c.l.b16 %v5285
      %v5350 = vunpack.c.l.b16 %v5286
      %v5351 = vunpack.c.l.b16 %v5287
      %v5352 = vunpack.c.l.b16 %v5288
      %v5353 = vunpack.c.l.b16 %v5289
      %v5354 = vunpack.c.l.b16 %v5290
      %v5355 = vunpack.c.l.b16 %v5291
      %v5356 = vunpack.c.l.b16 %v5292
      %v5357 = vunpack.c.l.b16 %v5293
      %v5358 = vunpack.c.l.b16 %v5294
      %v5359 = vunpack.c.l.b16 %v5295
      %v5360 = vunpack.c.l.b16 %v5296
      %v5361 = vunpack.c.l.b16 %v5297
      %v5362 = vunpack.c.l.b16 %v5298
      %v5363 = vunpack.c.l.b16 %v5299
      %v5364 = vunpack.c.l.b16 %v5300
      %v5365 = vunpack.c.l.b16 %v5301
      %v5366 = vpack.c.b16 %v5335, %v5334
      %v5367 = vpack.c.b16 %v5337, %v5336
      %v5368 = vpack.c.b16 %v5339, %v5338
      %v5369 = vpack.c.b16 %v5341, %v5340
      %v5370 = vpack.c.b16 %v5343, %v5342
      %v5371 = vpack.c.b16 %v5345, %v5344
      %v5372 = vpack.c.b16 %v5347, %v5346
      %v5373 = vpack.c.b16 %v5349, %v5348
      %v5374 = vpack.c.b16 %v5351, %v5350
      %v5375 = vpack.c.b16 %v5353, %v5352
      %v5376 = vpack.c.b16 %v5355, %v5354
      %v5377 = vpack.c.b16 %v5357, %v5356
      %v5378 = vpack.c.b16 %v5359, %v5358
      %v5379 = vpack.c.b16 %v5361, %v5360
      %v5380 = vpack.c.b16 %v5363, %v5362
      %v5381 = vpack.c.b16 %v5365, %v5364
      %5382 = vrot.lane.b32.xlu0 %v5366, 4
      %v5383 = vpop.permute.xlu0 %5382
      %5384 = vrot.lane.b32.xlu0 %v5367, 4
      %v5385 = vpop.permute.xlu0 %5384
      %5386 = vrot.lane.b32.xlu0 %v5368, 4
      %v5387 = vpop.permute.xlu0 %5386
      %5388 = vrot.lane.b32.xlu0 %v5369, 4
      %v5389 = vpop.permute.xlu0 %5388
      %5390 = vrot.lane.b32.xlu0 %v5370, 4
      %v5391 = vpop.permute.xlu0 %5390
      %5392 = vrot.lane.b32.xlu0 %v5371, 4
      %v5393 = vpop.permute.xlu0 %5392
      %5394 = vrot.lane.b32.xlu0 %v5372, 4
      %v5395 = vpop.permute.xlu0 %5394
      %5396 = vrot.lane.b32.xlu0 %v5373, 4
      %v5397 = vpop.permute.xlu0 %5396
      %5398 = vrot.lane.b32.xlu0 %v5374, 4
      %v5399 = vpop.permute.xlu0 %5398
      %5400 = vrot.lane.b32.xlu0 %v5375, 4
      %v5401 = vpop.permute.xlu0 %5400
      %5402 = vrot.lane.b32.xlu0 %v5376, 4
      %v5403 = vpop.permute.xlu0 %5402
      %5404 = vrot.lane.b32.xlu0 %v5377, 4
      %v5405 = vpop.permute.xlu0 %5404
      %5406 = vrot.lane.b32.xlu0 %v5378, 4
      %v5407 = vpop.permute.xlu0 %5406
      %5408 = vrot.lane.b32.xlu0 %v5379, 4
      %v5409 = vpop.permute.xlu0 %5408
      %5410 = vrot.lane.b32.xlu0 %v5380, 4
      %v5411 = vpop.permute.xlu0 %5410
      %5412 = vrot.lane.b32.xlu0 %v5381, 4
      %v5413 = vpop.permute.xlu0 %5412
      %5430 = vst.msk [vmem:[#allocation3] sm:$0xff] %vm1234, %v5383
      %5431 = vst.msk [vmem:[#allocation3 + $0x8] sm:$0xff] %vm1234, %v5385
      %5432 = vst.msk [vmem:[#allocation3 + $0x10] sm:$0xff] %vm1234, %v5387
      %5433 = vst.msk [vmem:[#allocation3 + $0x18] sm:$0xff] %vm1234, %v5389
      %5434 = vst.msk [vmem:[#allocation3 + $0x20] sm:$0xff] %vm1234, %v5391
      %5435 = vst.msk [vmem:[#allocation3 + $0x28] sm:$0xff] %vm1234, %v5393
      %5436 = vst.msk [vmem:[#allocation3 + $0x30] sm:$0xff] %vm1234, %v5395
      %5437 = vst.msk [vmem:[#allocation3 + $0x38] sm:$0xff] %vm1234, %v5397
      %5438 = vst.msk [vmem:[#allocation3 + $0x40] sm:$0xff] %vm1234, %v5399
      %5439 = vst.msk [vmem:[#allocation3 + $0x48] sm:$0xff] %vm1234, %v5401
      %5440 = vst.msk [vmem:[#allocation3 + $0x50] sm:$0xff] %vm1234, %v5403
      %5441 = vst.msk [vmem:[#allocation3 + $0x58] sm:$0xff] %vm1234, %v5405
      %5442 = vst.msk [vmem:[#allocation3 + $0x60] sm:$0xff] %vm1234, %v5407
      %5443 = vst.msk [vmem:[#allocation3 + $0x68] sm:$0xff] %vm1234, %v5409
      %5444 = vst.msk [vmem:[#allocation3 + $0x70] sm:$0xff] %vm1234, %v5411
      %5445 = vst.msk [vmem:[#allocation3 + $0x78] sm:$0xff] %vm1234, %v5413
      %v5446 = vld [vmem:[#allocation2 + $0x8] sm:$0xf]
      %v5447 = vld [vmem:[#allocation2 + $0xc] sm:$0xf]
      %v5448 = vld [vmem:[#allocation2 + $0x10] sm:$0x1]
      %v5449 = vld [vmem:[#allocation2 + $0x1c] sm:$0xf]
      %v5450 = vld [vmem:[#allocation2 + $0x20] sm:$0xf]
      %v5451 = vld [vmem:[#allocation2 + $0x24] sm:$0x1]
      %v5452 = vld [vmem:[#allocation2 + $0x30] sm:$0xf]
      %v5453 = vld [vmem:[#allocation2 + $0x34] sm:$0xf]
      %v5454 = vld [vmem:[#allocation2 + $0x38] sm:$0x1]
      %v5455 = vld [vmem:[#allocation2 + $0x44] sm:$0xf]
      %v5456 = vld [vmem:[#allocation2 + $0x48] sm:$0xf]
      %v5457 = vld [vmem:[#allocation2 + $0x4c] sm:$0x1]
      %v5458 = vld [vmem:[#allocation2 + $0x58] sm:$0xf]
      %v5459 = vld [vmem:[#allocation2 + $0x5c] sm:$0xf]
      %v5460 = vld [vmem:[#allocation2 + $0x60] sm:$0x1]
      %v5461 = vld [vmem:[#allocation2 + $0x6c] sm:$0xf]
      %v5462 = vld [vmem:[#allocation2 + $0x70] sm:$0xf]
      %v5463 = vld [vmem:[#allocation2 + $0x74] sm:$0x1]
      %v5464 = vld [vmem:[#allocation2 + $0x80] sm:$0xf]
      %v5465 = vld [vmem:[#allocation2 + $0x84] sm:$0xf]
      %v5466 = vld [vmem:[#allocation2 + $0x88] sm:$0x1]
      %v5467 = vld [vmem:[#allocation2 + $0x94] sm:$0xf]
      %v5468 = vld [vmem:[#allocation2 + $0x98] sm:$0xf]
      %v5469 = vld [vmem:[#allocation2 + $0x9c] sm:$0x1]
      %v5470 = vld [vmem:[#allocation2 + $0xa8] sm:$0xf]
      %v5471 = vld [vmem:[#allocation2 + $0xac] sm:$0xf]
      %v5472 = vld [vmem:[#allocation2 + $0xb0] sm:$0x1]
      %v5473 = vld [vmem:[#allocation2 + $0xbc] sm:$0xf]
      %v5474 = vld [vmem:[#allocation2 + $0xc0] sm:$0xf]
      %v5475 = vld [vmem:[#allocation2 + $0xc4] sm:$0x1]
      %v5476 = vld [vmem:[#allocation2 + $0xd0] sm:$0xf]
      %v5477 = vld [vmem:[#allocation2 + $0xd4] sm:$0xf]
      %v5478 = vld [vmem:[#allocation2 + $0xd8] sm:$0x1]
      %v5479 = vld [vmem:[#allocation2 + $0xe4] sm:$0xf]
      %v5480 = vld [vmem:[#allocation2 + $0xe8] sm:$0xf]
      %v5481 = vld [vmem:[#allocation2 + $0xec] sm:$0x1]
      %v5482 = vld [vmem:[#allocation2 + $0xf8] sm:$0xf]
      %v5483 = vld [vmem:[#allocation2 + $0xfc] sm:$0xf]
      %v5484 = vld [vmem:[#allocation2 + $0x100] sm:$0x1]
      %v5485 = vld [vmem:[#allocation2 + $0x10c] sm:$0xf]
      %v5486 = vld [vmem:[#allocation2 + $0x110] sm:$0xf]
      %v5487 = vld [vmem:[#allocation2 + $0x114] sm:$0x1]
      %v5488 = vld [vmem:[#allocation2 + $0x120] sm:$0xf]
      %v5489 = vld [vmem:[#allocation2 + $0x124] sm:$0xf]
      %v5490 = vld [vmem:[#allocation2 + $0x128] sm:$0x1]
      %v5491 = vld [vmem:[#allocation2 + $0x134] sm:$0xf]
      %v5492 = vld [vmem:[#allocation2 + $0x138] sm:$0xf]
      %v5493 = vld [vmem:[#allocation2 + $0x13c] sm:$0x1]
      %v5495 = vshrl.u32 %v5446, 16
      %v5497 = vrot.slane %v5495, 4
      %v5498 = vshll.u32 %v5446, 16
      %v5500 = vrot.slane %v5498, 5
      %v5501 = vor.u32 %v5497, %v5500
      %v5502 = vrot.slane %v5501, 4
      %v5504 = vshll.u32 %v5447, 16
      %v5506 = vrot.slane %v5504, 5
      %v5507 = vsel %vm1301, %v5502, %v5506
      %v5508 = vshrl.u32 %v5447, 16
      %v5510 = vrot.slane %v5508, 4
      %v5511 = vor.u32 %v5510, %v5506
      %v5512 = vrot.slane %v5511, 4
      %v5514 = vshll.u32 %v5448, 16
      %v5516 = vrot.slane %v5514, 5
      %v5517 = vsel %vm1301, %v5512, %v5516
      %v5519 = vshrl.u32 %v5449, 16
      %v5521 = vrot.slane %v5519, 4
      %v5522 = vshll.u32 %v5449, 16
      %v5524 = vrot.slane %v5522, 5
      %v5525 = vor.u32 %v5521, %v5524
      %v5526 = vrot.slane %v5525, 4
      %v5528 = vshll.u32 %v5450, 16
      %v5530 = vrot.slane %v5528, 5
      %v5531 = vsel %vm1301, %v5526, %v5530
      %v5532 = vshrl.u32 %v5450, 16
      %v5534 = vrot.slane %v5532, 4
      %v5535 = vor.u32 %v5534, %v5530
      %v5536 = vrot.slane %v5535, 4
      %v5538 = vshll.u32 %v5451, 16
      %v5540 = vrot.slane %v5538, 5
      %v5541 = vsel %vm1301, %v5536, %v5540
      %v5543 = vshrl.u32 %v5452, 16
      %v5545 = vrot.slane %v5543, 4
      %v5546 = vshll.u32 %v5452, 16
      %v5548 = vrot.slane %v5546, 5
      %v5549 = vor.u32 %v5545, %v5548
      %v5550 = vrot.slane %v5549, 4
      %v5552 = vshll.u32 %v5453, 16
      %v5554 = vrot.slane %v5552, 5
      %v5555 = vsel %vm1301, %v5550, %v5554
      %v5556 = vshrl.u32 %v5453, 16
      %v5558 = vrot.slane %v5556, 4
      %v5559 = vor.u32 %v5558, %v5554
      %v5560 = vrot.slane %v5559, 4
      %v5562 = vshll.u32 %v5454, 16
      %v5564 = vrot.slane %v5562, 5
      %v5565 = vsel %vm1301, %v5560, %v5564
      %v5567 = vshrl.u32 %v5455, 16
      %v5569 = vrot.slane %v5567, 4
      %v5570 = vshll.u32 %v5455, 16
      %v5572 = vrot.slane %v5570, 5
      %v5573 = vor.u32 %v5569, %v5572
      %v5574 = vrot.slane %v5573, 4
      %v5576 = vshll.u32 %v5456, 16
      %v5578 = vrot.slane %v5576, 5
      %v5579 = vsel %vm1301, %v5574, %v5578
      %v5580 = vshrl.u32 %v5456, 16
      %v5582 = vrot.slane %v5580, 4
      %v5583 = vor.u32 %v5582, %v5578
      %v5584 = vrot.slane %v5583, 4
      %v5586 = vshll.u32 %v5457, 16
      %v5588 = vrot.slane %v5586, 5
      %v5589 = vsel %vm1301, %v5584, %v5588
      %v5591 = vshrl.u32 %v5458, 16
      %v5593 = vrot.slane %v5591, 4
      %v5594 = vshll.u32 %v5458, 16
      %v5596 = vrot.slane %v5594, 5
      %v5597 = vor.u32 %v5593, %v5596
      %v5598 = vrot.slane %v5597, 4
      %v5600 = vshll.u32 %v5459, 16
      %v5602 = vrot.slane %v5600, 5
      %v5603 = vsel %vm1301, %v5598, %v5602
      %v5604 = vshrl.u32 %v5459, 16
      %v5606 = vrot.slane %v5604, 4
      %v5607 = vor.u32 %v5606, %v5602
      %v5608 = vrot.slane %v5607, 4
      %v5610 = vshll.u32 %v5460, 16
      %v5612 = vrot.slane %v5610, 5
      %v5613 = vsel %vm1301, %v5608, %v5612
      %v5615 = vshrl.u32 %v5461, 16
      %v5617 = vrot.slane %v5615, 4
      %v5618 = vshll.u32 %v5461, 16
      %v5620 = vrot.slane %v5618, 5
      %v5621 = vor.u32 %v5617, %v5620
      %v5622 = vrot.slane %v5621, 4
      %v5624 = vshll.u32 %v5462, 16
      %v5626 = vrot.slane %v5624, 5
      %v5627 = vsel %vm1301, %v5622, %v5626
      %v5628 = vshrl.u32 %v5462, 16
      %v5630 = vrot.slane %v5628, 4
      %v5631 = vor.u32 %v5630, %v5626
      %v5632 = vrot.slane %v5631, 4
      %v5634 = vshll.u32 %v5463, 16
      %v5636 = vrot.slane %v5634, 5
      %v5637 = vsel %vm1301, %v5632, %v5636
      %v5639 = vshrl.u32 %v5464, 16
      %v5641 = vrot.slane %v5639, 4
      %v5642 = vshll.u32 %v5464, 16
      %v5644 = vrot.slane %v5642, 5
      %v5645 = vor.u32 %v5641, %v5644
      %v5646 = vrot.slane %v5645, 4
      %v5648 = vshll.u32 %v5465, 16
      %v5650 = vrot.slane %v5648, 5
      %v5651 = vsel %vm1301, %v5646, %v5650
      %v5652 = vshrl.u32 %v5465, 16
      %v5654 = vrot.slane %v5652, 4
      %v5655 = vor.u32 %v5654, %v5650
      %v5656 = vrot.slane %v5655, 4
      %v5658 = vshll.u32 %v5466, 16
      %v5660 = vrot.slane %v5658, 5
      %v5661 = vsel %vm1301, %v5656, %v5660
      %v5663 = vshrl.u32 %v5467, 16
      %v5665 = vrot.slane %v5663, 4
      %v5666 = vshll.u32 %v5467, 16
      %v5668 = vrot.slane %v5666, 5
      %v5669 = vor.u32 %v5665, %v5668
      %v5670 = vrot.slane %v5669, 4
      %v5672 = vshll.u32 %v5468, 16
      %v5674 = vrot.slane %v5672, 5
      %v5675 = vsel %vm1301, %v5670, %v5674
      %v5676 = vshrl.u32 %v5468, 16
      %v5678 = vrot.slane %v5676, 4
      %v5679 = vor.u32 %v5678, %v5674
      %v5680 = vrot.slane %v5679, 4
      %v5682 = vshll.u32 %v5469, 16
      %v5684 = vrot.slane %v5682, 5
      %v5685 = vsel %vm1301, %v5680, %v5684
      %v5687 = vshrl.u32 %v5470, 16
      %v5689 = vrot.slane %v5687, 4
      %v5690 = vshll.u32 %v5470, 16
      %v5692 = vrot.slane %v5690, 5
      %v5693 = vor.u32 %v5689, %v5692
      %v5694 = vrot.slane %v5693, 4
      %v5696 = vshll.u32 %v5471, 16
      %v5698 = vrot.slane %v5696, 5
      %v5699 = vsel %vm1301, %v5694, %v5698
      %v5700 = vshrl.u32 %v5471, 16
      %v5702 = vrot.slane %v5700, 4
      %v5703 = vor.u32 %v5702, %v5698
      %v5704 = vrot.slane %v5703, 4
      %v5706 = vshll.u32 %v5472, 16
      %v5708 = vrot.slane %v5706, 5
      %v5709 = vsel %vm1301, %v5704, %v5708
      %v5711 = vshrl.u32 %v5473, 16
      %v5713 = vrot.slane %v5711, 4
      %v5714 = vshll.u32 %v5473, 16
      %v5716 = vrot.slane %v5714, 5
      %v5717 = vor.u32 %v5713, %v5716
      %v5718 = vrot.slane %v5717, 4
      %v5720 = vshll.u32 %v5474, 16
      %v5722 = vrot.slane %v5720, 5
      %v5723 = vsel %vm1301, %v5718, %v5722
      %v5724 = vshrl.u32 %v5474, 16
      %v5726 = vrot.slane %v5724, 4
      %v5727 = vor.u32 %v5726, %v5722
      %v5728 = vrot.slane %v5727, 4
      %v5730 = vshll.u32 %v5475, 16
      %v5732 = vrot.slane %v5730, 5
      %v5733 = vsel %vm1301, %v5728, %v5732
      %v5735 = vshrl.u32 %v5476, 16
      %v5737 = vrot.slane %v5735, 4
      %v5738 = vshll.u32 %v5476, 16
      %v5740 = vrot.slane %v5738, 5
      %v5741 = vor.u32 %v5737, %v5740
      %v5742 = vrot.slane %v5741, 4
      %v5744 = vshll.u32 %v5477, 16
      %v5746 = vrot.slane %v5744, 5
      %v5747 = vsel %vm1301, %v5742, %v5746
      %v5748 = vshrl.u32 %v5477, 16
      %v5750 = vrot.slane %v5748, 4
      %v5751 = vor.u32 %v5750, %v5746
      %v5752 = vrot.slane %v5751, 4
      %v5754 = vshll.u32 %v5478, 16
      %v5756 = vrot.slane %v5754, 5
      %v5757 = vsel %vm1301, %v5752, %v5756
      %v5759 = vshrl.u32 %v5479, 16
      %v5761 = vrot.slane %v5759, 4
      %v5762 = vshll.u32 %v5479, 16
      %v5764 = vrot.slane %v5762, 5
      %v5765 = vor.u32 %v5761, %v5764
      %v5766 = vrot.slane %v5765, 4
      %v5768 = vshll.u32 %v5480, 16
      %v5770 = vrot.slane %v5768, 5
      %v5771 = vsel %vm1301, %v5766, %v5770
      %v5772 = vshrl.u32 %v5480, 16
      %v5774 = vrot.slane %v5772, 4
      %v5775 = vor.u32 %v5774, %v5770
      %v5776 = vrot.slane %v5775, 4
      %v5778 = vshll.u32 %v5481, 16
      %v5780 = vrot.slane %v5778, 5
      %v5781 = vsel %vm1301, %v5776, %v5780
      %v5783 = vshrl.u32 %v5482, 16
      %v5785 = vrot.slane %v5783, 4
      %v5786 = vshll.u32 %v5482, 16
      %v5788 = vrot.slane %v5786, 5
      %v5789 = vor.u32 %v5785, %v5788
      %v5790 = vrot.slane %v5789, 4
      %v5792 = vshll.u32 %v5483, 16
      %v5794 = vrot.slane %v5792, 5
      %v5795 = vsel %vm1301, %v5790, %v5794
      %v5796 = vshrl.u32 %v5483, 16
      %v5798 = vrot.slane %v5796, 4
      %v5799 = vor.u32 %v5798, %v5794
      %v5800 = vrot.slane %v5799, 4
      %v5802 = vshll.u32 %v5484, 16
      %v5804 = vrot.slane %v5802, 5
      %v5805 = vsel %vm1301, %v5800, %v5804
      %v5807 = vshrl.u32 %v5485, 16
      %v5809 = vrot.slane %v5807, 4
      %v5810 = vshll.u32 %v5485, 16
      %v5812 = vrot.slane %v5810, 5
      %v5813 = vor.u32 %v5809, %v5812
      %v5814 = vrot.slane %v5813, 4
      %v5816 = vshll.u32 %v5486, 16
      %v5818 = vrot.slane %v5816, 5
      %v5819 = vsel %vm1301, %v5814, %v5818
      %v5820 = vshrl.u32 %v5486, 16
      %v5822 = vrot.slane %v5820, 4
      %v5823 = vor.u32 %v5822, %v5818
      %v5824 = vrot.slane %v5823, 4
      %v5826 = vshll.u32 %v5487, 16
      %v5828 = vrot.slane %v5826, 5
      %v5829 = vsel %vm1301, %v5824, %v5828
      %v5831 = vshrl.u32 %v5488, 16
      %v5833 = vrot.slane %v5831, 4
      %v5834 = vshll.u32 %v5488, 16
      %v5836 = vrot.slane %v5834, 5
      %v5837 = vor.u32 %v5833, %v5836
      %v5838 = vrot.slane %v5837, 4
      %v5840 = vshll.u32 %v5489, 16
      %v5842 = vrot.slane %v5840, 5
      %v5843 = vsel %vm1301, %v5838, %v5842
      %v5844 = vshrl.u32 %v5489, 16
      %v5846 = vrot.slane %v5844, 4
      %v5847 = vor.u32 %v5846, %v5842
      %v5848 = vrot.slane %v5847, 4
      %v5850 = vshll.u32 %v5490, 16
      %v5852 = vrot.slane %v5850, 5
      %v5853 = vsel %vm1301, %v5848, %v5852
      %v5855 = vshrl.u32 %v5491, 16
      %v5857 = vrot.slane %v5855, 4
      %v5858 = vshll.u32 %v5491, 16
      %v5860 = vrot.slane %v5858, 5
      %v5861 = vor.u32 %v5857, %v5860
      %v5862 = vrot.slane %v5861, 4
      %v5864 = vshll.u32 %v5492, 16
      %v5866 = vrot.slane %v5864, 5
      %v5867 = vsel %vm1301, %v5862, %v5866
      %v5868 = vshrl.u32 %v5492, 16
      %v5870 = vrot.slane %v5868, 4
      %v5871 = vor.u32 %v5870, %v5866
      %v5872 = vrot.slane %v5871, 4
      %v5874 = vshll.u32 %v5493, 16
      %v5876 = vrot.slane %v5874, 5
      %v5877 = vsel %vm1301, %v5872, %v5876
      %v5878 = vunpack.c.l.b16 %v5507
      %v5879 = vunpack.c.l.b16 %v5517
      %v5880 = vunpack.c.l.b16 %v5531
      %v5881 = vunpack.c.l.b16 %v5541
      %v5882 = vunpack.c.l.b16 %v5555
      %v5883 = vunpack.c.l.b16 %v5565
      %v5884 = vunpack.c.l.b16 %v5579
      %v5885 = vunpack.c.l.b16 %v5589
      %v5886 = vunpack.c.l.b16 %v5603
      %v5887 = vunpack.c.l.b16 %v5613
      %v5888 = vunpack.c.l.b16 %v5627
      %v5889 = vunpack.c.l.b16 %v5637
      %v5890 = vunpack.c.l.b16 %v5651
      %v5891 = vunpack.c.l.b16 %v5661
      %v5892 = vunpack.c.l.b16 %v5675
      %v5893 = vunpack.c.l.b16 %v5685
      %v5894 = vunpack.c.l.b16 %v5699
      %v5895 = vunpack.c.l.b16 %v5709
      %v5896 = vunpack.c.l.b16 %v5723
      %v5897 = vunpack.c.l.b16 %v5733
      %v5898 = vunpack.c.l.b16 %v5747
      %v5899 = vunpack.c.l.b16 %v5757
      %v5900 = vunpack.c.l.b16 %v5771
      %v5901 = vunpack.c.l.b16 %v5781
      %v5902 = vunpack.c.l.b16 %v5795
      %v5903 = vunpack.c.l.b16 %v5805
      %v5904 = vunpack.c.l.b16 %v5819
      %v5905 = vunpack.c.l.b16 %v5829
      %v5906 = vunpack.c.l.b16 %v5843
      %v5907 = vunpack.c.l.b16 %v5853
      %v5908 = vunpack.c.l.b16 %v5867
      %v5909 = vunpack.c.l.b16 %v5877
      %v5910 = vpack.c.b16 %v5879, %v5878
      %v5911 = vpack.c.b16 %v5881, %v5880
      %v5912 = vpack.c.b16 %v5883, %v5882
      %v5913 = vpack.c.b16 %v5885, %v5884
      %v5914 = vpack.c.b16 %v5887, %v5886
      %v5915 = vpack.c.b16 %v5889, %v5888
      %v5916 = vpack.c.b16 %v5891, %v5890
      %v5917 = vpack.c.b16 %v5893, %v5892
      %v5918 = vpack.c.b16 %v5895, %v5894
      %v5919 = vpack.c.b16 %v5897, %v5896
      %v5920 = vpack.c.b16 %v5899, %v5898
      %v5921 = vpack.c.b16 %v5901, %v5900
      %v5922 = vpack.c.b16 %v5903, %v5902
      %v5923 = vpack.c.b16 %v5905, %v5904
      %v5924 = vpack.c.b16 %v5907, %v5906
      %v5925 = vpack.c.b16 %v5909, %v5908
      %5926 = vrot.lane.b32.xlu0 %v5910, 8
      %v5927 = vpop.permute.xlu0 %5926
      %5928 = vrot.lane.b32.xlu0 %v5911, 8
      %v5929 = vpop.permute.xlu0 %5928
      %5930 = vrot.lane.b32.xlu0 %v5912, 8
      %v5931 = vpop.permute.xlu0 %5930
      %5932 = vrot.lane.b32.xlu0 %v5913, 8
      %v5933 = vpop.permute.xlu0 %5932
      %5934 = vrot.lane.b32.xlu0 %v5914, 8
      %v5935 = vpop.permute.xlu0 %5934
      %5936 = vrot.lane.b32.xlu0 %v5915, 8
      %v5937 = vpop.permute.xlu0 %5936
      %5938 = vrot.lane.b32.xlu0 %v5916, 8
      %v5939 = vpop.permute.xlu0 %5938
      %5940 = vrot.lane.b32.xlu0 %v5917, 8
      %v5941 = vpop.permute.xlu0 %5940
      %5942 = vrot.lane.b32.xlu0 %v5918, 8
      %v5943 = vpop.permute.xlu0 %5942
      %5944 = vrot.lane.b32.xlu0 %v5919, 8
      %v5945 = vpop.permute.xlu0 %5944
      %5946 = vrot.lane.b32.xlu0 %v5920, 8
      %v5947 = vpop.permute.xlu0 %5946
      %5948 = vrot.lane.b32.xlu0 %v5921, 8
      %v5949 = vpop.permute.xlu0 %5948
      %5950 = vrot.lane.b32.xlu0 %v5922, 8
      %v5951 = vpop.permute.xlu0 %5950
      %5952 = vrot.lane.b32.xlu0 %v5923, 8
      %v5953 = vpop.permute.xlu0 %5952
      %5954 = vrot.lane.b32.xlu0 %v5924, 8
      %v5955 = vpop.permute.xlu0 %5954
      %5956 = vrot.lane.b32.xlu0 %v5925, 8
      %v5957 = vpop.permute.xlu0 %5956
      %5974 = vst.msk [vmem:[#allocation3] sm:$0xff] %vm1782, %v5927
      %5975 = vst.msk [vmem:[#allocation3 + $0x8] sm:$0xff] %vm1782, %v5929
      %5976 = vst.msk [vmem:[#allocation3 + $0x10] sm:$0xff] %vm1782, %v5931
      %5977 = vst.msk [vmem:[#allocation3 + $0x18] sm:$0xff] %vm1782, %v5933
      %5978 = vst.msk [vmem:[#allocation3 + $0x20] sm:$0xff] %vm1782, %v5935
      %5979 = vst.msk [vmem:[#allocation3 + $0x28] sm:$0xff] %vm1782, %v5937
      %5980 = vst.msk [vmem:[#allocation3 + $0x30] sm:$0xff] %vm1782, %v5939
      %5981 = vst.msk [vmem:[#allocation3 + $0x38] sm:$0xff] %vm1782, %v5941
      %5982 = vst.msk [vmem:[#allocation3 + $0x40] sm:$0xff] %vm1782, %v5943
      %5983 = vst.msk [vmem:[#allocation3 + $0x48] sm:$0xff] %vm1782, %v5945
      %5984 = vst.msk [vmem:[#allocation3 + $0x50] sm:$0xff] %vm1782, %v5947
      %5985 = vst.msk [vmem:[#allocation3 + $0x58] sm:$0xff] %vm1782, %v5949
      %5986 = vst.msk [vmem:[#allocation3 + $0x60] sm:$0xff] %vm1782, %v5951
      %5987 = vst.msk [vmem:[#allocation3 + $0x68] sm:$0xff] %vm1782, %v5953
      %5988 = vst.msk [vmem:[#allocation3 + $0x70] sm:$0xff] %vm1782, %v5955
      %5989 = vst.msk [vmem:[#allocation3 + $0x78] sm:$0xff] %vm1782, %v5957
      %v5990 = vld [vmem:[%s331 + $0x4] sm:$0x8]
      %v5991 = vld [vmem:[%s331 + $0x8] sm:$0xf]
      %v5992 = vld [vmem:[%s331 + $0xc] sm:$0xf]
      %v5993 = vld [vmem:[%s331 + $0x18] sm:$0x8]
      %v5994 = vld [vmem:[%s331 + $0x1c] sm:$0xf]
      %v5995 = vld [vmem:[%s331 + $0x20] sm:$0xf]
      %v5996 = vld [vmem:[%s331 + $0x2c] sm:$0x8]
      %v5997 = vld [vmem:[%s331 + $0x30] sm:$0xf]
      %v5998 = vld [vmem:[%s331 + $0x34] sm:$0xf]
      %v5999 = vld [vmem:[%s331 + $0x40] sm:$0x8]
      %v6000 = vld [vmem:[%s331 + $0x44] sm:$0xf]
      %v6001 = vld [vmem:[%s331 + $0x48] sm:$0xf]
      %v6002 = vld [vmem:[%s331 + $0x54] sm:$0x8]
      %v6003 = vld [vmem:[%s331 + $0x58] sm:$0xf]
      %v6004 = vld [vmem:[%s331 + $0x5c] sm:$0xf]
      %v6005 = vld [vmem:[%s331 + $0x68] sm:$0x8]
      %v6006 = vld [vmem:[%s331 + $0x6c] sm:$0xf]
      %v6007 = vld [vmem:[%s331 + $0x70] sm:$0xf]
      %v6008 = vld [vmem:[%s331 + $0x7c] sm:$0x8]
      %v6009 = vld [vmem:[%s331 + $0x80] sm:$0xf]
      %v6010 = vld [vmem:[%s331 + $0x84] sm:$0xf]
      %v6011 = vld [vmem:[%s331 + $0x90] sm:$0x8]
      %v6012 = vld [vmem:[%s331 + $0x94] sm:$0xf]
      %v6013 = vld [vmem:[%s331 + $0x98] sm:$0xf]
      %v6014 = vld [vmem:[%s331 + $0xa4] sm:$0x8]
      %v6015 = vld [vmem:[%s331 + $0xa8] sm:$0xf]
      %v6016 = vld [vmem:[%s331 + $0xac] sm:$0xf]
      %v6017 = vld [vmem:[%s331 + $0xb8] sm:$0x8]
      %v6018 = vld [vmem:[%s331 + $0xbc] sm:$0xf]
      %v6019 = vld [vmem:[%s331 + $0xc0] sm:$0xf]
      %v6020 = vld [vmem:[%s331 + $0xcc] sm:$0x8]
      %v6021 = vld [vmem:[%s331 + $0xd0] sm:$0xf]
      %v6022 = vld [vmem:[%s331 + $0xd4] sm:$0xf]
      %v6023 = vld [vmem:[%s331 + $0xe0] sm:$0x8]
      %v6024 = vld [vmem:[%s331 + $0xe4] sm:$0xf]
      %v6025 = vld [vmem:[%s331 + $0xe8] sm:$0xf]
      %v6026 = vld [vmem:[%s331 + $0xf4] sm:$0x8]
      %v6027 = vld [vmem:[%s331 + $0xf8] sm:$0xf]
      %v6028 = vld [vmem:[%s331 + $0xfc] sm:$0xf]
      %v6029 = vld [vmem:[%s331 + $0x108] sm:$0x8]
      %v6030 = vld [vmem:[%s331 + $0x10c] sm:$0xf]
      %v6031 = vld [vmem:[%s331 + $0x110] sm:$0xf]
      %v6032 = vld [vmem:[%s331 + $0x11c] sm:$0x8]
      %v6033 = vld [vmem:[%s331 + $0x120] sm:$0xf]
      %v6034 = vld [vmem:[%s331 + $0x124] sm:$0xf]
      %v6035 = vld [vmem:[%s331 + $0x130] sm:$0x8]
      %v6036 = vld [vmem:[%s331 + $0x134] sm:$0xf]
      %v6037 = vld [vmem:[%s331 + $0x138] sm:$0xf]
      %v6039 = vshrl.u32 %v5990, 16
      %v6041 = vrot.slane %v6039, 7
      %v6042 = vrot.slane %v6041, 4
      %v6044 = vshrl.u32 %v5991, 16
      %v6046 = vrot.slane %v6044, 7
      %v6047 = vshll.u32 %v5991, 16
      %v6049 = vor.u32 %v6046, %v6047
      %v6050 = vsel %vm640, %v6042, %v6049
      %v6051 = vrot.slane %v6046, 4
      %v6053 = vshrl.u32 %v5992, 16
      %v6055 = vrot.slane %v6053, 7
      %v6056 = vshll.u32 %v5992, 16
      %v6058 = vor.u32 %v6055, %v6056
      %v6059 = vsel %vm640, %v6051, %v6058
      %v6061 = vshrl.u32 %v5993, 16
      %v6063 = vrot.slane %v6061, 7
      %v6064 = vrot.slane %v6063, 4
      %v6066 = vshrl.u32 %v5994, 16
      %v6068 = vrot.slane %v6066, 7
      %v6069 = vshll.u32 %v5994, 16
      %v6071 = vor.u32 %v6068, %v6069
      %v6072 = vsel %vm640, %v6064, %v6071
      %v6073 = vrot.slane %v6068, 4
      %v6075 = vshrl.u32 %v5995, 16
      %v6077 = vrot.slane %v6075, 7
      %v6078 = vshll.u32 %v5995, 16
      %v6080 = vor.u32 %v6077, %v6078
      %v6081 = vsel %vm640, %v6073, %v6080
      %v6083 = vshrl.u32 %v5996, 16
      %v6085 = vrot.slane %v6083, 7
      %v6086 = vrot.slane %v6085, 4
      %v6088 = vshrl.u32 %v5997, 16
      %v6090 = vrot.slane %v6088, 7
      %v6091 = vshll.u32 %v5997, 16
      %v6093 = vor.u32 %v6090, %v6091
      %v6094 = vsel %vm640, %v6086, %v6093
      %v6095 = vrot.slane %v6090, 4
      %v6097 = vshrl.u32 %v5998, 16
      %v6099 = vrot.slane %v6097, 7
      %v6100 = vshll.u32 %v5998, 16
      %v6102 = vor.u32 %v6099, %v6100
      %v6103 = vsel %vm640, %v6095, %v6102
      %v6105 = vshrl.u32 %v5999, 16
      %v6107 = vrot.slane %v6105, 7
      %v6108 = vrot.slane %v6107, 4
      %v6110 = vshrl.u32 %v6000, 16
      %v6112 = vrot.slane %v6110, 7
      %v6113 = vshll.u32 %v6000, 16
      %v6115 = vor.u32 %v6112, %v6113
      %v6116 = vsel %vm640, %v6108, %v6115
      %v6117 = vrot.slane %v6112, 4
      %v6119 = vshrl.u32 %v6001, 16
      %v6121 = vrot.slane %v6119, 7
      %v6122 = vshll.u32 %v6001, 16
      %v6124 = vor.u32 %v6121, %v6122
      %v6125 = vsel %vm640, %v6117, %v6124
      %v6127 = vshrl.u32 %v6002, 16
      %v6129 = vrot.slane %v6127, 7
      %v6130 = vrot.slane %v6129, 4
      %v6132 = vshrl.u32 %v6003, 16
      %v6134 = vrot.slane %v6132, 7
      %v6135 = vshll.u32 %v6003, 16
      %v6137 = vor.u32 %v6134, %v6135
      %v6138 = vsel %vm640, %v6130, %v6137
      %v6139 = vrot.slane %v6134, 4
      %v6141 = vshrl.u32 %v6004, 16
      %v6143 = vrot.slane %v6141, 7
      %v6144 = vshll.u32 %v6004, 16
      %v6146 = vor.u32 %v6143, %v6144
      %v6147 = vsel %vm640, %v6139, %v6146
      %v6149 = vshrl.u32 %v6005, 16
      %v6151 = vrot.slane %v6149, 7
      %v6152 = vrot.slane %v6151, 4
      %v6154 = vshrl.u32 %v6006, 16
      %v6156 = vrot.slane %v6154, 7
      %v6157 = vshll.u32 %v6006, 16
      %v6159 = vor.u32 %v6156, %v6157
      %v6160 = vsel %vm640, %v6152, %v6159
      %v6161 = vrot.slane %v6156, 4
      %v6163 = vshrl.u32 %v6007, 16
      %v6165 = vrot.slane %v6163, 7
      %v6166 = vshll.u32 %v6007, 16
      %v6168 = vor.u32 %v6165, %v6166
      %v6169 = vsel %vm640, %v6161, %v6168
      %v6171 = vshrl.u32 %v6008, 16
      %v6173 = vrot.slane %v6171, 7
      %v6174 = vrot.slane %v6173, 4
      %v6176 = vshrl.u32 %v6009, 16
      %v6178 = vrot.slane %v6176, 7
      %v6179 = vshll.u32 %v6009, 16
      %v6181 = vor.u32 %v6178, %v6179
      %v6182 = vsel %vm640, %v6174, %v6181
      %v6183 = vrot.slane %v6178, 4
      %v6185 = vshrl.u32 %v6010, 16
      %v6187 = vrot.slane %v6185, 7
      %v6188 = vshll.u32 %v6010, 16
      %v6190 = vor.u32 %v6187, %v6188
      %v6191 = vsel %vm640, %v6183, %v6190
      %v6193 = vshrl.u32 %v6011, 16
      %v6195 = vrot.slane %v6193, 7
      %v6196 = vrot.slane %v6195, 4
      %v6198 = vshrl.u32 %v6012, 16
      %v6200 = vrot.slane %v6198, 7
      %v6201 = vshll.u32 %v6012, 16
      %v6203 = vor.u32 %v6200, %v6201
      %v6204 = vsel %vm640, %v6196, %v6203
      %v6205 = vrot.slane %v6200, 4
      %v6207 = vshrl.u32 %v6013, 16
      %v6209 = vrot.slane %v6207, 7
      %v6210 = vshll.u32 %v6013, 16
      %v6212 = vor.u32 %v6209, %v6210
      %v6213 = vsel %vm640, %v6205, %v6212
      %v6215 = vshrl.u32 %v6014, 16
      %v6217 = vrot.slane %v6215, 7
      %v6218 = vrot.slane %v6217, 4
      %v6220 = vshrl.u32 %v6015, 16
      %v6222 = vrot.slane %v6220, 7
      %v6223 = vshll.u32 %v6015, 16
      %v6225 = vor.u32 %v6222, %v6223
      %v6226 = vsel %vm640, %v6218, %v6225
      %v6227 = vrot.slane %v6222, 4
      %v6229 = vshrl.u32 %v6016, 16
      %v6231 = vrot.slane %v6229, 7
      %v6232 = vshll.u32 %v6016, 16
      %v6234 = vor.u32 %v6231, %v6232
      %v6235 = vsel %vm640, %v6227, %v6234
      %v6237 = vshrl.u32 %v6017, 16
      %v6239 = vrot.slane %v6237, 7
      %v6240 = vrot.slane %v6239, 4
      %v6242 = vshrl.u32 %v6018, 16
      %v6244 = vrot.slane %v6242, 7
      %v6245 = vshll.u32 %v6018, 16
      %v6247 = vor.u32 %v6244, %v6245
      %v6248 = vsel %vm640, %v6240, %v6247
      %v6249 = vrot.slane %v6244, 4
      %v6251 = vshrl.u32 %v6019, 16
      %v6253 = vrot.slane %v6251, 7
      %v6254 = vshll.u32 %v6019, 16
      %v6256 = vor.u32 %v6253, %v6254
      %v6257 = vsel %vm640, %v6249, %v6256
      %v6259 = vshrl.u32 %v6020, 16
      %v6261 = vrot.slane %v6259, 7
      %v6262 = vrot.slane %v6261, 4
      %v6264 = vshrl.u32 %v6021, 16
      %v6266 = vrot.slane %v6264, 7
      %v6267 = vshll.u32 %v6021, 16
      %v6269 = vor.u32 %v6266, %v6267
      %v6270 = vsel %vm640, %v6262, %v6269
      %v6271 = vrot.slane %v6266, 4
      %v6273 = vshrl.u32 %v6022, 16
      %v6275 = vrot.slane %v6273, 7
      %v6276 = vshll.u32 %v6022, 16
      %v6278 = vor.u32 %v6275, %v6276
      %v6279 = vsel %vm640, %v6271, %v6278
      %v6281 = vshrl.u32 %v6023, 16
      %v6283 = vrot.slane %v6281, 7
      %v6284 = vrot.slane %v6283, 4
      %v6286 = vshrl.u32 %v6024, 16
      %v6288 = vrot.slane %v6286, 7
      %v6289 = vshll.u32 %v6024, 16
      %v6291 = vor.u32 %v6288, %v6289
      %v6292 = vsel %vm640, %v6284, %v6291
      %v6293 = vrot.slane %v6288, 4
      %v6295 = vshrl.u32 %v6025, 16
      %v6297 = vrot.slane %v6295, 7
      %v6298 = vshll.u32 %v6025, 16
      %v6300 = vor.u32 %v6297, %v6298
      %v6301 = vsel %vm640, %v6293, %v6300
      %v6303 = vshrl.u32 %v6026, 16
      %v6305 = vrot.slane %v6303, 7
      %v6306 = vrot.slane %v6305, 4
      %v6308 = vshrl.u32 %v6027, 16
      %v6310 = vrot.slane %v6308, 7
      %v6311 = vshll.u32 %v6027, 16
      %v6313 = vor.u32 %v6310, %v6311
      %v6314 = vsel %vm640, %v6306, %v6313
      %v6315 = vrot.slane %v6310, 4
      %v6317 = vshrl.u32 %v6028, 16
      %v6319 = vrot.slane %v6317, 7
      %v6320 = vshll.u32 %v6028, 16
      %v6322 = vor.u32 %v6319, %v6320
      %v6323 = vsel %vm640, %v6315, %v6322
      %v6325 = vshrl.u32 %v6029, 16
      %v6327 = vrot.slane %v6325, 7
      %v6328 = vrot.slane %v6327, 4
      %v6330 = vshrl.u32 %v6030, 16
      %v6332 = vrot.slane %v6330, 7
      %v6333 = vshll.u32 %v6030, 16
      %v6335 = vor.u32 %v6332, %v6333
      %v6336 = vsel %vm640, %v6328, %v6335
      %v6337 = vrot.slane %v6332, 4
      %v6339 = vshrl.u32 %v6031, 16
      %v6341 = vrot.slane %v6339, 7
      %v6342 = vshll.u32 %v6031, 16
      %v6344 = vor.u32 %v6341, %v6342
      %v6345 = vsel %vm640, %v6337, %v6344
      %v6347 = vshrl.u32 %v6032, 16
      %v6349 = vrot.slane %v6347, 7
      %v6350 = vrot.slane %v6349, 4
      %v6352 = vshrl.u32 %v6033, 16
      %v6354 = vrot.slane %v6352, 7
      %v6355 = vshll.u32 %v6033, 16
      %v6357 = vor.u32 %v6354, %v6355
      %v6358 = vsel %vm640, %v6350, %v6357
      %v6359 = vrot.slane %v6354, 4
      %v6361 = vshrl.u32 %v6034, 16
      %v6363 = vrot.slane %v6361, 7
      %v6364 = vshll.u32 %v6034, 16
      %v6366 = vor.u32 %v6363, %v6364
      %v6367 = vsel %vm640, %v6359, %v6366
      %v6369 = vshrl.u32 %v6035, 16
      %v6371 = vrot.slane %v6369, 7
      %v6372 = vrot.slane %v6371, 4
      %v6374 = vshrl.u32 %v6036, 16
      %v6376 = vrot.slane %v6374, 7
      %v6377 = vshll.u32 %v6036, 16
      %v6379 = vor.u32 %v6376, %v6377
      %v6380 = vsel %vm640, %v6372, %v6379
      %v6381 = vrot.slane %v6376, 4
      %v6383 = vshrl.u32 %v6037, 16
      %v6385 = vrot.slane %v6383, 7
      %v6386 = vshll.u32 %v6037, 16
      %v6388 = vor.u32 %v6385, %v6386
      %v6389 = vsel %vm640, %v6381, %v6388
      %v6390 = vunpack.c.l.b16 %v6050
      %v6391 = vunpack.c.l.b16 %v6059
      %v6392 = vunpack.c.l.b16 %v6072
      %v6393 = vunpack.c.l.b16 %v6081
      %v6394 = vunpack.c.l.b16 %v6094
      %v6395 = vunpack.c.l.b16 %v6103
      %v6396 = vunpack.c.l.b16 %v6116
      %v6397 = vunpack.c.l.b16 %v6125
      %v6398 = vunpack.c.l.b16 %v6138
      %v6399 = vunpack.c.l.b16 %v6147
      %v6400 = vunpack.c.l.b16 %v6160
      %v6401 = vunpack.c.l.b16 %v6169
      %v6402 = vunpack.c.l.b16 %v6182
      %v6403 = vunpack.c.l.b16 %v6191
      %v6404 = vunpack.c.l.b16 %v6204
      %v6405 = vunpack.c.l.b16 %v6213
      %v6406 = vunpack.c.l.b16 %v6226
      %v6407 = vunpack.c.l.b16 %v6235
      %v6408 = vunpack.c.l.b16 %v6248
      %v6409 = vunpack.c.l.b16 %v6257
      %v6410 = vunpack.c.l.b16 %v6270
      %v6411 = vunpack.c.l.b16 %v6279
      %v6412 = vunpack.c.l.b16 %v6292
      %v6413 = vunpack.c.l.b16 %v6301
      %v6414 = vunpack.c.l.b16 %v6314
      %v6415 = vunpack.c.l.b16 %v6323
      %v6416 = vunpack.c.l.b16 %v6336
      %v6417 = vunpack.c.l.b16 %v6345
      %v6418 = vunpack.c.l.b16 %v6358
      %v6419 = vunpack.c.l.b16 %v6367
      %v6420 = vunpack.c.l.b16 %v6380
      %v6421 = vunpack.c.l.b16 %v6389
      %v6422 = vpack.c.b16 %v6391, %v6390
      %v6423 = vpack.c.b16 %v6393, %v6392
      %v6424 = vpack.c.b16 %v6395, %v6394
      %v6425 = vpack.c.b16 %v6397, %v6396
      %v6426 = vpack.c.b16 %v6399, %v6398
      %v6427 = vpack.c.b16 %v6401, %v6400
      %v6428 = vpack.c.b16 %v6403, %v6402
      %v6429 = vpack.c.b16 %v6405, %v6404
      %v6430 = vpack.c.b16 %v6407, %v6406
      %v6431 = vpack.c.b16 %v6409, %v6408
      %v6432 = vpack.c.b16 %v6411, %v6410
      %v6433 = vpack.c.b16 %v6413, %v6412
      %v6434 = vpack.c.b16 %v6415, %v6414
      %v6435 = vpack.c.b16 %v6417, %v6416
      %v6436 = vpack.c.b16 %v6419, %v6418
      %v6437 = vpack.c.b16 %v6421, %v6420
      %6438 = vrot.lane.b32.xlu0 %v6422, 12
      %v6439 = vpop.permute.xlu0 %6438
      %6440 = vrot.lane.b32.xlu0 %v6423, 12
      %v6441 = vpop.permute.xlu0 %6440
      %6442 = vrot.lane.b32.xlu0 %v6424, 12
      %v6443 = vpop.permute.xlu0 %6442
      %6444 = vrot.lane.b32.xlu0 %v6425, 12
      %v6445 = vpop.permute.xlu0 %6444
      %6446 = vrot.lane.b32.xlu0 %v6426, 12
      %v6447 = vpop.permute.xlu0 %6446
      %6448 = vrot.lane.b32.xlu0 %v6427, 12
      %v6449 = vpop.permute.xlu0 %6448
      %6450 = vrot.lane.b32.xlu0 %v6428, 12
      %v6451 = vpop.permute.xlu0 %6450
      %6452 = vrot.lane.b32.xlu0 %v6429, 12
      %v6453 = vpop.permute.xlu0 %6452
      %6454 = vrot.lane.b32.xlu0 %v6430, 12
      %v6455 = vpop.permute.xlu0 %6454
      %6456 = vrot.lane.b32.xlu0 %v6431, 12
      %v6457 = vpop.permute.xlu0 %6456
      %6458 = vrot.lane.b32.xlu0 %v6432, 12
      %v6459 = vpop.permute.xlu0 %6458
      %6460 = vrot.lane.b32.xlu0 %v6433, 12
      %v6461 = vpop.permute.xlu0 %6460
      %6462 = vrot.lane.b32.xlu0 %v6434, 12
      %v6463 = vpop.permute.xlu0 %6462
      %6464 = vrot.lane.b32.xlu0 %v6435, 12
      %v6465 = vpop.permute.xlu0 %6464
      %6466 = vrot.lane.b32.xlu0 %v6436, 12
      %v6467 = vpop.permute.xlu0 %6466
      %6468 = vrot.lane.b32.xlu0 %v6437, 12
      %v6469 = vpop.permute.xlu0 %6468
      %6486 = vst.msk [vmem:[#allocation3] sm:$0xff] %vm2295, %v6439
      %6487 = vst.msk [vmem:[#allocation3 + $0x8] sm:$0xff] %vm2295, %v6441
      %6488 = vst.msk [vmem:[#allocation3 + $0x10] sm:$0xff] %vm2295, %v6443
      %6489 = vst.msk [vmem:[#allocation3 + $0x18] sm:$0xff] %vm2295, %v6445
      %6490 = vst.msk [vmem:[#allocation3 + $0x20] sm:$0xff] %vm2295, %v6447
      %6491 = vst.msk [vmem:[#allocation3 + $0x28] sm:$0xff] %vm2295, %v6449
      %6492 = vst.msk [vmem:[#allocation3 + $0x30] sm:$0xff] %vm2295, %v6451
      %6493 = vst.msk [vmem:[#allocation3 + $0x38] sm:$0xff] %vm2295, %v6453
      %6494 = vst.msk [vmem:[#allocation3 + $0x40] sm:$0xff] %vm2295, %v6455
      %6495 = vst.msk [vmem:[#allocation3 + $0x48] sm:$0xff] %vm2295, %v6457
      %6496 = vst.msk [vmem:[#allocation3 + $0x50] sm:$0xff] %vm2295, %v6459
      %6497 = vst.msk [vmem:[#allocation3 + $0x58] sm:$0xff] %vm2295, %v6461
      %6498 = vst.msk [vmem:[#allocation3 + $0x60] sm:$0xff] %vm2295, %v6463
      %6499 = vst.msk [vmem:[#allocation3 + $0x68] sm:$0xff] %vm2295, %v6465
      %6500 = vst.msk [vmem:[#allocation3 + $0x70] sm:$0xff] %vm2295, %v6467
      %6501 = vst.msk [vmem:[#allocation3 + $0x78] sm:$0xff] %vm2295, %v6469
      %v6502 = vld [vmem:[%s331 + $0x8] sm:$0xf]
      %v6503 = vld [vmem:[%s331 + $0xc] sm:$0xf]
      %v6504 = vld [vmem:[%s331 + $0x1c] sm:$0xf]
      %v6505 = vld [vmem:[%s331 + $0x20] sm:$0xf]
      %v6506 = vld [vmem:[%s331 + $0x30] sm:$0xf]
      %v6507 = vld [vmem:[%s331 + $0x34] sm:$0xf]
      %v6508 = vld [vmem:[%s331 + $0x44] sm:$0xf]
      %v6509 = vld [vmem:[%s331 + $0x48] sm:$0xf]
      %v6510 = vld [vmem:[%s331 + $0x58] sm:$0xf]
      %v6511 = vld [vmem:[%s331 + $0x5c] sm:$0xf]
      %v6512 = vld [vmem:[%s331 + $0x6c] sm:$0xf]
      %v6513 = vld [vmem:[%s331 + $0x70] sm:$0xf]
      %v6514 = vld [vmem:[%s331 + $0x80] sm:$0xf]
      %v6515 = vld [vmem:[%s331 + $0x84] sm:$0xf]
      %v6516 = vld [vmem:[%s331 + $0x94] sm:$0xf]
      %v6517 = vld [vmem:[%s331 + $0x98] sm:$0xf]
      %v6518 = vld [vmem:[%s331 + $0xa8] sm:$0xf]
      %v6519 = vld [vmem:[%s331 + $0xac] sm:$0xf]
      %v6520 = vld [vmem:[%s331 + $0xbc] sm:$0xf]
      %v6521 = vld [vmem:[%s331 + $0xc0] sm:$0xf]
      %v6522 = vld [vmem:[%s331 + $0xd0] sm:$0xf]
      %v6523 = vld [vmem:[%s331 + $0xd4] sm:$0xf]
      %v6524 = vld [vmem:[%s331 + $0xe4] sm:$0xf]
      %v6525 = vld [vmem:[%s331 + $0xe8] sm:$0xf]
      %v6526 = vld [vmem:[%s331 + $0xf8] sm:$0xf]
      %v6527 = vld [vmem:[%s331 + $0xfc] sm:$0xf]
      %v6528 = vld [vmem:[%s331 + $0x10c] sm:$0xf]
      %v6529 = vld [vmem:[%s331 + $0x110] sm:$0xf]
      %v6530 = vld [vmem:[%s331 + $0x120] sm:$0xf]
      %v6531 = vld [vmem:[%s331 + $0x124] sm:$0xf]
      %v6532 = vld [vmem:[%s331 + $0x134] sm:$0xf]
      %v6533 = vld [vmem:[%s331 + $0x138] sm:$0xf]
      %v6566 = vunpack.c.l.b16 %v6502
      %v6567 = vunpack.c.l.b16 %v6503
      %v6568 = vunpack.c.l.b16 %v6504
      %v6569 = vunpack.c.l.b16 %v6505
      %v6570 = vunpack.c.l.b16 %v6506
      %v6571 = vunpack.c.l.b16 %v6507
      %v6572 = vunpack.c.l.b16 %v6508
      %v6573 = vunpack.c.l.b16 %v6509
      %v6574 = vunpack.c.l.b16 %v6510
      %v6575 = vunpack.c.l.b16 %v6511
      %v6576 = vunpack.c.l.b16 %v6512
      %v6577 = vunpack.c.l.b16 %v6513
      %v6578 = vunpack.c.l.b16 %v6514
      %v6579 = vunpack.c.l.b16 %v6515
      %v6580 = vunpack.c.l.b16 %v6516
      %v6581 = vunpack.c.l.b16 %v6517
      %v6582 = vunpack.c.l.b16 %v6518
      %v6583 = vunpack.c.l.b16 %v6519
      %v6584 = vunpack.c.l.b16 %v6520
      %v6585 = vunpack.c.l.b16 %v6521
      %v6586 = vunpack.c.l.b16 %v6522
      %v6587 = vunpack.c.l.b16 %v6523
      %v6588 = vunpack.c.l.b16 %v6524
      %v6589 = vunpack.c.l.b16 %v6525
      %v6590 = vunpack.c.l.b16 %v6526
      %v6591 = vunpack.c.l.b16 %v6527
      %v6592 = vunpack.c.l.b16 %v6528
      %v6593 = vunpack.c.l.b16 %v6529
      %v6594 = vunpack.c.l.b16 %v6530
      %v6595 = vunpack.c.l.b16 %v6531
      %v6596 = vunpack.c.l.b16 %v6532
      %v6597 = vunpack.c.l.b16 %v6533
      %v6598 = vpack.c.b16 %v6567, %v6566
      %v6599 = vpack.c.b16 %v6569, %v6568
      %v6600 = vpack.c.b16 %v6571, %v6570
      %v6601 = vpack.c.b16 %v6573, %v6572
      %v6602 = vpack.c.b16 %v6575, %v6574
      %v6603 = vpack.c.b16 %v6577, %v6576
      %v6604 = vpack.c.b16 %v6579, %v6578
      %v6605 = vpack.c.b16 %v6581, %v6580
      %v6606 = vpack.c.b16 %v6583, %v6582
      %v6607 = vpack.c.b16 %v6585, %v6584
      %v6608 = vpack.c.b16 %v6587, %v6586
      %v6609 = vpack.c.b16 %v6589, %v6588
      %v6610 = vpack.c.b16 %v6591, %v6590
      %v6611 = vpack.c.b16 %v6593, %v6592
      %v6612 = vpack.c.b16 %v6595, %v6594
      %v6613 = vpack.c.b16 %v6597, %v6596
      %6614 = vrot.lane.b32.xlu0 %v6598, 16
      %v6615 = vpop.permute.xlu0 %6614
      %6616 = vrot.lane.b32.xlu0 %v6599, 16
      %v6617 = vpop.permute.xlu0 %6616
      %6618 = vrot.lane.b32.xlu0 %v6600, 16
      %v6619 = vpop.permute.xlu0 %6618
      %6620 = vrot.lane.b32.xlu0 %v6601, 16
      %v6621 = vpop.permute.xlu0 %6620
      %6622 = vrot.lane.b32.xlu0 %v6602, 16
      %v6623 = vpop.permute.xlu0 %6622
      %6624 = vrot.lane.b32.xlu0 %v6603, 16
      %v6625 = vpop.permute.xlu0 %6624
      %6626 = vrot.lane.b32.xlu0 %v6604, 16
      %v6627 = vpop.permute.xlu0 %6626
      %6628 = vrot.lane.b32.xlu0 %v6605, 16
      %v6629 = vpop.permute.xlu0 %6628
      %6630 = vrot.lane.b32.xlu0 %v6606, 16
      %v6631 = vpop.permute.xlu0 %6630
      %6632 = vrot.lane.b32.xlu0 %v6607, 16
      %v6633 = vpop.permute.xlu0 %6632
      %6634 = vrot.lane.b32.xlu0 %v6608, 16
      %v6635 = vpop.permute.xlu0 %6634
      %6636 = vrot.lane.b32.xlu0 %v6609, 16
      %v6637 = vpop.permute.xlu0 %6636
      %6638 = vrot.lane.b32.xlu0 %v6610, 16
      %v6639 = vpop.permute.xlu0 %6638
      %6640 = vrot.lane.b32.xlu0 %v6611, 16
      %v6641 = vpop.permute.xlu0 %6640
      %6642 = vrot.lane.b32.xlu0 %v6612, 16
      %v6643 = vpop.permute.xlu0 %6642
      %6644 = vrot.lane.b32.xlu0 %v6613, 16
      %v6645 = vpop.permute.xlu0 %6644
      %6662 = vst.msk [vmem:[#allocation3] sm:$0xff] %vm2472, %v6615
      %6663 = vst.msk [vmem:[#allocation3 + $0x8] sm:$0xff] %vm2472, %v6617
      %6664 = vst.msk [vmem:[#allocation3 + $0x10] sm:$0xff] %vm2472, %v6619
      %6665 = vst.msk [vmem:[#allocation3 + $0x18] sm:$0xff] %vm2472, %v6621
      %6666 = vst.msk [vmem:[#allocation3 + $0x20] sm:$0xff] %vm2472, %v6623
      %6667 = vst.msk [vmem:[#allocation3 + $0x28] sm:$0xff] %vm2472, %v6625
      %6668 = vst.msk [vmem:[#allocation3 + $0x30] sm:$0xff] %vm2472, %v6627
      %6669 = vst.msk [vmem:[#allocation3 + $0x38] sm:$0xff] %vm2472, %v6629
      %6670 = vst.msk [vmem:[#allocation3 + $0x40] sm:$0xff] %vm2472, %v6631
      %6671 = vst.msk [vmem:[#allocation3 + $0x48] sm:$0xff] %vm2472, %v6633
      %6672 = vst.msk [vmem:[#allocation3 + $0x50] sm:$0xff] %vm2472, %v6635
      %6673 = vst.msk [vmem:[#allocation3 + $0x58] sm:$0xff] %vm2472, %v6637
      %6674 = vst.msk [vmem:[#allocation3 + $0x60] sm:$0xff] %vm2472, %v6639
      %6675 = vst.msk [vmem:[#allocation3 + $0x68] sm:$0xff] %vm2472, %v6641
      %6676 = vst.msk [vmem:[#allocation3 + $0x70] sm:$0xff] %vm2472, %v6643
      %6677 = vst.msk [vmem:[#allocation3 + $0x78] sm:$0xff] %vm2472, %v6645
      %v6678 = vld [vmem:[%s331 + $0x8] sm:$0xf]
      %v6679 = vld [vmem:[%s331 + $0xc] sm:$0xf]
      %v6680 = vld [vmem:[%s331 + $0x10] sm:$0x1]
      %v6681 = vld [vmem:[%s331 + $0x1c] sm:$0xf]
      %v6682 = vld [vmem:[%s331 + $0x20] sm:$0xf]
      %v6683 = vld [vmem:[%s331 + $0x24] sm:$0x1]
      %v6684 = vld [vmem:[%s331 + $0x30] sm:$0xf]
      %v6685 = vld [vmem:[%s331 + $0x34] sm:$0xf]
      %v6686 = vld [vmem:[%s331 + $0x38] sm:$0x1]
      %v6687 = vld [vmem:[%s331 + $0x44] sm:$0xf]
      %v6688 = vld [vmem:[%s331 + $0x48] sm:$0xf]
      %v6689 = vld [vmem:[%s331 + $0x4c] sm:$0x1]
      %v6690 = vld [vmem:[%s331 + $0x58] sm:$0xf]
      %v6691 = vld [vmem:[%s331 + $0x5c] sm:$0xf]
      %v6692 = vld [vmem:[%s331 + $0x60] sm:$0x1]
      %v6693 = vld [vmem:[%s331 + $0x6c] sm:$0xf]
      %v6694 = vld [vmem:[%s331 + $0x70] sm:$0xf]
      %v6695 = vld [vmem:[%s331 + $0x74] sm:$0x1]
      %v6696 = vld [vmem:[%s331 + $0x80] sm:$0xf]
      %v6697 = vld [vmem:[%s331 + $0x84] sm:$0xf]
      %v6698 = vld [vmem:[%s331 + $0x88] sm:$0x1]
      %v6699 = vld [vmem:[%s331 + $0x94] sm:$0xf]
      %v6700 = vld [vmem:[%s331 + $0x98] sm:$0xf]
      %v6701 = vld [vmem:[%s331 + $0x9c] sm:$0x1]
      %v6702 = vld [vmem:[%s331 + $0xa8] sm:$0xf]
      %v6703 = vld [vmem:[%s331 + $0xac] sm:$0xf]
      %v6704 = vld [vmem:[%s331 + $0xb0] sm:$0x1]
      %v6705 = vld [vmem:[%s331 + $0xbc] sm:$0xf]
      %v6706 = vld [vmem:[%s331 + $0xc0] sm:$0xf]
      %v6707 = vld [vmem:[%s331 + $0xc4] sm:$0x1]
      %v6708 = vld [vmem:[%s331 + $0xd0] sm:$0xf]
      %v6709 = vld [vmem:[%s331 + $0xd4] sm:$0xf]
      %v6710 = vld [vmem:[%s331 + $0xd8] sm:$0x1]
      %v6711 = vld [vmem:[%s331 + $0xe4] sm:$0xf]
      %v6712 = vld [vmem:[%s331 + $0xe8] sm:$0xf]
      %v6713 = vld [vmem:[%s331 + $0xec] sm:$0x1]
      %v6714 = vld [vmem:[%s331 + $0xf8] sm:$0xf]
      %v6715 = vld [vmem:[%s331 + $0xfc] sm:$0xf]
      %v6716 = vld [vmem:[%s331 + $0x100] sm:$0x1]
      %v6717 = vld [vmem:[%s331 + $0x10c] sm:$0xf]
      %v6718 = vld [vmem:[%s331 + $0x110] sm:$0xf]
      %v6719 = vld [vmem:[%s331 + $0x114] sm:$0x1]
      %v6720 = vld [vmem:[%s331 + $0x120] sm:$0xf]
      %v6721 = vld [vmem:[%s331 + $0x124] sm:$0xf]
      %v6722 = vld [vmem:[%s331 + $0x128] sm:$0x1]
      %v6723 = vld [vmem:[%s331 + $0x134] sm:$0xf]
      %v6724 = vld [vmem:[%s331 + $0x138] sm:$0xf]
      %v6725 = vld [vmem:[%s331 + $0x13c] sm:$0x1]
      %v6727 = vshrl.u32 %v6678, 16
      %v6729 = vrot.slane %v6727, 4
      %v6730 = vshll.u32 %v6678, 16
      %v6732 = vrot.slane %v6730, 5
      %v6733 = vor.u32 %v6729, %v6732
      %v6734 = vrot.slane %v6733, 4
      %v6736 = vshll.u32 %v6679, 16
      %v6738 = vrot.slane %v6736, 5
      %v6739 = vsel %vm1301, %v6734, %v6738
      %v6740 = vshrl.u32 %v6679, 16
      %v6742 = vrot.slane %v6740, 4
      %v6743 = vor.u32 %v6742, %v6738
      %v6744 = vrot.slane %v6743, 4
      %v6746 = vshll.u32 %v6680, 16
      %v6748 = vrot.slane %v6746, 5
      %v6749 = vsel %vm1301, %v6744, %v6748
      %v6751 = vshrl.u32 %v6681, 16
      %v6753 = vrot.slane %v6751, 4
      %v6754 = vshll.u32 %v6681, 16
      %v6756 = vrot.slane %v6754, 5
      %v6757 = vor.u32 %v6753, %v6756
      %v6758 = vrot.slane %v6757, 4
      %v6760 = vshll.u32 %v6682, 16
      %v6762 = vrot.slane %v6760, 5
      %v6763 = vsel %vm1301, %v6758, %v6762
      %v6764 = vshrl.u32 %v6682, 16
      %v6766 = vrot.slane %v6764, 4
      %v6767 = vor.u32 %v6766, %v6762
      %v6768 = vrot.slane %v6767, 4
      %v6770 = vshll.u32 %v6683, 16
      %v6772 = vrot.slane %v6770, 5
      %v6773 = vsel %vm1301, %v6768, %v6772
      %v6775 = vshrl.u32 %v6684, 16
      %v6777 = vrot.slane %v6775, 4
      %v6778 = vshll.u32 %v6684, 16
      %v6780 = vrot.slane %v6778, 5
      %v6781 = vor.u32 %v6777, %v6780
      %v6782 = vrot.slane %v6781, 4
      %v6784 = vshll.u32 %v6685, 16
      %v6786 = vrot.slane %v6784, 5
      %v6787 = vsel %vm1301, %v6782, %v6786
      %v6788 = vshrl.u32 %v6685, 16
      %v6790 = vrot.slane %v6788, 4
      %v6791 = vor.u32 %v6790, %v6786
      %v6792 = vrot.slane %v6791, 4
      %v6794 = vshll.u32 %v6686, 16
      %v6796 = vrot.slane %v6794, 5
      %v6797 = vsel %vm1301, %v6792, %v6796
      %v6799 = vshrl.u32 %v6687, 16
      %v6801 = vrot.slane %v6799, 4
      %v6802 = vshll.u32 %v6687, 16
      %v6804 = vrot.slane %v6802, 5
      %v6805 = vor.u32 %v6801, %v6804
      %v6806 = vrot.slane %v6805, 4
      %v6808 = vshll.u32 %v6688, 16
      %v6810 = vrot.slane %v6808, 5
      %v6811 = vsel %vm1301, %v6806, %v6810
      %v6812 = vshrl.u32 %v6688, 16
      %v6814 = vrot.slane %v6812, 4
      %v6815 = vor.u32 %v6814, %v6810
      %v6816 = vrot.slane %v6815, 4
      %v6818 = vshll.u32 %v6689, 16
      %v6820 = vrot.slane %v6818, 5
      %v6821 = vsel %vm1301, %v6816, %v6820
      %v6823 = vshrl.u32 %v6690, 16
      %v6825 = vrot.slane %v6823, 4
      %v6826 = vshll.u32 %v6690, 16
      %v6828 = vrot.slane %v6826, 5
      %v6829 = vor.u32 %v6825, %v6828
      %v6830 = vrot.slane %v6829, 4
      %v6832 = vshll.u32 %v6691, 16
      %v6834 = vrot.slane %v6832, 5
      %v6835 = vsel %vm1301, %v6830, %v6834
      %v6836 = vshrl.u32 %v6691, 16
      %v6838 = vrot.slane %v6836, 4
      %v6839 = vor.u32 %v6838, %v6834
      %v6840 = vrot.slane %v6839, 4
      %v6842 = vshll.u32 %v6692, 16
      %v6844 = vrot.slane %v6842, 5
      %v6845 = vsel %vm1301, %v6840, %v6844
      %v6847 = vshrl.u32 %v6693, 16
      %v6849 = vrot.slane %v6847, 4
      %v6850 = vshll.u32 %v6693, 16
      %v6852 = vrot.slane %v6850, 5
      %v6853 = vor.u32 %v6849, %v6852
      %v6854 = vrot.slane %v6853, 4
      %v6856 = vshll.u32 %v6694, 16
      %v6858 = vrot.slane %v6856, 5
      %v6859 = vsel %vm1301, %v6854, %v6858
      %v6860 = vshrl.u32 %v6694, 16
      %v6862 = vrot.slane %v6860, 4
      %v6863 = vor.u32 %v6862, %v6858
      %v6864 = vrot.slane %v6863, 4
      %v6866 = vshll.u32 %v6695, 16
      %v6868 = vrot.slane %v6866, 5
      %v6869 = vsel %vm1301, %v6864, %v6868
      %v6871 = vshrl.u32 %v6696, 16
      %v6873 = vrot.slane %v6871, 4
      %v6874 = vshll.u32 %v6696, 16
      %v6876 = vrot.slane %v6874, 5
      %v6877 = vor.u32 %v6873, %v6876
      %v6878 = vrot.slane %v6877, 4
      %v6880 = vshll.u32 %v6697, 16
      %v6882 = vrot.slane %v6880, 5
      %v6883 = vsel %vm1301, %v6878, %v6882
      %v6884 = vshrl.u32 %v6697, 16
      %v6886 = vrot.slane %v6884, 4
      %v6887 = vor.u32 %v6886, %v6882
      %v6888 = vrot.slane %v6887, 4
      %v6890 = vshll.u32 %v6698, 16
      %v6892 = vrot.slane %v6890, 5
      %v6893 = vsel %vm1301, %v6888, %v6892
      %v6895 = vshrl.u32 %v6699, 16
      %v6897 = vrot.slane %v6895, 4
      %v6898 = vshll.u32 %v6699, 16
      %v6900 = vrot.slane %v6898, 5
      %v6901 = vor.u32 %v6897, %v6900
      %v6902 = vrot.slane %v6901, 4
      %v6904 = vshll.u32 %v6700, 16
      %v6906 = vrot.slane %v6904, 5
      %v6907 = vsel %vm1301, %v6902, %v6906
      %v6908 = vshrl.u32 %v6700, 16
      %v6910 = vrot.slane %v6908, 4
      %v6911 = vor.u32 %v6910, %v6906
      %v6912 = vrot.slane %v6911, 4
      %v6914 = vshll.u32 %v6701, 16
      %v6916 = vrot.slane %v6914, 5
      %v6917 = vsel %vm1301, %v6912, %v6916
      %v6919 = vshrl.u32 %v6702, 16
      %v6921 = vrot.slane %v6919, 4
      %v6922 = vshll.u32 %v6702, 16
      %v6924 = vrot.slane %v6922, 5
      %v6925 = vor.u32 %v6921, %v6924
      %v6926 = vrot.slane %v6925, 4
      %v6928 = vshll.u32 %v6703, 16
      %v6930 = vrot.slane %v6928, 5
      %v6931 = vsel %vm1301, %v6926, %v6930
      %v6932 = vshrl.u32 %v6703, 16
      %v6934 = vrot.slane %v6932, 4
      %v6935 = vor.u32 %v6934, %v6930
      %v6936 = vrot.slane %v6935, 4
      %v6938 = vshll.u32 %v6704, 16
      %v6940 = vrot.slane %v6938, 5
      %v6941 = vsel %vm1301, %v6936, %v6940
      %v6943 = vshrl.u32 %v6705, 16
      %v6945 = vrot.slane %v6943, 4
      %v6946 = vshll.u32 %v6705, 16
      %v6948 = vrot.slane %v6946, 5
      %v6949 = vor.u32 %v6945, %v6948
      %v6950 = vrot.slane %v6949, 4
      %v6952 = vshll.u32 %v6706, 16
      %v6954 = vrot.slane %v6952, 5
      %v6955 = vsel %vm1301, %v6950, %v6954
      %v6956 = vshrl.u32 %v6706, 16
      %v6958 = vrot.slane %v6956, 4
      %v6959 = vor.u32 %v6958, %v6954
      %v6960 = vrot.slane %v6959, 4
      %v6962 = vshll.u32 %v6707, 16
      %v6964 = vrot.slane %v6962, 5
      %v6965 = vsel %vm1301, %v6960, %v6964
      %v6967 = vshrl.u32 %v6708, 16
      %v6969 = vrot.slane %v6967, 4
      %v6970 = vshll.u32 %v6708, 16
      %v6972 = vrot.slane %v6970, 5
      %v6973 = vor.u32 %v6969, %v6972
      %v6974 = vrot.slane %v6973, 4
      %v6976 = vshll.u32 %v6709, 16
      %v6978 = vrot.slane %v6976, 5
      %v6979 = vsel %vm1301, %v6974, %v6978
      %v6980 = vshrl.u32 %v6709, 16
      %v6982 = vrot.slane %v6980, 4
      %v6983 = vor.u32 %v6982, %v6978
      %v6984 = vrot.slane %v6983, 4
      %v6986 = vshll.u32 %v6710, 16
      %v6988 = vrot.slane %v6986, 5
      %v6989 = vsel %vm1301, %v6984, %v6988
      %v6991 = vshrl.u32 %v6711, 16
      %v6993 = vrot.slane %v6991, 4
      %v6994 = vshll.u32 %v6711, 16
      %v6996 = vrot.slane %v6994, 5
      %v6997 = vor.u32 %v6993, %v6996
      %v6998 = vrot.slane %v6997, 4
      %v7000 = vshll.u32 %v6712, 16
      %v7002 = vrot.slane %v7000, 5
      %v7003 = vsel %vm1301, %v6998, %v7002
      %v7004 = vshrl.u32 %v6712, 16
      %v7006 = vrot.slane %v7004, 4
      %v7007 = vor.u32 %v7006, %v7002
      %v7008 = vrot.slane %v7007, 4
      %v7010 = vshll.u32 %v6713, 16
      %v7012 = vrot.slane %v7010, 5
      %v7013 = vsel %vm1301, %v7008, %v7012
      %v7015 = vshrl.u32 %v6714, 16
      %v7017 = vrot.slane %v7015, 4
      %v7018 = vshll.u32 %v6714, 16
      %v7020 = vrot.slane %v7018, 5
      %v7021 = vor.u32 %v7017, %v7020
      %v7022 = vrot.slane %v7021, 4
      %v7024 = vshll.u32 %v6715, 16
      %v7026 = vrot.slane %v7024, 5
      %v7027 = vsel %vm1301, %v7022, %v7026
      %v7028 = vshrl.u32 %v6715, 16
      %v7030 = vrot.slane %v7028, 4
      %v7031 = vor.u32 %v7030, %v7026
      %v7032 = vrot.slane %v7031, 4
      %v7034 = vshll.u32 %v6716, 16
      %v7036 = vrot.slane %v7034, 5
      %v7037 = vsel %vm1301, %v7032, %v7036
      %v7039 = vshrl.u32 %v6717, 16
      %v7041 = vrot.slane %v7039, 4
      %v7042 = vshll.u32 %v6717, 16
      %v7044 = vrot.slane %v7042, 5
      %v7045 = vor.u32 %v7041, %v7044
      %v7046 = vrot.slane %v7045, 4
      %v7048 = vshll.u32 %v6718, 16
      %v7050 = vrot.slane %v7048, 5
      %v7051 = vsel %vm1301, %v7046, %v7050
      %v7052 = vshrl.u32 %v6718, 16
      %v7054 = vrot.slane %v7052, 4
      %v7055 = vor.u32 %v7054, %v7050
      %v7056 = vrot.slane %v7055, 4
      %v7058 = vshll.u32 %v6719, 16
      %v7060 = vrot.slane %v7058, 5
      %v7061 = vsel %vm1301, %v7056, %v7060
      %v7063 = vshrl.u32 %v6720, 16
      %v7065 = vrot.slane %v7063, 4
      %v7066 = vshll.u32 %v6720, 16
      %v7068 = vrot.slane %v7066, 5
      %v7069 = vor.u32 %v7065, %v7068
      %v7070 = vrot.slane %v7069, 4
      %v7072 = vshll.u32 %v6721, 16
      %v7074 = vrot.slane %v7072, 5
      %v7075 = vsel %vm1301, %v7070, %v7074
      %v7076 = vshrl.u32 %v6721, 16
      %v7078 = vrot.slane %v7076, 4
      %v7079 = vor.u32 %v7078, %v7074
      %v7080 = vrot.slane %v7079, 4
      %v7082 = vshll.u32 %v6722, 16
      %v7084 = vrot.slane %v7082, 5
      %v7085 = vsel %vm1301, %v7080, %v7084
      %v7087 = vshrl.u32 %v6723, 16
      %v7089 = vrot.slane %v7087, 4
      %v7090 = vshll.u32 %v6723, 16
      %v7092 = vrot.slane %v7090, 5
      %v7093 = vor.u32 %v7089, %v7092
      %v7094 = vrot.slane %v7093, 4
      %v7096 = vshll.u32 %v6724, 16
      %v7098 = vrot.slane %v7096, 5
      %v7099 = vsel %vm1301, %v7094, %v7098
      %v7100 = vshrl.u32 %v6724, 16
      %v7102 = vrot.slane %v7100, 4
      %v7103 = vor.u32 %v7102, %v7098
      %v7104 = vrot.slane %v7103, 4
      %v7106 = vshll.u32 %v6725, 16
      %v7108 = vrot.slane %v7106, 5
      %v7109 = vsel %vm1301, %v7104, %v7108
      %v7110 = vunpack.c.l.b16 %v6739
      %v7111 = vunpack.c.l.b16 %v6749
      %v7112 = vunpack.c.l.b16 %v6763
      %v7113 = vunpack.c.l.b16 %v6773
      %v7114 = vunpack.c.l.b16 %v6787
      %v7115 = vunpack.c.l.b16 %v6797
      %v7116 = vunpack.c.l.b16 %v6811
      %v7117 = vunpack.c.l.b16 %v6821
      %v7118 = vunpack.c.l.b16 %v6835
      %v7119 = vunpack.c.l.b16 %v6845
      %v7120 = vunpack.c.l.b16 %v6859
      %v7121 = vunpack.c.l.b16 %v6869
      %v7122 = vunpack.c.l.b16 %v6883
      %v7123 = vunpack.c.l.b16 %v6893
      %v7124 = vunpack.c.l.b16 %v6907
      %v7125 = vunpack.c.l.b16 %v6917
      %v7126 = vunpack.c.l.b16 %v6931
      %v7127 = vunpack.c.l.b16 %v6941
      %v7128 = vunpack.c.l.b16 %v6955
      %v7129 = vunpack.c.l.b16 %v6965
      %v7130 = vunpack.c.l.b16 %v6979
      %v7131 = vunpack.c.l.b16 %v6989
      %v7132 = vunpack.c.l.b16 %v7003
      %v7133 = vunpack.c.l.b16 %v7013
      %v7134 = vunpack.c.l.b16 %v7027
      %v7135 = vunpack.c.l.b16 %v7037
      %v7136 = vunpack.c.l.b16 %v7051
      %v7137 = vunpack.c.l.b16 %v7061
      %v7138 = vunpack.c.l.b16 %v7075
      %v7139 = vunpack.c.l.b16 %v7085
      %v7140 = vunpack.c.l.b16 %v7099
      %v7141 = vunpack.c.l.b16 %v7109
      %v7142 = vpack.c.b16 %v7111, %v7110
      %v7143 = vpack.c.b16 %v7113, %v7112
      %v7144 = vpack.c.b16 %v7115, %v7114
      %v7145 = vpack.c.b16 %v7117, %v7116
      %v7146 = vpack.c.b16 %v7119, %v7118
      %v7147 = vpack.c.b16 %v7121, %v7120
      %v7148 = vpack.c.b16 %v7123, %v7122
      %v7149 = vpack.c.b16 %v7125, %v7124
      %v7150 = vpack.c.b16 %v7127, %v7126
      %v7151 = vpack.c.b16 %v7129, %v7128
      %v7152 = vpack.c.b16 %v7131, %v7130
      %v7153 = vpack.c.b16 %v7133, %v7132
      %v7154 = vpack.c.b16 %v7135, %v7134
      %v7155 = vpack.c.b16 %v7137, %v7136
      %v7156 = vpack.c.b16 %v7139, %v7138
      %v7157 = vpack.c.b16 %v7141, %v7140
      %7158 = vrot.lane.b32.xlu0 %v7142, 20
      %v7159 = vpop.permute.xlu0 %7158
      %7160 = vrot.lane.b32.xlu0 %v7143, 20
      %v7161 = vpop.permute.xlu0 %7160
      %7162 = vrot.lane.b32.xlu0 %v7144, 20
      %v7163 = vpop.permute.xlu0 %7162
      %7164 = vrot.lane.b32.xlu0 %v7145, 20
      %v7165 = vpop.permute.xlu0 %7164
      %7166 = vrot.lane.b32.xlu0 %v7146, 20
      %v7167 = vpop.permute.xlu0 %7166
      %7168 = vrot.lane.b32.xlu0 %v7147, 20
      %v7169 = vpop.permute.xlu0 %7168
      %7170 = vrot.lane.b32.xlu0 %v7148, 20
      %v7171 = vpop.permute.xlu0 %7170
      %7172 = vrot.lane.b32.xlu0 %v7149, 20
      %v7173 = vpop.permute.xlu0 %7172
      %7174 = vrot.lane.b32.xlu0 %v7150, 20
      %v7175 = vpop.permute.xlu0 %7174
      %7176 = vrot.lane.b32.xlu0 %v7151, 20
      %v7177 = vpop.permute.xlu0 %7176
      %7178 = vrot.lane.b32.xlu0 %v7152, 20
      %v7179 = vpop.permute.xlu0 %7178
      %7180 = vrot.lane.b32.xlu0 %v7153, 20
      %v7181 = vpop.permute.xlu0 %7180
      %7182 = vrot.lane.b32.xlu0 %v7154, 20
      %v7183 = vpop.permute.xlu0 %7182
      %7184 = vrot.lane.b32.xlu0 %v7155, 20
      %v7185 = vpop.permute.xlu0 %7184
      %7186 = vrot.lane.b32.xlu0 %v7156, 20
      %v7187 = vpop.permute.xlu0 %7186
      %7188 = vrot.lane.b32.xlu0 %v7157, 20
      %v7189 = vpop.permute.xlu0 %7188
      %7206 = vst.msk [vmem:[#allocation3] sm:$0xff] %vm3017, %v7159
      %7207 = vst.msk [vmem:[#allocation3 + $0x8] sm:$0xff] %vm3017, %v7161
      %7208 = vst.msk [vmem:[#allocation3 + $0x10] sm:$0xff] %vm3017, %v7163
      %7209 = vst.msk [vmem:[#allocation3 + $0x18] sm:$0xff] %vm3017, %v7165
      %7210 = vst.msk [vmem:[#allocation3 + $0x20] sm:$0xff] %vm3017, %v7167
      %7211 = vst.msk [vmem:[#allocation3 + $0x28] sm:$0xff] %vm3017, %v7169
      %7212 = vst.msk [vmem:[#allocation3 + $0x30] sm:$0xff] %vm3017, %v7171
      %7213 = vst.msk [vmem:[#allocation3 + $0x38] sm:$0xff] %vm3017, %v7173
      %7214 = vst.msk [vmem:[#allocation3 + $0x40] sm:$0xff] %vm3017, %v7175
      %7215 = vst.msk [vmem:[#allocation3 + $0x48] sm:$0xff] %vm3017, %v7177
      %7216 = vst.msk [vmem:[#allocation3 + $0x50] sm:$0xff] %vm3017, %v7179
      %7217 = vst.msk [vmem:[#allocation3 + $0x58] sm:$0xff] %vm3017, %v7181
      %7218 = vst.msk [vmem:[#allocation3 + $0x60] sm:$0xff] %vm3017, %v7183
      %7219 = vst.msk [vmem:[#allocation3 + $0x68] sm:$0xff] %vm3017, %v7185
      %7220 = vst.msk [vmem:[#allocation3 + $0x70] sm:$0xff] %vm3017, %v7187
      %7221 = vst.msk [vmem:[#allocation3 + $0x78] sm:$0xff] %vm3017, %v7189
      %v7222 = vld [vmem:[%s3034 + $0x4] sm:$0x8]
      %v7223 = vld [vmem:[%s3034 + $0x8] sm:$0xf]
      %v7224 = vld [vmem:[%s3034 + $0xc] sm:$0xf]
      %v7225 = vld [vmem:[%s3034 + $0x18] sm:$0x8]
      %v7226 = vld [vmem:[%s3034 + $0x1c] sm:$0xf]
      %v7227 = vld [vmem:[%s3034 + $0x20] sm:$0xf]
      %v7228 = vld [vmem:[%s3034 + $0x2c] sm:$0x8]
      %v7229 = vld [vmem:[%s3034 + $0x30] sm:$0xf]
      %v7230 = vld [vmem:[%s3034 + $0x34] sm:$0xf]
      %v7231 = vld [vmem:[%s3034 + $0x40] sm:$0x8]
      %v7232 = vld [vmem:[%s3034 + $0x44] sm:$0xf]
      %v7233 = vld [vmem:[%s3034 + $0x48] sm:$0xf]
      %v7234 = vld [vmem:[%s3034 + $0x54] sm:$0x8]
      %v7235 = vld [vmem:[%s3034 + $0x58] sm:$0xf]
      %v7236 = vld [vmem:[%s3034 + $0x5c] sm:$0xf]
      %v7237 = vld [vmem:[%s3034 + $0x68] sm:$0x8]
      %v7238 = vld [vmem:[%s3034 + $0x6c] sm:$0xf]
      %v7239 = vld [vmem:[%s3034 + $0x70] sm:$0xf]
      %v7240 = vld [vmem:[%s3034 + $0x7c] sm:$0x8]
      %v7241 = vld [vmem:[%s3034 + $0x80] sm:$0xf]
      %v7242 = vld [vmem:[%s3034 + $0x84] sm:$0xf]
      %v7243 = vld [vmem:[%s3034 + $0x90] sm:$0x8]
      %v7244 = vld [vmem:[%s3034 + $0x94] sm:$0xf]
      %v7245 = vld [vmem:[%s3034 + $0x98] sm:$0xf]
      %v7246 = vld [vmem:[%s3034 + $0xa4] sm:$0x8]
      %v7247 = vld [vmem:[%s3034 + $0xa8] sm:$0xf]
      %v7248 = vld [vmem:[%s3034 + $0xac] sm:$0xf]
      %v7249 = vld [vmem:[%s3034 + $0xb8] sm:$0x8]
      %v7250 = vld [vmem:[%s3034 + $0xbc] sm:$0xf]
      %v7251 = vld [vmem:[%s3034 + $0xc0] sm:$0xf]
      %v7252 = vld [vmem:[%s3034 + $0xcc] sm:$0x8]
      %v7253 = vld [vmem:[%s3034 + $0xd0] sm:$0xf]
      %v7254 = vld [vmem:[%s3034 + $0xd4] sm:$0xf]
      %v7255 = vld [vmem:[%s3034 + $0xe0] sm:$0x8]
      %v7256 = vld [vmem:[%s3034 + $0xe4] sm:$0xf]
      %v7257 = vld [vmem:[%s3034 + $0xe8] sm:$0xf]
      %v7258 = vld [vmem:[%s3034 + $0xf4] sm:$0x8]
      %v7259 = vld [vmem:[%s3034 + $0xf8] sm:$0xf]
      %v7260 = vld [vmem:[%s3034 + $0xfc] sm:$0xf]
      %v7261 = vld [vmem:[%s3034 + $0x108] sm:$0x8]
      %v7262 = vld [vmem:[%s3034 + $0x10c] sm:$0xf]
      %v7263 = vld [vmem:[%s3034 + $0x110] sm:$0xf]
      %v7264 = vld [vmem:[%s3034 + $0x11c] sm:$0x8]
      %v7265 = vld [vmem:[%s3034 + $0x120] sm:$0xf]
      %v7266 = vld [vmem:[%s3034 + $0x124] sm:$0xf]
      %v7267 = vld [vmem:[%s3034 + $0x130] sm:$0x8]
      %v7268 = vld [vmem:[%s3034 + $0x134] sm:$0xf]
      %v7269 = vld [vmem:[%s3034 + $0x138] sm:$0xf]
      %v7271 = vshrl.u32 %v7222, 16
      %v7273 = vrot.slane %v7271, 7
      %v7274 = vrot.slane %v7273, 4
      %v7276 = vshrl.u32 %v7223, 16
      %v7278 = vrot.slane %v7276, 7
      %v7279 = vshll.u32 %v7223, 16
      %v7281 = vor.u32 %v7278, %v7279
      %v7282 = vsel %vm640, %v7274, %v7281
      %v7283 = vrot.slane %v7278, 4
      %v7285 = vshrl.u32 %v7224, 16
      %v7287 = vrot.slane %v7285, 7
      %v7288 = vshll.u32 %v7224, 16
      %v7290 = vor.u32 %v7287, %v7288
      %v7291 = vsel %vm640, %v7283, %v7290
      %v7293 = vshrl.u32 %v7225, 16
      %v7295 = vrot.slane %v7293, 7
      %v7296 = vrot.slane %v7295, 4
      %v7298 = vshrl.u32 %v7226, 16
      %v7300 = vrot.slane %v7298, 7
      %v7301 = vshll.u32 %v7226, 16
      %v7303 = vor.u32 %v7300, %v7301
      %v7304 = vsel %vm640, %v7296, %v7303
      %v7305 = vrot.slane %v7300, 4
      %v7307 = vshrl.u32 %v7227, 16
      %v7309 = vrot.slane %v7307, 7
      %v7310 = vshll.u32 %v7227, 16
      %v7312 = vor.u32 %v7309, %v7310
      %v7313 = vsel %vm640, %v7305, %v7312
      %v7315 = vshrl.u32 %v7228, 16
      %v7317 = vrot.slane %v7315, 7
      %v7318 = vrot.slane %v7317, 4
      %v7320 = vshrl.u32 %v7229, 16
      %v7322 = vrot.slane %v7320, 7
      %v7323 = vshll.u32 %v7229, 16
      %v7325 = vor.u32 %v7322, %v7323
      %v7326 = vsel %vm640, %v7318, %v7325
      %v7327 = vrot.slane %v7322, 4
      %v7329 = vshrl.u32 %v7230, 16
      %v7331 = vrot.slane %v7329, 7
      %v7332 = vshll.u32 %v7230, 16
      %v7334 = vor.u32 %v7331, %v7332
      %v7335 = vsel %vm640, %v7327, %v7334
      %v7337 = vshrl.u32 %v7231, 16
      %v7339 = vrot.slane %v7337, 7
      %v7340 = vrot.slane %v7339, 4
      %v7342 = vshrl.u32 %v7232, 16
      %v7344 = vrot.slane %v7342, 7
      %v7345 = vshll.u32 %v7232, 16
      %v7347 = vor.u32 %v7344, %v7345
      %v7348 = vsel %vm640, %v7340, %v7347
      %v7349 = vrot.slane %v7344, 4
      %v7351 = vshrl.u32 %v7233, 16
      %v7353 = vrot.slane %v7351, 7
      %v7354 = vshll.u32 %v7233, 16
      %v7356 = vor.u32 %v7353, %v7354
      %v7357 = vsel %vm640, %v7349, %v7356
      %v7359 = vshrl.u32 %v7234, 16
      %v7361 = vrot.slane %v7359, 7
      %v7362 = vrot.slane %v7361, 4
      %v7364 = vshrl.u32 %v7235, 16
      %v7366 = vrot.slane %v7364, 7
      %v7367 = vshll.u32 %v7235, 16
      %v7369 = vor.u32 %v7366, %v7367
      %v7370 = vsel %vm640, %v7362, %v7369
      %v7371 = vrot.slane %v7366, 4
      %v7373 = vshrl.u32 %v7236, 16
      %v7375 = vrot.slane %v7373, 7
      %v7376 = vshll.u32 %v7236, 16
      %v7378 = vor.u32 %v7375, %v7376
      %v7379 = vsel %vm640, %v7371, %v7378
      %v7381 = vshrl.u32 %v7237, 16
      %v7383 = vrot.slane %v7381, 7
      %v7384 = vrot.slane %v7383, 4
      %v7386 = vshrl.u32 %v7238, 16
      %v7388 = vrot.slane %v7386, 7
      %v7389 = vshll.u32 %v7238, 16
      %v7391 = vor.u32 %v7388, %v7389
      %v7392 = vsel %vm640, %v7384, %v7391
      %v7393 = vrot.slane %v7388, 4
      %v7395 = vshrl.u32 %v7239, 16
      %v7397 = vrot.slane %v7395, 7
      %v7398 = vshll.u32 %v7239, 16
      %v7400 = vor.u32 %v7397, %v7398
      %v7401 = vsel %vm640, %v7393, %v7400
      %v7403 = vshrl.u32 %v7240, 16
      %v7405 = vrot.slane %v7403, 7
      %v7406 = vrot.slane %v7405, 4
      %v7408 = vshrl.u32 %v7241, 16
      %v7410 = vrot.slane %v7408, 7
      %v7411 = vshll.u32 %v7241, 16
      %v7413 = vor.u32 %v7410, %v7411
      %v7414 = vsel %vm640, %v7406, %v7413
      %v7415 = vrot.slane %v7410, 4
      %v7417 = vshrl.u32 %v7242, 16
      %v7419 = vrot.slane %v7417, 7
      %v7420 = vshll.u32 %v7242, 16
      %v7422 = vor.u32 %v7419, %v7420
      %v7423 = vsel %vm640, %v7415, %v7422
      %v7425 = vshrl.u32 %v7243, 16
      %v7427 = vrot.slane %v7425, 7
      %v7428 = vrot.slane %v7427, 4
      %v7430 = vshrl.u32 %v7244, 16
      %v7432 = vrot.slane %v7430, 7
      %v7433 = vshll.u32 %v7244, 16
      %v7435 = vor.u32 %v7432, %v7433
      %v7436 = vsel %vm640, %v7428, %v7435
      %v7437 = vrot.slane %v7432, 4
      %v7439 = vshrl.u32 %v7245, 16
      %v7441 = vrot.slane %v7439, 7
      %v7442 = vshll.u32 %v7245, 16
      %v7444 = vor.u32 %v7441, %v7442
      %v7445 = vsel %vm640, %v7437, %v7444
      %v7447 = vshrl.u32 %v7246, 16
      %v7449 = vrot.slane %v7447, 7
      %v7450 = vrot.slane %v7449, 4
      %v7452 = vshrl.u32 %v7247, 16
      %v7454 = vrot.slane %v7452, 7
      %v7455 = vshll.u32 %v7247, 16
      %v7457 = vor.u32 %v7454, %v7455
      %v7458 = vsel %vm640, %v7450, %v7457
      %v7459 = vrot.slane %v7454, 4
      %v7461 = vshrl.u32 %v7248, 16
      %v7463 = vrot.slane %v7461, 7
      %v7464 = vshll.u32 %v7248, 16
      %v7466 = vor.u32 %v7463, %v7464
      %v7467 = vsel %vm640, %v7459, %v7466
      %v7469 = vshrl.u32 %v7249, 16
      %v7471 = vrot.slane %v7469, 7
      %v7472 = vrot.slane %v7471, 4
      %v7474 = vshrl.u32 %v7250, 16
      %v7476 = vrot.slane %v7474, 7
      %v7477 = vshll.u32 %v7250, 16
      %v7479 = vor.u32 %v7476, %v7477
      %v7480 = vsel %vm640, %v7472, %v7479
      %v7481 = vrot.slane %v7476, 4
      %v7483 = vshrl.u32 %v7251, 16
      %v7485 = vrot.slane %v7483, 7
      %v7486 = vshll.u32 %v7251, 16
      %v7488 = vor.u32 %v7485, %v7486
      %v7489 = vsel %vm640, %v7481, %v7488
      %v7491 = vshrl.u32 %v7252, 16
      %v7493 = vrot.slane %v7491, 7
      %v7494 = vrot.slane %v7493, 4
      %v7496 = vshrl.u32 %v7253, 16
      %v7498 = vrot.slane %v7496, 7
      %v7499 = vshll.u32 %v7253, 16
      %v7501 = vor.u32 %v7498, %v7499
      %v7502 = vsel %vm640, %v7494, %v7501
      %v7503 = vrot.slane %v7498, 4
      %v7505 = vshrl.u32 %v7254, 16
      %v7507 = vrot.slane %v7505, 7
      %v7508 = vshll.u32 %v7254, 16
      %v7510 = vor.u32 %v7507, %v7508
      %v7511 = vsel %vm640, %v7503, %v7510
      %v7513 = vshrl.u32 %v7255, 16
      %v7515 = vrot.slane %v7513, 7
      %v7516 = vrot.slane %v7515, 4
      %v7518 = vshrl.u32 %v7256, 16
      %v7520 = vrot.slane %v7518, 7
      %v7521 = vshll.u32 %v7256, 16
      %v7523 = vor.u32 %v7520, %v7521
      %v7524 = vsel %vm640, %v7516, %v7523
      %v7525 = vrot.slane %v7520, 4
      %v7527 = vshrl.u32 %v7257, 16
      %v7529 = vrot.slane %v7527, 7
      %v7530 = vshll.u32 %v7257, 16
      %v7532 = vor.u32 %v7529, %v7530
      %v7533 = vsel %vm640, %v7525, %v7532
      %v7535 = vshrl.u32 %v7258, 16
      %v7537 = vrot.slane %v7535, 7
      %v7538 = vrot.slane %v7537, 4
      %v7540 = vshrl.u32 %v7259, 16
      %v7542 = vrot.slane %v7540, 7
      %v7543 = vshll.u32 %v7259, 16
      %v7545 = vor.u32 %v7542, %v7543
      %v7546 = vsel %vm640, %v7538, %v7545
      %v7547 = vrot.slane %v7542, 4
      %v7549 = vshrl.u32 %v7260, 16
      %v7551 = vrot.slane %v7549, 7
      %v7552 = vshll.u32 %v7260, 16
      %v7554 = vor.u32 %v7551, %v7552
      %v7555 = vsel %vm640, %v7547, %v7554
      %v7557 = vshrl.u32 %v7261, 16
      %v7559 = vrot.slane %v7557, 7
      %v7560 = vrot.slane %v7559, 4
      %v7562 = vshrl.u32 %v7262, 16
      %v7564 = vrot.slane %v7562, 7
      %v7565 = vshll.u32 %v7262, 16
      %v7567 = vor.u32 %v7564, %v7565
      %v7568 = vsel %vm640, %v7560, %v7567
      %v7569 = vrot.slane %v7564, 4
      %v7571 = vshrl.u32 %v7263, 16
      %v7573 = vrot.slane %v7571, 7
      %v7574 = vshll.u32 %v7263, 16
      %v7576 = vor.u32 %v7573, %v7574
      %v7577 = vsel %vm640, %v7569, %v7576
      %v7579 = vshrl.u32 %v7264, 16
      %v7581 = vrot.slane %v7579, 7
      %v7582 = vrot.slane %v7581, 4
      %v7584 = vshrl.u32 %v7265, 16
      %v7586 = vrot.slane %v7584, 7
      %v7587 = vshll.u32 %v7265, 16
      %v7589 = vor.u32 %v7586, %v7587
      %v7590 = vsel %vm640, %v7582, %v7589
      %v7591 = vrot.slane %v7586, 4
      %v7593 = vshrl.u32 %v7266, 16
      %v7595 = vrot.slane %v7593, 7
      %v7596 = vshll.u32 %v7266, 16
      %v7598 = vor.u32 %v7595, %v7596
      %v7599 = vsel %vm640, %v7591, %v7598
      %v7601 = vshrl.u32 %v7267, 16
      %v7603 = vrot.slane %v7601, 7
      %v7604 = vrot.slane %v7603, 4
      %v7606 = vshrl.u32 %v7268, 16
      %v7608 = vrot.slane %v7606, 7
      %v7609 = vshll.u32 %v7268, 16
      %v7611 = vor.u32 %v7608, %v7609
      %v7612 = vsel %vm640, %v7604, %v7611
      %v7613 = vrot.slane %v7608, 4
      %v7615 = vshrl.u32 %v7269, 16
      %v7617 = vrot.slane %v7615, 7
      %v7618 = vshll.u32 %v7269, 16
      %v7620 = vor.u32 %v7617, %v7618
      %v7621 = vsel %vm640, %v7613, %v7620
      %v7622 = vunpack.c.l.b16 %v7282
      %v7623 = vunpack.c.l.b16 %v7291
      %v7624 = vunpack.c.l.b16 %v7304
      %v7625 = vunpack.c.l.b16 %v7313
      %v7626 = vunpack.c.l.b16 %v7326
      %v7627 = vunpack.c.l.b16 %v7335
      %v7628 = vunpack.c.l.b16 %v7348
      %v7629 = vunpack.c.l.b16 %v7357
      %v7630 = vunpack.c.l.b16 %v7370
      %v7631 = vunpack.c.l.b16 %v7379
      %v7632 = vunpack.c.l.b16 %v7392
      %v7633 = vunpack.c.l.b16 %v7401
      %v7634 = vunpack.c.l.b16 %v7414
      %v7635 = vunpack.c.l.b16 %v7423
      %v7636 = vunpack.c.l.b16 %v7436
      %v7637 = vunpack.c.l.b16 %v7445
      %v7638 = vunpack.c.l.b16 %v7458
      %v7639 = vunpack.c.l.b16 %v7467
      %v7640 = vunpack.c.l.b16 %v7480
      %v7641 = vunpack.c.l.b16 %v7489
      %v7642 = vunpack.c.l.b16 %v7502
      %v7643 = vunpack.c.l.b16 %v7511
      %v7644 = vunpack.c.l.b16 %v7524
      %v7645 = vunpack.c.l.b16 %v7533
      %v7646 = vunpack.c.l.b16 %v7546
      %v7647 = vunpack.c.l.b16 %v7555
      %v7648 = vunpack.c.l.b16 %v7568
      %v7649 = vunpack.c.l.b16 %v7577
      %v7650 = vunpack.c.l.b16 %v7590
      %v7651 = vunpack.c.l.b16 %v7599
      %v7652 = vunpack.c.l.b16 %v7612
      %v7653 = vunpack.c.l.b16 %v7621
      %v7654 = vpack.c.b16 %v7623, %v7622
      %v7655 = vpack.c.b16 %v7625, %v7624
      %v7656 = vpack.c.b16 %v7627, %v7626
      %v7657 = vpack.c.b16 %v7629, %v7628
      %v7658 = vpack.c.b16 %v7631, %v7630
      %v7659 = vpack.c.b16 %v7633, %v7632
      %v7660 = vpack.c.b16 %v7635, %v7634
      %v7661 = vpack.c.b16 %v7637, %v7636
      %v7662 = vpack.c.b16 %v7639, %v7638
      %v7663 = vpack.c.b16 %v7641, %v7640
      %v7664 = vpack.c.b16 %v7643, %v7642
      %v7665 = vpack.c.b16 %v7645, %v7644
      %v7666 = vpack.c.b16 %v7647, %v7646
      %v7667 = vpack.c.b16 %v7649, %v7648
      %v7668 = vpack.c.b16 %v7651, %v7650
      %v7669 = vpack.c.b16 %v7653, %v7652
      %7670 = vrot.lane.b32.xlu0 %v7654, 24
      %v7671 = vpop.permute.xlu0 %7670
      %7672 = vrot.lane.b32.xlu0 %v7655, 24
      %v7673 = vpop.permute.xlu0 %7672
      %7674 = vrot.lane.b32.xlu0 %v7656, 24
      %v7675 = vpop.permute.xlu0 %7674
      %7676 = vrot.lane.b32.xlu0 %v7657, 24
      %v7677 = vpop.permute.xlu0 %7676
      %7678 = vrot.lane.b32.xlu0 %v7658, 24
      %v7679 = vpop.permute.xlu0 %7678
      %7680 = vrot.lane.b32.xlu0 %v7659, 24
      %v7681 = vpop.permute.xlu0 %7680
      %7682 = vrot.lane.b32.xlu0 %v7660, 24
      %v7683 = vpop.permute.xlu0 %7682
      %7684 = vrot.lane.b32.xlu0 %v7661, 24
      %v7685 = vpop.permute.xlu0 %7684
      %7686 = vrot.lane.b32.xlu0 %v7662, 24
      %v7687 = vpop.permute.xlu0 %7686
      %7688 = vrot.lane.b32.xlu0 %v7663, 24
      %v7689 = vpop.permute.xlu0 %7688
      %7690 = vrot.lane.b32.xlu0 %v7664, 24
      %v7691 = vpop.permute.xlu0 %7690
      %7692 = vrot.lane.b32.xlu0 %v7665, 24
      %v7693 = vpop.permute.xlu0 %7692
      %7694 = vrot.lane.b32.xlu0 %v7666, 24
      %v7695 = vpop.permute.xlu0 %7694
      %7696 = vrot.lane.b32.xlu0 %v7667, 24
      %v7697 = vpop.permute.xlu0 %7696
      %7698 = vrot.lane.b32.xlu0 %v7668, 24
      %v7699 = vpop.permute.xlu0 %7698
      %7700 = vrot.lane.b32.xlu0 %v7669, 24
      %v7701 = vpop.permute.xlu0 %7700
      %7718 = vst.msk [vmem:[#allocation3] sm:$0xff] %vm3531, %v7671
      %7719 = vst.msk [vmem:[#allocation3 + $0x8] sm:$0xff] %vm3531, %v7673
      %7720 = vst.msk [vmem:[#allocation3 + $0x10] sm:$0xff] %vm3531, %v7675
      %7721 = vst.msk [vmem:[#allocation3 + $0x18] sm:$0xff] %vm3531, %v7677
      %7722 = vst.msk [vmem:[#allocation3 + $0x20] sm:$0xff] %vm3531, %v7679
      %7723 = vst.msk [vmem:[#allocation3 + $0x28] sm:$0xff] %vm3531, %v7681
      %7724 = vst.msk [vmem:[#allocation3 + $0x30] sm:$0xff] %vm3531, %v7683
      %7725 = vst.msk [vmem:[#allocation3 + $0x38] sm:$0xff] %vm3531, %v7685
      %7726 = vst.msk [vmem:[#allocation3 + $0x40] sm:$0xff] %vm3531, %v7687
      %7727 = vst.msk [vmem:[#allocation3 + $0x48] sm:$0xff] %vm3531, %v7689
      %7728 = vst.msk [vmem:[#allocation3 + $0x50] sm:$0xff] %vm3531, %v7691
      %7729 = vst.msk [vmem:[#allocation3 + $0x58] sm:$0xff] %vm3531, %v7693
      %7730 = vst.msk [vmem:[#allocation3 + $0x60] sm:$0xff] %vm3531, %v7695
      %7731 = vst.msk [vmem:[#allocation3 + $0x68] sm:$0xff] %vm3531, %v7697
      %7732 = vst.msk [vmem:[#allocation3 + $0x70] sm:$0xff] %vm3531, %v7699
      %7733 = vst.msk [vmem:[#allocation3 + $0x78] sm:$0xff] %vm3531, %v7701
      %v7734 = vld [vmem:[%s3034 + $0x8] sm:$0xf]
      %v7735 = vld [vmem:[%s3034 + $0xc] sm:$0xf]
      %v7736 = vld [vmem:[%s3034 + $0x1c] sm:$0xf]
      %v7737 = vld [vmem:[%s3034 + $0x20] sm:$0xf]
      %v7738 = vld [vmem:[%s3034 + $0x30] sm:$0xf]
      %v7739 = vld [vmem:[%s3034 + $0x34] sm:$0xf]
      %v7740 = vld [vmem:[%s3034 + $0x44] sm:$0xf]
      %v7741 = vld [vmem:[%s3034 + $0x48] sm:$0xf]
      %v7742 = vld [vmem:[%s3034 + $0x58] sm:$0xf]
      %v7743 = vld [vmem:[%s3034 + $0x5c] sm:$0xf]
      %v7744 = vld [vmem:[%s3034 + $0x6c] sm:$0xf]
      %v7745 = vld [vmem:[%s3034 + $0x70] sm:$0xf]
      %v7746 = vld [vmem:[%s3034 + $0x80] sm:$0xf]
      %v7747 = vld [vmem:[%s3034 + $0x84] sm:$0xf]
      %v7748 = vld [vmem:[%s3034 + $0x94] sm:$0xf]
      %v7749 = vld [vmem:[%s3034 + $0x98] sm:$0xf]
      %v7750 = vld [vmem:[%s3034 + $0xa8] sm:$0xf]
      %v7751 = vld [vmem:[%s3034 + $0xac] sm:$0xf]
      %v7752 = vld [vmem:[%s3034 + $0xbc] sm:$0xf]
      %v7753 = vld [vmem:[%s3034 + $0xc0] sm:$0xf]
      %v7754 = vld [vmem:[%s3034 + $0xd0] sm:$0xf]
      %v7755 = vld [vmem:[%s3034 + $0xd4] sm:$0xf]
      %v7756 = vld [vmem:[%s3034 + $0xe4] sm:$0xf]
      %v7757 = vld [vmem:[%s3034 + $0xe8] sm:$0xf]
      %v7758 = vld [vmem:[%s3034 + $0xf8] sm:$0xf]
      %v7759 = vld [vmem:[%s3034 + $0xfc] sm:$0xf]
      %v7760 = vld [vmem:[%s3034 + $0x10c] sm:$0xf]
      %v7761 = vld [vmem:[%s3034 + $0x110] sm:$0xf]
      %v7762 = vld [vmem:[%s3034 + $0x120] sm:$0xf]
      %v7763 = vld [vmem:[%s3034 + $0x124] sm:$0xf]
      %v7764 = vld [vmem:[%s3034 + $0x134] sm:$0xf]
      %v7765 = vld [vmem:[%s3034 + $0x138] sm:$0xf]
      %v7798 = vunpack.c.l.b16 %v7734
      %v7799 = vunpack.c.l.b16 %v7735
      %v7800 = vunpack.c.l.b16 %v7736
      %v7801 = vunpack.c.l.b16 %v7737
      %v7802 = vunpack.c.l.b16 %v7738
      %v7803 = vunpack.c.l.b16 %v7739
      %v7804 = vunpack.c.l.b16 %v7740
      %v7805 = vunpack.c.l.b16 %v7741
      %v7806 = vunpack.c.l.b16 %v7742
      %v7807 = vunpack.c.l.b16 %v7743
      %v7808 = vunpack.c.l.b16 %v7744
      %v7809 = vunpack.c.l.b16 %v7745
      %v7810 = vunpack.c.l.b16 %v7746
      %v7811 = vunpack.c.l.b16 %v7747
      %v7812 = vunpack.c.l.b16 %v7748
      %v7813 = vunpack.c.l.b16 %v7749
      %v7814 = vunpack.c.l.b16 %v7750
      %v7815 = vunpack.c.l.b16 %v7751
      %v7816 = vunpack.c.l.b16 %v7752
      %v7817 = vunpack.c.l.b16 %v7753
      %v7818 = vunpack.c.l.b16 %v7754
      %v7819 = vunpack.c.l.b16 %v7755
      %v7820 = vunpack.c.l.b16 %v7756
      %v7821 = vunpack.c.l.b16 %v7757
      %v7822 = vunpack.c.l.b16 %v7758
      %v7823 = vunpack.c.l.b16 %v7759
      %v7824 = vunpack.c.l.b16 %v7760
      %v7825 = vunpack.c.l.b16 %v7761
      %v7826 = vunpack.c.l.b16 %v7762
      %v7827 = vunpack.c.l.b16 %v7763
      %v7828 = vunpack.c.l.b16 %v7764
      %v7829 = vunpack.c.l.b16 %v7765
      %v7830 = vpack.c.b16 %v7799, %v7798
      %v7831 = vpack.c.b16 %v7801, %v7800
      %v7832 = vpack.c.b16 %v7803, %v7802
      %v7833 = vpack.c.b16 %v7805, %v7804
      %v7834 = vpack.c.b16 %v7807, %v7806
      %v7835 = vpack.c.b16 %v7809, %v7808
      %v7836 = vpack.c.b16 %v7811, %v7810
      %v7837 = vpack.c.b16 %v7813, %v7812
      %v7838 = vpack.c.b16 %v7815, %v7814
      %v7839 = vpack.c.b16 %v7817, %v7816
      %v7840 = vpack.c.b16 %v7819, %v7818
      %v7841 = vpack.c.b16 %v7821, %v7820
      %v7842 = vpack.c.b16 %v7823, %v7822
      %v7843 = vpack.c.b16 %v7825, %v7824
      %v7844 = vpack.c.b16 %v7827, %v7826
      %v7845 = vpack.c.b16 %v7829, %v7828
      %7846 = vrot.lane.b32.xlu0 %v7830, 28
      %v7847 = vpop.permute.xlu0 %7846
      %7848 = vrot.lane.b32.xlu0 %v7831, 28
      %v7849 = vpop.permute.xlu0 %7848
      %7850 = vrot.lane.b32.xlu0 %v7832, 28
      %v7851 = vpop.permute.xlu0 %7850
      %7852 = vrot.lane.b32.xlu0 %v7833, 28
      %v7853 = vpop.permute.xlu0 %7852
      %7854 = vrot.lane.b32.xlu0 %v7834, 28
      %v7855 = vpop.permute.xlu0 %7854
      %7856 = vrot.lane.b32.xlu0 %v7835, 28
      %v7857 = vpop.permute.xlu0 %7856
      %7858 = vrot.lane.b32.xlu0 %v7836, 28
      %v7859 = vpop.permute.xlu0 %7858
      %7860 = vrot.lane.b32.xlu0 %v7837, 28
      %v7861 = vpop.permute.xlu0 %7860
      %7862 = vrot.lane.b32.xlu0 %v7838, 28
      %v7863 = vpop.permute.xlu0 %7862
      %7864 = vrot.lane.b32.xlu0 %v7839, 28
      %v7865 = vpop.permute.xlu0 %7864
      %7866 = vrot.lane.b32.xlu0 %v7840, 28
      %v7867 = vpop.permute.xlu0 %7866
      %7868 = vrot.lane.b32.xlu0 %v7841, 28
      %v7869 = vpop.permute.xlu0 %7868
      %7870 = vrot.lane.b32.xlu0 %v7842, 28
      %v7871 = vpop.permute.xlu0 %7870
      %7872 = vrot.lane.b32.xlu0 %v7843, 28
      %v7873 = vpop.permute.xlu0 %7872
      %7874 = vrot.lane.b32.xlu0 %v7844, 28
      %v7875 = vpop.permute.xlu0 %7874
      %7876 = vrot.lane.b32.xlu0 %v7845, 28
      %v7877 = vpop.permute.xlu0 %7876
      %7894 = vst.msk [vmem:[#allocation3] sm:$0xff] %vm3708, %v7847
      %7895 = vst.msk [vmem:[#allocation3 + $0x8] sm:$0xff] %vm3708, %v7849
      %7896 = vst.msk [vmem:[#allocation3 + $0x10] sm:$0xff] %vm3708, %v7851
      %7897 = vst.msk [vmem:[#allocation3 + $0x18] sm:$0xff] %vm3708, %v7853
      %7898 = vst.msk [vmem:[#allocation3 + $0x20] sm:$0xff] %vm3708, %v7855
      %7899 = vst.msk [vmem:[#allocation3 + $0x28] sm:$0xff] %vm3708, %v7857
      %7900 = vst.msk [vmem:[#allocation3 + $0x30] sm:$0xff] %vm3708, %v7859
      %7901 = vst.msk [vmem:[#allocation3 + $0x38] sm:$0xff] %vm3708, %v7861
      %7902 = vst.msk [vmem:[#allocation3 + $0x40] sm:$0xff] %vm3708, %v7863
      %7903 = vst.msk [vmem:[#allocation3 + $0x48] sm:$0xff] %vm3708, %v7865
      %7904 = vst.msk [vmem:[#allocation3 + $0x50] sm:$0xff] %vm3708, %v7867
      %7905 = vst.msk [vmem:[#allocation3 + $0x58] sm:$0xff] %vm3708, %v7869
      %7906 = vst.msk [vmem:[#allocation3 + $0x60] sm:$0xff] %vm3708, %v7871
      %7907 = vst.msk [vmem:[#allocation3 + $0x68] sm:$0xff] %vm3708, %v7873
      %7908 = vst.msk [vmem:[#allocation3 + $0x70] sm:$0xff] %vm3708, %v7875
      %7909 = vst.msk [vmem:[#allocation3 + $0x78] sm:$0xff] %vm3708, %v7877
      %v7910 = vld [vmem:[%s3034 + $0x8] sm:$0xf]
      %v7911 = vld [vmem:[%s3034 + $0xc] sm:$0xf]
      %v7912 = vld [vmem:[%s3034 + $0x10] sm:$0x1]
      %v7913 = vld [vmem:[%s3034 + $0x1c] sm:$0xf]
      %v7914 = vld [vmem:[%s3034 + $0x20] sm:$0xf]
      %v7915 = vld [vmem:[%s3034 + $0x24] sm:$0x1]
      %v7916 = vld [vmem:[%s3034 + $0x30] sm:$0xf]
      %v7917 = vld [vmem:[%s3034 + $0x34] sm:$0xf]
      %v7918 = vld [vmem:[%s3034 + $0x38] sm:$0x1]
      %v7919 = vld [vmem:[%s3034 + $0x44] sm:$0xf]
      %v7920 = vld [vmem:[%s3034 + $0x48] sm:$0xf]
      %v7921 = vld [vmem:[%s3034 + $0x4c] sm:$0x1]
      %v7922 = vld [vmem:[%s3034 + $0x58] sm:$0xf]
      %v7923 = vld [vmem:[%s3034 + $0x5c] sm:$0xf]
      %v7924 = vld [vmem:[%s3034 + $0x60] sm:$0x1]
      %v7925 = vld [vmem:[%s3034 + $0x6c] sm:$0xf]
      %v7926 = vld [vmem:[%s3034 + $0x70] sm:$0xf]
      %v7927 = vld [vmem:[%s3034 + $0x74] sm:$0x1]
      %v7928 = vld [vmem:[%s3034 + $0x80] sm:$0xf]
      %v7929 = vld [vmem:[%s3034 + $0x84] sm:$0xf]
      %v7930 = vld [vmem:[%s3034 + $0x88] sm:$0x1]
      %v7931 = vld [vmem:[%s3034 + $0x94] sm:$0xf]
      %v7932 = vld [vmem:[%s3034 + $0x98] sm:$0xf]
      %v7933 = vld [vmem:[%s3034 + $0x9c] sm:$0x1]
      %v7934 = vld [vmem:[%s3034 + $0xa8] sm:$0xf]
      %v7935 = vld [vmem:[%s3034 + $0xac] sm:$0xf]
      %v7936 = vld [vmem:[%s3034 + $0xb0] sm:$0x1]
      %v7937 = vld [vmem:[%s3034 + $0xbc] sm:$0xf]
      %v7938 = vld [vmem:[%s3034 + $0xc0] sm:$0xf]
      %v7939 = vld [vmem:[%s3034 + $0xc4] sm:$0x1]
      %v7940 = vld [vmem:[%s3034 + $0xd0] sm:$0xf]
      %v7941 = vld [vmem:[%s3034 + $0xd4] sm:$0xf]
      %v7942 = vld [vmem:[%s3034 + $0xd8] sm:$0x1]
      %v7943 = vld [vmem:[%s3034 + $0xe4] sm:$0xf]
      %v7944 = vld [vmem:[%s3034 + $0xe8] sm:$0xf]
      %v7945 = vld [vmem:[%s3034 + $0xec] sm:$0x1]
      %v7946 = vld [vmem:[%s3034 + $0xf8] sm:$0xf]
      %v7947 = vld [vmem:[%s3034 + $0xfc] sm:$0xf]
      %v7948 = vld [vmem:[%s3034 + $0x100] sm:$0x1]
      %v7949 = vld [vmem:[%s3034 + $0x10c] sm:$0xf]
      %v7950 = vld [vmem:[%s3034 + $0x110] sm:$0xf]
      %v7951 = vld [vmem:[%s3034 + $0x114] sm:$0x1]
      %v7952 = vld [vmem:[%s3034 + $0x120] sm:$0xf]
      %v7953 = vld [vmem:[%s3034 + $0x124] sm:$0xf]
      %v7954 = vld [vmem:[%s3034 + $0x128] sm:$0x1]
      %v7955 = vld [vmem:[%s3034 + $0x134] sm:$0xf]
      %v7956 = vld [vmem:[%s3034 + $0x138] sm:$0xf]
      %v7957 = vld [vmem:[%s3034 + $0x13c] sm:$0x1]
      %v7959 = vshrl.u32 %v7910, 16
      %v7961 = vrot.slane %v7959, 4
      %v7962 = vshll.u32 %v7910, 16
      %v7964 = vrot.slane %v7962, 5
      %v7965 = vor.u32 %v7961, %v7964
      %v7966 = vrot.slane %v7965, 4
      %v7968 = vshll.u32 %v7911, 16
      %v7970 = vrot.slane %v7968, 5
      %v7971 = vsel %vm1301, %v7966, %v7970
      %v7972 = vshrl.u32 %v7911, 16
      %v7974 = vrot.slane %v7972, 4
      %v7975 = vor.u32 %v7974, %v7970
      %v7976 = vrot.slane %v7975, 4
      %v7978 = vshll.u32 %v7912, 16
      %v7980 = vrot.slane %v7978, 5
      %v7981 = vsel %vm1301, %v7976, %v7980
      %v7983 = vshrl.u32 %v7913, 16
      %v7985 = vrot.slane %v7983, 4
      %v7986 = vshll.u32 %v7913, 16
      %v7988 = vrot.slane %v7986, 5
      %v7989 = vor.u32 %v7985, %v7988
      %v7990 = vrot.slane %v7989, 4
      %v7992 = vshll.u32 %v7914, 16
      %v7994 = vrot.slane %v7992, 5
      %v7995 = vsel %vm1301, %v7990, %v7994
      %v7996 = vshrl.u32 %v7914, 16
      %v7998 = vrot.slane %v7996, 4
      %v7999 = vor.u32 %v7998, %v7994
      %v8000 = vrot.slane %v7999, 4
      %v8002 = vshll.u32 %v7915, 16
      %v8004 = vrot.slane %v8002, 5
      %v8005 = vsel %vm1301, %v8000, %v8004
      %v8007 = vshrl.u32 %v7916, 16
      %v8009 = vrot.slane %v8007, 4
      %v8010 = vshll.u32 %v7916, 16
      %v8012 = vrot.slane %v8010, 5
      %v8013 = vor.u32 %v8009, %v8012
      %v8014 = vrot.slane %v8013, 4
      %v8016 = vshll.u32 %v7917, 16
      %v8018 = vrot.slane %v8016, 5
      %v8019 = vsel %vm1301, %v8014, %v8018
      %v8020 = vshrl.u32 %v7917, 16
      %v8022 = vrot.slane %v8020, 4
      %v8023 = vor.u32 %v8022, %v8018
      %v8024 = vrot.slane %v8023, 4
      %v8026 = vshll.u32 %v7918, 16
      %v8028 = vrot.slane %v8026, 5
      %v8029 = vsel %vm1301, %v8024, %v8028
      %v8031 = vshrl.u32 %v7919, 16
      %v8033 = vrot.slane %v8031, 4
      %v8034 = vshll.u32 %v7919, 16
      %v8036 = vrot.slane %v8034, 5
      %v8037 = vor.u32 %v8033, %v8036
      %v8038 = vrot.slane %v8037, 4
      %v8040 = vshll.u32 %v7920, 16
      %v8042 = vrot.slane %v8040, 5
      %v8043 = vsel %vm1301, %v8038, %v8042
      %v8044 = vshrl.u32 %v7920, 16
      %v8046 = vrot.slane %v8044, 4
      %v8047 = vor.u32 %v8046, %v8042
      %v8048 = vrot.slane %v8047, 4
      %v8050 = vshll.u32 %v7921, 16
      %v8052 = vrot.slane %v8050, 5
      %v8053 = vsel %vm1301, %v8048, %v8052
      %v8055 = vshrl.u32 %v7922, 16
      %v8057 = vrot.slane %v8055, 4
      %v8058 = vshll.u32 %v7922, 16
      %v8060 = vrot.slane %v8058, 5
      %v8061 = vor.u32 %v8057, %v8060
      %v8062 = vrot.slane %v8061, 4
      %v8064 = vshll.u32 %v7923, 16
      %v8066 = vrot.slane %v8064, 5
      %v8067 = vsel %vm1301, %v8062, %v8066
      %v8068 = vshrl.u32 %v7923, 16
      %v8070 = vrot.slane %v8068, 4
      %v8071 = vor.u32 %v8070, %v8066
      %v8072 = vrot.slane %v8071, 4
      %v8074 = vshll.u32 %v7924, 16
      %v8076 = vrot.slane %v8074, 5
      %v8077 = vsel %vm1301, %v8072, %v8076
      %v8079 = vshrl.u32 %v7925, 16
      %v8081 = vrot.slane %v8079, 4
      %v8082 = vshll.u32 %v7925, 16
      %v8084 = vrot.slane %v8082, 5
      %v8085 = vor.u32 %v8081, %v8084
      %v8086 = vrot.slane %v8085, 4
      %v8088 = vshll.u32 %v7926, 16
      %v8090 = vrot.slane %v8088, 5
      %v8091 = vsel %vm1301, %v8086, %v8090
      %v8092 = vshrl.u32 %v7926, 16
      %v8094 = vrot.slane %v8092, 4
      %v8095 = vor.u32 %v8094, %v8090
      %v8096 = vrot.slane %v8095, 4
      %v8098 = vshll.u32 %v7927, 16
      %v8100 = vrot.slane %v8098, 5
      %v8101 = vsel %vm1301, %v8096, %v8100
      %v8103 = vshrl.u32 %v7928, 16
      %v8105 = vrot.slane %v8103, 4
      %v8106 = vshll.u32 %v7928, 16
      %v8108 = vrot.slane %v8106, 5
      %v8109 = vor.u32 %v8105, %v8108
      %v8110 = vrot.slane %v8109, 4
      %v8112 = vshll.u32 %v7929, 16
      %v8114 = vrot.slane %v8112, 5
      %v8115 = vsel %vm1301, %v8110, %v8114
      %v8116 = vshrl.u32 %v7929, 16
      %v8118 = vrot.slane %v8116, 4
      %v8119 = vor.u32 %v8118, %v8114
      %v8120 = vrot.slane %v8119, 4
      %v8122 = vshll.u32 %v7930, 16
      %v8124 = vrot.slane %v8122, 5
      %v8125 = vsel %vm1301, %v8120, %v8124
      %v8127 = vshrl.u32 %v7931, 16
      %v8129 = vrot.slane %v8127, 4
      %v8130 = vshll.u32 %v7931, 16
      %v8132 = vrot.slane %v8130, 5
      %v8133 = vor.u32 %v8129, %v8132
      %v8134 = vrot.slane %v8133, 4
      %v8136 = vshll.u32 %v7932, 16
      %v8138 = vrot.slane %v8136, 5
      %v8139 = vsel %vm1301, %v8134, %v8138
      %v8140 = vshrl.u32 %v7932, 16
      %v8142 = vrot.slane %v8140, 4
      %v8143 = vor.u32 %v8142, %v8138
      %v8144 = vrot.slane %v8143, 4
      %v8146 = vshll.u32 %v7933, 16
      %v8148 = vrot.slane %v8146, 5
      %v8149 = vsel %vm1301, %v8144, %v8148
      %v8151 = vshrl.u32 %v7934, 16
      %v8153 = vrot.slane %v8151, 4
      %v8154 = vshll.u32 %v7934, 16
      %v8156 = vrot.slane %v8154, 5
      %v8157 = vor.u32 %v8153, %v8156
      %v8158 = vrot.slane %v8157, 4
      %v8160 = vshll.u32 %v7935, 16
      %v8162 = vrot.slane %v8160, 5
      %v8163 = vsel %vm1301, %v8158, %v8162
      %v8164 = vshrl.u32 %v7935, 16
      %v8166 = vrot.slane %v8164, 4
      %v8167 = vor.u32 %v8166, %v8162
      %v8168 = vrot.slane %v8167, 4
      %v8170 = vshll.u32 %v7936, 16
      %v8172 = vrot.slane %v8170, 5
      %v8173 = vsel %vm1301, %v8168, %v8172
      %v8175 = vshrl.u32 %v7937, 16
      %v8177 = vrot.slane %v8175, 4
      %v8178 = vshll.u32 %v7937, 16
      %v8180 = vrot.slane %v8178, 5
      %v8181 = vor.u32 %v8177, %v8180
      %v8182 = vrot.slane %v8181, 4
      %v8184 = vshll.u32 %v7938, 16
      %v8186 = vrot.slane %v8184, 5
      %v8187 = vsel %vm1301, %v8182, %v8186
      %v8188 = vshrl.u32 %v7938, 16
      %v8190 = vrot.slane %v8188, 4
      %v8191 = vor.u32 %v8190, %v8186
      %v8192 = vrot.slane %v8191, 4
      %v8194 = vshll.u32 %v7939, 16
      %v8196 = vrot.slane %v8194, 5
      %v8197 = vsel %vm1301, %v8192, %v8196
      %v8199 = vshrl.u32 %v7940, 16
      %v8201 = vrot.slane %v8199, 4
      %v8202 = vshll.u32 %v7940, 16
      %v8204 = vrot.slane %v8202, 5
      %v8205 = vor.u32 %v8201, %v8204
      %v8206 = vrot.slane %v8205, 4
      %v8208 = vshll.u32 %v7941, 16
      %v8210 = vrot.slane %v8208, 5
      %v8211 = vsel %vm1301, %v8206, %v8210
      %v8212 = vshrl.u32 %v7941, 16
      %v8214 = vrot.slane %v8212, 4
      %v8215 = vor.u32 %v8214, %v8210
      %v8216 = vrot.slane %v8215, 4
      %v8218 = vshll.u32 %v7942, 16
      %v8220 = vrot.slane %v8218, 5
      %v8221 = vsel %vm1301, %v8216, %v8220
      %v8223 = vshrl.u32 %v7943, 16
      %v8225 = vrot.slane %v8223, 4
      %v8226 = vshll.u32 %v7943, 16
      %v8228 = vrot.slane %v8226, 5
      %v8229 = vor.u32 %v8225, %v8228
      %v8230 = vrot.slane %v8229, 4
      %v8232 = vshll.u32 %v7944, 16
      %v8234 = vrot.slane %v8232, 5
      %v8235 = vsel %vm1301, %v8230, %v8234
      %v8236 = vshrl.u32 %v7944, 16
      %v8238 = vrot.slane %v8236, 4
      %v8239 = vor.u32 %v8238, %v8234
      %v8240 = vrot.slane %v8239, 4
      %v8242 = vshll.u32 %v7945, 16
      %v8244 = vrot.slane %v8242, 5
      %v8245 = vsel %vm1301, %v8240, %v8244
      %v8247 = vshrl.u32 %v7946, 16
      %v8249 = vrot.slane %v8247, 4
      %v8250 = vshll.u32 %v7946, 16
      %v8252 = vrot.slane %v8250, 5
      %v8253 = vor.u32 %v8249, %v8252
      %v8254 = vrot.slane %v8253, 4
      %v8256 = vshll.u32 %v7947, 16
      %v8258 = vrot.slane %v8256, 5
      %v8259 = vsel %vm1301, %v8254, %v8258
      %v8260 = vshrl.u32 %v7947, 16
      %v8262 = vrot.slane %v8260, 4
      %v8263 = vor.u32 %v8262, %v8258
      %v8264 = vrot.slane %v8263, 4
      %v8266 = vshll.u32 %v7948, 16
      %v8268 = vrot.slane %v8266, 5
      %v8269 = vsel %vm1301, %v8264, %v8268
      %v8271 = vshrl.u32 %v7949, 16
      %v8273 = vrot.slane %v8271, 4
      %v8274 = vshll.u32 %v7949, 16
      %v8276 = vrot.slane %v8274, 5
      %v8277 = vor.u32 %v8273, %v8276
      %v8278 = vrot.slane %v8277, 4
      %v8280 = vshll.u32 %v7950, 16
      %v8282 = vrot.slane %v8280, 5
      %v8283 = vsel %vm1301, %v8278, %v8282
      %v8284 = vshrl.u32 %v7950, 16
      %v8286 = vrot.slane %v8284, 4
      %v8287 = vor.u32 %v8286, %v8282
      %v8288 = vrot.slane %v8287, 4
      %v8290 = vshll.u32 %v7951, 16
      %v8292 = vrot.slane %v8290, 5
      %v8293 = vsel %vm1301, %v8288, %v8292
      %v8295 = vshrl.u32 %v7952, 16
      %v8297 = vrot.slane %v8295, 4
      %v8298 = vshll.u32 %v7952, 16
      %v8300 = vrot.slane %v8298, 5
      %v8301 = vor.u32 %v8297, %v8300
      %v8302 = vrot.slane %v8301, 4
      %v8304 = vshll.u32 %v7953, 16
      %v8306 = vrot.slane %v8304, 5
      %v8307 = vsel %vm1301, %v8302, %v8306
      %v8308 = vshrl.u32 %v7953, 16
      %v8310 = vrot.slane %v8308, 4
      %v8311 = vor.u32 %v8310, %v8306
      %v8312 = vrot.slane %v8311, 4
      %v8314 = vshll.u32 %v7954, 16
      %v8316 = vrot.slane %v8314, 5
      %v8317 = vsel %vm1301, %v8312, %v8316
      %v8319 = vshrl.u32 %v7955, 16
      %v8321 = vrot.slane %v8319, 4
      %v8322 = vshll.u32 %v7955, 16
      %v8324 = vrot.slane %v8322, 5
      %v8325 = vor.u32 %v8321, %v8324
      %v8326 = vrot.slane %v8325, 4
      %v8328 = vshll.u32 %v7956, 16
      %v8330 = vrot.slane %v8328, 5
      %v8331 = vsel %vm1301, %v8326, %v8330
      %v8332 = vshrl.u32 %v7956, 16
      %v8334 = vrot.slane %v8332, 4
      %v8335 = vor.u32 %v8334, %v8330
      %v8336 = vrot.slane %v8335, 4
      %v8338 = vshll.u32 %v7957, 16
      %v8340 = vrot.slane %v8338, 5
      %v8341 = vsel %vm1301, %v8336, %v8340
      %v8342 = vunpack.c.l.b16 %v7971
      %v8343 = vunpack.c.l.b16 %v7981
      %v8344 = vunpack.c.l.b16 %v7995
      %v8345 = vunpack.c.l.b16 %v8005
      %v8346 = vunpack.c.l.b16 %v8019
      %v8347 = vunpack.c.l.b16 %v8029
      %v8348 = vunpack.c.l.b16 %v8043
      %v8349 = vunpack.c.l.b16 %v8053
      %v8350 = vunpack.c.l.b16 %v8067
      %v8351 = vunpack.c.l.b16 %v8077
      %v8352 = vunpack.c.l.b16 %v8091
      %v8353 = vunpack.c.l.b16 %v8101
      %v8354 = vunpack.c.l.b16 %v8115
      %v8355 = vunpack.c.l.b16 %v8125
      %v8356 = vunpack.c.l.b16 %v8139
      %v8357 = vunpack.c.l.b16 %v8149
      %v8358 = vunpack.c.l.b16 %v8163
      %v8359 = vunpack.c.l.b16 %v8173
      %v8360 = vunpack.c.l.b16 %v8187
      %v8361 = vunpack.c.l.b16 %v8197
      %v8362 = vunpack.c.l.b16 %v8211
      %v8363 = vunpack.c.l.b16 %v8221
      %v8364 = vunpack.c.l.b16 %v8235
      %v8365 = vunpack.c.l.b16 %v8245
      %v8366 = vunpack.c.l.b16 %v8259
      %v8367 = vunpack.c.l.b16 %v8269
      %v8368 = vunpack.c.l.b16 %v8283
      %v8369 = vunpack.c.l.b16 %v8293
      %v8370 = vunpack.c.l.b16 %v8307
      %v8371 = vunpack.c.l.b16 %v8317
      %v8372 = vunpack.c.l.b16 %v8331
      %v8373 = vunpack.c.l.b16 %v8341
      %v8374 = vpack.c.b16 %v8343, %v8342
      %v8375 = vpack.c.b16 %v8345, %v8344
      %v8376 = vpack.c.b16 %v8347, %v8346
      %v8377 = vpack.c.b16 %v8349, %v8348
      %v8378 = vpack.c.b16 %v8351, %v8350
      %v8379 = vpack.c.b16 %v8353, %v8352
      %v8380 = vpack.c.b16 %v8355, %v8354
      %v8381 = vpack.c.b16 %v8357, %v8356
      %v8382 = vpack.c.b16 %v8359, %v8358
      %v8383 = vpack.c.b16 %v8361, %v8360
      %v8384 = vpack.c.b16 %v8363, %v8362
      %v8385 = vpack.c.b16 %v8365, %v8364
      %v8386 = vpack.c.b16 %v8367, %v8366
      %v8387 = vpack.c.b16 %v8369, %v8368
      %v8388 = vpack.c.b16 %v8371, %v8370
      %v8389 = vpack.c.b16 %v8373, %v8372
      %8390 = vrot.lane.b32.xlu0 %v8374, 32
      %v8391 = vpop.permute.xlu0 %8390
      %8392 = vrot.lane.b32.xlu0 %v8375, 32
      %v8393 = vpop.permute.xlu0 %8392
      %8394 = vrot.lane.b32.xlu0 %v8376, 32
      %v8395 = vpop.permute.xlu0 %8394
      %8396 = vrot.lane.b32.xlu0 %v8377, 32
      %v8397 = vpop.permute.xlu0 %8396
      %8398 = vrot.lane.b32.xlu0 %v8378, 32
      %v8399 = vpop.permute.xlu0 %8398
      %8400 = vrot.lane.b32.xlu0 %v8379, 32
      %v8401 = vpop.permute.xlu0 %8400
      %8402 = vrot.lane.b32.xlu0 %v8380, 32
      %v8403 = vpop.permute.xlu0 %8402
      %8404 = vrot.lane.b32.xlu0 %v8381, 32
      %v8405 = vpop.permute.xlu0 %8404
      %8406 = vrot.lane.b32.xlu0 %v8382, 32
      %v8407 = vpop.permute.xlu0 %8406
      %8408 = vrot.lane.b32.xlu0 %v8383, 32
      %v8409 = vpop.permute.xlu0 %8408
      %8410 = vrot.lane.b32.xlu0 %v8384, 32
      %v8411 = vpop.permute.xlu0 %8410
      %8412 = vrot.lane.b32.xlu0 %v8385, 32
      %v8413 = vpop.permute.xlu0 %8412
      %8414 = vrot.lane.b32.xlu0 %v8386, 32
      %v8415 = vpop.permute.xlu0 %8414
      %8416 = vrot.lane.b32.xlu0 %v8387, 32
      %v8417 = vpop.permute.xlu0 %8416
      %8418 = vrot.lane.b32.xlu0 %v8388, 32
      %v8419 = vpop.permute.xlu0 %8418
      %8420 = vrot.lane.b32.xlu0 %v8389, 32
      %v8421 = vpop.permute.xlu0 %8420
      %8438 = vst.msk [vmem:[#allocation3] sm:$0xff] %vm4253, %v8391
      %8439 = vst.msk [vmem:[#allocation3 + $0x8] sm:$0xff] %vm4253, %v8393
      %8440 = vst.msk [vmem:[#allocation3 + $0x10] sm:$0xff] %vm4253, %v8395
      %8441 = vst.msk [vmem:[#allocation3 + $0x18] sm:$0xff] %vm4253, %v8397
      %8442 = vst.msk [vmem:[#allocation3 + $0x20] sm:$0xff] %vm4253, %v8399
      %8443 = vst.msk [vmem:[#allocation3 + $0x28] sm:$0xff] %vm4253, %v8401
      %8444 = vst.msk [vmem:[#allocation3 + $0x30] sm:$0xff] %vm4253, %v8403
      %8445 = vst.msk [vmem:[#allocation3 + $0x38] sm:$0xff] %vm4253, %v8405
      %8446 = vst.msk [vmem:[#allocation3 + $0x40] sm:$0xff] %vm4253, %v8407
      %8447 = vst.msk [vmem:[#allocation3 + $0x48] sm:$0xff] %vm4253, %v8409
      %8448 = vst.msk [vmem:[#allocation3 + $0x50] sm:$0xff] %vm4253, %v8411
      %8449 = vst.msk [vmem:[#allocation3 + $0x58] sm:$0xff] %vm4253, %v8413
      %8450 = vst.msk [vmem:[#allocation3 + $0x60] sm:$0xff] %vm4253, %v8415
      %8451 = vst.msk [vmem:[#allocation3 + $0x68] sm:$0xff] %vm4253, %v8417
      %8452 = vst.msk [vmem:[#allocation3 + $0x70] sm:$0xff] %vm4253, %v8419
      %8453 = vst.msk [vmem:[#allocation3 + $0x78] sm:$0xff] %vm4253, %v8421
      %v8454 = vld [vmem:[#allocation3] sm:$0xff]
      %v8455 = vld [vmem:[#allocation3 + $0x8] sm:$0xff]
      %v8456 = vld [vmem:[#allocation3 + $0x10] sm:$0xff]
      %v8457 = vld [vmem:[#allocation3 + $0x18] sm:$0xff]
      %v8458 = vld [vmem:[#allocation3 + $0x20] sm:$0xff]
      %v8459 = vld [vmem:[#allocation3 + $0x28] sm:$0xff]
      %v8460 = vld [vmem:[#allocation3 + $0x30] sm:$0xff]
      %v8461 = vld [vmem:[#allocation3 + $0x38] sm:$0xff]
      %v8462 = vld [vmem:[#allocation3 + $0x40] sm:$0xff]
      %v8463 = vld [vmem:[#allocation3 + $0x48] sm:$0xff]
      %v8464 = vld [vmem:[#allocation3 + $0x50] sm:$0xff]
      %v8465 = vld [vmem:[#allocation3 + $0x58] sm:$0xff]
      %v8466 = vld [vmem:[#allocation3 + $0x60] sm:$0xff]
      %v8467 = vld [vmem:[#allocation3 + $0x68] sm:$0xff]
      %v8468 = vld [vmem:[#allocation3 + $0x70] sm:$0xff]
      %v8469 = vld [vmem:[#allocation3 + $0x78] sm:$0xff]
      %v8470 = vld [vmem:[%s4] sm:$0xf]
      %v8471 = vld [vmem:[%s4 + $0x4] sm:$0xf]
      %v8472 = vld [vmem:[%s4 + $0x8] sm:$0xf]
      %v8473 = vld [vmem:[%s4 + $0xc] sm:$0xf]
      %v8474 = vld [vmem:[%s4 + $0x10] sm:$0x3]
      %v8480 = vunpack.c.l.b16 %v8470
      %v8481 = vunpack.c.l.b16 %v8471
      %v8482 = vunpack.c.l.b16 %v8472
      %v8483 = vunpack.c.l.b16 %v8473
      %v8484 = vunpack.c.l.b16 %v8474
      %v8485 = vpack.c.b16 %v8481, %v8480
      %v8486 = vpack.c.b16 %v8483, %v8482
      %v8487 = vpack.c.b16 %v8484, %v8484
      %v8491 = vsel %vm4306, %v8454, 0
      %v8494 = vsel %vm4306, %v8455, 0
      %v8497 = vsel %vm4306, %v8456, 0
      %v8500 = vsel %vm4306, %v8457, 0
      %v8503 = vsel %vm4306, %v8458, 0
      %v8506 = vsel %vm4306, %v8459, 0
      %v8509 = vsel %vm4306, %v8460, 0
      %v8512 = vsel %vm4306, %v8461, 0
      %v8515 = vsel %vm4306, %v8462, 0
      %v8518 = vsel %vm4306, %v8463, 0
      %v8521 = vsel %vm4306, %v8464, 0
      %v8524 = vsel %vm4306, %v8465, 0
      %v8527 = vsel %vm4306, %v8466, 0
      %v8530 = vsel %vm4306, %v8467, 0
      %v8533 = vsel %vm4306, %v8468, 0
      %v8536 = vsel %vm4306, %v8469, 0
      %v8539 = vsel %vm4355, %v8487, 0
      %8541 = vmatprep.subr.bf16.mxu0 0
      %8542 = vmatpush1.bf16.msra.mxu0 %v8485
      %8543 = vmatprep.subr.bf16.mxu0 0
      %8544 = vmatpush1.bf16.msra.mxu0 %v8486
      %8545 = vmatprep.subr.bf16.mxu0 0
      %8546 = vmatpush1.bf16.msra.mxu0 %v8539
      %8547 = vmatprep.subr.bf16.mxu0 0
      %8548 = vmatpush1.bf16.msra.mxu0 0
      %8549 = vmatprep.subr.bf16.mxu0 0
      %8550 = vmatpush1.bf16.msra.mxu0 0
      %8551 = vmatprep.subr.bf16.mxu0 0
      %8552 = vmatpush1.bf16.msra.mxu0 0
      %8553 = vmatprep.subr.bf16.mxu0 0
      %8554 = vmatpush1.bf16.msra.mxu0 0
      %8555 = vmatprep.subr.bf16.mxu0 0
      %8556 = vmatpush1.bf16.msra.mxu0 0
      %8557 = vmatprep.subr.bf16.mxu0 0
      %8558 = vmatpush1.bf16.msra.mxu0 0
      %8559 = vmatprep.subr.bf16.mxu0 0
      %8560 = vmatpush1.bf16.msra.mxu0 0
      %8561 = vmatprep.subr.bf16.mxu0 0
      %8562 = vmatpush1.bf16.msra.mxu0 0
      %8563 = vmatprep.subr.bf16.mxu0 0
      %8564 = vmatpush1.bf16.msra.mxu0 0
      %8565 = vmatprep.subr.bf16.mxu0 0
      %8566 = vmatpush1.bf16.msra.mxu0 0
      %8567 = vmatprep.subr.bf16.mxu0 0
      %8568 = vmatpush1.bf16.msra.mxu0 0
      %8569 = vmatprep.subr.bf16.mxu0 0
      %8570 = vmatpush1.bf16.msra.mxu0 0
      %8571 = vmatprep.subr.bf16.mxu0 0
      %8572 = vmatpush1.bf16.msra.mxu0 0
      %8573 = vmatprep.mubr.bf16.mxu0 0
      %8574 = vmatmul.mubr.bf16.gmra.mrb[0].mxu0 %v8491
      %v8575 = vpop.f32.mrb[0].mxu0
      %v8576 = vadd.f32 0.0, %v8575
      %v8577 = vpop.f32.mrb[0].mxu0
      %v8578 = vpop.f32.mrb[0].mxu0
      %v8579 = vadd.f32 0.0, %v8578
      %v8580 = vpop.f32.mrb[0].mxu0
      %8581 = vmatprep.mubr.bf16.mxu0 0
      %8582 = vmatmul.mubr.bf16.gmra.mrb[0].mxu0 %v8494
      %v8583 = vpop.f32.mrb[0].mxu0
      %v8584 = vadd.f32 0.0, %v8583
      %v8585 = vpop.f32.mrb[0].mxu0
      %v8586 = vpop.f32.mrb[0].mxu0
      %v8587 = vadd.f32 0.0, %v8586
      %v8588 = vpop.f32.mrb[0].mxu0
      %8589 = vmatprep.mubr.bf16.mxu0 0
      %8590 = vmatmul.mubr.bf16.gmra.mrb[0].mxu0 %v8497
      %v8591 = vpop.f32.mrb[0].mxu0
      %v8592 = vadd.f32 0.0, %v8591
      %v8593 = vpop.f32.mrb[0].mxu0
      %v8594 = vpop.f32.mrb[0].mxu0
      %v8595 = vadd.f32 0.0, %v8594
      %v8596 = vpop.f32.mrb[0].mxu0
      %8597 = vmatprep.mubr.bf16.mxu0 0
      %8598 = vmatmul.mubr.bf16.gmra.mrb[0].mxu0 %v8500
      %v8599 = vpop.f32.mrb[0].mxu0
      %v8600 = vadd.f32 0.0, %v8599
      %v8601 = vpop.f32.mrb[0].mxu0
      %v8602 = vpop.f32.mrb[0].mxu0
      %v8603 = vadd.f32 0.0, %v8602
      %v8604 = vpop.f32.mrb[0].mxu0
      %8605 = vmatprep.mubr.bf16.mxu0 0
      %8606 = vmatmul.mubr.bf16.gmra.mrb[0].mxu0 %v8503
      %v8607 = vpop.f32.mrb[0].mxu0
      %v8608 = vadd.f32 0.0, %v8607
      %v8609 = vpop.f32.mrb[0].mxu0
      %v8610 = vpop.f32.mrb[0].mxu0
      %v8611 = vadd.f32 0.0, %v8610
      %v8612 = vpop.f32.mrb[0].mxu0
      %8613 = vmatprep.mubr.bf16.mxu0 0
      %8614 = vmatmul.mubr.bf16.gmra.mrb[0].mxu0 %v8506
      %v8615 = vpop.f32.mrb[0].mxu0
      %v8616 = vadd.f32 0.0, %v8615
      %v8617 = vpop.f32.mrb[0].mxu0
      %v8618 = vpop.f32.mrb[0].mxu0
      %v8619 = vadd.f32 0.0, %v8618
      %v8620 = vpop.f32.mrb[0].mxu0
      %8621 = vmatprep.mubr.bf16.mxu0 0
      %8622 = vmatmul.mubr.bf16.gmra.mrb[0].mxu0 %v8509
      %v8623 = vpop.f32.mrb[0].mxu0
      %v8624 = vadd.f32 0.0, %v8623
      %v8625 = vpop.f32.mrb[0].mxu0
      %v8626 = vpop.f32.mrb[0].mxu0
      %v8627 = vadd.f32 0.0, %v8626
      %v8628 = vpop.f32.mrb[0].mxu0
      %8629 = vmatprep.mubr.bf16.mxu0 0
      %8630 = vmatmul.mubr.bf16.gmra.mrb[0].mxu0 %v8512
      %v8631 = vpop.f32.mrb[0].mxu0
      %v8632 = vadd.f32 0.0, %v8631
      %v8633 = vpop.f32.mrb[0].mxu0
      %v8634 = vpop.f32.mrb[0].mxu0
      %v8635 = vadd.f32 0.0, %v8634
      %v8636 = vpop.f32.mrb[0].mxu0
      %8637 = vmatprep.mubr.bf16.mxu0 0
      %8638 = vmatmul.mubr.bf16.gmra.mrb[0].mxu0 %v8515
      %v8639 = vpop.f32.mrb[0].mxu0
      %v8640 = vadd.f32 0.0, %v8639
      %v8641 = vpop.f32.mrb[0].mxu0
      %v8642 = vpop.f32.mrb[0].mxu0
      %v8643 = vadd.f32 0.0, %v8642
      %v8644 = vpop.f32.mrb[0].mxu0
      %8645 = vmatprep.mubr.bf16.mxu0 0
      %8646 = vmatmul.mubr.bf16.gmra.mrb[0].mxu0 %v8518
      %v8647 = vpop.f32.mrb[0].mxu0
      %v8648 = vadd.f32 0.0, %v8647
      %v8649 = vpop.f32.mrb[0].mxu0
      %v8650 = vpop.f32.mrb[0].mxu0
      %v8651 = vadd.f32 0.0, %v8650
      %v8652 = vpop.f32.mrb[0].mxu0
      %8653 = vmatprep.mubr.bf16.mxu0 0
      %8654 = vmatmul.mubr.bf16.gmra.mrb[0].mxu0 %v8521
      %v8655 = vpop.f32.mrb[0].mxu0
      %v8656 = vadd.f32 0.0, %v8655
      %v8657 = vpop.f32.mrb[0].mxu0
      %v8658 = vpop.f32.mrb[0].mxu0
      %v8659 = vadd.f32 0.0, %v8658
      %v8660 = vpop.f32.mrb[0].mxu0
      %8661 = vmatprep.mubr.bf16.mxu0 0
      %8662 = vmatmul.mubr.bf16.gmra.mrb[0].mxu0 %v8524
      %v8663 = vpop.f32.mrb[0].mxu0
      %v8664 = vadd.f32 0.0, %v8663
      %v8665 = vpop.f32.mrb[0].mxu0
      %v8666 = vpop.f32.mrb[0].mxu0
      %v8667 = vadd.f32 0.0, %v8666
      %v8668 = vpop.f32.mrb[0].mxu0
      %8669 = vmatprep.mubr.bf16.mxu0 0
      %8670 = vmatmul.mubr.bf16.gmra.mrb[0].mxu0 %v8527
      %v8671 = vpop.f32.mrb[0].mxu0
      %v8672 = vadd.f32 0.0, %v8671
      %v8673 = vpop.f32.mrb[0].mxu0
      %v8674 = vpop.f32.mrb[0].mxu0
      %v8675 = vadd.f32 0.0, %v8674
      %v8676 = vpop.f32.mrb[0].mxu0
      %8677 = vmatprep.mubr.bf16.mxu0 0
      %8678 = vmatmul.mubr.bf16.gmra.mrb[0].mxu0 %v8530
      %v8679 = vpop.f32.mrb[0].mxu0
      %v8680 = vadd.f32 0.0, %v8679
      %v8681 = vpop.f32.mrb[0].mxu0
      %v8682 = vpop.f32.mrb[0].mxu0
      %v8683 = vadd.f32 0.0, %v8682
      %v8684 = vpop.f32.mrb[0].mxu0
      %8685 = vmatprep.mubr.bf16.mxu0 0
      %8686 = vmatmul.mubr.bf16.gmra.mrb[0].mxu0 %v8533
      %v8687 = vpop.f32.mrb[0].mxu0
      %v8688 = vadd.f32 0.0, %v8687
      %v8689 = vpop.f32.mrb[0].mxu0
      %v8690 = vpop.f32.mrb[0].mxu0
      %v8691 = vadd.f32 0.0, %v8690
      %v8692 = vpop.f32.mrb[0].mxu0
      %8693 = vmatprep.mubr.bf16.mxu0 0
      %8694 = vmatmul.mubr.bf16.gmra.mrb[0].mxu0 %v8536
      %v8695 = vpop.f32.mrb[0].mxu0
      %v8696 = vadd.f32 0.0, %v8695
      %v8697 = vpop.f32.mrb[0].mxu0
      %v8698 = vpop.f32.mrb[0].mxu0
      %v8699 = vadd.f32 0.0, %v8698
      %v8700 = vpop.f32.mrb[0].mxu0
      %8701 = vdwg.mxu0
      %v8702 = vld [vmem:[%s5] sm:$0x1]
      %v8704 = vlaneseq
      %v8705 = vshrl.u32 %v8704, 7
      %v8706 = vsub.s32 0, %v8705
      %v8707 = vrot.slane %v8702, %v8706
      %v8709 = vmul.f32 %v8576, %v8707
      %v8710 = vmul.f32 %v8579, %v8707
      %v8711 = vmul.f32 %v8584, %v8707
      %v8712 = vmul.f32 %v8587, %v8707
      %v8713 = vmul.f32 %v8592, %v8707
      %v8714 = vmul.f32 %v8595, %v8707
      %v8715 = vmul.f32 %v8600, %v8707
      %v8716 = vmul.f32 %v8603, %v8707
      %v8717 = vmul.f32 %v8608, %v8707
      %v8718 = vmul.f32 %v8611, %v8707
      %v8719 = vmul.f32 %v8616, %v8707
      %v8720 = vmul.f32 %v8619, %v8707
      %v8721 = vmul.f32 %v8624, %v8707
      %v8722 = vmul.f32 %v8627, %v8707
      %v8723 = vmul.f32 %v8632, %v8707
      %v8724 = vmul.f32 %v8635, %v8707
      %v8725 = vmul.f32 %v8640, %v8707
      %v8726 = vmul.f32 %v8643, %v8707
      %v8727 = vmul.f32 %v8648, %v8707
      %v8728 = vmul.f32 %v8651, %v8707
      %v8729 = vmul.f32 %v8656, %v8707
      %v8730 = vmul.f32 %v8659, %v8707
      %v8731 = vmul.f32 %v8664, %v8707
      %v8732 = vmul.f32 %v8667, %v8707
      %v8733 = vmul.f32 %v8672, %v8707
      %v8734 = vmul.f32 %v8675, %v8707
      %v8735 = vmul.f32 %v8680, %v8707
      %v8736 = vmul.f32 %v8683, %v8707
      %v8737 = vmul.f32 %v8688, %v8707
      %v8738 = vmul.f32 %v8691, %v8707
      %v8739 = vmul.f32 %v8696, %v8707
      %v8740 = vmul.f32 %v8699, %v8707
      %v8741 = vld [vmem:[%s6] sm:$0x1]
      %v8743 = vlaneseq
      %v8744 = vshrl.u32 %v8743, 7
      %v8745 = vsub.s32 0, %v8744
      %v8746 = vrot.slane %v8741, %v8745
      %v8748 = vadd.f32 %v8709, %v8746
      %v8749 = vadd.f32 %v8710, %v8746
      %v8750 = vadd.f32 %v8711, %v8746
      %v8751 = vadd.f32 %v8712, %v8746
      %v8752 = vadd.f32 %v8713, %v8746
      %v8753 = vadd.f32 %v8714, %v8746
      %v8754 = vadd.f32 %v8715, %v8746
      %v8755 = vadd.f32 %v8716, %v8746
      %v8756 = vadd.f32 %v8717, %v8746
      %v8757 = vadd.f32 %v8718, %v8746
      %v8758 = vadd.f32 %v8719, %v8746
      %v8759 = vadd.f32 %v8720, %v8746
      %v8760 = vadd.f32 %v8721, %v8746
      %v8761 = vadd.f32 %v8722, %v8746
      %v8762 = vadd.f32 %v8723, %v8746
      %v8763 = vadd.f32 %v8724, %v8746
      %v8764 = vadd.f32 %v8725, %v8746
      %v8765 = vadd.f32 %v8726, %v8746
      %v8766 = vadd.f32 %v8727, %v8746
      %v8767 = vadd.f32 %v8728, %v8746
      %v8768 = vadd.f32 %v8729, %v8746
      %v8769 = vadd.f32 %v8730, %v8746
      %v8770 = vadd.f32 %v8731, %v8746
      %v8771 = vadd.f32 %v8732, %v8746
      %v8772 = vadd.f32 %v8733, %v8746
      %v8773 = vadd.f32 %v8734, %v8746
      %v8774 = vadd.f32 %v8735, %v8746
      %v8775 = vadd.f32 %v8736, %v8746
      %v8776 = vadd.f32 %v8737, %v8746
      %v8777 = vadd.f32 %v8738, %v8746
      %v8778 = vadd.f32 %v8739, %v8746
      %v8779 = vadd.f32 %v8740, %v8746
      %v8780 = vadd.f32 %v8748, %v280
      %v8781 = vadd.f32 %v8749, %v281
      %v8782 = vadd.f32 %v8750, %v282
      %v8783 = vadd.f32 %v8751, %v283
      %v8784 = vadd.f32 %v8752, %v284
      %v8785 = vadd.f32 %v8753, %v285
      %v8786 = vadd.f32 %v8754, %v286
      %v8787 = vadd.f32 %v8755, %v287
      %v8788 = vadd.f32 %v8756, %v288
      %v8789 = vadd.f32 %v8757, %v289
      %v8790 = vadd.f32 %v8758, %v290
      %v8791 = vadd.f32 %v8759, %v291
      %v8792 = vadd.f32 %v8760, %v292
      %v8793 = vadd.f32 %v8761, %v293
      %v8794 = vadd.f32 %v8762, %v294
      %v8795 = vadd.f32 %v8763, %v295
      %v8796 = vadd.f32 %v8764, %v296
      %v8797 = vadd.f32 %v8765, %v297
      %v8798 = vadd.f32 %v8766, %v298
      %v8799 = vadd.f32 %v8767, %v299
      %v8800 = vadd.f32 %v8768, %v300
      %v8801 = vadd.f32 %v8769, %v301
      %v8802 = vadd.f32 %v8770, %v302
      %v8803 = vadd.f32 %v8771, %v303
      %v8804 = vadd.f32 %v8772, %v304
      %v8805 = vadd.f32 %v8773, %v305
      %v8806 = vadd.f32 %v8774, %v306
      %v8807 = vadd.f32 %v8775, %v307
      %v8808 = vadd.f32 %v8776, %v308
      %v8809 = vadd.f32 %v8777, %v309
      %v8810 = vadd.f32 %v8778, %v310
      %v8811 = vadd.f32 %v8779, %v311
      %v8812 = vmax.f32 %v8780, 0.0
      %v8813 = vmax.f32 %v8781, 0.0
      %v8814 = vmax.f32 %v8782, 0.0
      %v8815 = vmax.f32 %v8783, 0.0
      %v8816 = vmax.f32 %v8784, 0.0
      %v8817 = vmax.f32 %v8785, 0.0
      %v8818 = vmax.f32 %v8786, 0.0
      %v8819 = vmax.f32 %v8787, 0.0
      %v8820 = vmax.f32 %v8788, 0.0
      %v8821 = vmax.f32 %v8789, 0.0
      %v8822 = vmax.f32 %v8790, 0.0
      %v8823 = vmax.f32 %v8791, 0.0
      %v8824 = vmax.f32 %v8792, 0.0
      %v8825 = vmax.f32 %v8793, 0.0
      %v8826 = vmax.f32 %v8794, 0.0
      %v8827 = vmax.f32 %v8795, 0.0
      %v8828 = vmax.f32 %v8796, 0.0
      %v8829 = vmax.f32 %v8797, 0.0
      %v8830 = vmax.f32 %v8798, 0.0
      %v8831 = vmax.f32 %v8799, 0.0
      %v8832 = vmax.f32 %v8800, 0.0
      %v8833 = vmax.f32 %v8801, 0.0
      %v8834 = vmax.f32 %v8802, 0.0
      %v8835 = vmax.f32 %v8803, 0.0
      %v8836 = vmax.f32 %v8804, 0.0
      %v8837 = vmax.f32 %v8805, 0.0
      %v8838 = vmax.f32 %v8806, 0.0
      %v8839 = vmax.f32 %v8807, 0.0
      %v8840 = vmax.f32 %v8808, 0.0
      %v8841 = vmax.f32 %v8809, 0.0
      %v8842 = vmax.f32 %v8810, 0.0
      %v8843 = vmax.f32 %v8811, 0.0
      %8844 = vst.msk [vmem:[%s278] sm:$0xff] %vm1057, %v8812
      %8845 = vst.msk [vmem:[%s278 + $0x8] sm:$0xff] %vm1057, %v8813
      %8846 = vst.msk [vmem:[%s278 + $0x10] sm:$0xff] %vm1057, %v8814
      %8847 = vst.msk [vmem:[%s278 + $0x18] sm:$0xff] %vm1057, %v8815
      %8848 = vst.msk [vmem:[%s278 + $0x20] sm:$0xff] %vm1057, %v8816
      %8849 = vst.msk [vmem:[%s278 + $0x28] sm:$0xff] %vm1057, %v8817
      %8850 = vst.msk [vmem:[%s278 + $0x30] sm:$0xff] %vm1057, %v8818
      %8851 = vst.msk [vmem:[%s278 + $0x38] sm:$0xff] %vm1057, %v8819
      %8852 = vst.msk [vmem:[%s278 + $0x40] sm:$0xff] %vm1057, %v8820
      %8853 = vst.msk [vmem:[%s278 + $0x48] sm:$0xff] %vm1057, %v8821
      %8854 = vst.msk [vmem:[%s278 + $0x50] sm:$0xff] %vm1057, %v8822
      %8855 = vst.msk [vmem:[%s278 + $0x58] sm:$0xff] %vm1057, %v8823
      %8856 = vst.msk [vmem:[%s278 + $0x60] sm:$0xff] %vm1057, %v8824
      %8857 = vst.msk [vmem:[%s278 + $0x68] sm:$0xff] %vm1057, %v8825
      %8858 = vst.msk [vmem:[%s278 + $0x70] sm:$0xff] %vm1057, %v8826
      %8859 = vst.msk [vmem:[%s278 + $0x78] sm:$0xff] %vm1057, %v8827
      %8860 = vst.msk [vmem:[%s278 + $0x80] sm:$0xff] %vm1057, %v8828
      %8861 = vst.msk [vmem:[%s278 + $0x88] sm:$0xff] %vm1057, %v8829
      %8862 = vst.msk [vmem:[%s278 + $0x90] sm:$0xff] %vm1057, %v8830
      %8863 = vst.msk [vmem:[%s278 + $0x98] sm:$0xff] %vm1057, %v8831
      %8864 = vst.msk [vmem:[%s278 + $0xa0] sm:$0xff] %vm1057, %v8832
      %8865 = vst.msk [vmem:[%s278 + $0xa8] sm:$0xff] %vm1057, %v8833
      %8866 = vst.msk [vmem:[%s278 + $0xb0] sm:$0xff] %vm1057, %v8834
      %8867 = vst.msk [vmem:[%s278 + $0xb8] sm:$0xff] %vm1057, %v8835
      %8868 = vst.msk [vmem:[%s278 + $0xc0] sm:$0xff] %vm1057, %v8836
      %8869 = vst.msk [vmem:[%s278 + $0xc8] sm:$0xff] %vm1057, %v8837
      %8870 = vst.msk [vmem:[%s278 + $0xd0] sm:$0xff] %vm1057, %v8838
      %8871 = vst.msk [vmem:[%s278 + $0xd8] sm:$0xff] %vm1057, %v8839
      %8872 = vst.msk [vmem:[%s278 + $0xe0] sm:$0xff] %vm1057, %v8840
      %8873 = vst.msk [vmem:[%s278 + $0xe8] sm:$0xff] %vm1057, %v8841
      %8874 = vst.msk [vmem:[%s278 + $0xf0] sm:$0xff] %vm1057, %v8842
      %8875 = vst.msk [vmem:[%s278 + $0xf8] sm:$0xff] %vm1057, %v8843
      %p8876 = scmp.lt.s32.totalorder %s18, 1
      %s8877 = scalar_select %p8876, %s18, 1
      %s8878 = smul.addr %s8877, 32
      %s8879 = smul.addr %s8878, 8
      %s8880 = scalar_lea.vmem %s7, %s8879
      // Predicated region
      $region49: #{basic_block_forward.1} parent=47 // pred_check
        %p8881 = pneg %p188
      $region50: #{basic_block_forward.1} parent=47 // pred_check_branch
        %8883 = sbr.rel (%p8881) target = $region52
      $region51: #{basic_block_forward.1} parent=47 // pred_region
        _
      $region52: #{basic_block_forward.1} parent=47 // pred_fallthru
        _
    $region48: #{basic_block_forward.1} parent=5 // pred_fallthru
      _
    %p8884 = scmp.le.s32.totalorder 2, %s13
    // Predicated region
    $region53: #{basic_block_forward.1} parent=5 // pred_check
      %p8885 = pneg %p8884
    $region54: #{basic_block_forward.1} parent=5 // pred_check_branch
      %8887 = sbr.rel (%p8885) target = $region56
    $region55: #{basic_block_forward.1} parent=5 // pred_region
      %s8888 = ssub.s32 %s13, 2
      // Predicated region
      $region57: #{basic_block_forward.1} parent=55 // pred_check
        %p8889 = pneg %p194
      $region58: #{basic_block_forward.1} parent=55 // pred_check_branch
        %8891 = sbr.rel (%p8889) target = $region60
      $region59: #{basic_block_forward.1} parent=55 // pred_region
        %p8892 = scmp.lt.s32.totalorder %s19, 1
        %s8893 = scalar_select %p8892, %s19, 1
        %s8894 = smul.addr %s8893, 32
        %s8895 = smul.addr %s8894, 8
        %s8896 = scalar_lea.vmem %s7, %s8895
      $region60: #{basic_block_forward.1} parent=55 // pred_fallthru
        _
    $region56: #{basic_block_forward.1} parent=5 // pred_fallthru
      _
  $region6: #{basic_block_forward.1} parent=0 // loop_footer
    %s17 = sadd.s32 1, %s13
  $region7: #{basic_block_forward.1} parent=0 // loop_footer_branch
    %12 = sbr.rel target = $region3
  $region8: #{basic_block_forward.1} parent=0 // loop_exit
    _

</llo_original>
